<compile_context>
chip_gen: v7x
topology: tpu7x:2x2x1
jax: 0.10.0
libtpu: 0.0.40
codegen_flags: <defaults>
</compile_context>

<pallas_src>
import warnings
from functools import lru_cache

import jax
import jax.numpy as jnp
from jax.experimental import pallas as pl
from jax.experimental.pallas import tpu as pltpu

# Donated f32 inputs cannot alias the half-size bf16 outputs; JAX warns that
# the donation is "not usable" even though the buffer is still released.
warnings.filterwarnings("ignore", message=".*[Dd]onat.*")

_LANE = 128
_MAX_LANE_WIDTH = 4096          # cap slab width at 32 * 128 lanes
_MIN_PALLAS_ELEMS = 16384       # below this, launch overhead always dominates

_FP8_DTYPES = tuple(
    jnp.dtype(getattr(jnp, name))
    for name in ("float8_e4m3fn",)
    if hasattr(jnp, name)
)


def _target_tile_bytes() -> int:
    """Generation-aware input tile size (amortizes the ~0.35 us/step cost)."""
    try:
        kind = jax.devices()[0].device_kind.lower()
    except Exception:
        kind = ""
    if "v5" in kind:
        return 4 * 1024 * 1024      # v5e: slower HBM, 16 MiB scoped default
    return 8 * 1024 * 1024          # v6e / v7x: faster HBM -> bigger tiles


# ----------------------------- Pallas kernel ------------------------------ #
def _cast_kernel(x_ref, o_ref):
    # Elementwise cast on one (tr, c) VMEM tile (pure VPU op, mem-bound).
    o_ref[...] = x_ref[...].astype(o_ref.dtype)


def _choose_lane_width(n_elems: int) -> int:
    """Largest C = k*128 (k<=32) dividing n_elems -> lane-dense slab."""
    m = n_elems // _LANE
    for k in range(min(m, _MAX_LANE_WIDTH // _LANE), 0, -1):
        if m % k == 0:
            return k * _LANE
    return _LANE


def _slab_geometry(n_elems: int, itemsize: int, tile_bytes: int):
    """Return (c, r, tr, grid) or None when a Pallas launch is not worth it."""
    c = _choose_lane_width(n_elems)
    r = n_elems // c
    tr_target = max(16, tile_bytes // (c * itemsize))
    tr_target = (tr_target // 16) * 16          # whole packed bf16 vregs on store
    if r <= tr_target:
        return None                              # single block -> plain astype
    # Prefer a tr that divides r exactly: no masked tail, uniform DMAs.
    tr = 0
    floor = max(16, tr_target // 2)
    t = tr_target
    while t >= floor:
        if r % t == 0:
            tr = t
            break
        t -= 16
    if tr == 0:
        tr = tr_target                           # ragged tail: Pallas masks it
    return c, r, tr, pl.cdiv(r, tr)


@lru_cache(maxsize=None)
def _get_cast_fn(shape, dtype_name, c, r, tr, grid):
    """One compiled executable per slab geometry, reused across params."""
    itemsize = jnp.dtype(dtype_name).itemsize
    in_bytes = tr * c * itemsize
    out_bytes = tr * c * 2
    vmem_limit = int(min(56 << 20, 3 * in_bytes + 2 * out_bytes + (4 << 20)))

    spec_kwargs = {}
    if grid >= 3:
        # Pure-DMA pipeline: a third inbound buffer hides exposed DMA latency.
        spec_kwargs["pipeline_mode"] = pl.Buffered(3)
    in_spec = pl.BlockSpec((tr, c), lambda i: (i, 0), **spec_kwargs)

    call = pl.pallas_call(
        _cast_kernel,
        out_shape=jax.ShapeDtypeStruct((r, c), jnp.bfloat16),
        grid=(grid,),
        in_specs=[in_spec],
        out_specs=pl.BlockSpec((tr, c), lambda i: (i, 0)),
        compiler_params=pltpu.CompilerParams(
            # TODO(synk): consider pltpu.CORE_PARALLEL on v7x (verify 2-TC split).
            dimension_semantics=("parallel",),
            vmem_limit_bytes=vmem_limit,
        ),
    )

    def f(x):
        # Contiguous row-major reshapes lower to bitcasts: no extra HBM pass.
        return call(x.reshape(r, c)).reshape(shape)

    # Donate the source buffer so its HBM is released once the cast finishes.
    return jax.jit(f, donate_argnums=(0,))


def cast_to_bf16_pallas(x: jax.Array) -> jax.Array:
    """Pallas-tiled equivalent of `param.to(torch.bfloat16)` for one param."""
    n = int(x.size)
    # Tiny / lane-odd params: a single fused XLA convert already hits the HBM
    # roofline; a Pallas launch + per-shape Mosaic compile would only add cost.
    if n < _MIN_PALLAS_ELEMS or n % _LANE != 0:
        return x.astype(jnp.bfloat16)
    geom = _slab_geometry(n, x.dtype.itemsize, _target_tile_bytes())
    if geom is None:
        return x.astype(jnp.bfloat16)            # single-tile slab: skip Pallas
    c, r, tr, grid = geom
    fn = _get_cast_fn(tuple(x.shape), jnp.dtype(x.dtype).name, c, r, tr, grid)
    return fn(x)


# --------------------------- Python-side "module" -------------------------- #
class NeuronApplicationBaseJAX:
    """JAX/Pallas analogue of NeuronApplicationBase.

    Only checkpoint_loader_fn's dtype-conversion loop has tensor semantics;
    it is reproduced here with the Pallas cast kernel above.
    """

    def __init__(self, state_dict, torch_dtype=jnp.bfloat16):
        self.state_dict = state_dict
        self.torch_dtype = torch_dtype

    def checkpoint_loader_fn(self):
        model_sd = dict(self.state_dict)
        if self.torch_dtype == jnp.float32:
            return model_sd
        for name, param in model_sd.items():
            is_float = jnp.issubdtype(param.dtype, jnp.floating)
            is_fp8 = any(param.dtype == d for d in _FP8_DTYPES)
            if is_float and not is_fp8:
                if name.endswith("scale"):
                    # scales stay in their original dtype (PyTorch warning path)
                    continue
                if param.dtype == jnp.bfloat16:
                    continue  # already target dtype; .to() would be a no-op
                model_sd[name] = cast_to_bf16_pallas(param)
        return model_sd

    def forward(self, **kwargs):
        # TODO(synk): base class forward raises NotImplementedError; no compute.
        raise NotImplementedError("forward is not implemented")


# ---------------------------------- main ----------------------------------- #
if __name__ == "__main__":
    key = jax.random.PRNGKey(0)
    keys = jax.random.split(key, 6)

    # Deterministic synthetic "state dict".
    state_dict = {
        # Pallas path: slab (1024, 4096); multi-block on every generation
        # (tr=512/grid=2 on v6e/v7x, tr=256/grid=4 on v5e -> Buffered(3) path).
        "lm_head.weight": jax.random.normal(keys[0], (2048, 2048), dtype=jnp.float32),
        # Lane-even but single-tile slab -> astype fallback (skip-Pallas rule).
        "layers.0.attn.qkv.weight": jax.random.normal(keys[1], (96, 1536), dtype=jnp.float32),
        # Tiny param -> plain astype fallback (launch overhead would dominate).
        "layers.0.mlp.weight": jax.random.normal(keys[2], (2, 4, 16, 16), dtype=jnp.float32),
        # Half-precision param, small -> astype fallback, still converted to bf16.
        "layers.0.norm.weight": jax.random.normal(keys[3], (64, 128), dtype=jnp.float16),
        # Scale stays float32 (matches the PyTorch skip path).
        "layers.0.mlp.scale": jax.random.uniform(keys[4], (16,), dtype=jnp.float32),
        # Non-float param passes through untouched.
        "layers.0.token_ids": jnp.arange(8, dtype=jnp.int32),
    }

    # Snapshot reference results BEFORE conversion: converted f32/f16 params
    # are donated (their source buffers are invalidated by design).
    expected = {}
    for name, param in state_dict.items():
        is_float = jnp.issubdtype(param.dtype, jnp.floating)
        is_fp8 = any(param.dtype == d for d in _FP8_DTYPES)
        will_convert = (
            is_float and not is_fp8
            and not name.endswith("scale")
            and param.dtype != jnp.bfloat16
        )
        if will_convert:
            expected[name] = (param.astype(jnp.bfloat16), jnp.dtype(jnp.bfloat16))
        else:
            expected[name] = (param, param.dtype)
    jax.block_until_ready(expected)

    app = NeuronApplicationBaseJAX(state_dict)
    converted = app.checkpoint_loader_fn()
    jax.block_until_ready(converted)

    for name, (ref, dt) in expected.items():
        out = converted[name]
        assert out.dtype == dt, f"dtype mismatch in {name}: {out.dtype} vs {dt}"
        assert out.shape == ref.shape, f"shape mismatch in {name}"
        assert jnp.array_equal(out, ref), f"value mismatch in {name}"

    print("KERNEL_OK")
</pallas_src>

<mosaic_0001>
module attributes {stable_mosaic.version = 11 : i64} {
  func.func @_cast_kernel(%arg0: i32, %arg1: memref<512x4096xf32, #tpu.memory_space<vmem>>, %arg2: memref<512x4096xbf16, #tpu.memory_space<vmem>>) attributes {dimension_semantics = [#tpu.dimension_semantics<parallel>], iteration_bounds = array<i64: 2>, scalar_prefetch = 0 : i64, scratch_operands = 0 : i64, tpu.core_type = #tpu.core_type<tc>, window_params = [{transform_indices = @transform_0, window_bounds = array<i64: 512, 4096>}, {transform_indices = @transform_1, window_bounds = array<i64: 512, 4096>}]} {
    %c0 = arith.constant 0 : index
    %c0_0 = arith.constant 0 : index
    %0 = vector.load %arg1[%c0, %c0_0] : memref<512x4096xf32, #tpu.memory_space<vmem>>, vector<512x4096xf32>
    %1 = arith.truncf %0 : vector<512x4096xf32> to vector<512x4096xbf16>
    %c0_1 = arith.constant 0 : index
    %c0_2 = arith.constant 0 : index
    %2 = vector.load %arg2[%c0_1, %c0_2] : memref<512x4096xbf16, #tpu.memory_space<vmem>>, vector<512x4096xbf16>
    tpu.vector_store %arg2[%c0_1, %c0_2], %1 {strides = array<i32>} : memref<512x4096xbf16, #tpu.memory_space<vmem>>, vector<512x4096xbf16>,
    return
  }
  func.func @transform_0(%arg0: i32) -> (i32, i32) {
    %c0_i32 = arith.constant 0 : i32
    %c0_i32_0 = arith.constant 0 : i32
    return %arg0, %c0_i32 : i32, i32
  }
  func.func @transform_1(%arg0: i32) -> (i32, i32) {
    %c0_i32 = arith.constant 0 : i32
    %c0_i32_0 = arith.constant 0 : i32
    return %arg0, %c0_i32 : i32, i32
  }
}

</mosaic_0001>

<llo_original>
// kernel: f.1
$region0: #{f.1}
  #allocation0 [shape = 'u32[]', space=smem, size = 0x4, offset = 0x4, fixed_abs, tag = 'smem constant byte address 0x4 - core index']
  #allocation1 [shape = 'u32[144,128]{1,0:T(1,128)}', space=vmem, size = 0x12000, scoped, tag = 'internal scratch']
  %s0 = inlined_call_operand.vmem [shape: f32[1024,4096], index: 0, kind: input, shape index: {}]
  %s1 = inlined_call_operand.vmem [shape: bf16[1024,4096], index: 1, kind: output, shape index: {}]
  %s2 = sld [smem:[#allocation0]]
  $region37: #{f.1} parent=0
    _
  %s4 = ssub.s32 1, %s2
  %s5 = scalar_select 0, %s4, %s2
  loop: start=0, step=1, limit=4
  $region2: #{f.1} parent=0 // loop_pre_header
    _
  $region3: #{f.1} parent=0 // loop_header
    %s7 = sphi 0, %s11
    %p8 = scmp.ge.s32.totalorder %s7, 4
    %s17 = sphi 0, %s19
    %s20 = sphi 0, %s17
    %s21 = sphi 0, %s20
    %s37 = sphi 0, %s21
    %s43 = sphi 0, %s45
    %s46 = sphi 0, %s43
    %s47 = sphi 0, %s46
    %s63 = sphi 0, %s47
  $region4: #{f.1} parent=0 // loop_header_branch
    %10 = sbr.rel (%p8) target = $region8
  $region5: #{f.1} parent=0 // loop_body
    %s12 = ssub.s32 %s7, 1
    %s13 = ssub.s32 %s7, 2
    %s14 = sadd.s32 %s7, 1
    %s15 = ssub.s32 %s7, %s14
    %p16 = scmp.eq.s32.totalorder %s15, 0
    %s18 = sadd.s32 %s17, 1
    %s19 = scalar_select %p16, %s17, %s18
    %p22 = pneg %p16
    %p23 = scmp.eq.s32.totalorder %s7, 1
    %p24 = por %p22, %p23
    %p25 = scmp.ne.s32.totalorder %s17, %s20
    %p26 = scmp.eq.s32.totalorder %s7, 0
    %p27 = por %p25, %p26
    %p28 = scmp.ne.s32.totalorder %s17, %s20
    %p29 = scmp.eq.s32.totalorder %s12, 1
    %p30 = por %p28, %p29
    %p31 = scmp.ne.s32.totalorder %s20, %s21
    %p32 = scmp.eq.s32.totalorder %s12, 0
    %p33 = por %p31, %p32
    %p34 = scmp.ne.s32.totalorder %s20, %s21
    %p35 = scmp.eq.s32.totalorder %s13, 1
    %p36 = por %p34, %p35
    %p38 = scmp.ne.s32.totalorder %s21, %s37
    %p39 = scmp.eq.s32.totalorder %s13, 0
    %p40 = por %p38, %p39
    %s41 = ssub.s32 %s7, %s14
    %p42 = scmp.eq.s32.totalorder %s41, 0
    %s44 = sadd.s32 %s43, 1
    %s45 = scalar_select %p42, %s43, %s44
    %p48 = pneg %p42
    %p49 = scmp.eq.s32.totalorder %s7, 1
    %p50 = por %p48, %p49
    %p51 = scmp.ne.s32.totalorder %s43, %s46
    %p52 = scmp.eq.s32.totalorder %s7, 0
    %p53 = por %p51, %p52
    %p54 = scmp.ne.s32.totalorder %s43, %s46
    %p55 = scmp.eq.s32.totalorder %s12, 1
    %p56 = por %p54, %p55
    %p57 = scmp.ne.s32.totalorder %s46, %s47
    %p58 = scmp.eq.s32.totalorder %s12, 0
    %p59 = por %p57, %p58
    %p60 = scmp.ne.s32.totalorder %s46, %s47
    %p61 = scmp.eq.s32.totalorder %s13, 1
    %p62 = por %p60, %p61
    %p64 = scmp.ne.s32.totalorder %s47, %s63
    %p65 = scmp.eq.s32.totalorder %s13, 0
    %p66 = por %p64, %p65
    %p67 = scmp.le.s32.totalorder 1, %s7
    %p68 = scmp.lt.s32.totalorder %s7, 3
    %p69 = pnand %p67, %p68
    %p70 = pneg %p69
    // Predicated region
    $region9: #{f.1} parent=5 // pred_check
      _
    $region10: #{f.1} parent=5 // pred_check_branch
      %72 = sbr.rel (%p69) target = $region12
    $region11: #{f.1} parent=5 // pred_region
      %s73 = ssub.s32 %s7, 1
    $region12: #{f.1} parent=5 // pred_fallthru
      _
    %p74 = scmp.lt.s32.totalorder %s7, 2
    // Predicated region
    $region13: #{f.1} parent=5 // pred_check
      %p75 = pneg %p74
    $region14: #{f.1} parent=5 // pred_check_branch
      %77 = sbr.rel (%p75) target = $region16
    $region15: #{f.1} parent=5 // pred_region
      // Predicated region
      $region17: #{f.1} parent=15 // pred_check
        %p78 = pneg %p27
      $region18: #{f.1} parent=15 // pred_check_branch
        %80 = sbr.rel (%p78) target = $region20
      $region19: #{f.1} parent=15 // pred_region
        %s81 = smul.u32 64, %s7
        %p82 = scmp.lt.s32.totalorder %s81, 127
        %s83 = scalar_select %p82, %s81, 127
        %s84 = smul.addr %s83, 32
        %s85 = smul.addr %s84, 8
        %s86 = scalar_lea.vmem %s0, %s85
        %s87 = smul.u32 64, %s7
      $region20: #{f.1} parent=15 // pred_fallthru
        _
    $region16: #{f.1} parent=5 // pred_fallthru
      _
    %p88 = scmp.le.s32.totalorder 1, %s7
    %p89 = scmp.lt.s32.totalorder %s7, 3
    %p90 = pnand %p88, %p89
    %p91 = pneg %p90
    // Predicated region
    $region21: #{f.1} parent=5 // pred_check
      _
    $region22: #{f.1} parent=5 // pred_check_branch
      %93 = sbr.rel (%p90) target = $region24
    $region23: #{f.1} parent=5 // pred_region
      %s94 = ssub.s32 %s7, 1
      %s95 = smul.u32 64, %s12
      %p96 = scmp.lt.s32.totalorder %s95, 127
      %s97 = scalar_select %p96, %s95, 127
      %s98 = smul.addr %s97, 32
      %s99 = smul.addr %s98, 8
      %s100 = scalar_lea.vmem %s0, %s99
      %p101 = pneg %p33
      %p102 = pneg %p30
      %p103 = pneg %p59
      %p104 = pneg %p56
      %s105 = smul.u32 64, %s12
      %p106 = scmp.lt.s32.totalorder %s105, 127
      %s107 = scalar_select %p106, %s105, 127
      %s108 = smul.addr %s107, 32
      %s109 = smul.addr %s108, 4
      %s110 = scalar_lea.vmem %s1, %s109
      %s111 = smul.u32 64, %s12
      %p112 = scmp.lt.s32.totalorder %s111, 127
      %s113 = scalar_select %p112, %s111, 127
      %s114 = smul.addr %s113, 32
      %s115 = smul.addr %s114, 8
      %s116 = scalar_lea.vmem %s0, %s115
      %s117 = smul.u32 64, %s12
      %s118 = smul.u32 64, %s12
      %p119 = scmp.lt.s32.totalorder %s118, 127
      %s120 = scalar_select %p119, %s118, 127
      %s121 = smul.addr %s120, 32
      %s122 = smul.addr %s121, 4
      %s123 = scalar_lea.vmem %s1, %s122
      %s124 = smul.u32 64, %s12
      %v125 = vld [vmem:[%s116] sm:$0xff]
      %v126 = vld [vmem:[%s116 + $0x8] sm:$0xff]
      %v127 = vld [vmem:[%s116 + $0x10] sm:$0xff]
      %v128 = vld [vmem:[%s116 + $0x18] sm:$0xff]
      %v129 = vld [vmem:[%s116 + $0x20] sm:$0xff]
      %v130 = vld [vmem:[%s116 + $0x28] sm:$0xff]
      %v131 = vld [vmem:[%s116 + $0x30] sm:$0xff]
      %v132 = vld [vmem:[%s116 + $0x38] sm:$0xff]
      %v133 = vld [vmem:[%s116 + $0x40] sm:$0xff]
      %v134 = vld [vmem:[%s116 + $0x48] sm:$0xff]
      %v135 = vld [vmem:[%s116 + $0x50] sm:$0xff]
      %v136 = vld [vmem:[%s116 + $0x58] sm:$0xff]
      %v137 = vld [vmem:[%s116 + $0x60] sm:$0xff]
      %v138 = vld [vmem:[%s116 + $0x68] sm:$0xff]
      %v139 = vld [vmem:[%s116 + $0x70] sm:$0xff]
      %v140 = vld [vmem:[%s116 + $0x78] sm:$0xff]
      %v141 = vld [vmem:[%s116 + $0x80] sm:$0xff]
      %v142 = vld [vmem:[%s116 + $0x88] sm:$0xff]
      %v143 = vld [vmem:[%s116 + $0x90] sm:$0xff]
      %v144 = vld [vmem:[%s116 + $0x98] sm:$0xff]
      %v145 = vld [vmem:[%s116 + $0xa0] sm:$0xff]
      %v146 = vld [vmem:[%s116 + $0xa8] sm:$0xff]
      %v147 = vld [vmem:[%s116 + $0xb0] sm:$0xff]
      %v148 = vld [vmem:[%s116 + $0xb8] sm:$0xff]
      %v149 = vld [vmem:[%s116 + $0xc0] sm:$0xff]
      %v150 = vld [vmem:[%s116 + $0xc8] sm:$0xff]
      %v151 = vld [vmem:[%s116 + $0xd0] sm:$0xff]
      %v152 = vld [vmem:[%s116 + $0xd8] sm:$0xff]
      %v153 = vld [vmem:[%s116 + $0xe0] sm:$0xff]
      %v154 = vld [vmem:[%s116 + $0xe8] sm:$0xff]
      %v155 = vld [vmem:[%s116 + $0xf0] sm:$0xff]
      %v156 = vld [vmem:[%s116 + $0xf8] sm:$0xff]
      %v157 = vld [vmem:[%s116 + $0x100] sm:$0xff]
      %v158 = vld [vmem:[%s116 + $0x108] sm:$0xff]
      %v159 = vld [vmem:[%s116 + $0x110] sm:$0xff]
      %v160 = vld [vmem:[%s116 + $0x118] sm:$0xff]
      %v161 = vld [vmem:[%s116 + $0x120] sm:$0xff]
      %v162 = vld [vmem:[%s116 + $0x128] sm:$0xff]
      %v163 = vld [vmem:[%s116 + $0x130] sm:$0xff]
      %v164 = vld [vmem:[%s116 + $0x138] sm:$0xff]
      %v165 = vld [vmem:[%s116 + $0x140] sm:$0xff]
      %v166 = vld [vmem:[%s116 + $0x148] sm:$0xff]
      %v167 = vld [vmem:[%s116 + $0x150] sm:$0xff]
      %v168 = vld [vmem:[%s116 + $0x158] sm:$0xff]
      %v169 = vld [vmem:[%s116 + $0x160] sm:$0xff]
      %v170 = vld [vmem:[%s116 + $0x168] sm:$0xff]
      %v171 = vld [vmem:[%s116 + $0x170] sm:$0xff]
      %v172 = vld [vmem:[%s116 + $0x178] sm:$0xff]
      %v173 = vld [vmem:[%s116 + $0x180] sm:$0xff]
      %v174 = vld [vmem:[%s116 + $0x188] sm:$0xff]
      %v175 = vld [vmem:[%s116 + $0x190] sm:$0xff]
      %v176 = vld [vmem:[%s116 + $0x198] sm:$0xff]
      %v177 = vld [vmem:[%s116 + $0x1a0] sm:$0xff]
      %v178 = vld [vmem:[%s116 + $0x1a8] sm:$0xff]
      %v179 = vld [vmem:[%s116 + $0x1b0] sm:$0xff]
      %v180 = vld [vmem:[%s116 + $0x1b8] sm:$0xff]
      %v181 = vld [vmem:[%s116 + $0x1c0] sm:$0xff]
      %v182 = vld [vmem:[%s116 + $0x1c8] sm:$0xff]
      %v183 = vld [vmem:[%s116 + $0x1d0] sm:$0xff]
      %v184 = vld [vmem:[%s116 + $0x1d8] sm:$0xff]
      %v185 = vld [vmem:[%s116 + $0x1e0] sm:$0xff]
      %v186 = vld [vmem:[%s116 + $0x1e8] sm:$0xff]
      %v187 = vld [vmem:[%s116 + $0x1f0] sm:$0xff]
      %v188 = vld [vmem:[%s116 + $0x1f8] sm:$0xff]
      %v189 = vld [vmem:[%s116 + $0x200] sm:$0xff]
      %v190 = vld [vmem:[%s116 + $0x208] sm:$0xff]
      %v191 = vld [vmem:[%s116 + $0x210] sm:$0xff]
      %v192 = vld [vmem:[%s116 + $0x218] sm:$0xff]
      %v193 = vld [vmem:[%s116 + $0x220] sm:$0xff]
      %v194 = vld [vmem:[%s116 + $0x228] sm:$0xff]
      %v195 = vld [vmem:[%s116 + $0x230] sm:$0xff]
      %v196 = vld [vmem:[%s116 + $0x238] sm:$0xff]
      %v197 = vld [vmem:[%s116 + $0x240] sm:$0xff]
      %v198 = vld [vmem:[%s116 + $0x248] sm:$0xff]
      %v199 = vld [vmem:[%s116 + $0x250] sm:$0xff]
      %v200 = vld [vmem:[%s116 + $0x258] sm:$0xff]
      %v201 = vld [vmem:[%s116 + $0x260] sm:$0xff]
      %v202 = vld [vmem:[%s116 + $0x268] sm:$0xff]
      %v203 = vld [vmem:[%s116 + $0x270] sm:$0xff]
      %v204 = vld [vmem:[%s116 + $0x278] sm:$0xff]
      %v205 = vld [vmem:[%s116 + $0x280] sm:$0xff]
      %v206 = vld [vmem:[%s116 + $0x288] sm:$0xff]
      %v207 = vld [vmem:[%s116 + $0x290] sm:$0xff]
      %v208 = vld [vmem:[%s116 + $0x298] sm:$0xff]
      %v209 = vld [vmem:[%s116 + $0x2a0] sm:$0xff]
      %v210 = vld [vmem:[%s116 + $0x2a8] sm:$0xff]
      %v211 = vld [vmem:[%s116 + $0x2b0] sm:$0xff]
      %v212 = vld [vmem:[%s116 + $0x2b8] sm:$0xff]
      %v213 = vld [vmem:[%s116 + $0x2c0] sm:$0xff]
      %v214 = vld [vmem:[%s116 + $0x2c8] sm:$0xff]
      %v215 = vld [vmem:[%s116 + $0x2d0] sm:$0xff]
      %v216 = vld [vmem:[%s116 + $0x2d8] sm:$0xff]
      %v217 = vld [vmem:[%s116 + $0x2e0] sm:$0xff]
      %v218 = vld [vmem:[%s116 + $0x2e8] sm:$0xff]
      %v219 = vld [vmem:[%s116 + $0x2f0] sm:$0xff]
      %v220 = vld [vmem:[%s116 + $0x2f8] sm:$0xff]
      %v221 = vld [vmem:[%s116 + $0x300] sm:$0xff]
      %v222 = vld [vmem:[%s116 + $0x308] sm:$0xff]
      %v223 = vld [vmem:[%s116 + $0x310] sm:$0xff]
      %v224 = vld [vmem:[%s116 + $0x318] sm:$0xff]
      %v225 = vld [vmem:[%s116 + $0x320] sm:$0xff]
      %v226 = vld [vmem:[%s116 + $0x328] sm:$0xff]
      %v227 = vld [vmem:[%s116 + $0x330] sm:$0xff]
      %v228 = vld [vmem:[%s116 + $0x338] sm:$0xff]
      %v229 = vld [vmem:[%s116 + $0x340] sm:$0xff]
      %v230 = vld [vmem:[%s116 + $0x348] sm:$0xff]
      %v231 = vld [vmem:[%s116 + $0x350] sm:$0xff]
      %v232 = vld [vmem:[%s116 + $0x358] sm:$0xff]
      %v233 = vld [vmem:[%s116 + $0x360] sm:$0xff]
      %v234 = vld [vmem:[%s116 + $0x368] sm:$0xff]
      %v235 = vld [vmem:[%s116 + $0x370] sm:$0xff]
      %v236 = vld [vmem:[%s116 + $0x378] sm:$0xff]
      %v237 = vld [vmem:[%s116 + $0x380] sm:$0xff]
      %v238 = vld [vmem:[%s116 + $0x388] sm:$0xff]
      %v239 = vld [vmem:[%s116 + $0x390] sm:$0xff]
      %v240 = vld [vmem:[%s116 + $0x398] sm:$0xff]
      %v241 = vld [vmem:[%s116 + $0x3a0] sm:$0xff]
      %v242 = vld [vmem:[%s116 + $0x3a8] sm:$0xff]
      %v243 = vld [vmem:[%s116 + $0x3b0] sm:$0xff]
      %v244 = vld [vmem:[%s116 + $0x3b8] sm:$0xff]
      %v245 = vld [vmem:[%s116 + $0x3c0] sm:$0xff]
      %v246 = vld [vmem:[%s116 + $0x3c8] sm:$0xff]
      %v247 = vld [vmem:[%s116 + $0x3d0] sm:$0xff]
      %v248 = vld [vmem:[%s116 + $0x3d8] sm:$0xff]
      %v249 = vld [vmem:[%s116 + $0x3e0] sm:$0xff]
      %v250 = vld [vmem:[%s116 + $0x3e8] sm:$0xff]
      %v251 = vld [vmem:[%s116 + $0x3f0] sm:$0xff]
      %v252 = vld [vmem:[%s116 + $0x3f8] sm:$0xff]
      %v253 = vld [vmem:[%s116 + $0x400] sm:$0xff]
      %v254 = vld [vmem:[%s116 + $0x408] sm:$0xff]
      %v255 = vld [vmem:[%s116 + $0x410] sm:$0xff]
      %v256 = vld [vmem:[%s116 + $0x418] sm:$0xff]
      %v257 = vld [vmem:[%s116 + $0x420] sm:$0xff]
      %v258 = vld [vmem:[%s116 + $0x428] sm:$0xff]
      %v259 = vld [vmem:[%s116 + $0x430] sm:$0xff]
      %v260 = vld [vmem:[%s116 + $0x438] sm:$0xff]
      %v261 = vld [vmem:[%s116 + $0x440] sm:$0xff]
      %v262 = vld [vmem:[%s116 + $0x448] sm:$0xff]
      %v263 = vld [vmem:[%s116 + $0x450] sm:$0xff]
      %v264 = vld [vmem:[%s116 + $0x458] sm:$0xff]
      %v265 = vld [vmem:[%s116 + $0x460] sm:$0xff]
      %v266 = vld [vmem:[%s116 + $0x468] sm:$0xff]
      %v267 = vld [vmem:[%s116 + $0x470] sm:$0xff]
      %v268 = vld [vmem:[%s116 + $0x478] sm:$0xff]
      %v269 = vld [vmem:[%s116 + $0x480] sm:$0xff]
      %v270 = vld [vmem:[%s116 + $0x488] sm:$0xff]
      %v271 = vld [vmem:[%s116 + $0x490] sm:$0xff]
      %v272 = vld [vmem:[%s116 + $0x498] sm:$0xff]
      %v273 = vld [vmem:[%s116 + $0x4a0] sm:$0xff]
      %v274 = vld [vmem:[%s116 + $0x4a8] sm:$0xff]
      %v275 = vld [vmem:[%s116 + $0x4b0] sm:$0xff]
      %v276 = vld [vmem:[%s116 + $0x4b8] sm:$0xff]
      %v277 = vld [vmem:[%s116 + $0x4c0] sm:$0xff]
      %v278 = vld [vmem:[%s116 + $0x4c8] sm:$0xff]
      %v279 = vld [vmem:[%s116 + $0x4d0] sm:$0xff]
      %v280 = vld [vmem:[%s116 + $0x4d8] sm:$0xff]
      %v281 = vld [vmem:[%s116 + $0x4e0] sm:$0xff]
      %v282 = vld [vmem:[%s116 + $0x4e8] sm:$0xff]
      %v283 = vld [vmem:[%s116 + $0x4f0] sm:$0xff]
      %v284 = vld [vmem:[%s116 + $0x4f8] sm:$0xff]
      %v285 = vld [vmem:[%s116 + $0x500] sm:$0xff]
      %v286 = vld [vmem:[%s116 + $0x508] sm:$0xff]
      %v287 = vld [vmem:[%s116 + $0x510] sm:$0xff]
      %v288 = vld [vmem:[%s116 + $0x518] sm:$0xff]
      %v289 = vld [vmem:[%s116 + $0x520] sm:$0xff]
      %v290 = vld [vmem:[%s116 + $0x528] sm:$0xff]
      %v291 = vld [vmem:[%s116 + $0x530] sm:$0xff]
      %v292 = vld [vmem:[%s116 + $0x538] sm:$0xff]
      %v293 = vld [vmem:[%s116 + $0x540] sm:$0xff]
      %v294 = vld [vmem:[%s116 + $0x548] sm:$0xff]
      %v295 = vld [vmem:[%s116 + $0x550] sm:$0xff]
      %v296 = vld [vmem:[%s116 + $0x558] sm:$0xff]
      %v297 = vld [vmem:[%s116 + $0x560] sm:$0xff]
      %v298 = vld [vmem:[%s116 + $0x568] sm:$0xff]
      %v299 = vld [vmem:[%s116 + $0x570] sm:$0xff]
      %v300 = vld [vmem:[%s116 + $0x578] sm:$0xff]
      %v301 = vld [vmem:[%s116 + $0x580] sm:$0xff]
      %v302 = vld [vmem:[%s116 + $0x588] sm:$0xff]
      %v303 = vld [vmem:[%s116 + $0x590] sm:$0xff]
      %v304 = vld [vmem:[%s116 + $0x598] sm:$0xff]
      %v305 = vld [vmem:[%s116 + $0x5a0] sm:$0xff]
      %v306 = vld [vmem:[%s116 + $0x5a8] sm:$0xff]
      %v307 = vld [vmem:[%s116 + $0x5b0] sm:$0xff]
      %v308 = vld [vmem:[%s116 + $0x5b8] sm:$0xff]
      %v309 = vld [vmem:[%s116 + $0x5c0] sm:$0xff]
      %v310 = vld [vmem:[%s116 + $0x5c8] sm:$0xff]
      %v311 = vld [vmem:[%s116 + $0x5d0] sm:$0xff]
      %v312 = vld [vmem:[%s116 + $0x5d8] sm:$0xff]
      %v313 = vld [vmem:[%s116 + $0x5e0] sm:$0xff]
      %v314 = vld [vmem:[%s116 + $0x5e8] sm:$0xff]
      %v315 = vld [vmem:[%s116 + $0x5f0] sm:$0xff]
      %v316 = vld [vmem:[%s116 + $0x5f8] sm:$0xff]
      %v317 = vld [vmem:[%s116 + $0x600] sm:$0xff]
      %v318 = vld [vmem:[%s116 + $0x608] sm:$0xff]
      %v319 = vld [vmem:[%s116 + $0x610] sm:$0xff]
      %v320 = vld [vmem:[%s116 + $0x618] sm:$0xff]
      %v321 = vld [vmem:[%s116 + $0x620] sm:$0xff]
      %v322 = vld [vmem:[%s116 + $0x628] sm:$0xff]
      %v323 = vld [vmem:[%s116 + $0x630] sm:$0xff]
      %v324 = vld [vmem:[%s116 + $0x638] sm:$0xff]
      %v325 = vld [vmem:[%s116 + $0x640] sm:$0xff]
      %v326 = vld [vmem:[%s116 + $0x648] sm:$0xff]
      %v327 = vld [vmem:[%s116 + $0x650] sm:$0xff]
      %v328 = vld [vmem:[%s116 + $0x658] sm:$0xff]
      %v329 = vld [vmem:[%s116 + $0x660] sm:$0xff]
      %v330 = vld [vmem:[%s116 + $0x668] sm:$0xff]
      %v331 = vld [vmem:[%s116 + $0x670] sm:$0xff]
      %v332 = vld [vmem:[%s116 + $0x678] sm:$0xff]
      %v333 = vld [vmem:[%s116 + $0x680] sm:$0xff]
      %v334 = vld [vmem:[%s116 + $0x688] sm:$0xff]
      %v335 = vld [vmem:[%s116 + $0x690] sm:$0xff]
      %v336 = vld [vmem:[%s116 + $0x698] sm:$0xff]
      %v337 = vld [vmem:[%s116 + $0x6a0] sm:$0xff]
      %v338 = vld [vmem:[%s116 + $0x6a8] sm:$0xff]
      %v339 = vld [vmem:[%s116 + $0x6b0] sm:$0xff]
      %v340 = vld [vmem:[%s116 + $0x6b8] sm:$0xff]
      %v341 = vld [vmem:[%s116 + $0x6c0] sm:$0xff]
      %v342 = vld [vmem:[%s116 + $0x6c8] sm:$0xff]
      %v343 = vld [vmem:[%s116 + $0x6d0] sm:$0xff]
      %v344 = vld [vmem:[%s116 + $0x6d8] sm:$0xff]
      %v345 = vld [vmem:[%s116 + $0x6e0] sm:$0xff]
      %v346 = vld [vmem:[%s116 + $0x6e8] sm:$0xff]
      %v347 = vld [vmem:[%s116 + $0x6f0] sm:$0xff]
      %v348 = vld [vmem:[%s116 + $0x6f8] sm:$0xff]
      %v349 = vld [vmem:[%s116 + $0x700] sm:$0xff]
      %v350 = vld [vmem:[%s116 + $0x708] sm:$0xff]
      %v351 = vld [vmem:[%s116 + $0x710] sm:$0xff]
      %v352 = vld [vmem:[%s116 + $0x718] sm:$0xff]
      %v353 = vld [vmem:[%s116 + $0x720] sm:$0xff]
      %v354 = vld [vmem:[%s116 + $0x728] sm:$0xff]
      %v355 = vld [vmem:[%s116 + $0x730] sm:$0xff]
      %v356 = vld [vmem:[%s116 + $0x738] sm:$0xff]
      %v357 = vld [vmem:[%s116 + $0x740] sm:$0xff]
      %v358 = vld [vmem:[%s116 + $0x748] sm:$0xff]
      %v359 = vld [vmem:[%s116 + $0x750] sm:$0xff]
      %v360 = vld [vmem:[%s116 + $0x758] sm:$0xff]
      %v361 = vld [vmem:[%s116 + $0x760] sm:$0xff]
      %v362 = vld [vmem:[%s116 + $0x768] sm:$0xff]
      %v363 = vld [vmem:[%s116 + $0x770] sm:$0xff]
      %v364 = vld [vmem:[%s116 + $0x778] sm:$0xff]
      %v365 = vld [vmem:[%s116 + $0x780] sm:$0xff]
      %v366 = vld [vmem:[%s116 + $0x788] sm:$0xff]
      %v367 = vld [vmem:[%s116 + $0x790] sm:$0xff]
      %v368 = vld [vmem:[%s116 + $0x798] sm:$0xff]
      %v369 = vld [vmem:[%s116 + $0x7a0] sm:$0xff]
      %v370 = vld [vmem:[%s116 + $0x7a8] sm:$0xff]
      %v371 = vld [vmem:[%s116 + $0x7b0] sm:$0xff]
      %v372 = vld [vmem:[%s116 + $0x7b8] sm:$0xff]
      %v373 = vld [vmem:[%s116 + $0x7c0] sm:$0xff]
      %v374 = vld [vmem:[%s116 + $0x7c8] sm:$0xff]
      %v375 = vld [vmem:[%s116 + $0x7d0] sm:$0xff]
      %v376 = vld [vmem:[%s116 + $0x7d8] sm:$0xff]
      %v377 = vld [vmem:[%s116 + $0x7e0] sm:$0xff]
      %v378 = vld [vmem:[%s116 + $0x7e8] sm:$0xff]
      %v379 = vld [vmem:[%s116 + $0x7f0] sm:$0xff]
      %v380 = vld [vmem:[%s116 + $0x7f8] sm:$0xff]
      %v381 = vld [vmem:[%s116 + $0x800] sm:$0xff]
      %v382 = vld [vmem:[%s116 + $0x808] sm:$0xff]
      %v383 = vld [vmem:[%s116 + $0x810] sm:$0xff]
      %v384 = vld [vmem:[%s116 + $0x818] sm:$0xff]
      %v385 = vld [vmem:[%s116 + $0x820] sm:$0xff]
      %v386 = vld [vmem:[%s116 + $0x828] sm:$0xff]
      %v387 = vld [vmem:[%s116 + $0x830] sm:$0xff]
      %v388 = vld [vmem:[%s116 + $0x838] sm:$0xff]
      %v389 = vld [vmem:[%s116 + $0x840] sm:$0xff]
      %v390 = vld [vmem:[%s116 + $0x848] sm:$0xff]
      %v391 = vld [vmem:[%s116 + $0x850] sm:$0xff]
      %v392 = vld [vmem:[%s116 + $0x858] sm:$0xff]
      %v393 = vld [vmem:[%s116 + $0x860] sm:$0xff]
      %v394 = vld [vmem:[%s116 + $0x868] sm:$0xff]
      %v395 = vld [vmem:[%s116 + $0x870] sm:$0xff]
      %v396 = vld [vmem:[%s116 + $0x878] sm:$0xff]
      %v397 = vld [vmem:[%s116 + $0x880] sm:$0xff]
      %v398 = vld [vmem:[%s116 + $0x888] sm:$0xff]
      %v399 = vld [vmem:[%s116 + $0x890] sm:$0xff]
      %v400 = vld [vmem:[%s116 + $0x898] sm:$0xff]
      %v401 = vld [vmem:[%s116 + $0x8a0] sm:$0xff]
      %v402 = vld [vmem:[%s116 + $0x8a8] sm:$0xff]
      %v403 = vld [vmem:[%s116 + $0x8b0] sm:$0xff]
      %v404 = vld [vmem:[%s116 + $0x8b8] sm:$0xff]
      %v405 = vld [vmem:[%s116 + $0x8c0] sm:$0xff]
      %v406 = vld [vmem:[%s116 + $0x8c8] sm:$0xff]
      %v407 = vld [vmem:[%s116 + $0x8d0] sm:$0xff]
      %v408 = vld [vmem:[%s116 + $0x8d8] sm:$0xff]
      %v409 = vld [vmem:[%s116 + $0x8e0] sm:$0xff]
      %v410 = vld [vmem:[%s116 + $0x8e8] sm:$0xff]
      %v411 = vld [vmem:[%s116 + $0x8f0] sm:$0xff]
      %v412 = vld [vmem:[%s116 + $0x8f8] sm:$0xff]
      %v413 = vld [vmem:[%s116 + $0x900] sm:$0xff]
      %v414 = vld [vmem:[%s116 + $0x908] sm:$0xff]
      %v415 = vld [vmem:[%s116 + $0x910] sm:$0xff]
      %v416 = vld [vmem:[%s116 + $0x918] sm:$0xff]
      %v417 = vld [vmem:[%s116 + $0x920] sm:$0xff]
      %v418 = vld [vmem:[%s116 + $0x928] sm:$0xff]
      %v419 = vld [vmem:[%s116 + $0x930] sm:$0xff]
      %v420 = vld [vmem:[%s116 + $0x938] sm:$0xff]
      %v421 = vld [vmem:[%s116 + $0x940] sm:$0xff]
      %v422 = vld [vmem:[%s116 + $0x948] sm:$0xff]
      %v423 = vld [vmem:[%s116 + $0x950] sm:$0xff]
      %v424 = vld [vmem:[%s116 + $0x958] sm:$0xff]
      %v425 = vld [vmem:[%s116 + $0x960] sm:$0xff]
      %v426 = vld [vmem:[%s116 + $0x968] sm:$0xff]
      %v427 = vld [vmem:[%s116 + $0x970] sm:$0xff]
      %v428 = vld [vmem:[%s116 + $0x978] sm:$0xff]
      %v429 = vld [vmem:[%s116 + $0x980] sm:$0xff]
      %v430 = vld [vmem:[%s116 + $0x988] sm:$0xff]
      %v431 = vld [vmem:[%s116 + $0x990] sm:$0xff]
      %v432 = vld [vmem:[%s116 + $0x998] sm:$0xff]
      %v433 = vld [vmem:[%s116 + $0x9a0] sm:$0xff]
      %v434 = vld [vmem:[%s116 + $0x9a8] sm:$0xff]
      %v435 = vld [vmem:[%s116 + $0x9b0] sm:$0xff]
      %v436 = vld [vmem:[%s116 + $0x9b8] sm:$0xff]
      %v437 = vld [vmem:[%s116 + $0x9c0] sm:$0xff]
      %v438 = vld [vmem:[%s116 + $0x9c8] sm:$0xff]
      %v439 = vld [vmem:[%s116 + $0x9d0] sm:$0xff]
      %v440 = vld [vmem:[%s116 + $0x9d8] sm:$0xff]
      %v441 = vld [vmem:[%s116 + $0x9e0] sm:$0xff]
      %v442 = vld [vmem:[%s116 + $0x9e8] sm:$0xff]
      %v443 = vld [vmem:[%s116 + $0x9f0] sm:$0xff]
      %v444 = vld [vmem:[%s116 + $0x9f8] sm:$0xff]
      %v445 = vld [vmem:[%s116 + $0xa00] sm:$0xff]
      %v446 = vld [vmem:[%s116 + $0xa08] sm:$0xff]
      %v447 = vld [vmem:[%s116 + $0xa10] sm:$0xff]
      %v448 = vld [vmem:[%s116 + $0xa18] sm:$0xff]
      %v449 = vld [vmem:[%s116 + $0xa20] sm:$0xff]
      %v450 = vld [vmem:[%s116 + $0xa28] sm:$0xff]
      %v451 = vld [vmem:[%s116 + $0xa30] sm:$0xff]
      %v452 = vld [vmem:[%s116 + $0xa38] sm:$0xff]
      %v453 = vld [vmem:[%s116 + $0xa40] sm:$0xff]
      %v454 = vld [vmem:[%s116 + $0xa48] sm:$0xff]
      %v455 = vld [vmem:[%s116 + $0xa50] sm:$0xff]
      %v456 = vld [vmem:[%s116 + $0xa58] sm:$0xff]
      %v457 = vld [vmem:[%s116 + $0xa60] sm:$0xff]
      %v458 = vld [vmem:[%s116 + $0xa68] sm:$0xff]
      %v459 = vld [vmem:[%s116 + $0xa70] sm:$0xff]
      %v460 = vld [vmem:[%s116 + $0xa78] sm:$0xff]
      %v461 = vld [vmem:[%s116 + $0xa80] sm:$0xff]
      %v462 = vld [vmem:[%s116 + $0xa88] sm:$0xff]
      %v463 = vld [vmem:[%s116 + $0xa90] sm:$0xff]
      %v464 = vld [vmem:[%s116 + $0xa98] sm:$0xff]
      %v465 = vld [vmem:[%s116 + $0xaa0] sm:$0xff]
      %v466 = vld [vmem:[%s116 + $0xaa8] sm:$0xff]
      %v467 = vld [vmem:[%s116 + $0xab0] sm:$0xff]
      %v468 = vld [vmem:[%s116 + $0xab8] sm:$0xff]
      %v469 = vld [vmem:[%s116 + $0xac0] sm:$0xff]
      %v470 = vld [vmem:[%s116 + $0xac8] sm:$0xff]
      %v471 = vld [vmem:[%s116 + $0xad0] sm:$0xff]
      %v472 = vld [vmem:[%s116 + $0xad8] sm:$0xff]
      %v473 = vld [vmem:[%s116 + $0xae0] sm:$0xff]
      %v474 = vld [vmem:[%s116 + $0xae8] sm:$0xff]
      %v475 = vld [vmem:[%s116 + $0xaf0] sm:$0xff]
      %v476 = vld [vmem:[%s116 + $0xaf8] sm:$0xff]
      %v477 = vld [vmem:[%s116 + $0xb00] sm:$0xff]
      %v478 = vld [vmem:[%s116 + $0xb08] sm:$0xff]
      %v479 = vld [vmem:[%s116 + $0xb10] sm:$0xff]
      %v480 = vld [vmem:[%s116 + $0xb18] sm:$0xff]
      %v481 = vld [vmem:[%s116 + $0xb20] sm:$0xff]
      %v482 = vld [vmem:[%s116 + $0xb28] sm:$0xff]
      %v483 = vld [vmem:[%s116 + $0xb30] sm:$0xff]
      %v484 = vld [vmem:[%s116 + $0xb38] sm:$0xff]
      %v485 = vld [vmem:[%s116 + $0xb40] sm:$0xff]
      %v486 = vld [vmem:[%s116 + $0xb48] sm:$0xff]
      %v487 = vld [vmem:[%s116 + $0xb50] sm:$0xff]
      %v488 = vld [vmem:[%s116 + $0xb58] sm:$0xff]
      %v489 = vld [vmem:[%s116 + $0xb60] sm:$0xff]
      %v490 = vld [vmem:[%s116 + $0xb68] sm:$0xff]
      %v491 = vld [vmem:[%s116 + $0xb70] sm:$0xff]
      %v492 = vld [vmem:[%s116 + $0xb78] sm:$0xff]
      %v493 = vld [vmem:[%s116 + $0xb80] sm:$0xff]
      %v494 = vld [vmem:[%s116 + $0xb88] sm:$0xff]
      %v495 = vld [vmem:[%s116 + $0xb90] sm:$0xff]
      %v496 = vld [vmem:[%s116 + $0xb98] sm:$0xff]
      %v497 = vld [vmem:[%s116 + $0xba0] sm:$0xff]
      %v498 = vld [vmem:[%s116 + $0xba8] sm:$0xff]
      %v499 = vld [vmem:[%s116 + $0xbb0] sm:$0xff]
      %v500 = vld [vmem:[%s116 + $0xbb8] sm:$0xff]
      %v501 = vld [vmem:[%s116 + $0xbc0] sm:$0xff]
      %v502 = vld [vmem:[%s116 + $0xbc8] sm:$0xff]
      %v503 = vld [vmem:[%s116 + $0xbd0] sm:$0xff]
      %v504 = vld [vmem:[%s116 + $0xbd8] sm:$0xff]
      %v505 = vld [vmem:[%s116 + $0xbe0] sm:$0xff]
      %v506 = vld [vmem:[%s116 + $0xbe8] sm:$0xff]
      %v507 = vld [vmem:[%s116 + $0xbf0] sm:$0xff]
      %v508 = vld [vmem:[%s116 + $0xbf8] sm:$0xff]
      %v509 = vld [vmem:[%s116 + $0xc00] sm:$0xff]
      %v510 = vld [vmem:[%s116 + $0xc08] sm:$0xff]
      %v511 = vld [vmem:[%s116 + $0xc10] sm:$0xff]
      %v512 = vld [vmem:[%s116 + $0xc18] sm:$0xff]
      %v513 = vld [vmem:[%s116 + $0xc20] sm:$0xff]
      %v514 = vld [vmem:[%s116 + $0xc28] sm:$0xff]
      %v515 = vld [vmem:[%s116 + $0xc30] sm:$0xff]
      %v516 = vld [vmem:[%s116 + $0xc38] sm:$0xff]
      %v517 = vld [vmem:[%s116 + $0xc40] sm:$0xff]
      %v518 = vld [vmem:[%s116 + $0xc48] sm:$0xff]
      %v519 = vld [vmem:[%s116 + $0xc50] sm:$0xff]
      %v520 = vld [vmem:[%s116 + $0xc58] sm:$0xff]
      %v521 = vld [vmem:[%s116 + $0xc60] sm:$0xff]
      %v522 = vld [vmem:[%s116 + $0xc68] sm:$0xff]
      %v523 = vld [vmem:[%s116 + $0xc70] sm:$0xff]
      %v524 = vld [vmem:[%s116 + $0xc78] sm:$0xff]
      %v525 = vld [vmem:[%s116 + $0xc80] sm:$0xff]
      %v526 = vld [vmem:[%s116 + $0xc88] sm:$0xff]
      %v527 = vld [vmem:[%s116 + $0xc90] sm:$0xff]
      %v528 = vld [vmem:[%s116 + $0xc98] sm:$0xff]
      %v529 = vld [vmem:[%s116 + $0xca0] sm:$0xff]
      %v530 = vld [vmem:[%s116 + $0xca8] sm:$0xff]
      %v531 = vld [vmem:[%s116 + $0xcb0] sm:$0xff]
      %v532 = vld [vmem:[%s116 + $0xcb8] sm:$0xff]
      %v533 = vld [vmem:[%s116 + $0xcc0] sm:$0xff]
      %v534 = vld [vmem:[%s116 + $0xcc8] sm:$0xff]
      %v535 = vld [vmem:[%s116 + $0xcd0] sm:$0xff]
      %v536 = vld [vmem:[%s116 + $0xcd8] sm:$0xff]
      %v537 = vld [vmem:[%s116 + $0xce0] sm:$0xff]
      %v538 = vld [vmem:[%s116 + $0xce8] sm:$0xff]
      %v539 = vld [vmem:[%s116 + $0xcf0] sm:$0xff]
      %v540 = vld [vmem:[%s116 + $0xcf8] sm:$0xff]
      %v541 = vld [vmem:[%s116 + $0xd00] sm:$0xff]
      %v542 = vld [vmem:[%s116 + $0xd08] sm:$0xff]
      %v543 = vld [vmem:[%s116 + $0xd10] sm:$0xff]
      %v544 = vld [vmem:[%s116 + $0xd18] sm:$0xff]
      %v545 = vld [vmem:[%s116 + $0xd20] sm:$0xff]
      %v546 = vld [vmem:[%s116 + $0xd28] sm:$0xff]
      %v547 = vld [vmem:[%s116 + $0xd30] sm:$0xff]
      %v548 = vld [vmem:[%s116 + $0xd38] sm:$0xff]
      %v549 = vld [vmem:[%s116 + $0xd40] sm:$0xff]
      %v550 = vld [vmem:[%s116 + $0xd48] sm:$0xff]
      %v551 = vld [vmem:[%s116 + $0xd50] sm:$0xff]
      %v552 = vld [vmem:[%s116 + $0xd58] sm:$0xff]
      %v553 = vld [vmem:[%s116 + $0xd60] sm:$0xff]
      %v554 = vld [vmem:[%s116 + $0xd68] sm:$0xff]
      %v555 = vld [vmem:[%s116 + $0xd70] sm:$0xff]
      %v556 = vld [vmem:[%s116 + $0xd78] sm:$0xff]
      %v557 = vld [vmem:[%s116 + $0xd80] sm:$0xff]
      %v558 = vld [vmem:[%s116 + $0xd88] sm:$0xff]
      %v559 = vld [vmem:[%s116 + $0xd90] sm:$0xff]
      %v560 = vld [vmem:[%s116 + $0xd98] sm:$0xff]
      %v561 = vld [vmem:[%s116 + $0xda0] sm:$0xff]
      %v562 = vld [vmem:[%s116 + $0xda8] sm:$0xff]
      %v563 = vld [vmem:[%s116 + $0xdb0] sm:$0xff]
      %v564 = vld [vmem:[%s116 + $0xdb8] sm:$0xff]
      %v565 = vld [vmem:[%s116 + $0xdc0] sm:$0xff]
      %v566 = vld [vmem:[%s116 + $0xdc8] sm:$0xff]
      %v567 = vld [vmem:[%s116 + $0xdd0] sm:$0xff]
      %v568 = vld [vmem:[%s116 + $0xdd8] sm:$0xff]
      %v569 = vld [vmem:[%s116 + $0xde0] sm:$0xff]
      %v570 = vld [vmem:[%s116 + $0xde8] sm:$0xff]
      %v571 = vld [vmem:[%s116 + $0xdf0] sm:$0xff]
      %v572 = vld [vmem:[%s116 + $0xdf8] sm:$0xff]
      %v573 = vld [vmem:[%s116 + $0xe00] sm:$0xff]
      %v574 = vld [vmem:[%s116 + $0xe08] sm:$0xff]
      %v575 = vld [vmem:[%s116 + $0xe10] sm:$0xff]
      %v576 = vld [vmem:[%s116 + $0xe18] sm:$0xff]
      %v577 = vld [vmem:[%s116 + $0xe20] sm:$0xff]
      %v578 = vld [vmem:[%s116 + $0xe28] sm:$0xff]
      %v579 = vld [vmem:[%s116 + $0xe30] sm:$0xff]
      %v580 = vld [vmem:[%s116 + $0xe38] sm:$0xff]
      %v581 = vld [vmem:[%s116 + $0xe40] sm:$0xff]
      %v582 = vld [vmem:[%s116 + $0xe48] sm:$0xff]
      %v583 = vld [vmem:[%s116 + $0xe50] sm:$0xff]
      %v584 = vld [vmem:[%s116 + $0xe58] sm:$0xff]
      %v585 = vld [vmem:[%s116 + $0xe60] sm:$0xff]
      %v586 = vld [vmem:[%s116 + $0xe68] sm:$0xff]
      %v587 = vld [vmem:[%s116 + $0xe70] sm:$0xff]
      %v588 = vld [vmem:[%s116 + $0xe78] sm:$0xff]
      %v589 = vld [vmem:[%s116 + $0xe80] sm:$0xff]
      %v590 = vld [vmem:[%s116 + $0xe88] sm:$0xff]
      %v591 = vld [vmem:[%s116 + $0xe90] sm:$0xff]
      %v592 = vld [vmem:[%s116 + $0xe98] sm:$0xff]
      %v593 = vld [vmem:[%s116 + $0xea0] sm:$0xff]
      %v594 = vld [vmem:[%s116 + $0xea8] sm:$0xff]
      %v595 = vld [vmem:[%s116 + $0xeb0] sm:$0xff]
      %v596 = vld [vmem:[%s116 + $0xeb8] sm:$0xff]
      %v597 = vld [vmem:[%s116 + $0xec0] sm:$0xff]
      %v598 = vld [vmem:[%s116 + $0xec8] sm:$0xff]
      %v599 = vld [vmem:[%s116 + $0xed0] sm:$0xff]
      %v600 = vld [vmem:[%s116 + $0xed8] sm:$0xff]
      %v601 = vld [vmem:[%s116 + $0xee0] sm:$0xff]
      %v602 = vld [vmem:[%s116 + $0xee8] sm:$0xff]
      %v603 = vld [vmem:[%s116 + $0xef0] sm:$0xff]
      %v604 = vld [vmem:[%s116 + $0xef8] sm:$0xff]
      %v605 = vld [vmem:[%s116 + $0xf00] sm:$0xff]
      %v606 = vld [vmem:[%s116 + $0xf08] sm:$0xff]
      %v607 = vld [vmem:[%s116 + $0xf10] sm:$0xff]
      %v608 = vld [vmem:[%s116 + $0xf18] sm:$0xff]
      %v609 = vld [vmem:[%s116 + $0xf20] sm:$0xff]
      %v610 = vld [vmem:[%s116 + $0xf28] sm:$0xff]
      %v611 = vld [vmem:[%s116 + $0xf30] sm:$0xff]
      %v612 = vld [vmem:[%s116 + $0xf38] sm:$0xff]
      %v613 = vld [vmem:[%s116 + $0xf40] sm:$0xff]
      %v614 = vld [vmem:[%s116 + $0xf48] sm:$0xff]
      %v615 = vld [vmem:[%s116 + $0xf50] sm:$0xff]
      %v616 = vld [vmem:[%s116 + $0xf58] sm:$0xff]
      %v617 = vld [vmem:[%s116 + $0xf60] sm:$0xff]
      %v618 = vld [vmem:[%s116 + $0xf68] sm:$0xff]
      %v619 = vld [vmem:[%s116 + $0xf70] sm:$0xff]
      %v620 = vld [vmem:[%s116 + $0xf78] sm:$0xff]
      %v621 = vld [vmem:[%s116 + $0xf80] sm:$0xff]
      %v622 = vld [vmem:[%s116 + $0xf88] sm:$0xff]
      %v623 = vld [vmem:[%s116 + $0xf90] sm:$0xff]
      %v624 = vld [vmem:[%s116 + $0xf98] sm:$0xff]
      %v625 = vld [vmem:[%s116 + $0xfa0] sm:$0xff]
      %v626 = vld [vmem:[%s116 + $0xfa8] sm:$0xff]
      %v627 = vld [vmem:[%s116 + $0xfb0] sm:$0xff]
      %v628 = vld [vmem:[%s116 + $0xfb8] sm:$0xff]
      %v629 = vld [vmem:[%s116 + $0xfc0] sm:$0xff]
      %v630 = vld [vmem:[%s116 + $0xfc8] sm:$0xff]
      %v631 = vld [vmem:[%s116 + $0xfd0] sm:$0xff]
      %v632 = vld [vmem:[%s116 + $0xfd8] sm:$0xff]
      %v633 = vld [vmem:[%s116 + $0xfe0] sm:$0xff]
      %v634 = vld [vmem:[%s116 + $0xfe8] sm:$0xff]
      %v635 = vld [vmem:[%s116 + $0xff0] sm:$0xff]
      %v636 = vld [vmem:[%s116 + $0xff8] sm:$0xff]
      %v637 = vld [vmem:[%s116 + $0x1000] sm:$0xff]
      %v638 = vld [vmem:[%s116 + $0x1008] sm:$0xff]
      %v639 = vld [vmem:[%s116 + $0x1010] sm:$0xff]
      %v640 = vld [vmem:[%s116 + $0x1018] sm:$0xff]
      %v641 = vld [vmem:[%s116 + $0x1020] sm:$0xff]
      %v642 = vld [vmem:[%s116 + $0x1028] sm:$0xff]
      %v643 = vld [vmem:[%s116 + $0x1030] sm:$0xff]
      %v644 = vld [vmem:[%s116 + $0x1038] sm:$0xff]
      %v645 = vld [vmem:[%s116 + $0x1040] sm:$0xff]
      %v646 = vld [vmem:[%s116 + $0x1048] sm:$0xff]
      %v647 = vld [vmem:[%s116 + $0x1050] sm:$0xff]
      %v648 = vld [vmem:[%s116 + $0x1058] sm:$0xff]
      %v649 = vld [vmem:[%s116 + $0x1060] sm:$0xff]
      %v650 = vld [vmem:[%s116 + $0x1068] sm:$0xff]
      %v651 = vld [vmem:[%s116 + $0x1070] sm:$0xff]
      %v652 = vld [vmem:[%s116 + $0x1078] sm:$0xff]
      %v653 = vld [vmem:[%s116 + $0x1080] sm:$0xff]
      %v654 = vld [vmem:[%s116 + $0x1088] sm:$0xff]
      %v655 = vld [vmem:[%s116 + $0x1090] sm:$0xff]
      %v656 = vld [vmem:[%s116 + $0x1098] sm:$0xff]
      %v657 = vld [vmem:[%s116 + $0x10a0] sm:$0xff]
      %v658 = vld [vmem:[%s116 + $0x10a8] sm:$0xff]
      %v659 = vld [vmem:[%s116 + $0x10b0] sm:$0xff]
      %v660 = vld [vmem:[%s116 + $0x10b8] sm:$0xff]
      %v661 = vld [vmem:[%s116 + $0x10c0] sm:$0xff]
      %v662 = vld [vmem:[%s116 + $0x10c8] sm:$0xff]
      %v663 = vld [vmem:[%s116 + $0x10d0] sm:$0xff]
      %v664 = vld [vmem:[%s116 + $0x10d8] sm:$0xff]
      %v665 = vld [vmem:[%s116 + $0x10e0] sm:$0xff]
      %v666 = vld [vmem:[%s116 + $0x10e8] sm:$0xff]
      %v667 = vld [vmem:[%s116 + $0x10f0] sm:$0xff]
      %v668 = vld [vmem:[%s116 + $0x10f8] sm:$0xff]
      %v669 = vld [vmem:[%s116 + $0x1100] sm:$0xff]
      %v670 = vld [vmem:[%s116 + $0x1108] sm:$0xff]
      %v671 = vld [vmem:[%s116 + $0x1110] sm:$0xff]
      %v672 = vld [vmem:[%s116 + $0x1118] sm:$0xff]
      %v673 = vld [vmem:[%s116 + $0x1120] sm:$0xff]
      %v674 = vld [vmem:[%s116 + $0x1128] sm:$0xff]
      %v675 = vld [vmem:[%s116 + $0x1130] sm:$0xff]
      %v676 = vld [vmem:[%s116 + $0x1138] sm:$0xff]
      %v677 = vld [vmem:[%s116 + $0x1140] sm:$0xff]
      %v678 = vld [vmem:[%s116 + $0x1148] sm:$0xff]
      %v679 = vld [vmem:[%s116 + $0x1150] sm:$0xff]
      %v680 = vld [vmem:[%s116 + $0x1158] sm:$0xff]
      %v681 = vld [vmem:[%s116 + $0x1160] sm:$0xff]
      %v682 = vld [vmem:[%s116 + $0x1168] sm:$0xff]
      %v683 = vld [vmem:[%s116 + $0x1170] sm:$0xff]
      %v684 = vld [vmem:[%s116 + $0x1178] sm:$0xff]
      %v685 = vld [vmem:[%s116 + $0x1180] sm:$0xff]
      %v686 = vld [vmem:[%s116 + $0x1188] sm:$0xff]
      %v687 = vld [vmem:[%s116 + $0x1190] sm:$0xff]
      %v688 = vld [vmem:[%s116 + $0x1198] sm:$0xff]
      %v689 = vld [vmem:[%s116 + $0x11a0] sm:$0xff]
      %v690 = vld [vmem:[%s116 + $0x11a8] sm:$0xff]
      %v691 = vld [vmem:[%s116 + $0x11b0] sm:$0xff]
      %v692 = vld [vmem:[%s116 + $0x11b8] sm:$0xff]
      %v693 = vld [vmem:[%s116 + $0x11c0] sm:$0xff]
      %v694 = vld [vmem:[%s116 + $0x11c8] sm:$0xff]
      %v695 = vld [vmem:[%s116 + $0x11d0] sm:$0xff]
      %v696 = vld [vmem:[%s116 + $0x11d8] sm:$0xff]
      %v697 = vld [vmem:[%s116 + $0x11e0] sm:$0xff]
      %v698 = vld [vmem:[%s116 + $0x11e8] sm:$0xff]
      %v699 = vld [vmem:[%s116 + $0x11f0] sm:$0xff]
      %v700 = vld [vmem:[%s116 + $0x11f8] sm:$0xff]
      %v701 = vld [vmem:[%s116 + $0x1200] sm:$0xff]
      %v702 = vld [vmem:[%s116 + $0x1208] sm:$0xff]
      %v703 = vld [vmem:[%s116 + $0x1210] sm:$0xff]
      %v704 = vld [vmem:[%s116 + $0x1218] sm:$0xff]
      %v705 = vld [vmem:[%s116 + $0x1220] sm:$0xff]
      %v706 = vld [vmem:[%s116 + $0x1228] sm:$0xff]
      %v707 = vld [vmem:[%s116 + $0x1230] sm:$0xff]
      %v708 = vld [vmem:[%s116 + $0x1238] sm:$0xff]
      %v709 = vld [vmem:[%s116 + $0x1240] sm:$0xff]
      %v710 = vld [vmem:[%s116 + $0x1248] sm:$0xff]
      %v711 = vld [vmem:[%s116 + $0x1250] sm:$0xff]
      %v712 = vld [vmem:[%s116 + $0x1258] sm:$0xff]
      %v713 = vld [vmem:[%s116 + $0x1260] sm:$0xff]
      %v714 = vld [vmem:[%s116 + $0x1268] sm:$0xff]
      %v715 = vld [vmem:[%s116 + $0x1270] sm:$0xff]
      %v716 = vld [vmem:[%s116 + $0x1278] sm:$0xff]
      %v717 = vld [vmem:[%s116 + $0x1280] sm:$0xff]
      %v718 = vld [vmem:[%s116 + $0x1288] sm:$0xff]
      %v719 = vld [vmem:[%s116 + $0x1290] sm:$0xff]
      %v720 = vld [vmem:[%s116 + $0x1298] sm:$0xff]
      %v721 = vld [vmem:[%s116 + $0x12a0] sm:$0xff]
      %v722 = vld [vmem:[%s116 + $0x12a8] sm:$0xff]
      %v723 = vld [vmem:[%s116 + $0x12b0] sm:$0xff]
      %v724 = vld [vmem:[%s116 + $0x12b8] sm:$0xff]
      %v725 = vld [vmem:[%s116 + $0x12c0] sm:$0xff]
      %v726 = vld [vmem:[%s116 + $0x12c8] sm:$0xff]
      %v727 = vld [vmem:[%s116 + $0x12d0] sm:$0xff]
      %v728 = vld [vmem:[%s116 + $0x12d8] sm:$0xff]
      %v729 = vld [vmem:[%s116 + $0x12e0] sm:$0xff]
      %v730 = vld [vmem:[%s116 + $0x12e8] sm:$0xff]
      %v731 = vld [vmem:[%s116 + $0x12f0] sm:$0xff]
      %v732 = vld [vmem:[%s116 + $0x12f8] sm:$0xff]
      %v733 = vld [vmem:[%s116 + $0x1300] sm:$0xff]
      %v734 = vld [vmem:[%s116 + $0x1308] sm:$0xff]
      %v735 = vld [vmem:[%s116 + $0x1310] sm:$0xff]
      %v736 = vld [vmem:[%s116 + $0x1318] sm:$0xff]
      %v737 = vld [vmem:[%s116 + $0x1320] sm:$0xff]
      %v738 = vld [vmem:[%s116 + $0x1328] sm:$0xff]
      %v739 = vld [vmem:[%s116 + $0x1330] sm:$0xff]
      %v740 = vld [vmem:[%s116 + $0x1338] sm:$0xff]
      %v741 = vld [vmem:[%s116 + $0x1340] sm:$0xff]
      %v742 = vld [vmem:[%s116 + $0x1348] sm:$0xff]
      %v743 = vld [vmem:[%s116 + $0x1350] sm:$0xff]
      %v744 = vld [vmem:[%s116 + $0x1358] sm:$0xff]
      %v745 = vld [vmem:[%s116 + $0x1360] sm:$0xff]
      %v746 = vld [vmem:[%s116 + $0x1368] sm:$0xff]
      %v747 = vld [vmem:[%s116 + $0x1370] sm:$0xff]
      %v748 = vld [vmem:[%s116 + $0x1378] sm:$0xff]
      %v749 = vld [vmem:[%s116 + $0x1380] sm:$0xff]
      %v750 = vld [vmem:[%s116 + $0x1388] sm:$0xff]
      %v751 = vld [vmem:[%s116 + $0x1390] sm:$0xff]
      %v752 = vld [vmem:[%s116 + $0x1398] sm:$0xff]
      %v753 = vld [vmem:[%s116 + $0x13a0] sm:$0xff]
      %v754 = vld [vmem:[%s116 + $0x13a8] sm:$0xff]
      %v755 = vld [vmem:[%s116 + $0x13b0] sm:$0xff]
      %v756 = vld [vmem:[%s116 + $0x13b8] sm:$0xff]
      %v757 = vld [vmem:[%s116 + $0x13c0] sm:$0xff]
      %v758 = vld [vmem:[%s116 + $0x13c8] sm:$0xff]
      %v759 = vld [vmem:[%s116 + $0x13d0] sm:$0xff]
      %v760 = vld [vmem:[%s116 + $0x13d8] sm:$0xff]
      %v761 = vld [vmem:[%s116 + $0x13e0] sm:$0xff]
      %v762 = vld [vmem:[%s116 + $0x13e8] sm:$0xff]
      %v763 = vld [vmem:[%s116 + $0x13f0] sm:$0xff]
      %v764 = vld [vmem:[%s116 + $0x13f8] sm:$0xff]
      %v765 = vld [vmem:[%s116 + $0x1400] sm:$0xff]
      %v766 = vld [vmem:[%s116 + $0x1408] sm:$0xff]
      %v767 = vld [vmem:[%s116 + $0x1410] sm:$0xff]
      %v768 = vld [vmem:[%s116 + $0x1418] sm:$0xff]
      %v769 = vld [vmem:[%s116 + $0x1420] sm:$0xff]
      %v770 = vld [vmem:[%s116 + $0x1428] sm:$0xff]
      %v771 = vld [vmem:[%s116 + $0x1430] sm:$0xff]
      %v772 = vld [vmem:[%s116 + $0x1438] sm:$0xff]
      %v773 = vld [vmem:[%s116 + $0x1440] sm:$0xff]
      %v774 = vld [vmem:[%s116 + $0x1448] sm:$0xff]
      %v775 = vld [vmem:[%s116 + $0x1450] sm:$0xff]
      %v776 = vld [vmem:[%s116 + $0x1458] sm:$0xff]
      %v777 = vld [vmem:[%s116 + $0x1460] sm:$0xff]
      %v778 = vld [vmem:[%s116 + $0x1468] sm:$0xff]
      %v779 = vld [vmem:[%s116 + $0x1470] sm:$0xff]
      %v780 = vld [vmem:[%s116 + $0x1478] sm:$0xff]
      %v781 = vld [vmem:[%s116 + $0x1480] sm:$0xff]
      %v782 = vld [vmem:[%s116 + $0x1488] sm:$0xff]
      %v783 = vld [vmem:[%s116 + $0x1490] sm:$0xff]
      %v784 = vld [vmem:[%s116 + $0x1498] sm:$0xff]
      %v785 = vld [vmem:[%s116 + $0x14a0] sm:$0xff]
      %v786 = vld [vmem:[%s116 + $0x14a8] sm:$0xff]
      %v787 = vld [vmem:[%s116 + $0x14b0] sm:$0xff]
      %v788 = vld [vmem:[%s116 + $0x14b8] sm:$0xff]
      %v789 = vld [vmem:[%s116 + $0x14c0] sm:$0xff]
      %v790 = vld [vmem:[%s116 + $0x14c8] sm:$0xff]
      %v791 = vld [vmem:[%s116 + $0x14d0] sm:$0xff]
      %v792 = vld [vmem:[%s116 + $0x14d8] sm:$0xff]
      %v793 = vld [vmem:[%s116 + $0x14e0] sm:$0xff]
      %v794 = vld [vmem:[%s116 + $0x14e8] sm:$0xff]
      %v795 = vld [vmem:[%s116 + $0x14f0] sm:$0xff]
      %v796 = vld [vmem:[%s116 + $0x14f8] sm:$0xff]
      %v797 = vld [vmem:[%s116 + $0x1500] sm:$0xff]
      %v798 = vld [vmem:[%s116 + $0x1508] sm:$0xff]
      %v799 = vld [vmem:[%s116 + $0x1510] sm:$0xff]
      %v800 = vld [vmem:[%s116 + $0x1518] sm:$0xff]
      %v801 = vld [vmem:[%s116 + $0x1520] sm:$0xff]
      %v802 = vld [vmem:[%s116 + $0x1528] sm:$0xff]
      %v803 = vld [vmem:[%s116 + $0x1530] sm:$0xff]
      %v804 = vld [vmem:[%s116 + $0x1538] sm:$0xff]
      %v805 = vld [vmem:[%s116 + $0x1540] sm:$0xff]
      %v806 = vld [vmem:[%s116 + $0x1548] sm:$0xff]
      %v807 = vld [vmem:[%s116 + $0x1550] sm:$0xff]
      %v808 = vld [vmem:[%s116 + $0x1558] sm:$0xff]
      %v809 = vld [vmem:[%s116 + $0x1560] sm:$0xff]
      %v810 = vld [vmem:[%s116 + $0x1568] sm:$0xff]
      %v811 = vld [vmem:[%s116 + $0x1570] sm:$0xff]
      %v812 = vld [vmem:[%s116 + $0x1578] sm:$0xff]
      %v813 = vld [vmem:[%s116 + $0x1580] sm:$0xff]
      %v814 = vld [vmem:[%s116 + $0x1588] sm:$0xff]
      %v815 = vld [vmem:[%s116 + $0x1590] sm:$0xff]
      %v816 = vld [vmem:[%s116 + $0x1598] sm:$0xff]
      %v817 = vld [vmem:[%s116 + $0x15a0] sm:$0xff]
      %v818 = vld [vmem:[%s116 + $0x15a8] sm:$0xff]
      %v819 = vld [vmem:[%s116 + $0x15b0] sm:$0xff]
      %v820 = vld [vmem:[%s116 + $0x15b8] sm:$0xff]
      %v821 = vld [vmem:[%s116 + $0x15c0] sm:$0xff]
      %v822 = vld [vmem:[%s116 + $0x15c8] sm:$0xff]
      %v823 = vld [vmem:[%s116 + $0x15d0] sm:$0xff]
      %v824 = vld [vmem:[%s116 + $0x15d8] sm:$0xff]
      %v825 = vld [vmem:[%s116 + $0x15e0] sm:$0xff]
      %v826 = vld [vmem:[%s116 + $0x15e8] sm:$0xff]
      %v827 = vld [vmem:[%s116 + $0x15f0] sm:$0xff]
      %v828 = vld [vmem:[%s116 + $0x15f8] sm:$0xff]
      %v829 = vld [vmem:[%s116 + $0x1600] sm:$0xff]
      %v830 = vld [vmem:[%s116 + $0x1608] sm:$0xff]
      %v831 = vld [vmem:[%s116 + $0x1610] sm:$0xff]
      %v832 = vld [vmem:[%s116 + $0x1618] sm:$0xff]
      %v833 = vld [vmem:[%s116 + $0x1620] sm:$0xff]
      %v834 = vld [vmem:[%s116 + $0x1628] sm:$0xff]
      %v835 = vld [vmem:[%s116 + $0x1630] sm:$0xff]
      %v836 = vld [vmem:[%s116 + $0x1638] sm:$0xff]
      %v837 = vld [vmem:[%s116 + $0x1640] sm:$0xff]
      %v838 = vld [vmem:[%s116 + $0x1648] sm:$0xff]
      %v839 = vld [vmem:[%s116 + $0x1650] sm:$0xff]
      %v840 = vld [vmem:[%s116 + $0x1658] sm:$0xff]
      %v841 = vld [vmem:[%s116 + $0x1660] sm:$0xff]
      %v842 = vld [vmem:[%s116 + $0x1668] sm:$0xff]
      %v843 = vld [vmem:[%s116 + $0x1670] sm:$0xff]
      %v844 = vld [vmem:[%s116 + $0x1678] sm:$0xff]
      %v845 = vld [vmem:[%s116 + $0x1680] sm:$0xff]
      %v846 = vld [vmem:[%s116 + $0x1688] sm:$0xff]
      %v847 = vld [vmem:[%s116 + $0x1690] sm:$0xff]
      %v848 = vld [vmem:[%s116 + $0x1698] sm:$0xff]
      %v849 = vld [vmem:[%s116 + $0x16a0] sm:$0xff]
      %v850 = vld [vmem:[%s116 + $0x16a8] sm:$0xff]
      %v851 = vld [vmem:[%s116 + $0x16b0] sm:$0xff]
      %v852 = vld [vmem:[%s116 + $0x16b8] sm:$0xff]
      %v853 = vld [vmem:[%s116 + $0x16c0] sm:$0xff]
      %v854 = vld [vmem:[%s116 + $0x16c8] sm:$0xff]
      %v855 = vld [vmem:[%s116 + $0x16d0] sm:$0xff]
      %v856 = vld [vmem:[%s116 + $0x16d8] sm:$0xff]
      %v857 = vld [vmem:[%s116 + $0x16e0] sm:$0xff]
      %v858 = vld [vmem:[%s116 + $0x16e8] sm:$0xff]
      %v859 = vld [vmem:[%s116 + $0x16f0] sm:$0xff]
      %v860 = vld [vmem:[%s116 + $0x16f8] sm:$0xff]
      %v861 = vld [vmem:[%s116 + $0x1700] sm:$0xff]
      %v862 = vld [vmem:[%s116 + $0x1708] sm:$0xff]
      %v863 = vld [vmem:[%s116 + $0x1710] sm:$0xff]
      %v864 = vld [vmem:[%s116 + $0x1718] sm:$0xff]
      %v865 = vld [vmem:[%s116 + $0x1720] sm:$0xff]
      %v866 = vld [vmem:[%s116 + $0x1728] sm:$0xff]
      %v867 = vld [vmem:[%s116 + $0x1730] sm:$0xff]
      %v868 = vld [vmem:[%s116 + $0x1738] sm:$0xff]
      %v869 = vld [vmem:[%s116 + $0x1740] sm:$0xff]
      %v870 = vld [vmem:[%s116 + $0x1748] sm:$0xff]
      %v871 = vld [vmem:[%s116 + $0x1750] sm:$0xff]
      %v872 = vld [vmem:[%s116 + $0x1758] sm:$0xff]
      %v873 = vld [vmem:[%s116 + $0x1760] sm:$0xff]
      %v874 = vld [vmem:[%s116 + $0x1768] sm:$0xff]
      %v875 = vld [vmem:[%s116 + $0x1770] sm:$0xff]
      %v876 = vld [vmem:[%s116 + $0x1778] sm:$0xff]
      %v877 = vld [vmem:[%s116 + $0x1780] sm:$0xff]
      %v878 = vld [vmem:[%s116 + $0x1788] sm:$0xff]
      %v879 = vld [vmem:[%s116 + $0x1790] sm:$0xff]
      %v880 = vld [vmem:[%s116 + $0x1798] sm:$0xff]
      %v881 = vld [vmem:[%s116 + $0x17a0] sm:$0xff]
      %v882 = vld [vmem:[%s116 + $0x17a8] sm:$0xff]
      %v883 = vld [vmem:[%s116 + $0x17b0] sm:$0xff]
      %v884 = vld [vmem:[%s116 + $0x17b8] sm:$0xff]
      %v885 = vld [vmem:[%s116 + $0x17c0] sm:$0xff]
      %v886 = vld [vmem:[%s116 + $0x17c8] sm:$0xff]
      %v887 = vld [vmem:[%s116 + $0x17d0] sm:$0xff]
      %v888 = vld [vmem:[%s116 + $0x17d8] sm:$0xff]
      %v889 = vld [vmem:[%s116 + $0x17e0] sm:$0xff]
      %v890 = vld [vmem:[%s116 + $0x17e8] sm:$0xff]
      %v891 = vld [vmem:[%s116 + $0x17f0] sm:$0xff]
      %v892 = vld [vmem:[%s116 + $0x17f8] sm:$0xff]
      %v893 = vld [vmem:[%s116 + $0x1800] sm:$0xff]
      %v894 = vld [vmem:[%s116 + $0x1808] sm:$0xff]
      %v895 = vld [vmem:[%s116 + $0x1810] sm:$0xff]
      %v896 = vld [vmem:[%s116 + $0x1818] sm:$0xff]
      %v897 = vld [vmem:[%s116 + $0x1820] sm:$0xff]
      %v898 = vld [vmem:[%s116 + $0x1828] sm:$0xff]
      %v899 = vld [vmem:[%s116 + $0x1830] sm:$0xff]
      %v900 = vld [vmem:[%s116 + $0x1838] sm:$0xff]
      %v901 = vld [vmem:[%s116 + $0x1840] sm:$0xff]
      %v902 = vld [vmem:[%s116 + $0x1848] sm:$0xff]
      %v903 = vld [vmem:[%s116 + $0x1850] sm:$0xff]
      %v904 = vld [vmem:[%s116 + $0x1858] sm:$0xff]
      %v905 = vld [vmem:[%s116 + $0x1860] sm:$0xff]
      %v906 = vld [vmem:[%s116 + $0x1868] sm:$0xff]
      %v907 = vld [vmem:[%s116 + $0x1870] sm:$0xff]
      %v908 = vld [vmem:[%s116 + $0x1878] sm:$0xff]
      %v909 = vld [vmem:[%s116 + $0x1880] sm:$0xff]
      %v910 = vld [vmem:[%s116 + $0x1888] sm:$0xff]
      %v911 = vld [vmem:[%s116 + $0x1890] sm:$0xff]
      %v912 = vld [vmem:[%s116 + $0x1898] sm:$0xff]
      %v913 = vld [vmem:[%s116 + $0x18a0] sm:$0xff]
      %v914 = vld [vmem:[%s116 + $0x18a8] sm:$0xff]
      %v915 = vld [vmem:[%s116 + $0x18b0] sm:$0xff]
      %v916 = vld [vmem:[%s116 + $0x18b8] sm:$0xff]
      %v917 = vld [vmem:[%s116 + $0x18c0] sm:$0xff]
      %v918 = vld [vmem:[%s116 + $0x18c8] sm:$0xff]
      %v919 = vld [vmem:[%s116 + $0x18d0] sm:$0xff]
      %v920 = vld [vmem:[%s116 + $0x18d8] sm:$0xff]
      %v921 = vld [vmem:[%s116 + $0x18e0] sm:$0xff]
      %v922 = vld [vmem:[%s116 + $0x18e8] sm:$0xff]
      %v923 = vld [vmem:[%s116 + $0x18f0] sm:$0xff]
      %v924 = vld [vmem:[%s116 + $0x18f8] sm:$0xff]
      %v925 = vld [vmem:[%s116 + $0x1900] sm:$0xff]
      %v926 = vld [vmem:[%s116 + $0x1908] sm:$0xff]
      %v927 = vld [vmem:[%s116 + $0x1910] sm:$0xff]
      %v928 = vld [vmem:[%s116 + $0x1918] sm:$0xff]
      %v929 = vld [vmem:[%s116 + $0x1920] sm:$0xff]
      %v930 = vld [vmem:[%s116 + $0x1928] sm:$0xff]
      %v931 = vld [vmem:[%s116 + $0x1930] sm:$0xff]
      %v932 = vld [vmem:[%s116 + $0x1938] sm:$0xff]
      %v933 = vld [vmem:[%s116 + $0x1940] sm:$0xff]
      %v934 = vld [vmem:[%s116 + $0x1948] sm:$0xff]
      %v935 = vld [vmem:[%s116 + $0x1950] sm:$0xff]
      %v936 = vld [vmem:[%s116 + $0x1958] sm:$0xff]
      %v937 = vld [vmem:[%s116 + $0x1960] sm:$0xff]
      %v938 = vld [vmem:[%s116 + $0x1968] sm:$0xff]
      %v939 = vld [vmem:[%s116 + $0x1970] sm:$0xff]
      %v940 = vld [vmem:[%s116 + $0x1978] sm:$0xff]
      %v941 = vld [vmem:[%s116 + $0x1980] sm:$0xff]
      %v942 = vld [vmem:[%s116 + $0x1988] sm:$0xff]
      %v943 = vld [vmem:[%s116 + $0x1990] sm:$0xff]
      %v944 = vld [vmem:[%s116 + $0x1998] sm:$0xff]
      %v945 = vld [vmem:[%s116 + $0x19a0] sm:$0xff]
      %v946 = vld [vmem:[%s116 + $0x19a8] sm:$0xff]
      %v947 = vld [vmem:[%s116 + $0x19b0] sm:$0xff]
      %v948 = vld [vmem:[%s116 + $0x19b8] sm:$0xff]
      %v949 = vld [vmem:[%s116 + $0x19c0] sm:$0xff]
      %v950 = vld [vmem:[%s116 + $0x19c8] sm:$0xff]
      %v951 = vld [vmem:[%s116 + $0x19d0] sm:$0xff]
      %v952 = vld [vmem:[%s116 + $0x19d8] sm:$0xff]
      %v953 = vld [vmem:[%s116 + $0x19e0] sm:$0xff]
      %v954 = vld [vmem:[%s116 + $0x19e8] sm:$0xff]
      %v955 = vld [vmem:[%s116 + $0x19f0] sm:$0xff]
      %v956 = vld [vmem:[%s116 + $0x19f8] sm:$0xff]
      %v957 = vld [vmem:[%s116 + $0x1a00] sm:$0xff]
      %v958 = vld [vmem:[%s116 + $0x1a08] sm:$0xff]
      %v959 = vld [vmem:[%s116 + $0x1a10] sm:$0xff]
      %v960 = vld [vmem:[%s116 + $0x1a18] sm:$0xff]
      %v961 = vld [vmem:[%s116 + $0x1a20] sm:$0xff]
      %v962 = vld [vmem:[%s116 + $0x1a28] sm:$0xff]
      %v963 = vld [vmem:[%s116 + $0x1a30] sm:$0xff]
      %v964 = vld [vmem:[%s116 + $0x1a38] sm:$0xff]
      %v965 = vld [vmem:[%s116 + $0x1a40] sm:$0xff]
      %v966 = vld [vmem:[%s116 + $0x1a48] sm:$0xff]
      %v967 = vld [vmem:[%s116 + $0x1a50] sm:$0xff]
      %v968 = vld [vmem:[%s116 + $0x1a58] sm:$0xff]
      %v969 = vld [vmem:[%s116 + $0x1a60] sm:$0xff]
      %v970 = vld [vmem:[%s116 + $0x1a68] sm:$0xff]
      %v971 = vld [vmem:[%s116 + $0x1a70] sm:$0xff]
      %v972 = vld [vmem:[%s116 + $0x1a78] sm:$0xff]
      %v973 = vld [vmem:[%s116 + $0x1a80] sm:$0xff]
      %v974 = vld [vmem:[%s116 + $0x1a88] sm:$0xff]
      %v975 = vld [vmem:[%s116 + $0x1a90] sm:$0xff]
      %v976 = vld [vmem:[%s116 + $0x1a98] sm:$0xff]
      %v977 = vld [vmem:[%s116 + $0x1aa0] sm:$0xff]
      %v978 = vld [vmem:[%s116 + $0x1aa8] sm:$0xff]
      %v979 = vld [vmem:[%s116 + $0x1ab0] sm:$0xff]
      %v980 = vld [vmem:[%s116 + $0x1ab8] sm:$0xff]
      %v981 = vld [vmem:[%s116 + $0x1ac0] sm:$0xff]
      %v982 = vld [vmem:[%s116 + $0x1ac8] sm:$0xff]
      %v983 = vld [vmem:[%s116 + $0x1ad0] sm:$0xff]
      %v984 = vld [vmem:[%s116 + $0x1ad8] sm:$0xff]
      %v985 = vld [vmem:[%s116 + $0x1ae0] sm:$0xff]
      %v986 = vld [vmem:[%s116 + $0x1ae8] sm:$0xff]
      %v987 = vld [vmem:[%s116 + $0x1af0] sm:$0xff]
      %v988 = vld [vmem:[%s116 + $0x1af8] sm:$0xff]
      %v989 = vld [vmem:[%s116 + $0x1b00] sm:$0xff]
      %v990 = vld [vmem:[%s116 + $0x1b08] sm:$0xff]
      %v991 = vld [vmem:[%s116 + $0x1b10] sm:$0xff]
      %v992 = vld [vmem:[%s116 + $0x1b18] sm:$0xff]
      %v993 = vld [vmem:[%s116 + $0x1b20] sm:$0xff]
      %v994 = vld [vmem:[%s116 + $0x1b28] sm:$0xff]
      %v995 = vld [vmem:[%s116 + $0x1b30] sm:$0xff]
      %v996 = vld [vmem:[%s116 + $0x1b38] sm:$0xff]
      %v997 = vld [vmem:[%s116 + $0x1b40] sm:$0xff]
      %v998 = vld [vmem:[%s116 + $0x1b48] sm:$0xff]
      %v999 = vld [vmem:[%s116 + $0x1b50] sm:$0xff]
      %v1000 = vld [vmem:[%s116 + $0x1b58] sm:$0xff]
      %v1001 = vld [vmem:[%s116 + $0x1b60] sm:$0xff]
      %v1002 = vld [vmem:[%s116 + $0x1b68] sm:$0xff]
      %v1003 = vld [vmem:[%s116 + $0x1b70] sm:$0xff]
      %v1004 = vld [vmem:[%s116 + $0x1b78] sm:$0xff]
      %v1005 = vld [vmem:[%s116 + $0x1b80] sm:$0xff]
      %v1006 = vld [vmem:[%s116 + $0x1b88] sm:$0xff]
      %v1007 = vld [vmem:[%s116 + $0x1b90] sm:$0xff]
      %v1008 = vld [vmem:[%s116 + $0x1b98] sm:$0xff]
      %v1009 = vld [vmem:[%s116 + $0x1ba0] sm:$0xff]
      %v1010 = vld [vmem:[%s116 + $0x1ba8] sm:$0xff]
      %v1011 = vld [vmem:[%s116 + $0x1bb0] sm:$0xff]
      %v1012 = vld [vmem:[%s116 + $0x1bb8] sm:$0xff]
      %v1013 = vld [vmem:[%s116 + $0x1bc0] sm:$0xff]
      %v1014 = vld [vmem:[%s116 + $0x1bc8] sm:$0xff]
      %v1015 = vld [vmem:[%s116 + $0x1bd0] sm:$0xff]
      %v1016 = vld [vmem:[%s116 + $0x1bd8] sm:$0xff]
      %v1017 = vld [vmem:[%s116 + $0x1be0] sm:$0xff]
      %v1018 = vld [vmem:[%s116 + $0x1be8] sm:$0xff]
      %v1019 = vld [vmem:[%s116 + $0x1bf0] sm:$0xff]
      %v1020 = vld [vmem:[%s116 + $0x1bf8] sm:$0xff]
      %v1021 = vld [vmem:[%s116 + $0x1c00] sm:$0xff]
      %v1022 = vld [vmem:[%s116 + $0x1c08] sm:$0xff]
      %v1023 = vld [vmem:[%s116 + $0x1c10] sm:$0xff]
      %v1024 = vld [vmem:[%s116 + $0x1c18] sm:$0xff]
      %v1025 = vld [vmem:[%s116 + $0x1c20] sm:$0xff]
      %v1026 = vld [vmem:[%s116 + $0x1c28] sm:$0xff]
      %v1027 = vld [vmem:[%s116 + $0x1c30] sm:$0xff]
      %v1028 = vld [vmem:[%s116 + $0x1c38] sm:$0xff]
      %v1029 = vld [vmem:[%s116 + $0x1c40] sm:$0xff]
      %v1030 = vld [vmem:[%s116 + $0x1c48] sm:$0xff]
      %v1031 = vld [vmem:[%s116 + $0x1c50] sm:$0xff]
      %v1032 = vld [vmem:[%s116 + $0x1c58] sm:$0xff]
      %v1033 = vld [vmem:[%s116 + $0x1c60] sm:$0xff]
      %v1034 = vld [vmem:[%s116 + $0x1c68] sm:$0xff]
      %v1035 = vld [vmem:[%s116 + $0x1c70] sm:$0xff]
      %v1036 = vld [vmem:[%s116 + $0x1c78] sm:$0xff]
      %v1037 = vld [vmem:[%s116 + $0x1c80] sm:$0xff]
      %v1038 = vld [vmem:[%s116 + $0x1c88] sm:$0xff]
      %v1039 = vld [vmem:[%s116 + $0x1c90] sm:$0xff]
      %v1040 = vld [vmem:[%s116 + $0x1c98] sm:$0xff]
      %v1041 = vld [vmem:[%s116 + $0x1ca0] sm:$0xff]
      %v1042 = vld [vmem:[%s116 + $0x1ca8] sm:$0xff]
      %v1043 = vld [vmem:[%s116 + $0x1cb0] sm:$0xff]
      %v1044 = vld [vmem:[%s116 + $0x1cb8] sm:$0xff]
      %v1045 = vld [vmem:[%s116 + $0x1cc0] sm:$0xff]
      %v1046 = vld [vmem:[%s116 + $0x1cc8] sm:$0xff]
      %v1047 = vld [vmem:[%s116 + $0x1cd0] sm:$0xff]
      %v1048 = vld [vmem:[%s116 + $0x1cd8] sm:$0xff]
      %v1049 = vld [vmem:[%s116 + $0x1ce0] sm:$0xff]
      %v1050 = vld [vmem:[%s116 + $0x1ce8] sm:$0xff]
      %v1051 = vld [vmem:[%s116 + $0x1cf0] sm:$0xff]
      %v1052 = vld [vmem:[%s116 + $0x1cf8] sm:$0xff]
      %v1053 = vld [vmem:[%s116 + $0x1d00] sm:$0xff]
      %v1054 = vld [vmem:[%s116 + $0x1d08] sm:$0xff]
      %v1055 = vld [vmem:[%s116 + $0x1d10] sm:$0xff]
      %v1056 = vld [vmem:[%s116 + $0x1d18] sm:$0xff]
      %v1057 = vld [vmem:[%s116 + $0x1d20] sm:$0xff]
      %v1058 = vld [vmem:[%s116 + $0x1d28] sm:$0xff]
      %v1059 = vld [vmem:[%s116 + $0x1d30] sm:$0xff]
      %v1060 = vld [vmem:[%s116 + $0x1d38] sm:$0xff]
      %v1061 = vld [vmem:[%s116 + $0x1d40] sm:$0xff]
      %v1062 = vld [vmem:[%s116 + $0x1d48] sm:$0xff]
      %v1063 = vld [vmem:[%s116 + $0x1d50] sm:$0xff]
      %v1064 = vld [vmem:[%s116 + $0x1d58] sm:$0xff]
      %v1065 = vld [vmem:[%s116 + $0x1d60] sm:$0xff]
      %v1066 = vld [vmem:[%s116 + $0x1d68] sm:$0xff]
      %v1067 = vld [vmem:[%s116 + $0x1d70] sm:$0xff]
      %v1068 = vld [vmem:[%s116 + $0x1d78] sm:$0xff]
      %v1069 = vld [vmem:[%s116 + $0x1d80] sm:$0xff]
      %v1070 = vld [vmem:[%s116 + $0x1d88] sm:$0xff]
      %v1071 = vld [vmem:[%s116 + $0x1d90] sm:$0xff]
      %v1072 = vld [vmem:[%s116 + $0x1d98] sm:$0xff]
      %v1073 = vld [vmem:[%s116 + $0x1da0] sm:$0xff]
      %v1074 = vld [vmem:[%s116 + $0x1da8] sm:$0xff]
      %v1075 = vld [vmem:[%s116 + $0x1db0] sm:$0xff]
      %v1076 = vld [vmem:[%s116 + $0x1db8] sm:$0xff]
      %v1077 = vld [vmem:[%s116 + $0x1dc0] sm:$0xff]
      %v1078 = vld [vmem:[%s116 + $0x1dc8] sm:$0xff]
      %v1079 = vld [vmem:[%s116 + $0x1dd0] sm:$0xff]
      %v1080 = vld [vmem:[%s116 + $0x1dd8] sm:$0xff]
      %v1081 = vld [vmem:[%s116 + $0x1de0] sm:$0xff]
      %v1082 = vld [vmem:[%s116 + $0x1de8] sm:$0xff]
      %v1083 = vld [vmem:[%s116 + $0x1df0] sm:$0xff]
      %v1084 = vld [vmem:[%s116 + $0x1df8] sm:$0xff]
      %v1085 = vld [vmem:[%s116 + $0x1e00] sm:$0xff]
      %v1086 = vld [vmem:[%s116 + $0x1e08] sm:$0xff]
      %v1087 = vld [vmem:[%s116 + $0x1e10] sm:$0xff]
      %v1088 = vld [vmem:[%s116 + $0x1e18] sm:$0xff]
      %v1089 = vld [vmem:[%s116 + $0x1e20] sm:$0xff]
      %v1090 = vld [vmem:[%s116 + $0x1e28] sm:$0xff]
      %v1091 = vld [vmem:[%s116 + $0x1e30] sm:$0xff]
      %v1092 = vld [vmem:[%s116 + $0x1e38] sm:$0xff]
      %v1093 = vld [vmem:[%s116 + $0x1e40] sm:$0xff]
      %v1094 = vld [vmem:[%s116 + $0x1e48] sm:$0xff]
      %v1095 = vld [vmem:[%s116 + $0x1e50] sm:$0xff]
      %v1096 = vld [vmem:[%s116 + $0x1e58] sm:$0xff]
      %v1097 = vld [vmem:[%s116 + $0x1e60] sm:$0xff]
      %v1098 = vld [vmem:[%s116 + $0x1e68] sm:$0xff]
      %v1099 = vld [vmem:[%s116 + $0x1e70] sm:$0xff]
      %v1100 = vld [vmem:[%s116 + $0x1e78] sm:$0xff]
      %v1101 = vld [vmem:[%s116 + $0x1e80] sm:$0xff]
      %v1102 = vld [vmem:[%s116 + $0x1e88] sm:$0xff]
      %v1103 = vld [vmem:[%s116 + $0x1e90] sm:$0xff]
      %v1104 = vld [vmem:[%s116 + $0x1e98] sm:$0xff]
      %v1105 = vld [vmem:[%s116 + $0x1ea0] sm:$0xff]
      %v1106 = vld [vmem:[%s116 + $0x1ea8] sm:$0xff]
      %v1107 = vld [vmem:[%s116 + $0x1eb0] sm:$0xff]
      %v1108 = vld [vmem:[%s116 + $0x1eb8] sm:$0xff]
      %v1109 = vld [vmem:[%s116 + $0x1ec0] sm:$0xff]
      %v1110 = vld [vmem:[%s116 + $0x1ec8] sm:$0xff]
      %v1111 = vld [vmem:[%s116 + $0x1ed0] sm:$0xff]
      %v1112 = vld [vmem:[%s116 + $0x1ed8] sm:$0xff]
      %v1113 = vld [vmem:[%s116 + $0x1ee0] sm:$0xff]
      %v1114 = vld [vmem:[%s116 + $0x1ee8] sm:$0xff]
      %v1115 = vld [vmem:[%s116 + $0x1ef0] sm:$0xff]
      %v1116 = vld [vmem:[%s116 + $0x1ef8] sm:$0xff]
      %v1117 = vld [vmem:[%s116 + $0x1f00] sm:$0xff]
      %v1118 = vld [vmem:[%s116 + $0x1f08] sm:$0xff]
      %v1119 = vld [vmem:[%s116 + $0x1f10] sm:$0xff]
      %v1120 = vld [vmem:[%s116 + $0x1f18] sm:$0xff]
      %v1121 = vld [vmem:[%s116 + $0x1f20] sm:$0xff]
      %v1122 = vld [vmem:[%s116 + $0x1f28] sm:$0xff]
      %v1123 = vld [vmem:[%s116 + $0x1f30] sm:$0xff]
      %v1124 = vld [vmem:[%s116 + $0x1f38] sm:$0xff]
      %v1125 = vld [vmem:[%s116 + $0x1f40] sm:$0xff]
      %v1126 = vld [vmem:[%s116 + $0x1f48] sm:$0xff]
      %v1127 = vld [vmem:[%s116 + $0x1f50] sm:$0xff]
      %v1128 = vld [vmem:[%s116 + $0x1f58] sm:$0xff]
      %v1129 = vld [vmem:[%s116 + $0x1f60] sm:$0xff]
      %v1130 = vld [vmem:[%s116 + $0x1f68] sm:$0xff]
      %v1131 = vld [vmem:[%s116 + $0x1f70] sm:$0xff]
      %v1132 = vld [vmem:[%s116 + $0x1f78] sm:$0xff]
      %v1133 = vld [vmem:[%s116 + $0x1f80] sm:$0xff]
      %v1134 = vld [vmem:[%s116 + $0x1f88] sm:$0xff]
      %v1135 = vld [vmem:[%s116 + $0x1f90] sm:$0xff]
      %v1136 = vld [vmem:[%s116 + $0x1f98] sm:$0xff]
      %v1137 = vld [vmem:[%s116 + $0x1fa0] sm:$0xff]
      %v1138 = vld [vmem:[%s116 + $0x1fa8] sm:$0xff]
      %v1139 = vld [vmem:[%s116 + $0x1fb0] sm:$0xff]
      %v1140 = vld [vmem:[%s116 + $0x1fb8] sm:$0xff]
      %v1141 = vld [vmem:[%s116 + $0x1fc0] sm:$0xff]
      %v1142 = vld [vmem:[%s116 + $0x1fc8] sm:$0xff]
      %v1143 = vld [vmem:[%s116 + $0x1fd0] sm:$0xff]
      %v1144 = vld [vmem:[%s116 + $0x1fd8] sm:$0xff]
      %v1145 = vld [vmem:[%s116 + $0x1fe0] sm:$0xff]
      %v1146 = vld [vmem:[%s116 + $0x1fe8] sm:$0xff]
      %v1147 = vld [vmem:[%s116 + $0x1ff0] sm:$0xff]
      %v1148 = vld [vmem:[%s116 + $0x1ff8] sm:$0xff]
      %v1149 = vld [vmem:[%s116 + $0x2000] sm:$0xff]
      %v1150 = vld [vmem:[%s116 + $0x2008] sm:$0xff]
      %v1151 = vld [vmem:[%s116 + $0x2010] sm:$0xff]
      %v1152 = vld [vmem:[%s116 + $0x2018] sm:$0xff]
      %v1153 = vld [vmem:[%s116 + $0x2020] sm:$0xff]
      %v1154 = vld [vmem:[%s116 + $0x2028] sm:$0xff]
      %v1155 = vld [vmem:[%s116 + $0x2030] sm:$0xff]
      %v1156 = vld [vmem:[%s116 + $0x2038] sm:$0xff]
      %v1157 = vld [vmem:[%s116 + $0x2040] sm:$0xff]
      %v1158 = vld [vmem:[%s116 + $0x2048] sm:$0xff]
      %v1159 = vld [vmem:[%s116 + $0x2050] sm:$0xff]
      %v1160 = vld [vmem:[%s116 + $0x2058] sm:$0xff]
      %v1161 = vld [vmem:[%s116 + $0x2060] sm:$0xff]
      %v1162 = vld [vmem:[%s116 + $0x2068] sm:$0xff]
      %v1163 = vld [vmem:[%s116 + $0x2070] sm:$0xff]
      %v1164 = vld [vmem:[%s116 + $0x2078] sm:$0xff]
      %v1165 = vld [vmem:[%s116 + $0x2080] sm:$0xff]
      %v1166 = vld [vmem:[%s116 + $0x2088] sm:$0xff]
      %v1167 = vld [vmem:[%s116 + $0x2090] sm:$0xff]
      %v1168 = vld [vmem:[%s116 + $0x2098] sm:$0xff]
      %v1169 = vld [vmem:[%s116 + $0x20a0] sm:$0xff]
      %v1170 = vld [vmem:[%s116 + $0x20a8] sm:$0xff]
      %v1171 = vld [vmem:[%s116 + $0x20b0] sm:$0xff]
      %v1172 = vld [vmem:[%s116 + $0x20b8] sm:$0xff]
      %v1173 = vld [vmem:[%s116 + $0x20c0] sm:$0xff]
      %v1174 = vld [vmem:[%s116 + $0x20c8] sm:$0xff]
      %v1175 = vld [vmem:[%s116 + $0x20d0] sm:$0xff]
      %v1176 = vld [vmem:[%s116 + $0x20d8] sm:$0xff]
      %v1177 = vld [vmem:[%s116 + $0x20e0] sm:$0xff]
      %v1178 = vld [vmem:[%s116 + $0x20e8] sm:$0xff]
      %v1179 = vld [vmem:[%s116 + $0x20f0] sm:$0xff]
      %v1180 = vld [vmem:[%s116 + $0x20f8] sm:$0xff]
      %v1181 = vld [vmem:[%s116 + $0x2100] sm:$0xff]
      %v1182 = vld [vmem:[%s116 + $0x2108] sm:$0xff]
      %v1183 = vld [vmem:[%s116 + $0x2110] sm:$0xff]
      %v1184 = vld [vmem:[%s116 + $0x2118] sm:$0xff]
      %v1185 = vld [vmem:[%s116 + $0x2120] sm:$0xff]
      %v1186 = vld [vmem:[%s116 + $0x2128] sm:$0xff]
      %v1187 = vld [vmem:[%s116 + $0x2130] sm:$0xff]
      %v1188 = vld [vmem:[%s116 + $0x2138] sm:$0xff]
      %v1189 = vld [vmem:[%s116 + $0x2140] sm:$0xff]
      %v1190 = vld [vmem:[%s116 + $0x2148] sm:$0xff]
      %v1191 = vld [vmem:[%s116 + $0x2150] sm:$0xff]
      %v1192 = vld [vmem:[%s116 + $0x2158] sm:$0xff]
      %v1193 = vld [vmem:[%s116 + $0x2160] sm:$0xff]
      %v1194 = vld [vmem:[%s116 + $0x2168] sm:$0xff]
      %v1195 = vld [vmem:[%s116 + $0x2170] sm:$0xff]
      %v1196 = vld [vmem:[%s116 + $0x2178] sm:$0xff]
      %v1197 = vld [vmem:[%s116 + $0x2180] sm:$0xff]
      %v1198 = vld [vmem:[%s116 + $0x2188] sm:$0xff]
      %v1199 = vld [vmem:[%s116 + $0x2190] sm:$0xff]
      %v1200 = vld [vmem:[%s116 + $0x2198] sm:$0xff]
      %v1201 = vld [vmem:[%s116 + $0x21a0] sm:$0xff]
      %v1202 = vld [vmem:[%s116 + $0x21a8] sm:$0xff]
      %v1203 = vld [vmem:[%s116 + $0x21b0] sm:$0xff]
      %v1204 = vld [vmem:[%s116 + $0x21b8] sm:$0xff]
      %v1205 = vld [vmem:[%s116 + $0x21c0] sm:$0xff]
      %v1206 = vld [vmem:[%s116 + $0x21c8] sm:$0xff]
      %v1207 = vld [vmem:[%s116 + $0x21d0] sm:$0xff]
      %v1208 = vld [vmem:[%s116 + $0x21d8] sm:$0xff]
      %v1209 = vld [vmem:[%s116 + $0x21e0] sm:$0xff]
      %v1210 = vld [vmem:[%s116 + $0x21e8] sm:$0xff]
      %v1211 = vld [vmem:[%s116 + $0x21f0] sm:$0xff]
      %v1212 = vld [vmem:[%s116 + $0x21f8] sm:$0xff]
      %v1213 = vld [vmem:[%s116 + $0x2200] sm:$0xff]
      %v1214 = vld [vmem:[%s116 + $0x2208] sm:$0xff]
      %v1215 = vld [vmem:[%s116 + $0x2210] sm:$0xff]
      %v1216 = vld [vmem:[%s116 + $0x2218] sm:$0xff]
      %v1217 = vld [vmem:[%s116 + $0x2220] sm:$0xff]
      %v1218 = vld [vmem:[%s116 + $0x2228] sm:$0xff]
      %v1219 = vld [vmem:[%s116 + $0x2230] sm:$0xff]
      %v1220 = vld [vmem:[%s116 + $0x2238] sm:$0xff]
      %v1221 = vld [vmem:[%s116 + $0x2240] sm:$0xff]
      %v1222 = vld [vmem:[%s116 + $0x2248] sm:$0xff]
      %v1223 = vld [vmem:[%s116 + $0x2250] sm:$0xff]
      %v1224 = vld [vmem:[%s116 + $0x2258] sm:$0xff]
      %v1225 = vld [vmem:[%s116 + $0x2260] sm:$0xff]
      %v1226 = vld [vmem:[%s116 + $0x2268] sm:$0xff]
      %v1227 = vld [vmem:[%s116 + $0x2270] sm:$0xff]
      %v1228 = vld [vmem:[%s116 + $0x2278] sm:$0xff]
      %v1229 = vld [vmem:[%s116 + $0x2280] sm:$0xff]
      %v1230 = vld [vmem:[%s116 + $0x2288] sm:$0xff]
      %v1231 = vld [vmem:[%s116 + $0x2290] sm:$0xff]
      %v1232 = vld [vmem:[%s116 + $0x2298] sm:$0xff]
      %v1233 = vld [vmem:[%s116 + $0x22a0] sm:$0xff]
      %v1234 = vld [vmem:[%s116 + $0x22a8] sm:$0xff]
      %v1235 = vld [vmem:[%s116 + $0x22b0] sm:$0xff]
      %v1236 = vld [vmem:[%s116 + $0x22b8] sm:$0xff]
      %v1237 = vld [vmem:[%s116 + $0x22c0] sm:$0xff]
      %v1238 = vld [vmem:[%s116 + $0x22c8] sm:$0xff]
      %v1239 = vld [vmem:[%s116 + $0x22d0] sm:$0xff]
      %v1240 = vld [vmem:[%s116 + $0x22d8] sm:$0xff]
      %v1241 = vld [vmem:[%s116 + $0x22e0] sm:$0xff]
      %v1242 = vld [vmem:[%s116 + $0x22e8] sm:$0xff]
      %v1243 = vld [vmem:[%s116 + $0x22f0] sm:$0xff]
      %v1244 = vld [vmem:[%s116 + $0x22f8] sm:$0xff]
      %v1245 = vld [vmem:[%s116 + $0x2300] sm:$0xff]
      %v1246 = vld [vmem:[%s116 + $0x2308] sm:$0xff]
      %v1247 = vld [vmem:[%s116 + $0x2310] sm:$0xff]
      %v1248 = vld [vmem:[%s116 + $0x2318] sm:$0xff]
      %v1249 = vld [vmem:[%s116 + $0x2320] sm:$0xff]
      %v1250 = vld [vmem:[%s116 + $0x2328] sm:$0xff]
      %v1251 = vld [vmem:[%s116 + $0x2330] sm:$0xff]
      %v1252 = vld [vmem:[%s116 + $0x2338] sm:$0xff]
      %v1253 = vld [vmem:[%s116 + $0x2340] sm:$0xff]
      %v1254 = vld [vmem:[%s116 + $0x2348] sm:$0xff]
      %v1255 = vld [vmem:[%s116 + $0x2350] sm:$0xff]
      %v1256 = vld [vmem:[%s116 + $0x2358] sm:$0xff]
      %v1257 = vld [vmem:[%s116 + $0x2360] sm:$0xff]
      %v1258 = vld [vmem:[%s116 + $0x2368] sm:$0xff]
      %v1259 = vld [vmem:[%s116 + $0x2370] sm:$0xff]
      %v1260 = vld [vmem:[%s116 + $0x2378] sm:$0xff]
      %v1261 = vld [vmem:[%s116 + $0x2380] sm:$0xff]
      %v1262 = vld [vmem:[%s116 + $0x2388] sm:$0xff]
      %v1263 = vld [vmem:[%s116 + $0x2390] sm:$0xff]
      %v1264 = vld [vmem:[%s116 + $0x2398] sm:$0xff]
      %v1265 = vld [vmem:[%s116 + $0x23a0] sm:$0xff]
      %v1266 = vld [vmem:[%s116 + $0x23a8] sm:$0xff]
      %v1267 = vld [vmem:[%s116 + $0x23b0] sm:$0xff]
      %v1268 = vld [vmem:[%s116 + $0x23b8] sm:$0xff]
      %v1269 = vld [vmem:[%s116 + $0x23c0] sm:$0xff]
      %v1270 = vld [vmem:[%s116 + $0x23c8] sm:$0xff]
      %v1271 = vld [vmem:[%s116 + $0x23d0] sm:$0xff]
      %v1272 = vld [vmem:[%s116 + $0x23d8] sm:$0xff]
      %v1273 = vld [vmem:[%s116 + $0x23e0] sm:$0xff]
      %v1274 = vld [vmem:[%s116 + $0x23e8] sm:$0xff]
      %v1275 = vld [vmem:[%s116 + $0x23f0] sm:$0xff]
      %v1276 = vld [vmem:[%s116 + $0x23f8] sm:$0xff]
      %v1277 = vld [vmem:[%s116 + $0x2400] sm:$0xff]
      %v1278 = vld [vmem:[%s116 + $0x2408] sm:$0xff]
      %v1279 = vld [vmem:[%s116 + $0x2410] sm:$0xff]
      %v1280 = vld [vmem:[%s116 + $0x2418] sm:$0xff]
      %v1281 = vld [vmem:[%s116 + $0x2420] sm:$0xff]
      %v1282 = vld [vmem:[%s116 + $0x2428] sm:$0xff]
      %v1283 = vld [vmem:[%s116 + $0x2430] sm:$0xff]
      %v1284 = vld [vmem:[%s116 + $0x2438] sm:$0xff]
      %v1285 = vld [vmem:[%s116 + $0x2440] sm:$0xff]
      %v1286 = vld [vmem:[%s116 + $0x2448] sm:$0xff]
      %v1287 = vld [vmem:[%s116 + $0x2450] sm:$0xff]
      %v1288 = vld [vmem:[%s116 + $0x2458] sm:$0xff]
      %v1289 = vld [vmem:[%s116 + $0x2460] sm:$0xff]
      %v1290 = vld [vmem:[%s116 + $0x2468] sm:$0xff]
      %v1291 = vld [vmem:[%s116 + $0x2470] sm:$0xff]
      %v1292 = vld [vmem:[%s116 + $0x2478] sm:$0xff]
      %v1293 = vld [vmem:[%s116 + $0x2480] sm:$0xff]
      %v1294 = vld [vmem:[%s116 + $0x2488] sm:$0xff]
      %v1295 = vld [vmem:[%s116 + $0x2490] sm:$0xff]
      %v1296 = vld [vmem:[%s116 + $0x2498] sm:$0xff]
      %v1297 = vld [vmem:[%s116 + $0x24a0] sm:$0xff]
      %v1298 = vld [vmem:[%s116 + $0x24a8] sm:$0xff]
      %v1299 = vld [vmem:[%s116 + $0x24b0] sm:$0xff]
      %v1300 = vld [vmem:[%s116 + $0x24b8] sm:$0xff]
      %v1301 = vld [vmem:[%s116 + $0x24c0] sm:$0xff]
      %v1302 = vld [vmem:[%s116 + $0x24c8] sm:$0xff]
      %v1303 = vld [vmem:[%s116 + $0x24d0] sm:$0xff]
      %v1304 = vld [vmem:[%s116 + $0x24d8] sm:$0xff]
      %v1305 = vld [vmem:[%s116 + $0x24e0] sm:$0xff]
      %v1306 = vld [vmem:[%s116 + $0x24e8] sm:$0xff]
      %v1307 = vld [vmem:[%s116 + $0x24f0] sm:$0xff]
      %v1308 = vld [vmem:[%s116 + $0x24f8] sm:$0xff]
      %v1309 = vld [vmem:[%s116 + $0x2500] sm:$0xff]
      %v1310 = vld [vmem:[%s116 + $0x2508] sm:$0xff]
      %v1311 = vld [vmem:[%s116 + $0x2510] sm:$0xff]
      %v1312 = vld [vmem:[%s116 + $0x2518] sm:$0xff]
      %v1313 = vld [vmem:[%s116 + $0x2520] sm:$0xff]
      %v1314 = vld [vmem:[%s116 + $0x2528] sm:$0xff]
      %v1315 = vld [vmem:[%s116 + $0x2530] sm:$0xff]
      %v1316 = vld [vmem:[%s116 + $0x2538] sm:$0xff]
      %v1317 = vld [vmem:[%s116 + $0x2540] sm:$0xff]
      %v1318 = vld [vmem:[%s116 + $0x2548] sm:$0xff]
      %v1319 = vld [vmem:[%s116 + $0x2550] sm:$0xff]
      %v1320 = vld [vmem:[%s116 + $0x2558] sm:$0xff]
      %v1321 = vld [vmem:[%s116 + $0x2560] sm:$0xff]
      %v1322 = vld [vmem:[%s116 + $0x2568] sm:$0xff]
      %v1323 = vld [vmem:[%s116 + $0x2570] sm:$0xff]
      %v1324 = vld [vmem:[%s116 + $0x2578] sm:$0xff]
      %v1325 = vld [vmem:[%s116 + $0x2580] sm:$0xff]
      %v1326 = vld [vmem:[%s116 + $0x2588] sm:$0xff]
      %v1327 = vld [vmem:[%s116 + $0x2590] sm:$0xff]
      %v1328 = vld [vmem:[%s116 + $0x2598] sm:$0xff]
      %v1329 = vld [vmem:[%s116 + $0x25a0] sm:$0xff]
      %v1330 = vld [vmem:[%s116 + $0x25a8] sm:$0xff]
      %v1331 = vld [vmem:[%s116 + $0x25b0] sm:$0xff]
      %v1332 = vld [vmem:[%s116 + $0x25b8] sm:$0xff]
      %v1333 = vld [vmem:[%s116 + $0x25c0] sm:$0xff]
      %v1334 = vld [vmem:[%s116 + $0x25c8] sm:$0xff]
      %v1335 = vld [vmem:[%s116 + $0x25d0] sm:$0xff]
      %v1336 = vld [vmem:[%s116 + $0x25d8] sm:$0xff]
      %v1337 = vld [vmem:[%s116 + $0x25e0] sm:$0xff]
      %v1338 = vld [vmem:[%s116 + $0x25e8] sm:$0xff]
      %v1339 = vld [vmem:[%s116 + $0x25f0] sm:$0xff]
      %v1340 = vld [vmem:[%s116 + $0x25f8] sm:$0xff]
      %v1341 = vld [vmem:[%s116 + $0x2600] sm:$0xff]
      %v1342 = vld [vmem:[%s116 + $0x2608] sm:$0xff]
      %v1343 = vld [vmem:[%s116 + $0x2610] sm:$0xff]
      %v1344 = vld [vmem:[%s116 + $0x2618] sm:$0xff]
      %v1345 = vld [vmem:[%s116 + $0x2620] sm:$0xff]
      %v1346 = vld [vmem:[%s116 + $0x2628] sm:$0xff]
      %v1347 = vld [vmem:[%s116 + $0x2630] sm:$0xff]
      %v1348 = vld [vmem:[%s116 + $0x2638] sm:$0xff]
      %v1349 = vld [vmem:[%s116 + $0x2640] sm:$0xff]
      %v1350 = vld [vmem:[%s116 + $0x2648] sm:$0xff]
      %v1351 = vld [vmem:[%s116 + $0x2650] sm:$0xff]
      %v1352 = vld [vmem:[%s116 + $0x2658] sm:$0xff]
      %v1353 = vld [vmem:[%s116 + $0x2660] sm:$0xff]
      %v1354 = vld [vmem:[%s116 + $0x2668] sm:$0xff]
      %v1355 = vld [vmem:[%s116 + $0x2670] sm:$0xff]
      %v1356 = vld [vmem:[%s116 + $0x2678] sm:$0xff]
      %v1357 = vld [vmem:[%s116 + $0x2680] sm:$0xff]
      %v1358 = vld [vmem:[%s116 + $0x2688] sm:$0xff]
      %v1359 = vld [vmem:[%s116 + $0x2690] sm:$0xff]
      %v1360 = vld [vmem:[%s116 + $0x2698] sm:$0xff]
      %v1361 = vld [vmem:[%s116 + $0x26a0] sm:$0xff]
      %v1362 = vld [vmem:[%s116 + $0x26a8] sm:$0xff]
      %v1363 = vld [vmem:[%s116 + $0x26b0] sm:$0xff]
      %v1364 = vld [vmem:[%s116 + $0x26b8] sm:$0xff]
      %v1365 = vld [vmem:[%s116 + $0x26c0] sm:$0xff]
      %v1366 = vld [vmem:[%s116 + $0x26c8] sm:$0xff]
      %v1367 = vld [vmem:[%s116 + $0x26d0] sm:$0xff]
      %v1368 = vld [vmem:[%s116 + $0x26d8] sm:$0xff]
      %v1369 = vld [vmem:[%s116 + $0x26e0] sm:$0xff]
      %v1370 = vld [vmem:[%s116 + $0x26e8] sm:$0xff]
      %v1371 = vld [vmem:[%s116 + $0x26f0] sm:$0xff]
      %v1372 = vld [vmem:[%s116 + $0x26f8] sm:$0xff]
      %v1373 = vld [vmem:[%s116 + $0x2700] sm:$0xff]
      %v1374 = vld [vmem:[%s116 + $0x2708] sm:$0xff]
      %v1375 = vld [vmem:[%s116 + $0x2710] sm:$0xff]
      %v1376 = vld [vmem:[%s116 + $0x2718] sm:$0xff]
      %v1377 = vld [vmem:[%s116 + $0x2720] sm:$0xff]
      %v1378 = vld [vmem:[%s116 + $0x2728] sm:$0xff]
      %v1379 = vld [vmem:[%s116 + $0x2730] sm:$0xff]
      %v1380 = vld [vmem:[%s116 + $0x2738] sm:$0xff]
      %v1381 = vld [vmem:[%s116 + $0x2740] sm:$0xff]
      %v1382 = vld [vmem:[%s116 + $0x2748] sm:$0xff]
      %v1383 = vld [vmem:[%s116 + $0x2750] sm:$0xff]
      %v1384 = vld [vmem:[%s116 + $0x2758] sm:$0xff]
      %v1385 = vld [vmem:[%s116 + $0x2760] sm:$0xff]
      %v1386 = vld [vmem:[%s116 + $0x2768] sm:$0xff]
      %v1387 = vld [vmem:[%s116 + $0x2770] sm:$0xff]
      %v1388 = vld [vmem:[%s116 + $0x2778] sm:$0xff]
      %v1389 = vld [vmem:[%s116 + $0x2780] sm:$0xff]
      %v1390 = vld [vmem:[%s116 + $0x2788] sm:$0xff]
      %v1391 = vld [vmem:[%s116 + $0x2790] sm:$0xff]
      %v1392 = vld [vmem:[%s116 + $0x2798] sm:$0xff]
      %v1393 = vld [vmem:[%s116 + $0x27a0] sm:$0xff]
      %v1394 = vld [vmem:[%s116 + $0x27a8] sm:$0xff]
      %v1395 = vld [vmem:[%s116 + $0x27b0] sm:$0xff]
      %v1396 = vld [vmem:[%s116 + $0x27b8] sm:$0xff]
      %v1397 = vld [vmem:[%s116 + $0x27c0] sm:$0xff]
      %v1398 = vld [vmem:[%s116 + $0x27c8] sm:$0xff]
      %v1399 = vld [vmem:[%s116 + $0x27d0] sm:$0xff]
      %v1400 = vld [vmem:[%s116 + $0x27d8] sm:$0xff]
      %v1401 = vld [vmem:[%s116 + $0x27e0] sm:$0xff]
      %v1402 = vld [vmem:[%s116 + $0x27e8] sm:$0xff]
      %v1403 = vld [vmem:[%s116 + $0x27f0] sm:$0xff]
      %v1404 = vld [vmem:[%s116 + $0x27f8] sm:$0xff]
      %v1405 = vld [vmem:[%s116 + $0x2800] sm:$0xff]
      %v1406 = vld [vmem:[%s116 + $0x2808] sm:$0xff]
      %v1407 = vld [vmem:[%s116 + $0x2810] sm:$0xff]
      %v1408 = vld [vmem:[%s116 + $0x2818] sm:$0xff]
      %v1409 = vld [vmem:[%s116 + $0x2820] sm:$0xff]
      %v1410 = vld [vmem:[%s116 + $0x2828] sm:$0xff]
      %v1411 = vld [vmem:[%s116 + $0x2830] sm:$0xff]
      %v1412 = vld [vmem:[%s116 + $0x2838] sm:$0xff]
      %v1413 = vld [vmem:[%s116 + $0x2840] sm:$0xff]
      %v1414 = vld [vmem:[%s116 + $0x2848] sm:$0xff]
      %v1415 = vld [vmem:[%s116 + $0x2850] sm:$0xff]
      %v1416 = vld [vmem:[%s116 + $0x2858] sm:$0xff]
      %v1417 = vld [vmem:[%s116 + $0x2860] sm:$0xff]
      %v1418 = vld [vmem:[%s116 + $0x2868] sm:$0xff]
      %v1419 = vld [vmem:[%s116 + $0x2870] sm:$0xff]
      %v1420 = vld [vmem:[%s116 + $0x2878] sm:$0xff]
      %v1421 = vld [vmem:[%s116 + $0x2880] sm:$0xff]
      %v1422 = vld [vmem:[%s116 + $0x2888] sm:$0xff]
      %v1423 = vld [vmem:[%s116 + $0x2890] sm:$0xff]
      %v1424 = vld [vmem:[%s116 + $0x2898] sm:$0xff]
      %v1425 = vld [vmem:[%s116 + $0x28a0] sm:$0xff]
      %v1426 = vld [vmem:[%s116 + $0x28a8] sm:$0xff]
      %v1427 = vld [vmem:[%s116 + $0x28b0] sm:$0xff]
      %v1428 = vld [vmem:[%s116 + $0x28b8] sm:$0xff]
      %v1429 = vld [vmem:[%s116 + $0x28c0] sm:$0xff]
      %v1430 = vld [vmem:[%s116 + $0x28c8] sm:$0xff]
      %v1431 = vld [vmem:[%s116 + $0x28d0] sm:$0xff]
      %v1432 = vld [vmem:[%s116 + $0x28d8] sm:$0xff]
      %v1433 = vld [vmem:[%s116 + $0x28e0] sm:$0xff]
      %v1434 = vld [vmem:[%s116 + $0x28e8] sm:$0xff]
      %v1435 = vld [vmem:[%s116 + $0x28f0] sm:$0xff]
      %v1436 = vld [vmem:[%s116 + $0x28f8] sm:$0xff]
      %v1437 = vld [vmem:[%s116 + $0x2900] sm:$0xff]
      %v1438 = vld [vmem:[%s116 + $0x2908] sm:$0xff]
      %v1439 = vld [vmem:[%s116 + $0x2910] sm:$0xff]
      %v1440 = vld [vmem:[%s116 + $0x2918] sm:$0xff]
      %v1441 = vld [vmem:[%s116 + $0x2920] sm:$0xff]
      %v1442 = vld [vmem:[%s116 + $0x2928] sm:$0xff]
      %v1443 = vld [vmem:[%s116 + $0x2930] sm:$0xff]
      %v1444 = vld [vmem:[%s116 + $0x2938] sm:$0xff]
      %v1445 = vld [vmem:[%s116 + $0x2940] sm:$0xff]
      %v1446 = vld [vmem:[%s116 + $0x2948] sm:$0xff]
      %v1447 = vld [vmem:[%s116 + $0x2950] sm:$0xff]
      %v1448 = vld [vmem:[%s116 + $0x2958] sm:$0xff]
      %v1449 = vld [vmem:[%s116 + $0x2960] sm:$0xff]
      %v1450 = vld [vmem:[%s116 + $0x2968] sm:$0xff]
      %v1451 = vld [vmem:[%s116 + $0x2970] sm:$0xff]
      %v1452 = vld [vmem:[%s116 + $0x2978] sm:$0xff]
      %v1453 = vld [vmem:[%s116 + $0x2980] sm:$0xff]
      %v1454 = vld [vmem:[%s116 + $0x2988] sm:$0xff]
      %v1455 = vld [vmem:[%s116 + $0x2990] sm:$0xff]
      %v1456 = vld [vmem:[%s116 + $0x2998] sm:$0xff]
      %v1457 = vld [vmem:[%s116 + $0x29a0] sm:$0xff]
      %v1458 = vld [vmem:[%s116 + $0x29a8] sm:$0xff]
      %v1459 = vld [vmem:[%s116 + $0x29b0] sm:$0xff]
      %v1460 = vld [vmem:[%s116 + $0x29b8] sm:$0xff]
      %v1461 = vld [vmem:[%s116 + $0x29c0] sm:$0xff]
      %v1462 = vld [vmem:[%s116 + $0x29c8] sm:$0xff]
      %v1463 = vld [vmem:[%s116 + $0x29d0] sm:$0xff]
      %v1464 = vld [vmem:[%s116 + $0x29d8] sm:$0xff]
      %v1465 = vld [vmem:[%s116 + $0x29e0] sm:$0xff]
      %v1466 = vld [vmem:[%s116 + $0x29e8] sm:$0xff]
      %v1467 = vld [vmem:[%s116 + $0x29f0] sm:$0xff]
      %v1468 = vld [vmem:[%s116 + $0x29f8] sm:$0xff]
      %v1469 = vld [vmem:[%s116 + $0x2a00] sm:$0xff]
      %v1470 = vld [vmem:[%s116 + $0x2a08] sm:$0xff]
      %v1471 = vld [vmem:[%s116 + $0x2a10] sm:$0xff]
      %v1472 = vld [vmem:[%s116 + $0x2a18] sm:$0xff]
      %v1473 = vld [vmem:[%s116 + $0x2a20] sm:$0xff]
      %v1474 = vld [vmem:[%s116 + $0x2a28] sm:$0xff]
      %v1475 = vld [vmem:[%s116 + $0x2a30] sm:$0xff]
      %v1476 = vld [vmem:[%s116 + $0x2a38] sm:$0xff]
      %v1477 = vld [vmem:[%s116 + $0x2a40] sm:$0xff]
      %v1478 = vld [vmem:[%s116 + $0x2a48] sm:$0xff]
      %v1479 = vld [vmem:[%s116 + $0x2a50] sm:$0xff]
      %v1480 = vld [vmem:[%s116 + $0x2a58] sm:$0xff]
      %v1481 = vld [vmem:[%s116 + $0x2a60] sm:$0xff]
      %v1482 = vld [vmem:[%s116 + $0x2a68] sm:$0xff]
      %v1483 = vld [vmem:[%s116 + $0x2a70] sm:$0xff]
      %v1484 = vld [vmem:[%s116 + $0x2a78] sm:$0xff]
      %v1485 = vld [vmem:[%s116 + $0x2a80] sm:$0xff]
      %v1486 = vld [vmem:[%s116 + $0x2a88] sm:$0xff]
      %v1487 = vld [vmem:[%s116 + $0x2a90] sm:$0xff]
      %v1488 = vld [vmem:[%s116 + $0x2a98] sm:$0xff]
      %v1489 = vld [vmem:[%s116 + $0x2aa0] sm:$0xff]
      %v1490 = vld [vmem:[%s116 + $0x2aa8] sm:$0xff]
      %v1491 = vld [vmem:[%s116 + $0x2ab0] sm:$0xff]
      %v1492 = vld [vmem:[%s116 + $0x2ab8] sm:$0xff]
      %v1493 = vld [vmem:[%s116 + $0x2ac0] sm:$0xff]
      %v1494 = vld [vmem:[%s116 + $0x2ac8] sm:$0xff]
      %v1495 = vld [vmem:[%s116 + $0x2ad0] sm:$0xff]
      %v1496 = vld [vmem:[%s116 + $0x2ad8] sm:$0xff]
      %v1497 = vld [vmem:[%s116 + $0x2ae0] sm:$0xff]
      %v1498 = vld [vmem:[%s116 + $0x2ae8] sm:$0xff]
      %v1499 = vld [vmem:[%s116 + $0x2af0] sm:$0xff]
      %v1500 = vld [vmem:[%s116 + $0x2af8] sm:$0xff]
      %v1501 = vld [vmem:[%s116 + $0x2b00] sm:$0xff]
      %v1502 = vld [vmem:[%s116 + $0x2b08] sm:$0xff]
      %v1503 = vld [vmem:[%s116 + $0x2b10] sm:$0xff]
      %v1504 = vld [vmem:[%s116 + $0x2b18] sm:$0xff]
      %v1505 = vld [vmem:[%s116 + $0x2b20] sm:$0xff]
      %v1506 = vld [vmem:[%s116 + $0x2b28] sm:$0xff]
      %v1507 = vld [vmem:[%s116 + $0x2b30] sm:$0xff]
      %v1508 = vld [vmem:[%s116 + $0x2b38] sm:$0xff]
      %v1509 = vld [vmem:[%s116 + $0x2b40] sm:$0xff]
      %v1510 = vld [vmem:[%s116 + $0x2b48] sm:$0xff]
      %v1511 = vld [vmem:[%s116 + $0x2b50] sm:$0xff]
      %v1512 = vld [vmem:[%s116 + $0x2b58] sm:$0xff]
      %v1513 = vld [vmem:[%s116 + $0x2b60] sm:$0xff]
      %v1514 = vld [vmem:[%s116 + $0x2b68] sm:$0xff]
      %v1515 = vld [vmem:[%s116 + $0x2b70] sm:$0xff]
      %v1516 = vld [vmem:[%s116 + $0x2b78] sm:$0xff]
      %v1517 = vld [vmem:[%s116 + $0x2b80] sm:$0xff]
      %v1518 = vld [vmem:[%s116 + $0x2b88] sm:$0xff]
      %v1519 = vld [vmem:[%s116 + $0x2b90] sm:$0xff]
      %v1520 = vld [vmem:[%s116 + $0x2b98] sm:$0xff]
      %v1521 = vld [vmem:[%s116 + $0x2ba0] sm:$0xff]
      %v1522 = vld [vmem:[%s116 + $0x2ba8] sm:$0xff]
      %v1523 = vld [vmem:[%s116 + $0x2bb0] sm:$0xff]
      %v1524 = vld [vmem:[%s116 + $0x2bb8] sm:$0xff]
      %v1525 = vld [vmem:[%s116 + $0x2bc0] sm:$0xff]
      %v1526 = vld [vmem:[%s116 + $0x2bc8] sm:$0xff]
      %v1527 = vld [vmem:[%s116 + $0x2bd0] sm:$0xff]
      %v1528 = vld [vmem:[%s116 + $0x2bd8] sm:$0xff]
      %v1529 = vld [vmem:[%s116 + $0x2be0] sm:$0xff]
      %v1530 = vld [vmem:[%s116 + $0x2be8] sm:$0xff]
      %v1531 = vld [vmem:[%s116 + $0x2bf0] sm:$0xff]
      %v1532 = vld [vmem:[%s116 + $0x2bf8] sm:$0xff]
      %v1533 = vld [vmem:[%s116 + $0x2c00] sm:$0xff]
      %v1534 = vld [vmem:[%s116 + $0x2c08] sm:$0xff]
      %v1535 = vld [vmem:[%s116 + $0x2c10] sm:$0xff]
      %v1536 = vld [vmem:[%s116 + $0x2c18] sm:$0xff]
      %v1537 = vld [vmem:[%s116 + $0x2c20] sm:$0xff]
      %v1538 = vld [vmem:[%s116 + $0x2c28] sm:$0xff]
      %v1539 = vld [vmem:[%s116 + $0x2c30] sm:$0xff]
      %v1540 = vld [vmem:[%s116 + $0x2c38] sm:$0xff]
      %v1541 = vld [vmem:[%s116 + $0x2c40] sm:$0xff]
      %v1542 = vld [vmem:[%s116 + $0x2c48] sm:$0xff]
      %v1543 = vld [vmem:[%s116 + $0x2c50] sm:$0xff]
      %v1544 = vld [vmem:[%s116 + $0x2c58] sm:$0xff]
      %v1545 = vld [vmem:[%s116 + $0x2c60] sm:$0xff]
      %v1546 = vld [vmem:[%s116 + $0x2c68] sm:$0xff]
      %v1547 = vld [vmem:[%s116 + $0x2c70] sm:$0xff]
      %v1548 = vld [vmem:[%s116 + $0x2c78] sm:$0xff]
      %v1549 = vld [vmem:[%s116 + $0x2c80] sm:$0xff]
      %v1550 = vld [vmem:[%s116 + $0x2c88] sm:$0xff]
      %v1551 = vld [vmem:[%s116 + $0x2c90] sm:$0xff]
      %v1552 = vld [vmem:[%s116 + $0x2c98] sm:$0xff]
      %v1553 = vld [vmem:[%s116 + $0x2ca0] sm:$0xff]
      %v1554 = vld [vmem:[%s116 + $0x2ca8] sm:$0xff]
      %v1555 = vld [vmem:[%s116 + $0x2cb0] sm:$0xff]
      %v1556 = vld [vmem:[%s116 + $0x2cb8] sm:$0xff]
      %v1557 = vld [vmem:[%s116 + $0x2cc0] sm:$0xff]
      %v1558 = vld [vmem:[%s116 + $0x2cc8] sm:$0xff]
      %v1559 = vld [vmem:[%s116 + $0x2cd0] sm:$0xff]
      %v1560 = vld [vmem:[%s116 + $0x2cd8] sm:$0xff]
      %v1561 = vld [vmem:[%s116 + $0x2ce0] sm:$0xff]
      %v1562 = vld [vmem:[%s116 + $0x2ce8] sm:$0xff]
      %v1563 = vld [vmem:[%s116 + $0x2cf0] sm:$0xff]
      %v1564 = vld [vmem:[%s116 + $0x2cf8] sm:$0xff]
      %v1565 = vld [vmem:[%s116 + $0x2d00] sm:$0xff]
      %v1566 = vld [vmem:[%s116 + $0x2d08] sm:$0xff]
      %v1567 = vld [vmem:[%s116 + $0x2d10] sm:$0xff]
      %v1568 = vld [vmem:[%s116 + $0x2d18] sm:$0xff]
      %v1569 = vld [vmem:[%s116 + $0x2d20] sm:$0xff]
      %v1570 = vld [vmem:[%s116 + $0x2d28] sm:$0xff]
      %v1571 = vld [vmem:[%s116 + $0x2d30] sm:$0xff]
      %v1572 = vld [vmem:[%s116 + $0x2d38] sm:$0xff]
      %v1573 = vld [vmem:[%s116 + $0x2d40] sm:$0xff]
      %v1574 = vld [vmem:[%s116 + $0x2d48] sm:$0xff]
      %v1575 = vld [vmem:[%s116 + $0x2d50] sm:$0xff]
      %v1576 = vld [vmem:[%s116 + $0x2d58] sm:$0xff]
      %v1577 = vld [vmem:[%s116 + $0x2d60] sm:$0xff]
      %v1578 = vld [vmem:[%s116 + $0x2d68] sm:$0xff]
      %v1579 = vld [vmem:[%s116 + $0x2d70] sm:$0xff]
      %v1580 = vld [vmem:[%s116 + $0x2d78] sm:$0xff]
      %v1581 = vld [vmem:[%s116 + $0x2d80] sm:$0xff]
      %v1582 = vld [vmem:[%s116 + $0x2d88] sm:$0xff]
      %v1583 = vld [vmem:[%s116 + $0x2d90] sm:$0xff]
      %v1584 = vld [vmem:[%s116 + $0x2d98] sm:$0xff]
      %v1585 = vld [vmem:[%s116 + $0x2da0] sm:$0xff]
      %v1586 = vld [vmem:[%s116 + $0x2da8] sm:$0xff]
      %v1587 = vld [vmem:[%s116 + $0x2db0] sm:$0xff]
      %v1588 = vld [vmem:[%s116 + $0x2db8] sm:$0xff]
      %v1589 = vld [vmem:[%s116 + $0x2dc0] sm:$0xff]
      %v1590 = vld [vmem:[%s116 + $0x2dc8] sm:$0xff]
      %v1591 = vld [vmem:[%s116 + $0x2dd0] sm:$0xff]
      %v1592 = vld [vmem:[%s116 + $0x2dd8] sm:$0xff]
      %v1593 = vld [vmem:[%s116 + $0x2de0] sm:$0xff]
      %v1594 = vld [vmem:[%s116 + $0x2de8] sm:$0xff]
      %v1595 = vld [vmem:[%s116 + $0x2df0] sm:$0xff]
      %v1596 = vld [vmem:[%s116 + $0x2df8] sm:$0xff]
      %v1597 = vld [vmem:[%s116 + $0x2e00] sm:$0xff]
      %v1598 = vld [vmem:[%s116 + $0x2e08] sm:$0xff]
      %v1599 = vld [vmem:[%s116 + $0x2e10] sm:$0xff]
      %v1600 = vld [vmem:[%s116 + $0x2e18] sm:$0xff]
      %v1601 = vld [vmem:[%s116 + $0x2e20] sm:$0xff]
      %v1602 = vld [vmem:[%s116 + $0x2e28] sm:$0xff]
      %v1603 = vld [vmem:[%s116 + $0x2e30] sm:$0xff]
      %v1604 = vld [vmem:[%s116 + $0x2e38] sm:$0xff]
      %v1605 = vld [vmem:[%s116 + $0x2e40] sm:$0xff]
      %v1606 = vld [vmem:[%s116 + $0x2e48] sm:$0xff]
      %v1607 = vld [vmem:[%s116 + $0x2e50] sm:$0xff]
      %v1608 = vld [vmem:[%s116 + $0x2e58] sm:$0xff]
      %v1609 = vld [vmem:[%s116 + $0x2e60] sm:$0xff]
      %v1610 = vld [vmem:[%s116 + $0x2e68] sm:$0xff]
      %v1611 = vld [vmem:[%s116 + $0x2e70] sm:$0xff]
      %v1612 = vld [vmem:[%s116 + $0x2e78] sm:$0xff]
      %v1613 = vld [vmem:[%s116 + $0x2e80] sm:$0xff]
      %v1614 = vld [vmem:[%s116 + $0x2e88] sm:$0xff]
      %v1615 = vld [vmem:[%s116 + $0x2e90] sm:$0xff]
      %v1616 = vld [vmem:[%s116 + $0x2e98] sm:$0xff]
      %v1617 = vld [vmem:[%s116 + $0x2ea0] sm:$0xff]
      %v1618 = vld [vmem:[%s116 + $0x2ea8] sm:$0xff]
      %v1619 = vld [vmem:[%s116 + $0x2eb0] sm:$0xff]
      %v1620 = vld [vmem:[%s116 + $0x2eb8] sm:$0xff]
      %v1621 = vld [vmem:[%s116 + $0x2ec0] sm:$0xff]
      %v1622 = vld [vmem:[%s116 + $0x2ec8] sm:$0xff]
      %v1623 = vld [vmem:[%s116 + $0x2ed0] sm:$0xff]
      %v1624 = vld [vmem:[%s116 + $0x2ed8] sm:$0xff]
      %v1625 = vld [vmem:[%s116 + $0x2ee0] sm:$0xff]
      %v1626 = vld [vmem:[%s116 + $0x2ee8] sm:$0xff]
      %v1627 = vld [vmem:[%s116 + $0x2ef0] sm:$0xff]
      %v1628 = vld [vmem:[%s116 + $0x2ef8] sm:$0xff]
      %v1629 = vld [vmem:[%s116 + $0x2f00] sm:$0xff]
      %v1630 = vld [vmem:[%s116 + $0x2f08] sm:$0xff]
      %v1631 = vld [vmem:[%s116 + $0x2f10] sm:$0xff]
      %v1632 = vld [vmem:[%s116 + $0x2f18] sm:$0xff]
      %v1633 = vld [vmem:[%s116 + $0x2f20] sm:$0xff]
      %v1634 = vld [vmem:[%s116 + $0x2f28] sm:$0xff]
      %v1635 = vld [vmem:[%s116 + $0x2f30] sm:$0xff]
      %v1636 = vld [vmem:[%s116 + $0x2f38] sm:$0xff]
      %v1637 = vld [vmem:[%s116 + $0x2f40] sm:$0xff]
      %v1638 = vld [vmem:[%s116 + $0x2f48] sm:$0xff]
      %v1639 = vld [vmem:[%s116 + $0x2f50] sm:$0xff]
      %v1640 = vld [vmem:[%s116 + $0x2f58] sm:$0xff]
      %v1641 = vld [vmem:[%s116 + $0x2f60] sm:$0xff]
      %v1642 = vld [vmem:[%s116 + $0x2f68] sm:$0xff]
      %v1643 = vld [vmem:[%s116 + $0x2f70] sm:$0xff]
      %v1644 = vld [vmem:[%s116 + $0x2f78] sm:$0xff]
      %v1645 = vld [vmem:[%s116 + $0x2f80] sm:$0xff]
      %v1646 = vld [vmem:[%s116 + $0x2f88] sm:$0xff]
      %v1647 = vld [vmem:[%s116 + $0x2f90] sm:$0xff]
      %v1648 = vld [vmem:[%s116 + $0x2f98] sm:$0xff]
      %v1649 = vld [vmem:[%s116 + $0x2fa0] sm:$0xff]
      %v1650 = vld [vmem:[%s116 + $0x2fa8] sm:$0xff]
      %v1651 = vld [vmem:[%s116 + $0x2fb0] sm:$0xff]
      %v1652 = vld [vmem:[%s116 + $0x2fb8] sm:$0xff]
      %v1653 = vld [vmem:[%s116 + $0x2fc0] sm:$0xff]
      %v1654 = vld [vmem:[%s116 + $0x2fc8] sm:$0xff]
      %v1655 = vld [vmem:[%s116 + $0x2fd0] sm:$0xff]
      %v1656 = vld [vmem:[%s116 + $0x2fd8] sm:$0xff]
      %v1657 = vld [vmem:[%s116 + $0x2fe0] sm:$0xff]
      %v1658 = vld [vmem:[%s116 + $0x2fe8] sm:$0xff]
      %v1659 = vld [vmem:[%s116 + $0x2ff0] sm:$0xff]
      %v1660 = vld [vmem:[%s116 + $0x2ff8] sm:$0xff]
      %v1661 = vld [vmem:[%s116 + $0x3000] sm:$0xff]
      %v1662 = vld [vmem:[%s116 + $0x3008] sm:$0xff]
      %v1663 = vld [vmem:[%s116 + $0x3010] sm:$0xff]
      %v1664 = vld [vmem:[%s116 + $0x3018] sm:$0xff]
      %v1665 = vld [vmem:[%s116 + $0x3020] sm:$0xff]
      %v1666 = vld [vmem:[%s116 + $0x3028] sm:$0xff]
      %v1667 = vld [vmem:[%s116 + $0x3030] sm:$0xff]
      %v1668 = vld [vmem:[%s116 + $0x3038] sm:$0xff]
      %v1669 = vld [vmem:[%s116 + $0x3040] sm:$0xff]
      %v1670 = vld [vmem:[%s116 + $0x3048] sm:$0xff]
      %v1671 = vld [vmem:[%s116 + $0x3050] sm:$0xff]
      %v1672 = vld [vmem:[%s116 + $0x3058] sm:$0xff]
      %v1673 = vld [vmem:[%s116 + $0x3060] sm:$0xff]
      %v1674 = vld [vmem:[%s116 + $0x3068] sm:$0xff]
      %v1675 = vld [vmem:[%s116 + $0x3070] sm:$0xff]
      %v1676 = vld [vmem:[%s116 + $0x3078] sm:$0xff]
      %v1677 = vld [vmem:[%s116 + $0x3080] sm:$0xff]
      %v1678 = vld [vmem:[%s116 + $0x3088] sm:$0xff]
      %v1679 = vld [vmem:[%s116 + $0x3090] sm:$0xff]
      %v1680 = vld [vmem:[%s116 + $0x3098] sm:$0xff]
      %v1681 = vld [vmem:[%s116 + $0x30a0] sm:$0xff]
      %v1682 = vld [vmem:[%s116 + $0x30a8] sm:$0xff]
      %v1683 = vld [vmem:[%s116 + $0x30b0] sm:$0xff]
      %v1684 = vld [vmem:[%s116 + $0x30b8] sm:$0xff]
      %v1685 = vld [vmem:[%s116 + $0x30c0] sm:$0xff]
      %v1686 = vld [vmem:[%s116 + $0x30c8] sm:$0xff]
      %v1687 = vld [vmem:[%s116 + $0x30d0] sm:$0xff]
      %v1688 = vld [vmem:[%s116 + $0x30d8] sm:$0xff]
      %v1689 = vld [vmem:[%s116 + $0x30e0] sm:$0xff]
      %v1690 = vld [vmem:[%s116 + $0x30e8] sm:$0xff]
      %v1691 = vld [vmem:[%s116 + $0x30f0] sm:$0xff]
      %v1692 = vld [vmem:[%s116 + $0x30f8] sm:$0xff]
      %v1693 = vld [vmem:[%s116 + $0x3100] sm:$0xff]
      %v1694 = vld [vmem:[%s116 + $0x3108] sm:$0xff]
      %v1695 = vld [vmem:[%s116 + $0x3110] sm:$0xff]
      %v1696 = vld [vmem:[%s116 + $0x3118] sm:$0xff]
      %v1697 = vld [vmem:[%s116 + $0x3120] sm:$0xff]
      %v1698 = vld [vmem:[%s116 + $0x3128] sm:$0xff]
      %v1699 = vld [vmem:[%s116 + $0x3130] sm:$0xff]
      %v1700 = vld [vmem:[%s116 + $0x3138] sm:$0xff]
      %v1701 = vld [vmem:[%s116 + $0x3140] sm:$0xff]
      %v1702 = vld [vmem:[%s116 + $0x3148] sm:$0xff]
      %v1703 = vld [vmem:[%s116 + $0x3150] sm:$0xff]
      %v1704 = vld [vmem:[%s116 + $0x3158] sm:$0xff]
      %v1705 = vld [vmem:[%s116 + $0x3160] sm:$0xff]
      %v1706 = vld [vmem:[%s116 + $0x3168] sm:$0xff]
      %v1707 = vld [vmem:[%s116 + $0x3170] sm:$0xff]
      %v1708 = vld [vmem:[%s116 + $0x3178] sm:$0xff]
      %v1709 = vld [vmem:[%s116 + $0x3180] sm:$0xff]
      %v1710 = vld [vmem:[%s116 + $0x3188] sm:$0xff]
      %v1711 = vld [vmem:[%s116 + $0x3190] sm:$0xff]
      %v1712 = vld [vmem:[%s116 + $0x3198] sm:$0xff]
      %v1713 = vld [vmem:[%s116 + $0x31a0] sm:$0xff]
      %v1714 = vld [vmem:[%s116 + $0x31a8] sm:$0xff]
      %v1715 = vld [vmem:[%s116 + $0x31b0] sm:$0xff]
      %v1716 = vld [vmem:[%s116 + $0x31b8] sm:$0xff]
      %v1717 = vld [vmem:[%s116 + $0x31c0] sm:$0xff]
      %v1718 = vld [vmem:[%s116 + $0x31c8] sm:$0xff]
      %v1719 = vld [vmem:[%s116 + $0x31d0] sm:$0xff]
      %v1720 = vld [vmem:[%s116 + $0x31d8] sm:$0xff]
      %v1721 = vld [vmem:[%s116 + $0x31e0] sm:$0xff]
      %v1722 = vld [vmem:[%s116 + $0x31e8] sm:$0xff]
      %v1723 = vld [vmem:[%s116 + $0x31f0] sm:$0xff]
      %v1724 = vld [vmem:[%s116 + $0x31f8] sm:$0xff]
      %v1725 = vld [vmem:[%s116 + $0x3200] sm:$0xff]
      %v1726 = vld [vmem:[%s116 + $0x3208] sm:$0xff]
      %v1727 = vld [vmem:[%s116 + $0x3210] sm:$0xff]
      %v1728 = vld [vmem:[%s116 + $0x3218] sm:$0xff]
      %v1729 = vld [vmem:[%s116 + $0x3220] sm:$0xff]
      %v1730 = vld [vmem:[%s116 + $0x3228] sm:$0xff]
      %v1731 = vld [vmem:[%s116 + $0x3230] sm:$0xff]
      %v1732 = vld [vmem:[%s116 + $0x3238] sm:$0xff]
      %v1733 = vld [vmem:[%s116 + $0x3240] sm:$0xff]
      %v1734 = vld [vmem:[%s116 + $0x3248] sm:$0xff]
      %v1735 = vld [vmem:[%s116 + $0x3250] sm:$0xff]
      %v1736 = vld [vmem:[%s116 + $0x3258] sm:$0xff]
      %v1737 = vld [vmem:[%s116 + $0x3260] sm:$0xff]
      %v1738 = vld [vmem:[%s116 + $0x3268] sm:$0xff]
      %v1739 = vld [vmem:[%s116 + $0x3270] sm:$0xff]
      %v1740 = vld [vmem:[%s116 + $0x3278] sm:$0xff]
      %v1741 = vld [vmem:[%s116 + $0x3280] sm:$0xff]
      %v1742 = vld [vmem:[%s116 + $0x3288] sm:$0xff]
      %v1743 = vld [vmem:[%s116 + $0x3290] sm:$0xff]
      %v1744 = vld [vmem:[%s116 + $0x3298] sm:$0xff]
      %v1745 = vld [vmem:[%s116 + $0x32a0] sm:$0xff]
      %v1746 = vld [vmem:[%s116 + $0x32a8] sm:$0xff]
      %v1747 = vld [vmem:[%s116 + $0x32b0] sm:$0xff]
      %v1748 = vld [vmem:[%s116 + $0x32b8] sm:$0xff]
      %v1749 = vld [vmem:[%s116 + $0x32c0] sm:$0xff]
      %v1750 = vld [vmem:[%s116 + $0x32c8] sm:$0xff]
      %v1751 = vld [vmem:[%s116 + $0x32d0] sm:$0xff]
      %v1752 = vld [vmem:[%s116 + $0x32d8] sm:$0xff]
      %v1753 = vld [vmem:[%s116 + $0x32e0] sm:$0xff]
      %v1754 = vld [vmem:[%s116 + $0x32e8] sm:$0xff]
      %v1755 = vld [vmem:[%s116 + $0x32f0] sm:$0xff]
      %v1756 = vld [vmem:[%s116 + $0x32f8] sm:$0xff]
      %v1757 = vld [vmem:[%s116 + $0x3300] sm:$0xff]
      %v1758 = vld [vmem:[%s116 + $0x3308] sm:$0xff]
      %v1759 = vld [vmem:[%s116 + $0x3310] sm:$0xff]
      %v1760 = vld [vmem:[%s116 + $0x3318] sm:$0xff]
      %v1761 = vld [vmem:[%s116 + $0x3320] sm:$0xff]
      %v1762 = vld [vmem:[%s116 + $0x3328] sm:$0xff]
      %v1763 = vld [vmem:[%s116 + $0x3330] sm:$0xff]
      %v1764 = vld [vmem:[%s116 + $0x3338] sm:$0xff]
      %v1765 = vld [vmem:[%s116 + $0x3340] sm:$0xff]
      %v1766 = vld [vmem:[%s116 + $0x3348] sm:$0xff]
      %v1767 = vld [vmem:[%s116 + $0x3350] sm:$0xff]
      %v1768 = vld [vmem:[%s116 + $0x3358] sm:$0xff]
      %v1769 = vld [vmem:[%s116 + $0x3360] sm:$0xff]
      %v1770 = vld [vmem:[%s116 + $0x3368] sm:$0xff]
      %v1771 = vld [vmem:[%s116 + $0x3370] sm:$0xff]
      %v1772 = vld [vmem:[%s116 + $0x3378] sm:$0xff]
      %v1773 = vld [vmem:[%s116 + $0x3380] sm:$0xff]
      %v1774 = vld [vmem:[%s116 + $0x3388] sm:$0xff]
      %v1775 = vld [vmem:[%s116 + $0x3390] sm:$0xff]
      %v1776 = vld [vmem:[%s116 + $0x3398] sm:$0xff]
      %v1777 = vld [vmem:[%s116 + $0x33a0] sm:$0xff]
      %v1778 = vld [vmem:[%s116 + $0x33a8] sm:$0xff]
      %v1779 = vld [vmem:[%s116 + $0x33b0] sm:$0xff]
      %v1780 = vld [vmem:[%s116 + $0x33b8] sm:$0xff]
      %v1781 = vld [vmem:[%s116 + $0x33c0] sm:$0xff]
      %v1782 = vld [vmem:[%s116 + $0x33c8] sm:$0xff]
      %v1783 = vld [vmem:[%s116 + $0x33d0] sm:$0xff]
      %v1784 = vld [vmem:[%s116 + $0x33d8] sm:$0xff]
      %v1785 = vld [vmem:[%s116 + $0x33e0] sm:$0xff]
      %v1786 = vld [vmem:[%s116 + $0x33e8] sm:$0xff]
      %v1787 = vld [vmem:[%s116 + $0x33f0] sm:$0xff]
      %v1788 = vld [vmem:[%s116 + $0x33f8] sm:$0xff]
      %v1789 = vld [vmem:[%s116 + $0x3400] sm:$0xff]
      %v1790 = vld [vmem:[%s116 + $0x3408] sm:$0xff]
      %v1791 = vld [vmem:[%s116 + $0x3410] sm:$0xff]
      %v1792 = vld [vmem:[%s116 + $0x3418] sm:$0xff]
      %v1793 = vld [vmem:[%s116 + $0x3420] sm:$0xff]
      %v1794 = vld [vmem:[%s116 + $0x3428] sm:$0xff]
      %v1795 = vld [vmem:[%s116 + $0x3430] sm:$0xff]
      %v1796 = vld [vmem:[%s116 + $0x3438] sm:$0xff]
      %v1797 = vld [vmem:[%s116 + $0x3440] sm:$0xff]
      %v1798 = vld [vmem:[%s116 + $0x3448] sm:$0xff]
      %v1799 = vld [vmem:[%s116 + $0x3450] sm:$0xff]
      %v1800 = vld [vmem:[%s116 + $0x3458] sm:$0xff]
      %v1801 = vld [vmem:[%s116 + $0x3460] sm:$0xff]
      %v1802 = vld [vmem:[%s116 + $0x3468] sm:$0xff]
      %v1803 = vld [vmem:[%s116 + $0x3470] sm:$0xff]
      %v1804 = vld [vmem:[%s116 + $0x3478] sm:$0xff]
      %v1805 = vld [vmem:[%s116 + $0x3480] sm:$0xff]
      %v1806 = vld [vmem:[%s116 + $0x3488] sm:$0xff]
      %v1807 = vld [vmem:[%s116 + $0x3490] sm:$0xff]
      %v1808 = vld [vmem:[%s116 + $0x3498] sm:$0xff]
      %v1809 = vld [vmem:[%s116 + $0x34a0] sm:$0xff]
      %v1810 = vld [vmem:[%s116 + $0x34a8] sm:$0xff]
      %v1811 = vld [vmem:[%s116 + $0x34b0] sm:$0xff]
      %v1812 = vld [vmem:[%s116 + $0x34b8] sm:$0xff]
      %v1813 = vld [vmem:[%s116 + $0x34c0] sm:$0xff]
      %v1814 = vld [vmem:[%s116 + $0x34c8] sm:$0xff]
      %v1815 = vld [vmem:[%s116 + $0x34d0] sm:$0xff]
      %v1816 = vld [vmem:[%s116 + $0x34d8] sm:$0xff]
      %v1817 = vld [vmem:[%s116 + $0x34e0] sm:$0xff]
      %v1818 = vld [vmem:[%s116 + $0x34e8] sm:$0xff]
      %v1819 = vld [vmem:[%s116 + $0x34f0] sm:$0xff]
      %v1820 = vld [vmem:[%s116 + $0x34f8] sm:$0xff]
      %v1821 = vld [vmem:[%s116 + $0x3500] sm:$0xff]
      %v1822 = vld [vmem:[%s116 + $0x3508] sm:$0xff]
      %v1823 = vld [vmem:[%s116 + $0x3510] sm:$0xff]
      %v1824 = vld [vmem:[%s116 + $0x3518] sm:$0xff]
      %v1825 = vld [vmem:[%s116 + $0x3520] sm:$0xff]
      %v1826 = vld [vmem:[%s116 + $0x3528] sm:$0xff]
      %v1827 = vld [vmem:[%s116 + $0x3530] sm:$0xff]
      %v1828 = vld [vmem:[%s116 + $0x3538] sm:$0xff]
      %v1829 = vld [vmem:[%s116 + $0x3540] sm:$0xff]
      %v1830 = vld [vmem:[%s116 + $0x3548] sm:$0xff]
      %v1831 = vld [vmem:[%s116 + $0x3550] sm:$0xff]
      %v1832 = vld [vmem:[%s116 + $0x3558] sm:$0xff]
      %v1833 = vld [vmem:[%s116 + $0x3560] sm:$0xff]
      %v1834 = vld [vmem:[%s116 + $0x3568] sm:$0xff]
      %v1835 = vld [vmem:[%s116 + $0x3570] sm:$0xff]
      %v1836 = vld [vmem:[%s116 + $0x3578] sm:$0xff]
      %v1837 = vld [vmem:[%s116 + $0x3580] sm:$0xff]
      %v1838 = vld [vmem:[%s116 + $0x3588] sm:$0xff]
      %v1839 = vld [vmem:[%s116 + $0x3590] sm:$0xff]
      %v1840 = vld [vmem:[%s116 + $0x3598] sm:$0xff]
      %v1841 = vld [vmem:[%s116 + $0x35a0] sm:$0xff]
      %v1842 = vld [vmem:[%s116 + $0x35a8] sm:$0xff]
      %v1843 = vld [vmem:[%s116 + $0x35b0] sm:$0xff]
      %v1844 = vld [vmem:[%s116 + $0x35b8] sm:$0xff]
      %v1845 = vld [vmem:[%s116 + $0x35c0] sm:$0xff]
      %v1846 = vld [vmem:[%s116 + $0x35c8] sm:$0xff]
      %v1847 = vld [vmem:[%s116 + $0x35d0] sm:$0xff]
      %v1848 = vld [vmem:[%s116 + $0x35d8] sm:$0xff]
      %v1849 = vld [vmem:[%s116 + $0x35e0] sm:$0xff]
      %v1850 = vld [vmem:[%s116 + $0x35e8] sm:$0xff]
      %v1851 = vld [vmem:[%s116 + $0x35f0] sm:$0xff]
      %v1852 = vld [vmem:[%s116 + $0x35f8] sm:$0xff]
      %v1853 = vld [vmem:[%s116 + $0x3600] sm:$0xff]
      %v1854 = vld [vmem:[%s116 + $0x3608] sm:$0xff]
      %v1855 = vld [vmem:[%s116 + $0x3610] sm:$0xff]
      %v1856 = vld [vmem:[%s116 + $0x3618] sm:$0xff]
      %v1857 = vld [vmem:[%s116 + $0x3620] sm:$0xff]
      %v1858 = vld [vmem:[%s116 + $0x3628] sm:$0xff]
      %v1859 = vld [vmem:[%s116 + $0x3630] sm:$0xff]
      %v1860 = vld [vmem:[%s116 + $0x3638] sm:$0xff]
      %v1861 = vld [vmem:[%s116 + $0x3640] sm:$0xff]
      %v1862 = vld [vmem:[%s116 + $0x3648] sm:$0xff]
      %v1863 = vld [vmem:[%s116 + $0x3650] sm:$0xff]
      %v1864 = vld [vmem:[%s116 + $0x3658] sm:$0xff]
      %v1865 = vld [vmem:[%s116 + $0x3660] sm:$0xff]
      %v1866 = vld [vmem:[%s116 + $0x3668] sm:$0xff]
      %v1867 = vld [vmem:[%s116 + $0x3670] sm:$0xff]
      %v1868 = vld [vmem:[%s116 + $0x3678] sm:$0xff]
      %v1869 = vld [vmem:[%s116 + $0x3680] sm:$0xff]
      %v1870 = vld [vmem:[%s116 + $0x3688] sm:$0xff]
      %v1871 = vld [vmem:[%s116 + $0x3690] sm:$0xff]
      %v1872 = vld [vmem:[%s116 + $0x3698] sm:$0xff]
      %v1873 = vld [vmem:[%s116 + $0x36a0] sm:$0xff]
      %v1874 = vld [vmem:[%s116 + $0x36a8] sm:$0xff]
      %v1875 = vld [vmem:[%s116 + $0x36b0] sm:$0xff]
      %v1876 = vld [vmem:[%s116 + $0x36b8] sm:$0xff]
      %v1877 = vld [vmem:[%s116 + $0x36c0] sm:$0xff]
      %v1878 = vld [vmem:[%s116 + $0x36c8] sm:$0xff]
      %v1879 = vld [vmem:[%s116 + $0x36d0] sm:$0xff]
      %v1880 = vld [vmem:[%s116 + $0x36d8] sm:$0xff]
      %v1881 = vld [vmem:[%s116 + $0x36e0] sm:$0xff]
      %v1882 = vld [vmem:[%s116 + $0x36e8] sm:$0xff]
      %v1883 = vld [vmem:[%s116 + $0x36f0] sm:$0xff]
      %v1884 = vld [vmem:[%s116 + $0x36f8] sm:$0xff]
      %v1885 = vld [vmem:[%s116 + $0x3700] sm:$0xff]
      %v1886 = vld [vmem:[%s116 + $0x3708] sm:$0xff]
      %v1887 = vld [vmem:[%s116 + $0x3710] sm:$0xff]
      %v1888 = vld [vmem:[%s116 + $0x3718] sm:$0xff]
      %v1889 = vld [vmem:[%s116 + $0x3720] sm:$0xff]
      %v1890 = vld [vmem:[%s116 + $0x3728] sm:$0xff]
      %v1891 = vld [vmem:[%s116 + $0x3730] sm:$0xff]
      %v1892 = vld [vmem:[%s116 + $0x3738] sm:$0xff]
      %v1893 = vld [vmem:[%s116 + $0x3740] sm:$0xff]
      %v1894 = vld [vmem:[%s116 + $0x3748] sm:$0xff]
      %v1895 = vld [vmem:[%s116 + $0x3750] sm:$0xff]
      %v1896 = vld [vmem:[%s116 + $0x3758] sm:$0xff]
      %v1897 = vld [vmem:[%s116 + $0x3760] sm:$0xff]
      %v1898 = vld [vmem:[%s116 + $0x3768] sm:$0xff]
      %v1899 = vld [vmem:[%s116 + $0x3770] sm:$0xff]
      %v1900 = vld [vmem:[%s116 + $0x3778] sm:$0xff]
      %v1901 = vld [vmem:[%s116 + $0x3780] sm:$0xff]
      %v1902 = vld [vmem:[%s116 + $0x3788] sm:$0xff]
      %v1903 = vld [vmem:[%s116 + $0x3790] sm:$0xff]
      %v1904 = vld [vmem:[%s116 + $0x3798] sm:$0xff]
      %v1905 = vld [vmem:[%s116 + $0x37a0] sm:$0xff]
      %v1906 = vld [vmem:[%s116 + $0x37a8] sm:$0xff]
      %v1907 = vld [vmem:[%s116 + $0x37b0] sm:$0xff]
      %v1908 = vld [vmem:[%s116 + $0x37b8] sm:$0xff]
      %v1909 = vld [vmem:[%s116 + $0x37c0] sm:$0xff]
      %v1910 = vld [vmem:[%s116 + $0x37c8] sm:$0xff]
      %v1911 = vld [vmem:[%s116 + $0x37d0] sm:$0xff]
      %v1912 = vld [vmem:[%s116 + $0x37d8] sm:$0xff]
      %v1913 = vld [vmem:[%s116 + $0x37e0] sm:$0xff]
      %v1914 = vld [vmem:[%s116 + $0x37e8] sm:$0xff]
      %v1915 = vld [vmem:[%s116 + $0x37f0] sm:$0xff]
      %v1916 = vld [vmem:[%s116 + $0x37f8] sm:$0xff]
      %v1917 = vld [vmem:[%s116 + $0x3800] sm:$0xff]
      %v1918 = vld [vmem:[%s116 + $0x3808] sm:$0xff]
      %v1919 = vld [vmem:[%s116 + $0x3810] sm:$0xff]
      %v1920 = vld [vmem:[%s116 + $0x3818] sm:$0xff]
      %v1921 = vld [vmem:[%s116 + $0x3820] sm:$0xff]
      %v1922 = vld [vmem:[%s116 + $0x3828] sm:$0xff]
      %v1923 = vld [vmem:[%s116 + $0x3830] sm:$0xff]
      %v1924 = vld [vmem:[%s116 + $0x3838] sm:$0xff]
      %v1925 = vld [vmem:[%s116 + $0x3840] sm:$0xff]
      %v1926 = vld [vmem:[%s116 + $0x3848] sm:$0xff]
      %v1927 = vld [vmem:[%s116 + $0x3850] sm:$0xff]
      %v1928 = vld [vmem:[%s116 + $0x3858] sm:$0xff]
      %v1929 = vld [vmem:[%s116 + $0x3860] sm:$0xff]
      %v1930 = vld [vmem:[%s116 + $0x3868] sm:$0xff]
      %v1931 = vld [vmem:[%s116 + $0x3870] sm:$0xff]
      %v1932 = vld [vmem:[%s116 + $0x3878] sm:$0xff]
      %v1933 = vld [vmem:[%s116 + $0x3880] sm:$0xff]
      %v1934 = vld [vmem:[%s116 + $0x3888] sm:$0xff]
      %v1935 = vld [vmem:[%s116 + $0x3890] sm:$0xff]
      %v1936 = vld [vmem:[%s116 + $0x3898] sm:$0xff]
      %v1937 = vld [vmem:[%s116 + $0x38a0] sm:$0xff]
      %v1938 = vld [vmem:[%s116 + $0x38a8] sm:$0xff]
      %v1939 = vld [vmem:[%s116 + $0x38b0] sm:$0xff]
      %v1940 = vld [vmem:[%s116 + $0x38b8] sm:$0xff]
      %v1941 = vld [vmem:[%s116 + $0x38c0] sm:$0xff]
      %v1942 = vld [vmem:[%s116 + $0x38c8] sm:$0xff]
      %v1943 = vld [vmem:[%s116 + $0x38d0] sm:$0xff]
      %v1944 = vld [vmem:[%s116 + $0x38d8] sm:$0xff]
      %v1945 = vld [vmem:[%s116 + $0x38e0] sm:$0xff]
      %v1946 = vld [vmem:[%s116 + $0x38e8] sm:$0xff]
      %v1947 = vld [vmem:[%s116 + $0x38f0] sm:$0xff]
      %v1948 = vld [vmem:[%s116 + $0x38f8] sm:$0xff]
      %v1949 = vld [vmem:[%s116 + $0x3900] sm:$0xff]
      %v1950 = vld [vmem:[%s116 + $0x3908] sm:$0xff]
      %v1951 = vld [vmem:[%s116 + $0x3910] sm:$0xff]
      %v1952 = vld [vmem:[%s116 + $0x3918] sm:$0xff]
      %v1953 = vld [vmem:[%s116 + $0x3920] sm:$0xff]
      %v1954 = vld [vmem:[%s116 + $0x3928] sm:$0xff]
      %v1955 = vld [vmem:[%s116 + $0x3930] sm:$0xff]
      %v1956 = vld [vmem:[%s116 + $0x3938] sm:$0xff]
      %v1957 = vld [vmem:[%s116 + $0x3940] sm:$0xff]
      %v1958 = vld [vmem:[%s116 + $0x3948] sm:$0xff]
      %v1959 = vld [vmem:[%s116 + $0x3950] sm:$0xff]
      %v1960 = vld [vmem:[%s116 + $0x3958] sm:$0xff]
      %v1961 = vld [vmem:[%s116 + $0x3960] sm:$0xff]
      %v1962 = vld [vmem:[%s116 + $0x3968] sm:$0xff]
      %v1963 = vld [vmem:[%s116 + $0x3970] sm:$0xff]
      %v1964 = vld [vmem:[%s116 + $0x3978] sm:$0xff]
      %v1965 = vld [vmem:[%s116 + $0x3980] sm:$0xff]
      %v1966 = vld [vmem:[%s116 + $0x3988] sm:$0xff]
      %v1967 = vld [vmem:[%s116 + $0x3990] sm:$0xff]
      %v1968 = vld [vmem:[%s116 + $0x3998] sm:$0xff]
      %v1969 = vld [vmem:[%s116 + $0x39a0] sm:$0xff]
      %v1970 = vld [vmem:[%s116 + $0x39a8] sm:$0xff]
      %v1971 = vld [vmem:[%s116 + $0x39b0] sm:$0xff]
      %v1972 = vld [vmem:[%s116 + $0x39b8] sm:$0xff]
      %v1973 = vld [vmem:[%s116 + $0x39c0] sm:$0xff]
      %v1974 = vld [vmem:[%s116 + $0x39c8] sm:$0xff]
      %v1975 = vld [vmem:[%s116 + $0x39d0] sm:$0xff]
      %v1976 = vld [vmem:[%s116 + $0x39d8] sm:$0xff]
      %v1977 = vld [vmem:[%s116 + $0x39e0] sm:$0xff]
      %v1978 = vld [vmem:[%s116 + $0x39e8] sm:$0xff]
      %v1979 = vld [vmem:[%s116 + $0x39f0] sm:$0xff]
      %v1980 = vld [vmem:[%s116 + $0x39f8] sm:$0xff]
      %v1981 = vld [vmem:[%s116 + $0x3a00] sm:$0xff]
      %v1982 = vld [vmem:[%s116 + $0x3a08] sm:$0xff]
      %v1983 = vld [vmem:[%s116 + $0x3a10] sm:$0xff]
      %v1984 = vld [vmem:[%s116 + $0x3a18] sm:$0xff]
      %v1985 = vld [vmem:[%s116 + $0x3a20] sm:$0xff]
      %v1986 = vld [vmem:[%s116 + $0x3a28] sm:$0xff]
      %v1987 = vld [vmem:[%s116 + $0x3a30] sm:$0xff]
      %v1988 = vld [vmem:[%s116 + $0x3a38] sm:$0xff]
      %v1989 = vld [vmem:[%s116 + $0x3a40] sm:$0xff]
      %v1990 = vld [vmem:[%s116 + $0x3a48] sm:$0xff]
      %v1991 = vld [vmem:[%s116 + $0x3a50] sm:$0xff]
      %v1992 = vld [vmem:[%s116 + $0x3a58] sm:$0xff]
      %v1993 = vld [vmem:[%s116 + $0x3a60] sm:$0xff]
      %v1994 = vld [vmem:[%s116 + $0x3a68] sm:$0xff]
      %v1995 = vld [vmem:[%s116 + $0x3a70] sm:$0xff]
      %v1996 = vld [vmem:[%s116 + $0x3a78] sm:$0xff]
      %v1997 = vld [vmem:[%s116 + $0x3a80] sm:$0xff]
      %v1998 = vld [vmem:[%s116 + $0x3a88] sm:$0xff]
      %v1999 = vld [vmem:[%s116 + $0x3a90] sm:$0xff]
      %v2000 = vld [vmem:[%s116 + $0x3a98] sm:$0xff]
      %v2001 = vld [vmem:[%s116 + $0x3aa0] sm:$0xff]
      %v2002 = vld [vmem:[%s116 + $0x3aa8] sm:$0xff]
      %v2003 = vld [vmem:[%s116 + $0x3ab0] sm:$0xff]
      %v2004 = vld [vmem:[%s116 + $0x3ab8] sm:$0xff]
      %v2005 = vld [vmem:[%s116 + $0x3ac0] sm:$0xff]
      %v2006 = vld [vmem:[%s116 + $0x3ac8] sm:$0xff]
      %v2007 = vld [vmem:[%s116 + $0x3ad0] sm:$0xff]
      %v2008 = vld [vmem:[%s116 + $0x3ad8] sm:$0xff]
      %v2009 = vld [vmem:[%s116 + $0x3ae0] sm:$0xff]
      %v2010 = vld [vmem:[%s116 + $0x3ae8] sm:$0xff]
      %v2011 = vld [vmem:[%s116 + $0x3af0] sm:$0xff]
      %v2012 = vld [vmem:[%s116 + $0x3af8] sm:$0xff]
      %v2013 = vld [vmem:[%s116 + $0x3b00] sm:$0xff]
      %v2014 = vld [vmem:[%s116 + $0x3b08] sm:$0xff]
      %v2015 = vld [vmem:[%s116 + $0x3b10] sm:$0xff]
      %v2016 = vld [vmem:[%s116 + $0x3b18] sm:$0xff]
      %v2017 = vld [vmem:[%s116 + $0x3b20] sm:$0xff]
      %v2018 = vld [vmem:[%s116 + $0x3b28] sm:$0xff]
      %v2019 = vld [vmem:[%s116 + $0x3b30] sm:$0xff]
      %v2020 = vld [vmem:[%s116 + $0x3b38] sm:$0xff]
      %v2021 = vld [vmem:[%s116 + $0x3b40] sm:$0xff]
      %v2022 = vld [vmem:[%s116 + $0x3b48] sm:$0xff]
      %v2023 = vld [vmem:[%s116 + $0x3b50] sm:$0xff]
      %v2024 = vld [vmem:[%s116 + $0x3b58] sm:$0xff]
      %v2025 = vld [vmem:[%s116 + $0x3b60] sm:$0xff]
      %v2026 = vld [vmem:[%s116 + $0x3b68] sm:$0xff]
      %v2027 = vld [vmem:[%s116 + $0x3b70] sm:$0xff]
      %v2028 = vld [vmem:[%s116 + $0x3b78] sm:$0xff]
      %v2029 = vld [vmem:[%s116 + $0x3b80] sm:$0xff]
      %v2030 = vld [vmem:[%s116 + $0x3b88] sm:$0xff]
      %v2031 = vld [vmem:[%s116 + $0x3b90] sm:$0xff]
      %v2032 = vld [vmem:[%s116 + $0x3b98] sm:$0xff]
      %v2033 = vld [vmem:[%s116 + $0x3ba0] sm:$0xff]
      %v2034 = vld [vmem:[%s116 + $0x3ba8] sm:$0xff]
      %v2035 = vld [vmem:[%s116 + $0x3bb0] sm:$0xff]
      %v2036 = vld [vmem:[%s116 + $0x3bb8] sm:$0xff]
      %v2037 = vld [vmem:[%s116 + $0x3bc0] sm:$0xff]
      %v2038 = vld [vmem:[%s116 + $0x3bc8] sm:$0xff]
      %v2039 = vld [vmem:[%s116 + $0x3bd0] sm:$0xff]
      %v2040 = vld [vmem:[%s116 + $0x3bd8] sm:$0xff]
      %v2041 = vld [vmem:[%s116 + $0x3be0] sm:$0xff]
      %v2042 = vld [vmem:[%s116 + $0x3be8] sm:$0xff]
      %v2043 = vld [vmem:[%s116 + $0x3bf0] sm:$0xff]
      %v2044 = vld [vmem:[%s116 + $0x3bf8] sm:$0xff]
      %v2045 = vld [vmem:[%s116 + $0x3c00] sm:$0xff]
      %v2046 = vld [vmem:[%s116 + $0x3c08] sm:$0xff]
      %v2047 = vld [vmem:[%s116 + $0x3c10] sm:$0xff]
      %v2048 = vld [vmem:[%s116 + $0x3c18] sm:$0xff]
      %v2049 = vld [vmem:[%s116 + $0x3c20] sm:$0xff]
      %v2050 = vld [vmem:[%s116 + $0x3c28] sm:$0xff]
      %v2051 = vld [vmem:[%s116 + $0x3c30] sm:$0xff]
      %v2052 = vld [vmem:[%s116 + $0x3c38] sm:$0xff]
      %v2053 = vld [vmem:[%s116 + $0x3c40] sm:$0xff]
      %v2054 = vld [vmem:[%s116 + $0x3c48] sm:$0xff]
      %v2055 = vld [vmem:[%s116 + $0x3c50] sm:$0xff]
      %v2056 = vld [vmem:[%s116 + $0x3c58] sm:$0xff]
      %v2057 = vld [vmem:[%s116 + $0x3c60] sm:$0xff]
      %v2058 = vld [vmem:[%s116 + $0x3c68] sm:$0xff]
      %v2059 = vld [vmem:[%s116 + $0x3c70] sm:$0xff]
      %v2060 = vld [vmem:[%s116 + $0x3c78] sm:$0xff]
      %v2061 = vld [vmem:[%s116 + $0x3c80] sm:$0xff]
      %v2062 = vld [vmem:[%s116 + $0x3c88] sm:$0xff]
      %v2063 = vld [vmem:[%s116 + $0x3c90] sm:$0xff]
      %v2064 = vld [vmem:[%s116 + $0x3c98] sm:$0xff]
      %v2065 = vld [vmem:[%s116 + $0x3ca0] sm:$0xff]
      %v2066 = vld [vmem:[%s116 + $0x3ca8] sm:$0xff]
      %v2067 = vld [vmem:[%s116 + $0x3cb0] sm:$0xff]
      %v2068 = vld [vmem:[%s116 + $0x3cb8] sm:$0xff]
      %v2069 = vld [vmem:[%s116 + $0x3cc0] sm:$0xff]
      %v2070 = vld [vmem:[%s116 + $0x3cc8] sm:$0xff]
      %v2071 = vld [vmem:[%s116 + $0x3cd0] sm:$0xff]
      %v2072 = vld [vmem:[%s116 + $0x3cd8] sm:$0xff]
      %v2073 = vld [vmem:[%s116 + $0x3ce0] sm:$0xff]
      %v2074 = vld [vmem:[%s116 + $0x3ce8] sm:$0xff]
      %v2075 = vld [vmem:[%s116 + $0x3cf0] sm:$0xff]
      %v2076 = vld [vmem:[%s116 + $0x3cf8] sm:$0xff]
      %v2077 = vld [vmem:[%s116 + $0x3d00] sm:$0xff]
      %v2078 = vld [vmem:[%s116 + $0x3d08] sm:$0xff]
      %v2079 = vld [vmem:[%s116 + $0x3d10] sm:$0xff]
      %v2080 = vld [vmem:[%s116 + $0x3d18] sm:$0xff]
      %v2081 = vld [vmem:[%s116 + $0x3d20] sm:$0xff]
      %v2082 = vld [vmem:[%s116 + $0x3d28] sm:$0xff]
      %v2083 = vld [vmem:[%s116 + $0x3d30] sm:$0xff]
      %v2084 = vld [vmem:[%s116 + $0x3d38] sm:$0xff]
      %v2085 = vld [vmem:[%s116 + $0x3d40] sm:$0xff]
      %v2086 = vld [vmem:[%s116 + $0x3d48] sm:$0xff]
      %v2087 = vld [vmem:[%s116 + $0x3d50] sm:$0xff]
      %v2088 = vld [vmem:[%s116 + $0x3d58] sm:$0xff]
      %v2089 = vld [vmem:[%s116 + $0x3d60] sm:$0xff]
      %v2090 = vld [vmem:[%s116 + $0x3d68] sm:$0xff]
      %v2091 = vld [vmem:[%s116 + $0x3d70] sm:$0xff]
      %v2092 = vld [vmem:[%s116 + $0x3d78] sm:$0xff]
      %v2093 = vld [vmem:[%s116 + $0x3d80] sm:$0xff]
      %v2094 = vld [vmem:[%s116 + $0x3d88] sm:$0xff]
      %v2095 = vld [vmem:[%s116 + $0x3d90] sm:$0xff]
      %v2096 = vld [vmem:[%s116 + $0x3d98] sm:$0xff]
      %v2097 = vld [vmem:[%s116 + $0x3da0] sm:$0xff]
      %v2098 = vld [vmem:[%s116 + $0x3da8] sm:$0xff]
      %v2099 = vld [vmem:[%s116 + $0x3db0] sm:$0xff]
      %v2100 = vld [vmem:[%s116 + $0x3db8] sm:$0xff]
      %v2101 = vld [vmem:[%s116 + $0x3dc0] sm:$0xff]
      %v2102 = vld [vmem:[%s116 + $0x3dc8] sm:$0xff]
      %v2103 = vld [vmem:[%s116 + $0x3dd0] sm:$0xff]
      %v2104 = vld [vmem:[%s116 + $0x3dd8] sm:$0xff]
      %v2105 = vld [vmem:[%s116 + $0x3de0] sm:$0xff]
      %v2106 = vld [vmem:[%s116 + $0x3de8] sm:$0xff]
      %v2107 = vld [vmem:[%s116 + $0x3df0] sm:$0xff]
      %v2108 = vld [vmem:[%s116 + $0x3df8] sm:$0xff]
      %v2109 = vld [vmem:[%s116 + $0x3e00] sm:$0xff]
      %v2110 = vld [vmem:[%s116 + $0x3e08] sm:$0xff]
      %v2111 = vld [vmem:[%s116 + $0x3e10] sm:$0xff]
      %v2112 = vld [vmem:[%s116 + $0x3e18] sm:$0xff]
      %v2113 = vld [vmem:[%s116 + $0x3e20] sm:$0xff]
      %v2114 = vld [vmem:[%s116 + $0x3e28] sm:$0xff]
      %v2115 = vld [vmem:[%s116 + $0x3e30] sm:$0xff]
      %v2116 = vld [vmem:[%s116 + $0x3e38] sm:$0xff]
      %v2117 = vld [vmem:[%s116 + $0x3e40] sm:$0xff]
      %v2118 = vld [vmem:[%s116 + $0x3e48] sm:$0xff]
      %v2119 = vld [vmem:[%s116 + $0x3e50] sm:$0xff]
      %v2120 = vld [vmem:[%s116 + $0x3e58] sm:$0xff]
      %v2121 = vld [vmem:[%s116 + $0x3e60] sm:$0xff]
      %v2122 = vld [vmem:[%s116 + $0x3e68] sm:$0xff]
      %v2123 = vld [vmem:[%s116 + $0x3e70] sm:$0xff]
      %v2124 = vld [vmem:[%s116 + $0x3e78] sm:$0xff]
      %v2125 = vld [vmem:[%s116 + $0x3e80] sm:$0xff]
      %v2126 = vld [vmem:[%s116 + $0x3e88] sm:$0xff]
      %v2127 = vld [vmem:[%s116 + $0x3e90] sm:$0xff]
      %v2128 = vld [vmem:[%s116 + $0x3e98] sm:$0xff]
      %v2129 = vld [vmem:[%s116 + $0x3ea0] sm:$0xff]
      %v2130 = vld [vmem:[%s116 + $0x3ea8] sm:$0xff]
      %v2131 = vld [vmem:[%s116 + $0x3eb0] sm:$0xff]
      %v2132 = vld [vmem:[%s116 + $0x3eb8] sm:$0xff]
      %v2133 = vld [vmem:[%s116 + $0x3ec0] sm:$0xff]
      %v2134 = vld [vmem:[%s116 + $0x3ec8] sm:$0xff]
      %v2135 = vld [vmem:[%s116 + $0x3ed0] sm:$0xff]
      %v2136 = vld [vmem:[%s116 + $0x3ed8] sm:$0xff]
      %v2137 = vld [vmem:[%s116 + $0x3ee0] sm:$0xff]
      %v2138 = vld [vmem:[%s116 + $0x3ee8] sm:$0xff]
      %v2139 = vld [vmem:[%s116 + $0x3ef0] sm:$0xff]
      %v2140 = vld [vmem:[%s116 + $0x3ef8] sm:$0xff]
      %v2141 = vld [vmem:[%s116 + $0x3f00] sm:$0xff]
      %v2142 = vld [vmem:[%s116 + $0x3f08] sm:$0xff]
      %v2143 = vld [vmem:[%s116 + $0x3f10] sm:$0xff]
      %v2144 = vld [vmem:[%s116 + $0x3f18] sm:$0xff]
      %v2145 = vld [vmem:[%s116 + $0x3f20] sm:$0xff]
      %v2146 = vld [vmem:[%s116 + $0x3f28] sm:$0xff]
      %v2147 = vld [vmem:[%s116 + $0x3f30] sm:$0xff]
      %v2148 = vld [vmem:[%s116 + $0x3f38] sm:$0xff]
      %v2149 = vld [vmem:[%s116 + $0x3f40] sm:$0xff]
      %v2150 = vld [vmem:[%s116 + $0x3f48] sm:$0xff]
      %v2151 = vld [vmem:[%s116 + $0x3f50] sm:$0xff]
      %v2152 = vld [vmem:[%s116 + $0x3f58] sm:$0xff]
      %v2153 = vld [vmem:[%s116 + $0x3f60] sm:$0xff]
      %v2154 = vld [vmem:[%s116 + $0x3f68] sm:$0xff]
      %v2155 = vld [vmem:[%s116 + $0x3f70] sm:$0xff]
      %v2156 = vld [vmem:[%s116 + $0x3f78] sm:$0xff]
      %v2157 = vld [vmem:[%s116 + $0x3f80] sm:$0xff]
      %v2158 = vld [vmem:[%s116 + $0x3f88] sm:$0xff]
      %v2159 = vld [vmem:[%s116 + $0x3f90] sm:$0xff]
      %v2160 = vld [vmem:[%s116 + $0x3f98] sm:$0xff]
      %v2161 = vld [vmem:[%s116 + $0x3fa0] sm:$0xff]
      %v2162 = vld [vmem:[%s116 + $0x3fa8] sm:$0xff]
      %v2163 = vld [vmem:[%s116 + $0x3fb0] sm:$0xff]
      %v2164 = vld [vmem:[%s116 + $0x3fb8] sm:$0xff]
      %v2165 = vld [vmem:[%s116 + $0x3fc0] sm:$0xff]
      %v2166 = vld [vmem:[%s116 + $0x3fc8] sm:$0xff]
      %v2167 = vld [vmem:[%s116 + $0x3fd0] sm:$0xff]
      %v2168 = vld [vmem:[%s116 + $0x3fd8] sm:$0xff]
      %v2169 = vld [vmem:[%s116 + $0x3fe0] sm:$0xff]
      %v2170 = vld [vmem:[%s116 + $0x3fe8] sm:$0xff]
      %v2171 = vld [vmem:[%s116 + $0x3ff0] sm:$0xff]
      %v2172 = vld [vmem:[%s116 + $0x3ff8] sm:$0xff]
      %v2173 = vpack.c.bf16 %v157, %v125
      %v2174 = vpack.c.bf16 %v158, %v126
      %v2175 = vpack.c.bf16 %v159, %v127
      %v2176 = vpack.c.bf16 %v160, %v128
      %v2177 = vpack.c.bf16 %v161, %v129
      %v2178 = vpack.c.bf16 %v162, %v130
      %v2179 = vpack.c.bf16 %v163, %v131
      %v2180 = vpack.c.bf16 %v164, %v132
      %v2181 = vpack.c.bf16 %v165, %v133
      %v2182 = vpack.c.bf16 %v166, %v134
      %v2183 = vpack.c.bf16 %v167, %v135
      %v2184 = vpack.c.bf16 %v168, %v136
      %v2185 = vpack.c.bf16 %v169, %v137
      %v2186 = vpack.c.bf16 %v170, %v138
      %v2187 = vpack.c.bf16 %v171, %v139
      %v2188 = vpack.c.bf16 %v172, %v140
      %v2189 = vpack.c.bf16 %v173, %v141
      %v2190 = vpack.c.bf16 %v174, %v142
      %v2191 = vpack.c.bf16 %v175, %v143
      %v2192 = vpack.c.bf16 %v176, %v144
      %v2193 = vpack.c.bf16 %v177, %v145
      %v2194 = vpack.c.bf16 %v178, %v146
      %v2195 = vpack.c.bf16 %v179, %v147
      %v2196 = vpack.c.bf16 %v180, %v148
      %v2197 = vpack.c.bf16 %v181, %v149
      %v2198 = vpack.c.bf16 %v182, %v150
      %v2199 = vpack.c.bf16 %v183, %v151
      %v2200 = vpack.c.bf16 %v184, %v152
      %v2201 = vpack.c.bf16 %v185, %v153
      %v2202 = vpack.c.bf16 %v186, %v154
      %v2203 = vpack.c.bf16 %v187, %v155
      %v2204 = vpack.c.bf16 %v188, %v156
      %v2205 = vpack.c.bf16 %v221, %v189
      %v2206 = vpack.c.bf16 %v222, %v190
      %v2207 = vpack.c.bf16 %v223, %v191
      %v2208 = vpack.c.bf16 %v224, %v192
      %v2209 = vpack.c.bf16 %v225, %v193
      %v2210 = vpack.c.bf16 %v226, %v194
      %v2211 = vpack.c.bf16 %v227, %v195
      %v2212 = vpack.c.bf16 %v228, %v196
      %v2213 = vpack.c.bf16 %v229, %v197
      %v2214 = vpack.c.bf16 %v230, %v198
      %v2215 = vpack.c.bf16 %v231, %v199
      %v2216 = vpack.c.bf16 %v232, %v200
      %v2217 = vpack.c.bf16 %v233, %v201
      %v2218 = vpack.c.bf16 %v234, %v202
      %v2219 = vpack.c.bf16 %v235, %v203
      %v2220 = vpack.c.bf16 %v236, %v204
      %v2221 = vpack.c.bf16 %v237, %v205
      %v2222 = vpack.c.bf16 %v238, %v206
      %v2223 = vpack.c.bf16 %v239, %v207
      %v2224 = vpack.c.bf16 %v240, %v208
      %v2225 = vpack.c.bf16 %v241, %v209
      %v2226 = vpack.c.bf16 %v242, %v210
      %v2227 = vpack.c.bf16 %v243, %v211
      %v2228 = vpack.c.bf16 %v244, %v212
      %v2229 = vpack.c.bf16 %v245, %v213
      %v2230 = vpack.c.bf16 %v246, %v214
      %v2231 = vpack.c.bf16 %v247, %v215
      %v2232 = vpack.c.bf16 %v248, %v216
      %v2233 = vpack.c.bf16 %v249, %v217
      %v2234 = vpack.c.bf16 %v250, %v218
      %v2235 = vpack.c.bf16 %v251, %v219
      %v2236 = vpack.c.bf16 %v252, %v220
      %v2237 = vpack.c.bf16 %v285, %v253
      %v2238 = vpack.c.bf16 %v286, %v254
      %v2239 = vpack.c.bf16 %v287, %v255
      %v2240 = vpack.c.bf16 %v288, %v256
      %v2241 = vpack.c.bf16 %v289, %v257
      %v2242 = vpack.c.bf16 %v290, %v258
      %v2243 = vpack.c.bf16 %v291, %v259
      %v2244 = vpack.c.bf16 %v292, %v260
      %v2245 = vpack.c.bf16 %v293, %v261
      %v2246 = vpack.c.bf16 %v294, %v262
      %v2247 = vpack.c.bf16 %v295, %v263
      %v2248 = vpack.c.bf16 %v296, %v264
      %v2249 = vpack.c.bf16 %v297, %v265
      %v2250 = vpack.c.bf16 %v298, %v266
      %v2251 = vpack.c.bf16 %v299, %v267
      %v2252 = vpack.c.bf16 %v300, %v268
      %v2253 = vpack.c.bf16 %v301, %v269
      %v2254 = vpack.c.bf16 %v302, %v270
      %v2255 = vpack.c.bf16 %v303, %v271
      %v2256 = vpack.c.bf16 %v304, %v272
      %v2257 = vpack.c.bf16 %v305, %v273
      %v2258 = vpack.c.bf16 %v306, %v274
      %v2259 = vpack.c.bf16 %v307, %v275
      %v2260 = vpack.c.bf16 %v308, %v276
      %v2261 = vpack.c.bf16 %v309, %v277
      %v2262 = vpack.c.bf16 %v310, %v278
      %v2263 = vpack.c.bf16 %v311, %v279
      %v2264 = vpack.c.bf16 %v312, %v280
      %v2265 = vpack.c.bf16 %v313, %v281
      %v2266 = vpack.c.bf16 %v314, %v282
      %v2267 = vpack.c.bf16 %v315, %v283
      %v2268 = vpack.c.bf16 %v316, %v284
      %v2269 = vpack.c.bf16 %v349, %v317
      %v2270 = vpack.c.bf16 %v350, %v318
      %v2271 = vpack.c.bf16 %v351, %v319
      %v2272 = vpack.c.bf16 %v352, %v320
      %v2273 = vpack.c.bf16 %v353, %v321
      %v2274 = vpack.c.bf16 %v354, %v322
      %v2275 = vpack.c.bf16 %v355, %v323
      %v2276 = vpack.c.bf16 %v356, %v324
      %v2277 = vpack.c.bf16 %v357, %v325
      %v2278 = vpack.c.bf16 %v358, %v326
      %v2279 = vpack.c.bf16 %v359, %v327
      %v2280 = vpack.c.bf16 %v360, %v328
      %v2281 = vpack.c.bf16 %v361, %v329
      %v2282 = vpack.c.bf16 %v362, %v330
      %v2283 = vpack.c.bf16 %v363, %v331
      %v2284 = vpack.c.bf16 %v364, %v332
      %v2285 = vpack.c.bf16 %v365, %v333
      %v2286 = vpack.c.bf16 %v366, %v334
      %v2287 = vpack.c.bf16 %v367, %v335
      %v2288 = vpack.c.bf16 %v368, %v336
      %v2289 = vpack.c.bf16 %v369, %v337
      %v2290 = vpack.c.bf16 %v370, %v338
      %v2291 = vpack.c.bf16 %v371, %v339
      %v2292 = vpack.c.bf16 %v372, %v340
      %v2293 = vpack.c.bf16 %v373, %v341
      %v2294 = vpack.c.bf16 %v374, %v342
      %v2295 = vpack.c.bf16 %v375, %v343
      %v2296 = vpack.c.bf16 %v376, %v344
      %v2297 = vpack.c.bf16 %v377, %v345
      %v2298 = vpack.c.bf16 %v378, %v346
      %v2299 = vpack.c.bf16 %v379, %v347
      %v2300 = vpack.c.bf16 %v380, %v348
      %v2301 = vpack.c.bf16 %v413, %v381
      %v2302 = vpack.c.bf16 %v414, %v382
      %v2303 = vpack.c.bf16 %v415, %v383
      %v2304 = vpack.c.bf16 %v416, %v384
      %v2305 = vpack.c.bf16 %v417, %v385
      %v2306 = vpack.c.bf16 %v418, %v386
      %v2307 = vpack.c.bf16 %v419, %v387
      %v2308 = vpack.c.bf16 %v420, %v388
      %v2309 = vpack.c.bf16 %v421, %v389
      %v2310 = vpack.c.bf16 %v422, %v390
      %v2311 = vpack.c.bf16 %v423, %v391
      %v2312 = vpack.c.bf16 %v424, %v392
      %v2313 = vpack.c.bf16 %v425, %v393
      %v2314 = vpack.c.bf16 %v426, %v394
      %v2315 = vpack.c.bf16 %v427, %v395
      %v2316 = vpack.c.bf16 %v428, %v396
      %v2317 = vpack.c.bf16 %v429, %v397
      %v2318 = vpack.c.bf16 %v430, %v398
      %v2319 = vpack.c.bf16 %v431, %v399
      %v2320 = vpack.c.bf16 %v432, %v400
      %v2321 = vpack.c.bf16 %v433, %v401
      %v2322 = vpack.c.bf16 %v434, %v402
      %v2323 = vpack.c.bf16 %v435, %v403
      %v2324 = vpack.c.bf16 %v436, %v404
      %v2325 = vpack.c.bf16 %v437, %v405
      %v2326 = vpack.c.bf16 %v438, %v406
      %v2327 = vpack.c.bf16 %v439, %v407
      %v2328 = vpack.c.bf16 %v440, %v408
      %v2329 = vpack.c.bf16 %v441, %v409
      %v2330 = vpack.c.bf16 %v442, %v410
      %v2331 = vpack.c.bf16 %v443, %v411
      %v2332 = vpack.c.bf16 %v444, %v412
      %v2333 = vpack.c.bf16 %v477, %v445
      %v2334 = vpack.c.bf16 %v478, %v446
      %v2335 = vpack.c.bf16 %v479, %v447
      %v2336 = vpack.c.bf16 %v480, %v448
      %v2337 = vpack.c.bf16 %v481, %v449
      %v2338 = vpack.c.bf16 %v482, %v450
      %v2339 = vpack.c.bf16 %v483, %v451
      %v2340 = vpack.c.bf16 %v484, %v452
      %v2341 = vpack.c.bf16 %v485, %v453
      %v2342 = vpack.c.bf16 %v486, %v454
      %v2343 = vpack.c.bf16 %v487, %v455
      %v2344 = vpack.c.bf16 %v488, %v456
      %v2345 = vpack.c.bf16 %v489, %v457
      %v2346 = vpack.c.bf16 %v490, %v458
      %v2347 = vpack.c.bf16 %v491, %v459
      %v2348 = vpack.c.bf16 %v492, %v460
      %v2349 = vpack.c.bf16 %v493, %v461
      %v2350 = vpack.c.bf16 %v494, %v462
      %v2351 = vpack.c.bf16 %v495, %v463
      %v2352 = vpack.c.bf16 %v496, %v464
      %v2353 = vpack.c.bf16 %v497, %v465
      %v2354 = vpack.c.bf16 %v498, %v466
      %v2355 = vpack.c.bf16 %v499, %v467
      %v2356 = vpack.c.bf16 %v500, %v468
      %v2357 = vpack.c.bf16 %v501, %v469
      %v2358 = vpack.c.bf16 %v502, %v470
      %v2359 = vpack.c.bf16 %v503, %v471
      %v2360 = vpack.c.bf16 %v504, %v472
      %v2361 = vpack.c.bf16 %v505, %v473
      %v2362 = vpack.c.bf16 %v506, %v474
      %v2363 = vpack.c.bf16 %v507, %v475
      %v2364 = vpack.c.bf16 %v508, %v476
      %v2365 = vpack.c.bf16 %v541, %v509
      %v2366 = vpack.c.bf16 %v542, %v510
      %v2367 = vpack.c.bf16 %v543, %v511
      %v2368 = vpack.c.bf16 %v544, %v512
      %v2369 = vpack.c.bf16 %v545, %v513
      %v2370 = vpack.c.bf16 %v546, %v514
      %v2371 = vpack.c.bf16 %v547, %v515
      %v2372 = vpack.c.bf16 %v548, %v516
      %v2373 = vpack.c.bf16 %v549, %v517
      %v2374 = vpack.c.bf16 %v550, %v518
      %v2375 = vpack.c.bf16 %v551, %v519
      %v2376 = vpack.c.bf16 %v552, %v520
      %v2377 = vpack.c.bf16 %v553, %v521
      %v2378 = vpack.c.bf16 %v554, %v522
      %v2379 = vpack.c.bf16 %v555, %v523
      %v2380 = vpack.c.bf16 %v556, %v524
      %v2381 = vpack.c.bf16 %v557, %v525
      %v2382 = vpack.c.bf16 %v558, %v526
      %v2383 = vpack.c.bf16 %v559, %v527
      %v2384 = vpack.c.bf16 %v560, %v528
      %v2385 = vpack.c.bf16 %v561, %v529
      %v2386 = vpack.c.bf16 %v562, %v530
      %v2387 = vpack.c.bf16 %v563, %v531
      %v2388 = vpack.c.bf16 %v564, %v532
      %v2389 = vpack.c.bf16 %v565, %v533
      %v2390 = vpack.c.bf16 %v566, %v534
      %v2391 = vpack.c.bf16 %v567, %v535
      %v2392 = vpack.c.bf16 %v568, %v536
      %v2393 = vpack.c.bf16 %v569, %v537
      %v2394 = vpack.c.bf16 %v570, %v538
      %v2395 = vpack.c.bf16 %v571, %v539
      %v2396 = vpack.c.bf16 %v572, %v540
      %v2397 = vpack.c.bf16 %v605, %v573
      %v2398 = vpack.c.bf16 %v606, %v574
      %v2399 = vpack.c.bf16 %v607, %v575
      %v2400 = vpack.c.bf16 %v608, %v576
      %v2401 = vpack.c.bf16 %v609, %v577
      %v2402 = vpack.c.bf16 %v610, %v578
      %v2403 = vpack.c.bf16 %v611, %v579
      %v2404 = vpack.c.bf16 %v612, %v580
      %v2405 = vpack.c.bf16 %v613, %v581
      %v2406 = vpack.c.bf16 %v614, %v582
      %v2407 = vpack.c.bf16 %v615, %v583
      %v2408 = vpack.c.bf16 %v616, %v584
      %v2409 = vpack.c.bf16 %v617, %v585
      %v2410 = vpack.c.bf16 %v618, %v586
      %v2411 = vpack.c.bf16 %v619, %v587
      %v2412 = vpack.c.bf16 %v620, %v588
      %v2413 = vpack.c.bf16 %v621, %v589
      %v2414 = vpack.c.bf16 %v622, %v590
      %v2415 = vpack.c.bf16 %v623, %v591
      %v2416 = vpack.c.bf16 %v624, %v592
      %v2417 = vpack.c.bf16 %v625, %v593
      %v2418 = vpack.c.bf16 %v626, %v594
      %v2419 = vpack.c.bf16 %v627, %v595
      %v2420 = vpack.c.bf16 %v628, %v596
      %v2421 = vpack.c.bf16 %v629, %v597
      %v2422 = vpack.c.bf16 %v630, %v598
      %v2423 = vpack.c.bf16 %v631, %v599
      %v2424 = vpack.c.bf16 %v632, %v600
      %v2425 = vpack.c.bf16 %v633, %v601
      %v2426 = vpack.c.bf16 %v634, %v602
      %v2427 = vpack.c.bf16 %v635, %v603
      %v2428 = vpack.c.bf16 %v636, %v604
      %v2429 = vpack.c.bf16 %v669, %v637
      %v2430 = vpack.c.bf16 %v670, %v638
      %v2431 = vpack.c.bf16 %v671, %v639
      %v2432 = vpack.c.bf16 %v672, %v640
      %v2433 = vpack.c.bf16 %v673, %v641
      %v2434 = vpack.c.bf16 %v674, %v642
      %v2435 = vpack.c.bf16 %v675, %v643
      %v2436 = vpack.c.bf16 %v676, %v644
      %v2437 = vpack.c.bf16 %v677, %v645
      %v2438 = vpack.c.bf16 %v678, %v646
      %v2439 = vpack.c.bf16 %v679, %v647
      %v2440 = vpack.c.bf16 %v680, %v648
      %v2441 = vpack.c.bf16 %v681, %v649
      %v2442 = vpack.c.bf16 %v682, %v650
      %v2443 = vpack.c.bf16 %v683, %v651
      %v2444 = vpack.c.bf16 %v684, %v652
      %v2445 = vpack.c.bf16 %v685, %v653
      %v2446 = vpack.c.bf16 %v686, %v654
      %v2447 = vpack.c.bf16 %v687, %v655
      %v2448 = vpack.c.bf16 %v688, %v656
      %v2449 = vpack.c.bf16 %v689, %v657
      %v2450 = vpack.c.bf16 %v690, %v658
      %v2451 = vpack.c.bf16 %v691, %v659
      %v2452 = vpack.c.bf16 %v692, %v660
      %v2453 = vpack.c.bf16 %v693, %v661
      %v2454 = vpack.c.bf16 %v694, %v662
      %v2455 = vpack.c.bf16 %v695, %v663
      %v2456 = vpack.c.bf16 %v696, %v664
      %v2457 = vpack.c.bf16 %v697, %v665
      %v2458 = vpack.c.bf16 %v698, %v666
      %v2459 = vpack.c.bf16 %v699, %v667
      %v2460 = vpack.c.bf16 %v700, %v668
      %v2461 = vpack.c.bf16 %v733, %v701
      %v2462 = vpack.c.bf16 %v734, %v702
      %v2463 = vpack.c.bf16 %v735, %v703
      %v2464 = vpack.c.bf16 %v736, %v704
      %v2465 = vpack.c.bf16 %v737, %v705
      %v2466 = vpack.c.bf16 %v738, %v706
      %v2467 = vpack.c.bf16 %v739, %v707
      %v2468 = vpack.c.bf16 %v740, %v708
      %v2469 = vpack.c.bf16 %v741, %v709
      %v2470 = vpack.c.bf16 %v742, %v710
      %v2471 = vpack.c.bf16 %v743, %v711
      %v2472 = vpack.c.bf16 %v744, %v712
      %v2473 = vpack.c.bf16 %v745, %v713
      %v2474 = vpack.c.bf16 %v746, %v714
      %v2475 = vpack.c.bf16 %v747, %v715
      %v2476 = vpack.c.bf16 %v748, %v716
      %v2477 = vpack.c.bf16 %v749, %v717
      %v2478 = vpack.c.bf16 %v750, %v718
      %v2479 = vpack.c.bf16 %v751, %v719
      %v2480 = vpack.c.bf16 %v752, %v720
      %v2481 = vpack.c.bf16 %v753, %v721
      %v2482 = vpack.c.bf16 %v754, %v722
      %v2483 = vpack.c.bf16 %v755, %v723
      %v2484 = vpack.c.bf16 %v756, %v724
      %v2485 = vpack.c.bf16 %v757, %v725
      %v2486 = vpack.c.bf16 %v758, %v726
      %v2487 = vpack.c.bf16 %v759, %v727
      %v2488 = vpack.c.bf16 %v760, %v728
      %v2489 = vpack.c.bf16 %v761, %v729
      %v2490 = vpack.c.bf16 %v762, %v730
      %v2491 = vpack.c.bf16 %v763, %v731
      %v2492 = vpack.c.bf16 %v764, %v732
      %v2493 = vpack.c.bf16 %v797, %v765
      %v2494 = vpack.c.bf16 %v798, %v766
      %v2495 = vpack.c.bf16 %v799, %v767
      %v2496 = vpack.c.bf16 %v800, %v768
      %v2497 = vpack.c.bf16 %v801, %v769
      %v2498 = vpack.c.bf16 %v802, %v770
      %v2499 = vpack.c.bf16 %v803, %v771
      %v2500 = vpack.c.bf16 %v804, %v772
      %v2501 = vpack.c.bf16 %v805, %v773
      %v2502 = vpack.c.bf16 %v806, %v774
      %v2503 = vpack.c.bf16 %v807, %v775
      %v2504 = vpack.c.bf16 %v808, %v776
      %v2505 = vpack.c.bf16 %v809, %v777
      %v2506 = vpack.c.bf16 %v810, %v778
      %v2507 = vpack.c.bf16 %v811, %v779
      %v2508 = vpack.c.bf16 %v812, %v780
      %v2509 = vpack.c.bf16 %v813, %v781
      %v2510 = vpack.c.bf16 %v814, %v782
      %v2511 = vpack.c.bf16 %v815, %v783
      %v2512 = vpack.c.bf16 %v816, %v784
      %v2513 = vpack.c.bf16 %v817, %v785
      %v2514 = vpack.c.bf16 %v818, %v786
      %v2515 = vpack.c.bf16 %v819, %v787
      %v2516 = vpack.c.bf16 %v820, %v788
      %v2517 = vpack.c.bf16 %v821, %v789
      %v2518 = vpack.c.bf16 %v822, %v790
      %v2519 = vpack.c.bf16 %v823, %v791
      %v2520 = vpack.c.bf16 %v824, %v792
      %v2521 = vpack.c.bf16 %v825, %v793
      %v2522 = vpack.c.bf16 %v826, %v794
      %v2523 = vpack.c.bf16 %v827, %v795
      %v2524 = vpack.c.bf16 %v828, %v796
      %v2525 = vpack.c.bf16 %v861, %v829
      %v2526 = vpack.c.bf16 %v862, %v830
      %v2527 = vpack.c.bf16 %v863, %v831
      %v2528 = vpack.c.bf16 %v864, %v832
      %v2529 = vpack.c.bf16 %v865, %v833
      %v2530 = vpack.c.bf16 %v866, %v834
      %v2531 = vpack.c.bf16 %v867, %v835
      %v2532 = vpack.c.bf16 %v868, %v836
      %v2533 = vpack.c.bf16 %v869, %v837
      %v2534 = vpack.c.bf16 %v870, %v838
      %v2535 = vpack.c.bf16 %v871, %v839
      %v2536 = vpack.c.bf16 %v872, %v840
      %v2537 = vpack.c.bf16 %v873, %v841
      %v2538 = vpack.c.bf16 %v874, %v842
      %v2539 = vpack.c.bf16 %v875, %v843
      %v2540 = vpack.c.bf16 %v876, %v844
      %v2541 = vpack.c.bf16 %v877, %v845
      %v2542 = vpack.c.bf16 %v878, %v846
      %v2543 = vpack.c.bf16 %v879, %v847
      %v2544 = vpack.c.bf16 %v880, %v848
      %v2545 = vpack.c.bf16 %v881, %v849
      %v2546 = vpack.c.bf16 %v882, %v850
      %v2547 = vpack.c.bf16 %v883, %v851
      %v2548 = vpack.c.bf16 %v884, %v852
      %v2549 = vpack.c.bf16 %v885, %v853
      %v2550 = vpack.c.bf16 %v886, %v854
      %v2551 = vpack.c.bf16 %v887, %v855
      %v2552 = vpack.c.bf16 %v888, %v856
      %v2553 = vpack.c.bf16 %v889, %v857
      %v2554 = vpack.c.bf16 %v890, %v858
      %v2555 = vpack.c.bf16 %v891, %v859
      %v2556 = vpack.c.bf16 %v892, %v860
      %v2557 = vpack.c.bf16 %v925, %v893
      %v2558 = vpack.c.bf16 %v926, %v894
      %v2559 = vpack.c.bf16 %v927, %v895
      %v2560 = vpack.c.bf16 %v928, %v896
      %v2561 = vpack.c.bf16 %v929, %v897
      %v2562 = vpack.c.bf16 %v930, %v898
      %v2563 = vpack.c.bf16 %v931, %v899
      %v2564 = vpack.c.bf16 %v932, %v900
      %v2565 = vpack.c.bf16 %v933, %v901
      %v2566 = vpack.c.bf16 %v934, %v902
      %v2567 = vpack.c.bf16 %v935, %v903
      %v2568 = vpack.c.bf16 %v936, %v904
      %v2569 = vpack.c.bf16 %v937, %v905
      %v2570 = vpack.c.bf16 %v938, %v906
      %v2571 = vpack.c.bf16 %v939, %v907
      %v2572 = vpack.c.bf16 %v940, %v908
      %v2573 = vpack.c.bf16 %v941, %v909
      %v2574 = vpack.c.bf16 %v942, %v910
      %v2575 = vpack.c.bf16 %v943, %v911
      %v2576 = vpack.c.bf16 %v944, %v912
      %v2577 = vpack.c.bf16 %v945, %v913
      %v2578 = vpack.c.bf16 %v946, %v914
      %v2579 = vpack.c.bf16 %v947, %v915
      %v2580 = vpack.c.bf16 %v948, %v916
      %v2581 = vpack.c.bf16 %v949, %v917
      %v2582 = vpack.c.bf16 %v950, %v918
      %v2583 = vpack.c.bf16 %v951, %v919
      %v2584 = vpack.c.bf16 %v952, %v920
      %v2585 = vpack.c.bf16 %v953, %v921
      %v2586 = vpack.c.bf16 %v954, %v922
      %v2587 = vpack.c.bf16 %v955, %v923
      %v2588 = vpack.c.bf16 %v956, %v924
      %v2589 = vpack.c.bf16 %v989, %v957
      %v2590 = vpack.c.bf16 %v990, %v958
      %v2591 = vpack.c.bf16 %v991, %v959
      %v2592 = vpack.c.bf16 %v992, %v960
      %v2593 = vpack.c.bf16 %v993, %v961
      %v2594 = vpack.c.bf16 %v994, %v962
      %v2595 = vpack.c.bf16 %v995, %v963
      %v2596 = vpack.c.bf16 %v996, %v964
      %v2597 = vpack.c.bf16 %v997, %v965
      %v2598 = vpack.c.bf16 %v998, %v966
      %v2599 = vpack.c.bf16 %v999, %v967
      %v2600 = vpack.c.bf16 %v1000, %v968
      %v2601 = vpack.c.bf16 %v1001, %v969
      %v2602 = vpack.c.bf16 %v1002, %v970
      %v2603 = vpack.c.bf16 %v1003, %v971
      %v2604 = vpack.c.bf16 %v1004, %v972
      %v2605 = vpack.c.bf16 %v1005, %v973
      %v2606 = vpack.c.bf16 %v1006, %v974
      %v2607 = vpack.c.bf16 %v1007, %v975
      %v2608 = vpack.c.bf16 %v1008, %v976
      %v2609 = vpack.c.bf16 %v1009, %v977
      %v2610 = vpack.c.bf16 %v1010, %v978
      %v2611 = vpack.c.bf16 %v1011, %v979
      %v2612 = vpack.c.bf16 %v1012, %v980
      %v2613 = vpack.c.bf16 %v1013, %v981
      %v2614 = vpack.c.bf16 %v1014, %v982
      %v2615 = vpack.c.bf16 %v1015, %v983
      %v2616 = vpack.c.bf16 %v1016, %v984
      %v2617 = vpack.c.bf16 %v1017, %v985
      %v2618 = vpack.c.bf16 %v1018, %v986
      %v2619 = vpack.c.bf16 %v1019, %v987
      %v2620 = vpack.c.bf16 %v1020, %v988
      %v2621 = vpack.c.bf16 %v1053, %v1021
      %v2622 = vpack.c.bf16 %v1054, %v1022
      %v2623 = vpack.c.bf16 %v1055, %v1023
      %v2624 = vpack.c.bf16 %v1056, %v1024
      %v2625 = vpack.c.bf16 %v1057, %v1025
      %v2626 = vpack.c.bf16 %v1058, %v1026
      %v2627 = vpack.c.bf16 %v1059, %v1027
      %v2628 = vpack.c.bf16 %v1060, %v1028
      %v2629 = vpack.c.bf16 %v1061, %v1029
      %v2630 = vpack.c.bf16 %v1062, %v1030
      %v2631 = vpack.c.bf16 %v1063, %v1031
      %v2632 = vpack.c.bf16 %v1064, %v1032
      %v2633 = vpack.c.bf16 %v1065, %v1033
      %v2634 = vpack.c.bf16 %v1066, %v1034
      %v2635 = vpack.c.bf16 %v1067, %v1035
      %v2636 = vpack.c.bf16 %v1068, %v1036
      %v2637 = vpack.c.bf16 %v1069, %v1037
      %v2638 = vpack.c.bf16 %v1070, %v1038
      %v2639 = vpack.c.bf16 %v1071, %v1039
      %v2640 = vpack.c.bf16 %v1072, %v1040
      %v2641 = vpack.c.bf16 %v1073, %v1041
      %v2642 = vpack.c.bf16 %v1074, %v1042
      %v2643 = vpack.c.bf16 %v1075, %v1043
      %v2644 = vpack.c.bf16 %v1076, %v1044
      %v2645 = vpack.c.bf16 %v1077, %v1045
      %v2646 = vpack.c.bf16 %v1078, %v1046
      %v2647 = vpack.c.bf16 %v1079, %v1047
      %v2648 = vpack.c.bf16 %v1080, %v1048
      %v2649 = vpack.c.bf16 %v1081, %v1049
      %v2650 = vpack.c.bf16 %v1082, %v1050
      %v2651 = vpack.c.bf16 %v1083, %v1051
      %v2652 = vpack.c.bf16 %v1084, %v1052
      %v2653 = vpack.c.bf16 %v1117, %v1085
      %v2654 = vpack.c.bf16 %v1118, %v1086
      %v2655 = vpack.c.bf16 %v1119, %v1087
      %v2656 = vpack.c.bf16 %v1120, %v1088
      %v2657 = vpack.c.bf16 %v1121, %v1089
      %v2658 = vpack.c.bf16 %v1122, %v1090
      %v2659 = vpack.c.bf16 %v1123, %v1091
      %v2660 = vpack.c.bf16 %v1124, %v1092
      %v2661 = vpack.c.bf16 %v1125, %v1093
      %v2662 = vpack.c.bf16 %v1126, %v1094
      %v2663 = vpack.c.bf16 %v1127, %v1095
      %v2664 = vpack.c.bf16 %v1128, %v1096
      %v2665 = vpack.c.bf16 %v1129, %v1097
      %v2666 = vpack.c.bf16 %v1130, %v1098
      %v2667 = vpack.c.bf16 %v1131, %v1099
      %v2668 = vpack.c.bf16 %v1132, %v1100
      %v2669 = vpack.c.bf16 %v1133, %v1101
      %v2670 = vpack.c.bf16 %v1134, %v1102
      %v2671 = vpack.c.bf16 %v1135, %v1103
      %v2672 = vpack.c.bf16 %v1136, %v1104
      %v2673 = vpack.c.bf16 %v1137, %v1105
      %v2674 = vpack.c.bf16 %v1138, %v1106
      %v2675 = vpack.c.bf16 %v1139, %v1107
      %v2676 = vpack.c.bf16 %v1140, %v1108
      %v2677 = vpack.c.bf16 %v1141, %v1109
      %v2678 = vpack.c.bf16 %v1142, %v1110
      %v2679 = vpack.c.bf16 %v1143, %v1111
      %v2680 = vpack.c.bf16 %v1144, %v1112
      %v2681 = vpack.c.bf16 %v1145, %v1113
      %v2682 = vpack.c.bf16 %v1146, %v1114
      %v2683 = vpack.c.bf16 %v1147, %v1115
      %v2684 = vpack.c.bf16 %v1148, %v1116
      %v2685 = vpack.c.bf16 %v1181, %v1149
      %v2686 = vpack.c.bf16 %v1182, %v1150
      %v2687 = vpack.c.bf16 %v1183, %v1151
      %v2688 = vpack.c.bf16 %v1184, %v1152
      %v2689 = vpack.c.bf16 %v1185, %v1153
      %v2690 = vpack.c.bf16 %v1186, %v1154
      %v2691 = vpack.c.bf16 %v1187, %v1155
      %v2692 = vpack.c.bf16 %v1188, %v1156
      %v2693 = vpack.c.bf16 %v1189, %v1157
      %v2694 = vpack.c.bf16 %v1190, %v1158
      %v2695 = vpack.c.bf16 %v1191, %v1159
      %v2696 = vpack.c.bf16 %v1192, %v1160
      %v2697 = vpack.c.bf16 %v1193, %v1161
      %v2698 = vpack.c.bf16 %v1194, %v1162
      %v2699 = vpack.c.bf16 %v1195, %v1163
      %v2700 = vpack.c.bf16 %v1196, %v1164
      %v2701 = vpack.c.bf16 %v1197, %v1165
      %v2702 = vpack.c.bf16 %v1198, %v1166
      %v2703 = vpack.c.bf16 %v1199, %v1167
      %v2704 = vpack.c.bf16 %v1200, %v1168
      %v2705 = vpack.c.bf16 %v1201, %v1169
      %v2706 = vpack.c.bf16 %v1202, %v1170
      %v2707 = vpack.c.bf16 %v1203, %v1171
      %v2708 = vpack.c.bf16 %v1204, %v1172
      %v2709 = vpack.c.bf16 %v1205, %v1173
      %v2710 = vpack.c.bf16 %v1206, %v1174
      %v2711 = vpack.c.bf16 %v1207, %v1175
      %v2712 = vpack.c.bf16 %v1208, %v1176
      %v2713 = vpack.c.bf16 %v1209, %v1177
      %v2714 = vpack.c.bf16 %v1210, %v1178
      %v2715 = vpack.c.bf16 %v1211, %v1179
      %v2716 = vpack.c.bf16 %v1212, %v1180
      %v2717 = vpack.c.bf16 %v1245, %v1213
      %v2718 = vpack.c.bf16 %v1246, %v1214
      %v2719 = vpack.c.bf16 %v1247, %v1215
      %v2720 = vpack.c.bf16 %v1248, %v1216
      %v2721 = vpack.c.bf16 %v1249, %v1217
      %v2722 = vpack.c.bf16 %v1250, %v1218
      %v2723 = vpack.c.bf16 %v1251, %v1219
      %v2724 = vpack.c.bf16 %v1252, %v1220
      %v2725 = vpack.c.bf16 %v1253, %v1221
      %v2726 = vpack.c.bf16 %v1254, %v1222
      %v2727 = vpack.c.bf16 %v1255, %v1223
      %v2728 = vpack.c.bf16 %v1256, %v1224
      %v2729 = vpack.c.bf16 %v1257, %v1225
      %v2730 = vpack.c.bf16 %v1258, %v1226
      %v2731 = vpack.c.bf16 %v1259, %v1227
      %v2732 = vpack.c.bf16 %v1260, %v1228
      %v2733 = vpack.c.bf16 %v1261, %v1229
      %v2734 = vpack.c.bf16 %v1262, %v1230
      %v2735 = vpack.c.bf16 %v1263, %v1231
      %v2736 = vpack.c.bf16 %v1264, %v1232
      %v2737 = vpack.c.bf16 %v1265, %v1233
      %v2738 = vpack.c.bf16 %v1266, %v1234
      %v2739 = vpack.c.bf16 %v1267, %v1235
      %v2740 = vpack.c.bf16 %v1268, %v1236
      %v2741 = vpack.c.bf16 %v1269, %v1237
      %v2742 = vpack.c.bf16 %v1270, %v1238
      %v2743 = vpack.c.bf16 %v1271, %v1239
      %v2744 = vpack.c.bf16 %v1272, %v1240
      %v2745 = vpack.c.bf16 %v1273, %v1241
      %v2746 = vpack.c.bf16 %v1274, %v1242
      %v2747 = vpack.c.bf16 %v1275, %v1243
      %v2748 = vpack.c.bf16 %v1276, %v1244
      %v2749 = vpack.c.bf16 %v1309, %v1277
      %v2750 = vpack.c.bf16 %v1310, %v1278
      %v2751 = vpack.c.bf16 %v1311, %v1279
      %v2752 = vpack.c.bf16 %v1312, %v1280
      %v2753 = vpack.c.bf16 %v1313, %v1281
      %v2754 = vpack.c.bf16 %v1314, %v1282
      %v2755 = vpack.c.bf16 %v1315, %v1283
      %v2756 = vpack.c.bf16 %v1316, %v1284
      %v2757 = vpack.c.bf16 %v1317, %v1285
      %v2758 = vpack.c.bf16 %v1318, %v1286
      %v2759 = vpack.c.bf16 %v1319, %v1287
      %v2760 = vpack.c.bf16 %v1320, %v1288
      %v2761 = vpack.c.bf16 %v1321, %v1289
      %v2762 = vpack.c.bf16 %v1322, %v1290
      %v2763 = vpack.c.bf16 %v1323, %v1291
      %v2764 = vpack.c.bf16 %v1324, %v1292
      %v2765 = vpack.c.bf16 %v1325, %v1293
      %v2766 = vpack.c.bf16 %v1326, %v1294
      %v2767 = vpack.c.bf16 %v1327, %v1295
      %v2768 = vpack.c.bf16 %v1328, %v1296
      %v2769 = vpack.c.bf16 %v1329, %v1297
      %v2770 = vpack.c.bf16 %v1330, %v1298
      %v2771 = vpack.c.bf16 %v1331, %v1299
      %v2772 = vpack.c.bf16 %v1332, %v1300
      %v2773 = vpack.c.bf16 %v1333, %v1301
      %v2774 = vpack.c.bf16 %v1334, %v1302
      %v2775 = vpack.c.bf16 %v1335, %v1303
      %v2776 = vpack.c.bf16 %v1336, %v1304
      %v2777 = vpack.c.bf16 %v1337, %v1305
      %v2778 = vpack.c.bf16 %v1338, %v1306
      %v2779 = vpack.c.bf16 %v1339, %v1307
      %v2780 = vpack.c.bf16 %v1340, %v1308
      %v2781 = vpack.c.bf16 %v1373, %v1341
      %v2782 = vpack.c.bf16 %v1374, %v1342
      %v2783 = vpack.c.bf16 %v1375, %v1343
      %v2784 = vpack.c.bf16 %v1376, %v1344
      %v2785 = vpack.c.bf16 %v1377, %v1345
      %v2786 = vpack.c.bf16 %v1378, %v1346
      %v2787 = vpack.c.bf16 %v1379, %v1347
      %v2788 = vpack.c.bf16 %v1380, %v1348
      %v2789 = vpack.c.bf16 %v1381, %v1349
      %v2790 = vpack.c.bf16 %v1382, %v1350
      %v2791 = vpack.c.bf16 %v1383, %v1351
      %v2792 = vpack.c.bf16 %v1384, %v1352
      %v2793 = vpack.c.bf16 %v1385, %v1353
      %v2794 = vpack.c.bf16 %v1386, %v1354
      %v2795 = vpack.c.bf16 %v1387, %v1355
      %v2796 = vpack.c.bf16 %v1388, %v1356
      %v2797 = vpack.c.bf16 %v1389, %v1357
      %v2798 = vpack.c.bf16 %v1390, %v1358
      %v2799 = vpack.c.bf16 %v1391, %v1359
      %v2800 = vpack.c.bf16 %v1392, %v1360
      %v2801 = vpack.c.bf16 %v1393, %v1361
      %v2802 = vpack.c.bf16 %v1394, %v1362
      %v2803 = vpack.c.bf16 %v1395, %v1363
      %v2804 = vpack.c.bf16 %v1396, %v1364
      %v2805 = vpack.c.bf16 %v1397, %v1365
      %v2806 = vpack.c.bf16 %v1398, %v1366
      %v2807 = vpack.c.bf16 %v1399, %v1367
      %v2808 = vpack.c.bf16 %v1400, %v1368
      %v2809 = vpack.c.bf16 %v1401, %v1369
      %v2810 = vpack.c.bf16 %v1402, %v1370
      %v2811 = vpack.c.bf16 %v1403, %v1371
      %v2812 = vpack.c.bf16 %v1404, %v1372
      %v2813 = vpack.c.bf16 %v1437, %v1405
      %v2814 = vpack.c.bf16 %v1438, %v1406
      %v2815 = vpack.c.bf16 %v1439, %v1407
      %v2816 = vpack.c.bf16 %v1440, %v1408
      %v2817 = vpack.c.bf16 %v1441, %v1409
      %v2818 = vpack.c.bf16 %v1442, %v1410
      %v2819 = vpack.c.bf16 %v1443, %v1411
      %v2820 = vpack.c.bf16 %v1444, %v1412
      %v2821 = vpack.c.bf16 %v1445, %v1413
      %v2822 = vpack.c.bf16 %v1446, %v1414
      %v2823 = vpack.c.bf16 %v1447, %v1415
      %v2824 = vpack.c.bf16 %v1448, %v1416
      %v2825 = vpack.c.bf16 %v1449, %v1417
      %v2826 = vpack.c.bf16 %v1450, %v1418
      %v2827 = vpack.c.bf16 %v1451, %v1419
      %v2828 = vpack.c.bf16 %v1452, %v1420
      %v2829 = vpack.c.bf16 %v1453, %v1421
      %v2830 = vpack.c.bf16 %v1454, %v1422
      %v2831 = vpack.c.bf16 %v1455, %v1423
      %v2832 = vpack.c.bf16 %v1456, %v1424
      %v2833 = vpack.c.bf16 %v1457, %v1425
      %v2834 = vpack.c.bf16 %v1458, %v1426
      %v2835 = vpack.c.bf16 %v1459, %v1427
      %v2836 = vpack.c.bf16 %v1460, %v1428
      %v2837 = vpack.c.bf16 %v1461, %v1429
      %v2838 = vpack.c.bf16 %v1462, %v1430
      %v2839 = vpack.c.bf16 %v1463, %v1431
      %v2840 = vpack.c.bf16 %v1464, %v1432
      %v2841 = vpack.c.bf16 %v1465, %v1433
      %v2842 = vpack.c.bf16 %v1466, %v1434
      %v2843 = vpack.c.bf16 %v1467, %v1435
      %v2844 = vpack.c.bf16 %v1468, %v1436
      %v2845 = vpack.c.bf16 %v1501, %v1469
      %v2846 = vpack.c.bf16 %v1502, %v1470
      %v2847 = vpack.c.bf16 %v1503, %v1471
      %v2848 = vpack.c.bf16 %v1504, %v1472
      %v2849 = vpack.c.bf16 %v1505, %v1473
      %v2850 = vpack.c.bf16 %v1506, %v1474
      %v2851 = vpack.c.bf16 %v1507, %v1475
      %v2852 = vpack.c.bf16 %v1508, %v1476
      %v2853 = vpack.c.bf16 %v1509, %v1477
      %v2854 = vpack.c.bf16 %v1510, %v1478
      %v2855 = vpack.c.bf16 %v1511, %v1479
      %v2856 = vpack.c.bf16 %v1512, %v1480
      %v2857 = vpack.c.bf16 %v1513, %v1481
      %v2858 = vpack.c.bf16 %v1514, %v1482
      %v2859 = vpack.c.bf16 %v1515, %v1483
      %v2860 = vpack.c.bf16 %v1516, %v1484
      %v2861 = vpack.c.bf16 %v1517, %v1485
      %v2862 = vpack.c.bf16 %v1518, %v1486
      %v2863 = vpack.c.bf16 %v1519, %v1487
      %v2864 = vpack.c.bf16 %v1520, %v1488
      %v2865 = vpack.c.bf16 %v1521, %v1489
      %v2866 = vpack.c.bf16 %v1522, %v1490
      %v2867 = vpack.c.bf16 %v1523, %v1491
      %v2868 = vpack.c.bf16 %v1524, %v1492
      %v2869 = vpack.c.bf16 %v1525, %v1493
      %v2870 = vpack.c.bf16 %v1526, %v1494
      %v2871 = vpack.c.bf16 %v1527, %v1495
      %v2872 = vpack.c.bf16 %v1528, %v1496
      %v2873 = vpack.c.bf16 %v1529, %v1497
      %v2874 = vpack.c.bf16 %v1530, %v1498
      %v2875 = vpack.c.bf16 %v1531, %v1499
      %v2876 = vpack.c.bf16 %v1532, %v1500
      %v2877 = vpack.c.bf16 %v1565, %v1533
      %v2878 = vpack.c.bf16 %v1566, %v1534
      %v2879 = vpack.c.bf16 %v1567, %v1535
      %v2880 = vpack.c.bf16 %v1568, %v1536
      %v2881 = vpack.c.bf16 %v1569, %v1537
      %v2882 = vpack.c.bf16 %v1570, %v1538
      %v2883 = vpack.c.bf16 %v1571, %v1539
      %v2884 = vpack.c.bf16 %v1572, %v1540
      %v2885 = vpack.c.bf16 %v1573, %v1541
      %v2886 = vpack.c.bf16 %v1574, %v1542
      %v2887 = vpack.c.bf16 %v1575, %v1543
      %v2888 = vpack.c.bf16 %v1576, %v1544
      %v2889 = vpack.c.bf16 %v1577, %v1545
      %v2890 = vpack.c.bf16 %v1578, %v1546
      %v2891 = vpack.c.bf16 %v1579, %v1547
      %v2892 = vpack.c.bf16 %v1580, %v1548
      %v2893 = vpack.c.bf16 %v1581, %v1549
      %v2894 = vpack.c.bf16 %v1582, %v1550
      %v2895 = vpack.c.bf16 %v1583, %v1551
      %v2896 = vpack.c.bf16 %v1584, %v1552
      %v2897 = vpack.c.bf16 %v1585, %v1553
      %v2898 = vpack.c.bf16 %v1586, %v1554
      %v2899 = vpack.c.bf16 %v1587, %v1555
      %v2900 = vpack.c.bf16 %v1588, %v1556
      %v2901 = vpack.c.bf16 %v1589, %v1557
      %v2902 = vpack.c.bf16 %v1590, %v1558
      %v2903 = vpack.c.bf16 %v1591, %v1559
      %v2904 = vpack.c.bf16 %v1592, %v1560
      %v2905 = vpack.c.bf16 %v1593, %v1561
      %v2906 = vpack.c.bf16 %v1594, %v1562
      %v2907 = vpack.c.bf16 %v1595, %v1563
      %v2908 = vpack.c.bf16 %v1596, %v1564
      %v2909 = vpack.c.bf16 %v1629, %v1597
      %v2910 = vpack.c.bf16 %v1630, %v1598
      %v2911 = vpack.c.bf16 %v1631, %v1599
      %v2912 = vpack.c.bf16 %v1632, %v1600
      %v2913 = vpack.c.bf16 %v1633, %v1601
      %v2914 = vpack.c.bf16 %v1634, %v1602
      %v2915 = vpack.c.bf16 %v1635, %v1603
      %v2916 = vpack.c.bf16 %v1636, %v1604
      %v2917 = vpack.c.bf16 %v1637, %v1605
      %v2918 = vpack.c.bf16 %v1638, %v1606
      %v2919 = vpack.c.bf16 %v1639, %v1607
      %v2920 = vpack.c.bf16 %v1640, %v1608
      %v2921 = vpack.c.bf16 %v1641, %v1609
      %v2922 = vpack.c.bf16 %v1642, %v1610
      %v2923 = vpack.c.bf16 %v1643, %v1611
      %v2924 = vpack.c.bf16 %v1644, %v1612
      %v2925 = vpack.c.bf16 %v1645, %v1613
      %v2926 = vpack.c.bf16 %v1646, %v1614
      %v2927 = vpack.c.bf16 %v1647, %v1615
      %v2928 = vpack.c.bf16 %v1648, %v1616
      %v2929 = vpack.c.bf16 %v1649, %v1617
      %v2930 = vpack.c.bf16 %v1650, %v1618
      %v2931 = vpack.c.bf16 %v1651, %v1619
      %v2932 = vpack.c.bf16 %v1652, %v1620
      %v2933 = vpack.c.bf16 %v1653, %v1621
      %v2934 = vpack.c.bf16 %v1654, %v1622
      %v2935 = vpack.c.bf16 %v1655, %v1623
      %v2936 = vpack.c.bf16 %v1656, %v1624
      %v2937 = vpack.c.bf16 %v1657, %v1625
      %v2938 = vpack.c.bf16 %v1658, %v1626
      %v2939 = vpack.c.bf16 %v1659, %v1627
      %v2940 = vpack.c.bf16 %v1660, %v1628
      %v2941 = vpack.c.bf16 %v1693, %v1661
      %v2942 = vpack.c.bf16 %v1694, %v1662
      %v2943 = vpack.c.bf16 %v1695, %v1663
      %v2944 = vpack.c.bf16 %v1696, %v1664
      %v2945 = vpack.c.bf16 %v1697, %v1665
      %v2946 = vpack.c.bf16 %v1698, %v1666
      %v2947 = vpack.c.bf16 %v1699, %v1667
      %v2948 = vpack.c.bf16 %v1700, %v1668
      %v2949 = vpack.c.bf16 %v1701, %v1669
      %v2950 = vpack.c.bf16 %v1702, %v1670
      %v2951 = vpack.c.bf16 %v1703, %v1671
      %v2952 = vpack.c.bf16 %v1704, %v1672
      %v2953 = vpack.c.bf16 %v1705, %v1673
      %v2954 = vpack.c.bf16 %v1706, %v1674
      %v2955 = vpack.c.bf16 %v1707, %v1675
      %v2956 = vpack.c.bf16 %v1708, %v1676
      %v2957 = vpack.c.bf16 %v1709, %v1677
      %v2958 = vpack.c.bf16 %v1710, %v1678
      %v2959 = vpack.c.bf16 %v1711, %v1679
      %v2960 = vpack.c.bf16 %v1712, %v1680
      %v2961 = vpack.c.bf16 %v1713, %v1681
      %v2962 = vpack.c.bf16 %v1714, %v1682
      %v2963 = vpack.c.bf16 %v1715, %v1683
      %v2964 = vpack.c.bf16 %v1716, %v1684
      %v2965 = vpack.c.bf16 %v1717, %v1685
      %v2966 = vpack.c.bf16 %v1718, %v1686
      %v2967 = vpack.c.bf16 %v1719, %v1687
      %v2968 = vpack.c.bf16 %v1720, %v1688
      %v2969 = vpack.c.bf16 %v1721, %v1689
      %v2970 = vpack.c.bf16 %v1722, %v1690
      %v2971 = vpack.c.bf16 %v1723, %v1691
      %v2972 = vpack.c.bf16 %v1724, %v1692
      %v2973 = vpack.c.bf16 %v1757, %v1725
      %v2974 = vpack.c.bf16 %v1758, %v1726
      %v2975 = vpack.c.bf16 %v1759, %v1727
      %v2976 = vpack.c.bf16 %v1760, %v1728
      %v2977 = vpack.c.bf16 %v1761, %v1729
      %v2978 = vpack.c.bf16 %v1762, %v1730
      %v2979 = vpack.c.bf16 %v1763, %v1731
      %v2980 = vpack.c.bf16 %v1764, %v1732
      %v2981 = vpack.c.bf16 %v1765, %v1733
      %v2982 = vpack.c.bf16 %v1766, %v1734
      %v2983 = vpack.c.bf16 %v1767, %v1735
      %v2984 = vpack.c.bf16 %v1768, %v1736
      %v2985 = vpack.c.bf16 %v1769, %v1737
      %v2986 = vpack.c.bf16 %v1770, %v1738
      %v2987 = vpack.c.bf16 %v1771, %v1739
      %v2988 = vpack.c.bf16 %v1772, %v1740
      %v2989 = vpack.c.bf16 %v1773, %v1741
      %v2990 = vpack.c.bf16 %v1774, %v1742
      %v2991 = vpack.c.bf16 %v1775, %v1743
      %v2992 = vpack.c.bf16 %v1776, %v1744
      %v2993 = vpack.c.bf16 %v1777, %v1745
      %v2994 = vpack.c.bf16 %v1778, %v1746
      %v2995 = vpack.c.bf16 %v1779, %v1747
      %v2996 = vpack.c.bf16 %v1780, %v1748
      %v2997 = vpack.c.bf16 %v1781, %v1749
      %v2998 = vpack.c.bf16 %v1782, %v1750
      %v2999 = vpack.c.bf16 %v1783, %v1751
      %v3000 = vpack.c.bf16 %v1784, %v1752
      %v3001 = vpack.c.bf16 %v1785, %v1753
      %v3002 = vpack.c.bf16 %v1786, %v1754
      %v3003 = vpack.c.bf16 %v1787, %v1755
      %v3004 = vpack.c.bf16 %v1788, %v1756
      %v3005 = vpack.c.bf16 %v1821, %v1789
      %v3006 = vpack.c.bf16 %v1822, %v1790
      %v3007 = vpack.c.bf16 %v1823, %v1791
      %v3008 = vpack.c.bf16 %v1824, %v1792
      %v3009 = vpack.c.bf16 %v1825, %v1793
      %v3010 = vpack.c.bf16 %v1826, %v1794
      %v3011 = vpack.c.bf16 %v1827, %v1795
      %v3012 = vpack.c.bf16 %v1828, %v1796
      %v3013 = vpack.c.bf16 %v1829, %v1797
      %v3014 = vpack.c.bf16 %v1830, %v1798
      %v3015 = vpack.c.bf16 %v1831, %v1799
      %v3016 = vpack.c.bf16 %v1832, %v1800
      %v3017 = vpack.c.bf16 %v1833, %v1801
      %v3018 = vpack.c.bf16 %v1834, %v1802
      %v3019 = vpack.c.bf16 %v1835, %v1803
      %v3020 = vpack.c.bf16 %v1836, %v1804
      %v3021 = vpack.c.bf16 %v1837, %v1805
      %v3022 = vpack.c.bf16 %v1838, %v1806
      %v3023 = vpack.c.bf16 %v1839, %v1807
      %v3024 = vpack.c.bf16 %v1840, %v1808
      %v3025 = vpack.c.bf16 %v1841, %v1809
      %v3026 = vpack.c.bf16 %v1842, %v1810
      %v3027 = vpack.c.bf16 %v1843, %v1811
      %v3028 = vpack.c.bf16 %v1844, %v1812
      %v3029 = vpack.c.bf16 %v1845, %v1813
      %v3030 = vpack.c.bf16 %v1846, %v1814
      %v3031 = vpack.c.bf16 %v1847, %v1815
      %v3032 = vpack.c.bf16 %v1848, %v1816
      %v3033 = vpack.c.bf16 %v1849, %v1817
      %v3034 = vpack.c.bf16 %v1850, %v1818
      %v3035 = vpack.c.bf16 %v1851, %v1819
      %v3036 = vpack.c.bf16 %v1852, %v1820
      %v3037 = vpack.c.bf16 %v1885, %v1853
      %v3038 = vpack.c.bf16 %v1886, %v1854
      %v3039 = vpack.c.bf16 %v1887, %v1855
      %v3040 = vpack.c.bf16 %v1888, %v1856
      %v3041 = vpack.c.bf16 %v1889, %v1857
      %v3042 = vpack.c.bf16 %v1890, %v1858
      %v3043 = vpack.c.bf16 %v1891, %v1859
      %v3044 = vpack.c.bf16 %v1892, %v1860
      %v3045 = vpack.c.bf16 %v1893, %v1861
      %v3046 = vpack.c.bf16 %v1894, %v1862
      %v3047 = vpack.c.bf16 %v1895, %v1863
      %v3048 = vpack.c.bf16 %v1896, %v1864
      %v3049 = vpack.c.bf16 %v1897, %v1865
      %v3050 = vpack.c.bf16 %v1898, %v1866
      %v3051 = vpack.c.bf16 %v1899, %v1867
      %v3052 = vpack.c.bf16 %v1900, %v1868
      %v3053 = vpack.c.bf16 %v1901, %v1869
      %v3054 = vpack.c.bf16 %v1902, %v1870
      %v3055 = vpack.c.bf16 %v1903, %v1871
      %v3056 = vpack.c.bf16 %v1904, %v1872
      %v3057 = vpack.c.bf16 %v1905, %v1873
      %v3058 = vpack.c.bf16 %v1906, %v1874
      %v3059 = vpack.c.bf16 %v1907, %v1875
      %v3060 = vpack.c.bf16 %v1908, %v1876
      %v3061 = vpack.c.bf16 %v1909, %v1877
      %v3062 = vpack.c.bf16 %v1910, %v1878
      %v3063 = vpack.c.bf16 %v1911, %v1879
      %v3064 = vpack.c.bf16 %v1912, %v1880
      %v3065 = vpack.c.bf16 %v1913, %v1881
      %v3066 = vpack.c.bf16 %v1914, %v1882
      %v3067 = vpack.c.bf16 %v1915, %v1883
      %v3068 = vpack.c.bf16 %v1916, %v1884
      %v3069 = vpack.c.bf16 %v1949, %v1917
      %v3070 = vpack.c.bf16 %v1950, %v1918
      %v3071 = vpack.c.bf16 %v1951, %v1919
      %v3072 = vpack.c.bf16 %v1952, %v1920
      %v3073 = vpack.c.bf16 %v1953, %v1921
      %v3074 = vpack.c.bf16 %v1954, %v1922
      %v3075 = vpack.c.bf16 %v1955, %v1923
      %v3076 = vpack.c.bf16 %v1956, %v1924
      %v3077 = vpack.c.bf16 %v1957, %v1925
      %v3078 = vpack.c.bf16 %v1958, %v1926
      %v3079 = vpack.c.bf16 %v1959, %v1927
      %v3080 = vpack.c.bf16 %v1960, %v1928
      %v3081 = vpack.c.bf16 %v1961, %v1929
      %v3082 = vpack.c.bf16 %v1962, %v1930
      %v3083 = vpack.c.bf16 %v1963, %v1931
      %v3084 = vpack.c.bf16 %v1964, %v1932
      %v3085 = vpack.c.bf16 %v1965, %v1933
      %v3086 = vpack.c.bf16 %v1966, %v1934
      %v3087 = vpack.c.bf16 %v1967, %v1935
      %v3088 = vpack.c.bf16 %v1968, %v1936
      %v3089 = vpack.c.bf16 %v1969, %v1937
      %v3090 = vpack.c.bf16 %v1970, %v1938
      %v3091 = vpack.c.bf16 %v1971, %v1939
      %v3092 = vpack.c.bf16 %v1972, %v1940
      %v3093 = vpack.c.bf16 %v1973, %v1941
      %v3094 = vpack.c.bf16 %v1974, %v1942
      %v3095 = vpack.c.bf16 %v1975, %v1943
      %v3096 = vpack.c.bf16 %v1976, %v1944
      %v3097 = vpack.c.bf16 %v1977, %v1945
      %v3098 = vpack.c.bf16 %v1978, %v1946
      %v3099 = vpack.c.bf16 %v1979, %v1947
      %v3100 = vpack.c.bf16 %v1980, %v1948
      %v3101 = vpack.c.bf16 %v2013, %v1981
      %v3102 = vpack.c.bf16 %v2014, %v1982
      %v3103 = vpack.c.bf16 %v2015, %v1983
      %v3104 = vpack.c.bf16 %v2016, %v1984
      %v3105 = vpack.c.bf16 %v2017, %v1985
      %v3106 = vpack.c.bf16 %v2018, %v1986
      %v3107 = vpack.c.bf16 %v2019, %v1987
      %v3108 = vpack.c.bf16 %v2020, %v1988
      %v3109 = vpack.c.bf16 %v2021, %v1989
      %v3110 = vpack.c.bf16 %v2022, %v1990
      %v3111 = vpack.c.bf16 %v2023, %v1991
      %v3112 = vpack.c.bf16 %v2024, %v1992
      %v3113 = vpack.c.bf16 %v2025, %v1993
      %v3114 = vpack.c.bf16 %v2026, %v1994
      %v3115 = vpack.c.bf16 %v2027, %v1995
      %v3116 = vpack.c.bf16 %v2028, %v1996
      %v3117 = vpack.c.bf16 %v2029, %v1997
      %v3118 = vpack.c.bf16 %v2030, %v1998
      %v3119 = vpack.c.bf16 %v2031, %v1999
      %v3120 = vpack.c.bf16 %v2032, %v2000
      %v3121 = vpack.c.bf16 %v2033, %v2001
      %v3122 = vpack.c.bf16 %v2034, %v2002
      %v3123 = vpack.c.bf16 %v2035, %v2003
      %v3124 = vpack.c.bf16 %v2036, %v2004
      %v3125 = vpack.c.bf16 %v2037, %v2005
      %v3126 = vpack.c.bf16 %v2038, %v2006
      %v3127 = vpack.c.bf16 %v2039, %v2007
      %v3128 = vpack.c.bf16 %v2040, %v2008
      %v3129 = vpack.c.bf16 %v2041, %v2009
      %v3130 = vpack.c.bf16 %v2042, %v2010
      %v3131 = vpack.c.bf16 %v2043, %v2011
      %v3132 = vpack.c.bf16 %v2044, %v2012
      %v3133 = vpack.c.bf16 %v2077, %v2045
      %v3134 = vpack.c.bf16 %v2078, %v2046
      %v3135 = vpack.c.bf16 %v2079, %v2047
      %v3136 = vpack.c.bf16 %v2080, %v2048
      %v3137 = vpack.c.bf16 %v2081, %v2049
      %v3138 = vpack.c.bf16 %v2082, %v2050
      %v3139 = vpack.c.bf16 %v2083, %v2051
      %v3140 = vpack.c.bf16 %v2084, %v2052
      %v3141 = vpack.c.bf16 %v2085, %v2053
      %v3142 = vpack.c.bf16 %v2086, %v2054
      %v3143 = vpack.c.bf16 %v2087, %v2055
      %v3144 = vpack.c.bf16 %v2088, %v2056
      %v3145 = vpack.c.bf16 %v2089, %v2057
      %v3146 = vpack.c.bf16 %v2090, %v2058
      %v3147 = vpack.c.bf16 %v2091, %v2059
      %v3148 = vpack.c.bf16 %v2092, %v2060
      %v3149 = vpack.c.bf16 %v2093, %v2061
      %v3150 = vpack.c.bf16 %v2094, %v2062
      %v3151 = vpack.c.bf16 %v2095, %v2063
      %v3152 = vpack.c.bf16 %v2096, %v2064
      %v3153 = vpack.c.bf16 %v2097, %v2065
      %v3154 = vpack.c.bf16 %v2098, %v2066
      %v3155 = vpack.c.bf16 %v2099, %v2067
      %v3156 = vpack.c.bf16 %v2100, %v2068
      %v3157 = vpack.c.bf16 %v2101, %v2069
      %v3158 = vpack.c.bf16 %v2102, %v2070
      %v3159 = vpack.c.bf16 %v2103, %v2071
      %v3160 = vpack.c.bf16 %v2104, %v2072
      %v3161 = vpack.c.bf16 %v2105, %v2073
      %v3162 = vpack.c.bf16 %v2106, %v2074
      %v3163 = vpack.c.bf16 %v2107, %v2075
      %v3164 = vpack.c.bf16 %v2108, %v2076
      %v3165 = vpack.c.bf16 %v2141, %v2109
      %v3166 = vpack.c.bf16 %v2142, %v2110
      %v3167 = vpack.c.bf16 %v2143, %v2111
      %v3168 = vpack.c.bf16 %v2144, %v2112
      %v3169 = vpack.c.bf16 %v2145, %v2113
      %v3170 = vpack.c.bf16 %v2146, %v2114
      %v3171 = vpack.c.bf16 %v2147, %v2115
      %v3172 = vpack.c.bf16 %v2148, %v2116
      %v3173 = vpack.c.bf16 %v2149, %v2117
      %v3174 = vpack.c.bf16 %v2150, %v2118
      %v3175 = vpack.c.bf16 %v2151, %v2119
      %v3176 = vpack.c.bf16 %v2152, %v2120
      %v3177 = vpack.c.bf16 %v2153, %v2121
      %v3178 = vpack.c.bf16 %v2154, %v2122
      %v3179 = vpack.c.bf16 %v2155, %v2123
      %v3180 = vpack.c.bf16 %v2156, %v2124
      %v3181 = vpack.c.bf16 %v2157, %v2125
      %v3182 = vpack.c.bf16 %v2158, %v2126
      %v3183 = vpack.c.bf16 %v2159, %v2127
      %v3184 = vpack.c.bf16 %v2160, %v2128
      %v3185 = vpack.c.bf16 %v2161, %v2129
      %v3186 = vpack.c.bf16 %v2162, %v2130
      %v3187 = vpack.c.bf16 %v2163, %v2131
      %v3188 = vpack.c.bf16 %v2164, %v2132
      %v3189 = vpack.c.bf16 %v2165, %v2133
      %v3190 = vpack.c.bf16 %v2166, %v2134
      %v3191 = vpack.c.bf16 %v2167, %v2135
      %v3192 = vpack.c.bf16 %v2168, %v2136
      %v3193 = vpack.c.bf16 %v2169, %v2137
      %v3194 = vpack.c.bf16 %v2170, %v2138
      %v3195 = vpack.c.bf16 %v2171, %v2139
      %v3196 = vpack.c.bf16 %v2172, %v2140
      %v4221 = vunpack.c.l.b16 %v2173
      %v4222 = vunpack.c.l.b16 %v2174
      %v4223 = vunpack.c.l.b16 %v2175
      %v4224 = vunpack.c.l.b16 %v2176
      %v4225 = vunpack.c.l.b16 %v2177
      %v4226 = vunpack.c.l.b16 %v2178
      %v4227 = vunpack.c.l.b16 %v2179
      %v4228 = vunpack.c.l.b16 %v2180
      %v4229 = vunpack.c.l.b16 %v2181
      %v4230 = vunpack.c.l.b16 %v2182
      %v4231 = vunpack.c.l.b16 %v2183
      %v4232 = vunpack.c.l.b16 %v2184
      %v4233 = vunpack.c.l.b16 %v2185
      %v4234 = vunpack.c.l.b16 %v2186
      %v4235 = vunpack.c.l.b16 %v2187
      %v4236 = vunpack.c.l.b16 %v2188
      %v4237 = vunpack.c.l.b16 %v2189
      %v4238 = vunpack.c.l.b16 %v2190
      %v4239 = vunpack.c.l.b16 %v2191
      %v4240 = vunpack.c.l.b16 %v2192
      %v4241 = vunpack.c.l.b16 %v2193
      %v4242 = vunpack.c.l.b16 %v2194
      %v4243 = vunpack.c.l.b16 %v2195
      %v4244 = vunpack.c.l.b16 %v2196
      %v4245 = vunpack.c.l.b16 %v2197
      %v4246 = vunpack.c.l.b16 %v2198
      %v4247 = vunpack.c.l.b16 %v2199
      %v4248 = vunpack.c.l.b16 %v2200
      %v4249 = vunpack.c.l.b16 %v2201
      %v4250 = vunpack.c.l.b16 %v2202
      %v4251 = vunpack.c.l.b16 %v2203
      %v4252 = vunpack.c.l.b16 %v2204
      %v4253 = vunpack.c.h.b16 %v2173
      %v4254 = vunpack.c.h.b16 %v2174
      %v4255 = vunpack.c.h.b16 %v2175
      %v4256 = vunpack.c.h.b16 %v2176
      %v4257 = vunpack.c.h.b16 %v2177
      %v4258 = vunpack.c.h.b16 %v2178
      %v4259 = vunpack.c.h.b16 %v2179
      %v4260 = vunpack.c.h.b16 %v2180
      %v4261 = vunpack.c.h.b16 %v2181
      %v4262 = vunpack.c.h.b16 %v2182
      %v4263 = vunpack.c.h.b16 %v2183
      %v4264 = vunpack.c.h.b16 %v2184
      %v4265 = vunpack.c.h.b16 %v2185
      %v4266 = vunpack.c.h.b16 %v2186
      %v4267 = vunpack.c.h.b16 %v2187
      %v4268 = vunpack.c.h.b16 %v2188
      %v4269 = vunpack.c.h.b16 %v2189
      %v4270 = vunpack.c.h.b16 %v2190
      %v4271 = vunpack.c.h.b16 %v2191
      %v4272 = vunpack.c.h.b16 %v2192
      %v4273 = vunpack.c.h.b16 %v2193
      %v4274 = vunpack.c.h.b16 %v2194
      %v4275 = vunpack.c.h.b16 %v2195
      %v4276 = vunpack.c.h.b16 %v2196
      %v4277 = vunpack.c.h.b16 %v2197
      %v4278 = vunpack.c.h.b16 %v2198
      %v4279 = vunpack.c.h.b16 %v2199
      %v4280 = vunpack.c.h.b16 %v2200
      %v4281 = vunpack.c.h.b16 %v2201
      %v4282 = vunpack.c.h.b16 %v2202
      %v4283 = vunpack.c.h.b16 %v2203
      %v4284 = vunpack.c.h.b16 %v2204
      %v4285 = vunpack.c.l.b16 %v2205
      %v4286 = vunpack.c.l.b16 %v2206
      %v4287 = vunpack.c.l.b16 %v2207
      %v4288 = vunpack.c.l.b16 %v2208
      %v4289 = vunpack.c.l.b16 %v2209
      %v4290 = vunpack.c.l.b16 %v2210
      %v4291 = vunpack.c.l.b16 %v2211
      %v4292 = vunpack.c.l.b16 %v2212
      %v4293 = vunpack.c.l.b16 %v2213
      %v4294 = vunpack.c.l.b16 %v2214
      %v4295 = vunpack.c.l.b16 %v2215
      %v4296 = vunpack.c.l.b16 %v2216
      %v4297 = vunpack.c.l.b16 %v2217
      %v4298 = vunpack.c.l.b16 %v2218
      %v4299 = vunpack.c.l.b16 %v2219
      %v4300 = vunpack.c.l.b16 %v2220
      %v4301 = vunpack.c.l.b16 %v2221
      %v4302 = vunpack.c.l.b16 %v2222
      %v4303 = vunpack.c.l.b16 %v2223
      %v4304 = vunpack.c.l.b16 %v2224
      %v4305 = vunpack.c.l.b16 %v2225
      %v4306 = vunpack.c.l.b16 %v2226
      %v4307 = vunpack.c.l.b16 %v2227
      %v4308 = vunpack.c.l.b16 %v2228
      %v4309 = vunpack.c.l.b16 %v2229
      %v4310 = vunpack.c.l.b16 %v2230
      %v4311 = vunpack.c.l.b16 %v2231
      %v4312 = vunpack.c.l.b16 %v2232
      %v4313 = vunpack.c.l.b16 %v2233
      %v4314 = vunpack.c.l.b16 %v2234
      %v4315 = vunpack.c.l.b16 %v2235
      %v4316 = vunpack.c.l.b16 %v2236
      %v4317 = vunpack.c.h.b16 %v2205
      %v4318 = vunpack.c.h.b16 %v2206
      %v4319 = vunpack.c.h.b16 %v2207
      %v4320 = vunpack.c.h.b16 %v2208
      %v4321 = vunpack.c.h.b16 %v2209
      %v4322 = vunpack.c.h.b16 %v2210
      %v4323 = vunpack.c.h.b16 %v2211
      %v4324 = vunpack.c.h.b16 %v2212
      %v4325 = vunpack.c.h.b16 %v2213
      %v4326 = vunpack.c.h.b16 %v2214
      %v4327 = vunpack.c.h.b16 %v2215
      %v4328 = vunpack.c.h.b16 %v2216
      %v4329 = vunpack.c.h.b16 %v2217
      %v4330 = vunpack.c.h.b16 %v2218
      %v4331 = vunpack.c.h.b16 %v2219
      %v4332 = vunpack.c.h.b16 %v2220
      %v4333 = vunpack.c.h.b16 %v2221
      %v4334 = vunpack.c.h.b16 %v2222
      %v4335 = vunpack.c.h.b16 %v2223
      %v4336 = vunpack.c.h.b16 %v2224
      %v4337 = vunpack.c.h.b16 %v2225
      %v4338 = vunpack.c.h.b16 %v2226
      %v4339 = vunpack.c.h.b16 %v2227
      %v4340 = vunpack.c.h.b16 %v2228
      %v4341 = vunpack.c.h.b16 %v2229
      %v4342 = vunpack.c.h.b16 %v2230
      %v4343 = vunpack.c.h.b16 %v2231
      %v4344 = vunpack.c.h.b16 %v2232
      %v4345 = vunpack.c.h.b16 %v2233
      %v4346 = vunpack.c.h.b16 %v2234
      %v4347 = vunpack.c.h.b16 %v2235
      %v4348 = vunpack.c.h.b16 %v2236
      %v4349 = vunpack.c.l.b16 %v2237
      %v4350 = vunpack.c.l.b16 %v2238
      %v4351 = vunpack.c.l.b16 %v2239
      %v4352 = vunpack.c.l.b16 %v2240
      %v4353 = vunpack.c.l.b16 %v2241
      %v4354 = vunpack.c.l.b16 %v2242
      %v4355 = vunpack.c.l.b16 %v2243
      %v4356 = vunpack.c.l.b16 %v2244
      %v4357 = vunpack.c.l.b16 %v2245
      %v4358 = vunpack.c.l.b16 %v2246
      %v4359 = vunpack.c.l.b16 %v2247
      %v4360 = vunpack.c.l.b16 %v2248
      %v4361 = vunpack.c.l.b16 %v2249
      %v4362 = vunpack.c.l.b16 %v2250
      %v4363 = vunpack.c.l.b16 %v2251
      %v4364 = vunpack.c.l.b16 %v2252
      %v4365 = vunpack.c.l.b16 %v2253
      %v4366 = vunpack.c.l.b16 %v2254
      %v4367 = vunpack.c.l.b16 %v2255
      %v4368 = vunpack.c.l.b16 %v2256
      %v4369 = vunpack.c.l.b16 %v2257
      %v4370 = vunpack.c.l.b16 %v2258
      %v4371 = vunpack.c.l.b16 %v2259
      %v4372 = vunpack.c.l.b16 %v2260
      %v4373 = vunpack.c.l.b16 %v2261
      %v4374 = vunpack.c.l.b16 %v2262
      %v4375 = vunpack.c.l.b16 %v2263
      %v4376 = vunpack.c.l.b16 %v2264
      %v4377 = vunpack.c.l.b16 %v2265
      %v4378 = vunpack.c.l.b16 %v2266
      %v4379 = vunpack.c.l.b16 %v2267
      %v4380 = vunpack.c.l.b16 %v2268
      %v4381 = vunpack.c.h.b16 %v2237
      %v4382 = vunpack.c.h.b16 %v2238
      %v4383 = vunpack.c.h.b16 %v2239
      %v4384 = vunpack.c.h.b16 %v2240
      %v4385 = vunpack.c.h.b16 %v2241
      %v4386 = vunpack.c.h.b16 %v2242
      %v4387 = vunpack.c.h.b16 %v2243
      %v4388 = vunpack.c.h.b16 %v2244
      %v4389 = vunpack.c.h.b16 %v2245
      %v4390 = vunpack.c.h.b16 %v2246
      %v4391 = vunpack.c.h.b16 %v2247
      %v4392 = vunpack.c.h.b16 %v2248
      %v4393 = vunpack.c.h.b16 %v2249
      %v4394 = vunpack.c.h.b16 %v2250
      %v4395 = vunpack.c.h.b16 %v2251
      %v4396 = vunpack.c.h.b16 %v2252
      %v4397 = vunpack.c.h.b16 %v2253
      %v4398 = vunpack.c.h.b16 %v2254
      %v4399 = vunpack.c.h.b16 %v2255
      %v4400 = vunpack.c.h.b16 %v2256
      %v4401 = vunpack.c.h.b16 %v2257
      %v4402 = vunpack.c.h.b16 %v2258
      %v4403 = vunpack.c.h.b16 %v2259
      %v4404 = vunpack.c.h.b16 %v2260
      %v4405 = vunpack.c.h.b16 %v2261
      %v4406 = vunpack.c.h.b16 %v2262
      %v4407 = vunpack.c.h.b16 %v2263
      %v4408 = vunpack.c.h.b16 %v2264
      %v4409 = vunpack.c.h.b16 %v2265
      %v4410 = vunpack.c.h.b16 %v2266
      %v4411 = vunpack.c.h.b16 %v2267
      %v4412 = vunpack.c.h.b16 %v2268
      %v4413 = vunpack.c.l.b16 %v2269
      %v4414 = vunpack.c.l.b16 %v2270
      %v4415 = vunpack.c.l.b16 %v2271
      %v4416 = vunpack.c.l.b16 %v2272
      %v4417 = vunpack.c.l.b16 %v2273
      %v4418 = vunpack.c.l.b16 %v2274
      %v4419 = vunpack.c.l.b16 %v2275
      %v4420 = vunpack.c.l.b16 %v2276
      %v4421 = vunpack.c.l.b16 %v2277
      %v4422 = vunpack.c.l.b16 %v2278
      %v4423 = vunpack.c.l.b16 %v2279
      %v4424 = vunpack.c.l.b16 %v2280
      %v4425 = vunpack.c.l.b16 %v2281
      %v4426 = vunpack.c.l.b16 %v2282
      %v4427 = vunpack.c.l.b16 %v2283
      %v4428 = vunpack.c.l.b16 %v2284
      %v4429 = vunpack.c.l.b16 %v2285
      %v4430 = vunpack.c.l.b16 %v2286
      %v4431 = vunpack.c.l.b16 %v2287
      %v4432 = vunpack.c.l.b16 %v2288
      %v4433 = vunpack.c.l.b16 %v2289
      %v4434 = vunpack.c.l.b16 %v2290
      %v4435 = vunpack.c.l.b16 %v2291
      %v4436 = vunpack.c.l.b16 %v2292
      %v4437 = vunpack.c.l.b16 %v2293
      %v4438 = vunpack.c.l.b16 %v2294
      %v4439 = vunpack.c.l.b16 %v2295
      %v4440 = vunpack.c.l.b16 %v2296
      %v4441 = vunpack.c.l.b16 %v2297
      %v4442 = vunpack.c.l.b16 %v2298
      %v4443 = vunpack.c.l.b16 %v2299
      %v4444 = vunpack.c.l.b16 %v2300
      %v4445 = vunpack.c.h.b16 %v2269
      %v4446 = vunpack.c.h.b16 %v2270
      %v4447 = vunpack.c.h.b16 %v2271
      %v4448 = vunpack.c.h.b16 %v2272
      %v4449 = vunpack.c.h.b16 %v2273
      %v4450 = vunpack.c.h.b16 %v2274
      %v4451 = vunpack.c.h.b16 %v2275
      %v4452 = vunpack.c.h.b16 %v2276
      %v4453 = vunpack.c.h.b16 %v2277
      %v4454 = vunpack.c.h.b16 %v2278
      %v4455 = vunpack.c.h.b16 %v2279
      %v4456 = vunpack.c.h.b16 %v2280
      %v4457 = vunpack.c.h.b16 %v2281
      %v4458 = vunpack.c.h.b16 %v2282
      %v4459 = vunpack.c.h.b16 %v2283
      %v4460 = vunpack.c.h.b16 %v2284
      %v4461 = vunpack.c.h.b16 %v2285
      %v4462 = vunpack.c.h.b16 %v2286
      %v4463 = vunpack.c.h.b16 %v2287
      %v4464 = vunpack.c.h.b16 %v2288
      %v4465 = vunpack.c.h.b16 %v2289
      %v4466 = vunpack.c.h.b16 %v2290
      %v4467 = vunpack.c.h.b16 %v2291
      %v4468 = vunpack.c.h.b16 %v2292
      %v4469 = vunpack.c.h.b16 %v2293
      %v4470 = vunpack.c.h.b16 %v2294
      %v4471 = vunpack.c.h.b16 %v2295
      %v4472 = vunpack.c.h.b16 %v2296
      %v4473 = vunpack.c.h.b16 %v2297
      %v4474 = vunpack.c.h.b16 %v2298
      %v4475 = vunpack.c.h.b16 %v2299
      %v4476 = vunpack.c.h.b16 %v2300
      %v4477 = vunpack.c.l.b16 %v2301
      %v4478 = vunpack.c.l.b16 %v2302
      %v4479 = vunpack.c.l.b16 %v2303
      %v4480 = vunpack.c.l.b16 %v2304
      %v4481 = vunpack.c.l.b16 %v2305
      %v4482 = vunpack.c.l.b16 %v2306
      %v4483 = vunpack.c.l.b16 %v2307
      %v4484 = vunpack.c.l.b16 %v2308
      %v4485 = vunpack.c.l.b16 %v2309
      %v4486 = vunpack.c.l.b16 %v2310
      %v4487 = vunpack.c.l.b16 %v2311
      %v4488 = vunpack.c.l.b16 %v2312
      %v4489 = vunpack.c.l.b16 %v2313
      %v4490 = vunpack.c.l.b16 %v2314
      %v4491 = vunpack.c.l.b16 %v2315
      %v4492 = vunpack.c.l.b16 %v2316
      %v4493 = vunpack.c.l.b16 %v2317
      %v4494 = vunpack.c.l.b16 %v2318
      %v4495 = vunpack.c.l.b16 %v2319
      %v4496 = vunpack.c.l.b16 %v2320
      %v4497 = vunpack.c.l.b16 %v2321
      %v4498 = vunpack.c.l.b16 %v2322
      %v4499 = vunpack.c.l.b16 %v2323
      %v4500 = vunpack.c.l.b16 %v2324
      %v4501 = vunpack.c.l.b16 %v2325
      %v4502 = vunpack.c.l.b16 %v2326
      %v4503 = vunpack.c.l.b16 %v2327
      %v4504 = vunpack.c.l.b16 %v2328
      %v4505 = vunpack.c.l.b16 %v2329
      %v4506 = vunpack.c.l.b16 %v2330
      %v4507 = vunpack.c.l.b16 %v2331
      %v4508 = vunpack.c.l.b16 %v2332
      %v4509 = vunpack.c.h.b16 %v2301
      %v4510 = vunpack.c.h.b16 %v2302
      %v4511 = vunpack.c.h.b16 %v2303
      %v4512 = vunpack.c.h.b16 %v2304
      %v4513 = vunpack.c.h.b16 %v2305
      %v4514 = vunpack.c.h.b16 %v2306
      %v4515 = vunpack.c.h.b16 %v2307
      %v4516 = vunpack.c.h.b16 %v2308
      %v4517 = vunpack.c.h.b16 %v2309
      %v4518 = vunpack.c.h.b16 %v2310
      %v4519 = vunpack.c.h.b16 %v2311
      %v4520 = vunpack.c.h.b16 %v2312
      %v4521 = vunpack.c.h.b16 %v2313
      %v4522 = vunpack.c.h.b16 %v2314
      %v4523 = vunpack.c.h.b16 %v2315
      %v4524 = vunpack.c.h.b16 %v2316
      %v4525 = vunpack.c.h.b16 %v2317
      %v4526 = vunpack.c.h.b16 %v2318
      %v4527 = vunpack.c.h.b16 %v2319
      %v4528 = vunpack.c.h.b16 %v2320
      %v4529 = vunpack.c.h.b16 %v2321
      %v4530 = vunpack.c.h.b16 %v2322
      %v4531 = vunpack.c.h.b16 %v2323
      %v4532 = vunpack.c.h.b16 %v2324
      %v4533 = vunpack.c.h.b16 %v2325
      %v4534 = vunpack.c.h.b16 %v2326
      %v4535 = vunpack.c.h.b16 %v2327
      %v4536 = vunpack.c.h.b16 %v2328
      %v4537 = vunpack.c.h.b16 %v2329
      %v4538 = vunpack.c.h.b16 %v2330
      %v4539 = vunpack.c.h.b16 %v2331
      %v4540 = vunpack.c.h.b16 %v2332
      %v4541 = vunpack.c.l.b16 %v2333
      %v4542 = vunpack.c.l.b16 %v2334
      %v4543 = vunpack.c.l.b16 %v2335
      %v4544 = vunpack.c.l.b16 %v2336
      %v4545 = vunpack.c.l.b16 %v2337
      %v4546 = vunpack.c.l.b16 %v2338
      %v4547 = vunpack.c.l.b16 %v2339
      %v4548 = vunpack.c.l.b16 %v2340
      %v4549 = vunpack.c.l.b16 %v2341
      %v4550 = vunpack.c.l.b16 %v2342
      %v4551 = vunpack.c.l.b16 %v2343
      %v4552 = vunpack.c.l.b16 %v2344
      %v4553 = vunpack.c.l.b16 %v2345
      %v4554 = vunpack.c.l.b16 %v2346
      %v4555 = vunpack.c.l.b16 %v2347
      %v4556 = vunpack.c.l.b16 %v2348
      %v4557 = vunpack.c.l.b16 %v2349
      %v4558 = vunpack.c.l.b16 %v2350
      %v4559 = vunpack.c.l.b16 %v2351
      %v4560 = vunpack.c.l.b16 %v2352
      %v4561 = vunpack.c.l.b16 %v2353
      %v4562 = vunpack.c.l.b16 %v2354
      %v4563 = vunpack.c.l.b16 %v2355
      %v4564 = vunpack.c.l.b16 %v2356
      %v4565 = vunpack.c.l.b16 %v2357
      %v4566 = vunpack.c.l.b16 %v2358
      %v4567 = vunpack.c.l.b16 %v2359
      %v4568 = vunpack.c.l.b16 %v2360
      %v4569 = vunpack.c.l.b16 %v2361
      %v4570 = vunpack.c.l.b16 %v2362
      %v4571 = vunpack.c.l.b16 %v2363
      %v4572 = vunpack.c.l.b16 %v2364
      %v4573 = vunpack.c.h.b16 %v2333
      %v4574 = vunpack.c.h.b16 %v2334
      %v4575 = vunpack.c.h.b16 %v2335
      %v4576 = vunpack.c.h.b16 %v2336
      %v4577 = vunpack.c.h.b16 %v2337
      %v4578 = vunpack.c.h.b16 %v2338
      %v4579 = vunpack.c.h.b16 %v2339
      %v4580 = vunpack.c.h.b16 %v2340
      %v4581 = vunpack.c.h.b16 %v2341
      %v4582 = vunpack.c.h.b16 %v2342
      %v4583 = vunpack.c.h.b16 %v2343
      %v4584 = vunpack.c.h.b16 %v2344
      %v4585 = vunpack.c.h.b16 %v2345
      %v4586 = vunpack.c.h.b16 %v2346
      %v4587 = vunpack.c.h.b16 %v2347
      %v4588 = vunpack.c.h.b16 %v2348
      %v4589 = vunpack.c.h.b16 %v2349
      %v4590 = vunpack.c.h.b16 %v2350
      %v4591 = vunpack.c.h.b16 %v2351
      %v4592 = vunpack.c.h.b16 %v2352
      %v4593 = vunpack.c.h.b16 %v2353
      %v4594 = vunpack.c.h.b16 %v2354
      %v4595 = vunpack.c.h.b16 %v2355
      %v4596 = vunpack.c.h.b16 %v2356
      %v4597 = vunpack.c.h.b16 %v2357
      %v4598 = vunpack.c.h.b16 %v2358
      %v4599 = vunpack.c.h.b16 %v2359
      %v4600 = vunpack.c.h.b16 %v2360
      %v4601 = vunpack.c.h.b16 %v2361
      %v4602 = vunpack.c.h.b16 %v2362
      %v4603 = vunpack.c.h.b16 %v2363
      %v4604 = vunpack.c.h.b16 %v2364
      %v4605 = vunpack.c.l.b16 %v2365
      %v4606 = vunpack.c.l.b16 %v2366
      %v4607 = vunpack.c.l.b16 %v2367
      %v4608 = vunpack.c.l.b16 %v2368
      %v4609 = vunpack.c.l.b16 %v2369
      %v4610 = vunpack.c.l.b16 %v2370
      %v4611 = vunpack.c.l.b16 %v2371
      %v4612 = vunpack.c.l.b16 %v2372
      %v4613 = vunpack.c.l.b16 %v2373
      %v4614 = vunpack.c.l.b16 %v2374
      %v4615 = vunpack.c.l.b16 %v2375
      %v4616 = vunpack.c.l.b16 %v2376
      %v4617 = vunpack.c.l.b16 %v2377
      %v4618 = vunpack.c.l.b16 %v2378
      %v4619 = vunpack.c.l.b16 %v2379
      %v4620 = vunpack.c.l.b16 %v2380
      %v4621 = vunpack.c.l.b16 %v2381
      %v4622 = vunpack.c.l.b16 %v2382
      %v4623 = vunpack.c.l.b16 %v2383
      %v4624 = vunpack.c.l.b16 %v2384
      %v4625 = vunpack.c.l.b16 %v2385
      %v4626 = vunpack.c.l.b16 %v2386
      %v4627 = vunpack.c.l.b16 %v2387
      %v4628 = vunpack.c.l.b16 %v2388
      %v4629 = vunpack.c.l.b16 %v2389
      %v4630 = vunpack.c.l.b16 %v2390
      %v4631 = vunpack.c.l.b16 %v2391
      %v4632 = vunpack.c.l.b16 %v2392
      %v4633 = vunpack.c.l.b16 %v2393
      %v4634 = vunpack.c.l.b16 %v2394
      %v4635 = vunpack.c.l.b16 %v2395
      %v4636 = vunpack.c.l.b16 %v2396
      %v4637 = vunpack.c.h.b16 %v2365
      %v4638 = vunpack.c.h.b16 %v2366
      %v4639 = vunpack.c.h.b16 %v2367
      %v4640 = vunpack.c.h.b16 %v2368
      %v4641 = vunpack.c.h.b16 %v2369
      %v4642 = vunpack.c.h.b16 %v2370
      %v4643 = vunpack.c.h.b16 %v2371
      %v4644 = vunpack.c.h.b16 %v2372
      %v4645 = vunpack.c.h.b16 %v2373
      %v4646 = vunpack.c.h.b16 %v2374
      %v4647 = vunpack.c.h.b16 %v2375
      %v4648 = vunpack.c.h.b16 %v2376
      %v4649 = vunpack.c.h.b16 %v2377
      %v4650 = vunpack.c.h.b16 %v2378
      %v4651 = vunpack.c.h.b16 %v2379
      %v4652 = vunpack.c.h.b16 %v2380
      %v4653 = vunpack.c.h.b16 %v2381
      %v4654 = vunpack.c.h.b16 %v2382
      %v4655 = vunpack.c.h.b16 %v2383
      %v4656 = vunpack.c.h.b16 %v2384
      %v4657 = vunpack.c.h.b16 %v2385
      %v4658 = vunpack.c.h.b16 %v2386
      %v4659 = vunpack.c.h.b16 %v2387
      %v4660 = vunpack.c.h.b16 %v2388
      %v4661 = vunpack.c.h.b16 %v2389
      %v4662 = vunpack.c.h.b16 %v2390
      %v4663 = vunpack.c.h.b16 %v2391
      %v4664 = vunpack.c.h.b16 %v2392
      %v4665 = vunpack.c.h.b16 %v2393
      %v4666 = vunpack.c.h.b16 %v2394
      %v4667 = vunpack.c.h.b16 %v2395
      %v4668 = vunpack.c.h.b16 %v2396
      %v4669 = vunpack.c.l.b16 %v2397
      %v4670 = vunpack.c.l.b16 %v2398
      %v4671 = vunpack.c.l.b16 %v2399
      %v4672 = vunpack.c.l.b16 %v2400
      %v4673 = vunpack.c.l.b16 %v2401
      %v4674 = vunpack.c.l.b16 %v2402
      %v4675 = vunpack.c.l.b16 %v2403
      %v4676 = vunpack.c.l.b16 %v2404
      %v4677 = vunpack.c.l.b16 %v2405
      %v4678 = vunpack.c.l.b16 %v2406
      %v4679 = vunpack.c.l.b16 %v2407
      %v4680 = vunpack.c.l.b16 %v2408
      %v4681 = vunpack.c.l.b16 %v2409
      %v4682 = vunpack.c.l.b16 %v2410
      %v4683 = vunpack.c.l.b16 %v2411
      %v4684 = vunpack.c.l.b16 %v2412
      %v4685 = vunpack.c.l.b16 %v2413
      %v4686 = vunpack.c.l.b16 %v2414
      %v4687 = vunpack.c.l.b16 %v2415
      %v4688 = vunpack.c.l.b16 %v2416
      %v4689 = vunpack.c.l.b16 %v2417
      %v4690 = vunpack.c.l.b16 %v2418
      %v4691 = vunpack.c.l.b16 %v2419
      %v4692 = vunpack.c.l.b16 %v2420
      %v4693 = vunpack.c.l.b16 %v2421
      %v4694 = vunpack.c.l.b16 %v2422
      %v4695 = vunpack.c.l.b16 %v2423
      %v4696 = vunpack.c.l.b16 %v2424
      %v4697 = vunpack.c.l.b16 %v2425
      %v4698 = vunpack.c.l.b16 %v2426
      %v4699 = vunpack.c.l.b16 %v2427
      %v4700 = vunpack.c.l.b16 %v2428
      %v4701 = vunpack.c.h.b16 %v2397
      %v4702 = vunpack.c.h.b16 %v2398
      %v4703 = vunpack.c.h.b16 %v2399
      %v4704 = vunpack.c.h.b16 %v2400
      %v4705 = vunpack.c.h.b16 %v2401
      %v4706 = vunpack.c.h.b16 %v2402
      %v4707 = vunpack.c.h.b16 %v2403
      %v4708 = vunpack.c.h.b16 %v2404
      %v4709 = vunpack.c.h.b16 %v2405
      %v4710 = vunpack.c.h.b16 %v2406
      %v4711 = vunpack.c.h.b16 %v2407
      %v4712 = vunpack.c.h.b16 %v2408
      %v4713 = vunpack.c.h.b16 %v2409
      %v4714 = vunpack.c.h.b16 %v2410
      %v4715 = vunpack.c.h.b16 %v2411
      %v4716 = vunpack.c.h.b16 %v2412
      %v4717 = vunpack.c.h.b16 %v2413
      %v4718 = vunpack.c.h.b16 %v2414
      %v4719 = vunpack.c.h.b16 %v2415
      %v4720 = vunpack.c.h.b16 %v2416
      %v4721 = vunpack.c.h.b16 %v2417
      %v4722 = vunpack.c.h.b16 %v2418
      %v4723 = vunpack.c.h.b16 %v2419
      %v4724 = vunpack.c.h.b16 %v2420
      %v4725 = vunpack.c.h.b16 %v2421
      %v4726 = vunpack.c.h.b16 %v2422
      %v4727 = vunpack.c.h.b16 %v2423
      %v4728 = vunpack.c.h.b16 %v2424
      %v4729 = vunpack.c.h.b16 %v2425
      %v4730 = vunpack.c.h.b16 %v2426
      %v4731 = vunpack.c.h.b16 %v2427
      %v4732 = vunpack.c.h.b16 %v2428
      %v4733 = vunpack.c.l.b16 %v2429
      %v4734 = vunpack.c.l.b16 %v2430
      %v4735 = vunpack.c.l.b16 %v2431
      %v4736 = vunpack.c.l.b16 %v2432
      %v4737 = vunpack.c.l.b16 %v2433
      %v4738 = vunpack.c.l.b16 %v2434
      %v4739 = vunpack.c.l.b16 %v2435
      %v4740 = vunpack.c.l.b16 %v2436
      %v4741 = vunpack.c.l.b16 %v2437
      %v4742 = vunpack.c.l.b16 %v2438
      %v4743 = vunpack.c.l.b16 %v2439
      %v4744 = vunpack.c.l.b16 %v2440
      %v4745 = vunpack.c.l.b16 %v2441
      %v4746 = vunpack.c.l.b16 %v2442
      %v4747 = vunpack.c.l.b16 %v2443
      %v4748 = vunpack.c.l.b16 %v2444
      %v4749 = vunpack.c.l.b16 %v2445
      %v4750 = vunpack.c.l.b16 %v2446
      %v4751 = vunpack.c.l.b16 %v2447
      %v4752 = vunpack.c.l.b16 %v2448
      %v4753 = vunpack.c.l.b16 %v2449
      %v4754 = vunpack.c.l.b16 %v2450
      %v4755 = vunpack.c.l.b16 %v2451
      %v4756 = vunpack.c.l.b16 %v2452
      %v4757 = vunpack.c.l.b16 %v2453
      %v4758 = vunpack.c.l.b16 %v2454
      %v4759 = vunpack.c.l.b16 %v2455
      %v4760 = vunpack.c.l.b16 %v2456
      %v4761 = vunpack.c.l.b16 %v2457
      %v4762 = vunpack.c.l.b16 %v2458
      %v4763 = vunpack.c.l.b16 %v2459
      %v4764 = vunpack.c.l.b16 %v2460
      %v4765 = vunpack.c.h.b16 %v2429
      %v4766 = vunpack.c.h.b16 %v2430
      %v4767 = vunpack.c.h.b16 %v2431
      %v4768 = vunpack.c.h.b16 %v2432
      %v4769 = vunpack.c.h.b16 %v2433
      %v4770 = vunpack.c.h.b16 %v2434
      %v4771 = vunpack.c.h.b16 %v2435
      %v4772 = vunpack.c.h.b16 %v2436
      %v4773 = vunpack.c.h.b16 %v2437
      %v4774 = vunpack.c.h.b16 %v2438
      %v4775 = vunpack.c.h.b16 %v2439
      %v4776 = vunpack.c.h.b16 %v2440
      %v4777 = vunpack.c.h.b16 %v2441
      %v4778 = vunpack.c.h.b16 %v2442
      %v4779 = vunpack.c.h.b16 %v2443
      %v4780 = vunpack.c.h.b16 %v2444
      %v4781 = vunpack.c.h.b16 %v2445
      %v4782 = vunpack.c.h.b16 %v2446
      %v4783 = vunpack.c.h.b16 %v2447
      %v4784 = vunpack.c.h.b16 %v2448
      %v4785 = vunpack.c.h.b16 %v2449
      %v4786 = vunpack.c.h.b16 %v2450
      %v4787 = vunpack.c.h.b16 %v2451
      %v4788 = vunpack.c.h.b16 %v2452
      %v4789 = vunpack.c.h.b16 %v2453
      %v4790 = vunpack.c.h.b16 %v2454
      %v4791 = vunpack.c.h.b16 %v2455
      %v4792 = vunpack.c.h.b16 %v2456
      %v4793 = vunpack.c.h.b16 %v2457
      %v4794 = vunpack.c.h.b16 %v2458
      %v4795 = vunpack.c.h.b16 %v2459
      %v4796 = vunpack.c.h.b16 %v2460
      %v4797 = vunpack.c.l.b16 %v2461
      %v4798 = vunpack.c.l.b16 %v2462
      %v4799 = vunpack.c.l.b16 %v2463
      %v4800 = vunpack.c.l.b16 %v2464
      %v4801 = vunpack.c.l.b16 %v2465
      %v4802 = vunpack.c.l.b16 %v2466
      %v4803 = vunpack.c.l.b16 %v2467
      %v4804 = vunpack.c.l.b16 %v2468
      %v4805 = vunpack.c.l.b16 %v2469
      %v4806 = vunpack.c.l.b16 %v2470
      %v4807 = vunpack.c.l.b16 %v2471
      %v4808 = vunpack.c.l.b16 %v2472
      %v4809 = vunpack.c.l.b16 %v2473
      %v4810 = vunpack.c.l.b16 %v2474
      %v4811 = vunpack.c.l.b16 %v2475
      %v4812 = vunpack.c.l.b16 %v2476
      %v4813 = vunpack.c.l.b16 %v2477
      %v4814 = vunpack.c.l.b16 %v2478
      %v4815 = vunpack.c.l.b16 %v2479
      %v4816 = vunpack.c.l.b16 %v2480
      %v4817 = vunpack.c.l.b16 %v2481
      %v4818 = vunpack.c.l.b16 %v2482
      %v4819 = vunpack.c.l.b16 %v2483
      %v4820 = vunpack.c.l.b16 %v2484
      %v4821 = vunpack.c.l.b16 %v2485
      %v4822 = vunpack.c.l.b16 %v2486
      %v4823 = vunpack.c.l.b16 %v2487
      %v4824 = vunpack.c.l.b16 %v2488
      %v4825 = vunpack.c.l.b16 %v2489
      %v4826 = vunpack.c.l.b16 %v2490
      %v4827 = vunpack.c.l.b16 %v2491
      %v4828 = vunpack.c.l.b16 %v2492
      %v4829 = vunpack.c.h.b16 %v2461
      %v4830 = vunpack.c.h.b16 %v2462
      %v4831 = vunpack.c.h.b16 %v2463
      %v4832 = vunpack.c.h.b16 %v2464
      %v4833 = vunpack.c.h.b16 %v2465
      %v4834 = vunpack.c.h.b16 %v2466
      %v4835 = vunpack.c.h.b16 %v2467
      %v4836 = vunpack.c.h.b16 %v2468
      %v4837 = vunpack.c.h.b16 %v2469
      %v4838 = vunpack.c.h.b16 %v2470
      %v4839 = vunpack.c.h.b16 %v2471
      %v4840 = vunpack.c.h.b16 %v2472
      %v4841 = vunpack.c.h.b16 %v2473
      %v4842 = vunpack.c.h.b16 %v2474
      %v4843 = vunpack.c.h.b16 %v2475
      %v4844 = vunpack.c.h.b16 %v2476
      %v4845 = vunpack.c.h.b16 %v2477
      %v4846 = vunpack.c.h.b16 %v2478
      %v4847 = vunpack.c.h.b16 %v2479
      %v4848 = vunpack.c.h.b16 %v2480
      %v4849 = vunpack.c.h.b16 %v2481
      %v4850 = vunpack.c.h.b16 %v2482
      %v4851 = vunpack.c.h.b16 %v2483
      %v4852 = vunpack.c.h.b16 %v2484
      %v4853 = vunpack.c.h.b16 %v2485
      %v4854 = vunpack.c.h.b16 %v2486
      %v4855 = vunpack.c.h.b16 %v2487
      %v4856 = vunpack.c.h.b16 %v2488
      %v4857 = vunpack.c.h.b16 %v2489
      %v4858 = vunpack.c.h.b16 %v2490
      %v4859 = vunpack.c.h.b16 %v2491
      %v4860 = vunpack.c.h.b16 %v2492
      %v4861 = vunpack.c.l.b16 %v2493
      %v4862 = vunpack.c.l.b16 %v2494
      %v4863 = vunpack.c.l.b16 %v2495
      %v4864 = vunpack.c.l.b16 %v2496
      %v4865 = vunpack.c.l.b16 %v2497
      %v4866 = vunpack.c.l.b16 %v2498
      %v4867 = vunpack.c.l.b16 %v2499
      %v4868 = vunpack.c.l.b16 %v2500
      %v4869 = vunpack.c.l.b16 %v2501
      %v4870 = vunpack.c.l.b16 %v2502
      %v4871 = vunpack.c.l.b16 %v2503
      %v4872 = vunpack.c.l.b16 %v2504
      %v4873 = vunpack.c.l.b16 %v2505
      %v4874 = vunpack.c.l.b16 %v2506
      %v4875 = vunpack.c.l.b16 %v2507
      %v4876 = vunpack.c.l.b16 %v2508
      %v4877 = vunpack.c.l.b16 %v2509
      %v4878 = vunpack.c.l.b16 %v2510
      %v4879 = vunpack.c.l.b16 %v2511
      %v4880 = vunpack.c.l.b16 %v2512
      %v4881 = vunpack.c.l.b16 %v2513
      %v4882 = vunpack.c.l.b16 %v2514
      %v4883 = vunpack.c.l.b16 %v2515
      %v4884 = vunpack.c.l.b16 %v2516
      %v4885 = vunpack.c.l.b16 %v2517
      %v4886 = vunpack.c.l.b16 %v2518
      %v4887 = vunpack.c.l.b16 %v2519
      %v4888 = vunpack.c.l.b16 %v2520
      %v4889 = vunpack.c.l.b16 %v2521
      %v4890 = vunpack.c.l.b16 %v2522
      %v4891 = vunpack.c.l.b16 %v2523
      %v4892 = vunpack.c.l.b16 %v2524
      %v4893 = vunpack.c.h.b16 %v2493
      %v4894 = vunpack.c.h.b16 %v2494
      %v4895 = vunpack.c.h.b16 %v2495
      %v4896 = vunpack.c.h.b16 %v2496
      %v4897 = vunpack.c.h.b16 %v2497
      %v4898 = vunpack.c.h.b16 %v2498
      %v4899 = vunpack.c.h.b16 %v2499
      %v4900 = vunpack.c.h.b16 %v2500
      %v4901 = vunpack.c.h.b16 %v2501
      %v4902 = vunpack.c.h.b16 %v2502
      %v4903 = vunpack.c.h.b16 %v2503
      %v4904 = vunpack.c.h.b16 %v2504
      %v4905 = vunpack.c.h.b16 %v2505
      %v4906 = vunpack.c.h.b16 %v2506
      %v4907 = vunpack.c.h.b16 %v2507
      %v4908 = vunpack.c.h.b16 %v2508
      %v4909 = vunpack.c.h.b16 %v2509
      %v4910 = vunpack.c.h.b16 %v2510
      %v4911 = vunpack.c.h.b16 %v2511
      %v4912 = vunpack.c.h.b16 %v2512
      %v4913 = vunpack.c.h.b16 %v2513
      %v4914 = vunpack.c.h.b16 %v2514
      %v4915 = vunpack.c.h.b16 %v2515
      %v4916 = vunpack.c.h.b16 %v2516
      %v4917 = vunpack.c.h.b16 %v2517
      %v4918 = vunpack.c.h.b16 %v2518
      %v4919 = vunpack.c.h.b16 %v2519
      %v4920 = vunpack.c.h.b16 %v2520
      %v4921 = vunpack.c.h.b16 %v2521
      %v4922 = vunpack.c.h.b16 %v2522
      %v4923 = vunpack.c.h.b16 %v2523
      %v4924 = vunpack.c.h.b16 %v2524
      %v4925 = vunpack.c.l.b16 %v2525
      %v4926 = vunpack.c.l.b16 %v2526
      %v4927 = vunpack.c.l.b16 %v2527
      %v4928 = vunpack.c.l.b16 %v2528
      %v4929 = vunpack.c.l.b16 %v2529
      %v4930 = vunpack.c.l.b16 %v2530
      %v4931 = vunpack.c.l.b16 %v2531
      %v4932 = vunpack.c.l.b16 %v2532
      %v4933 = vunpack.c.l.b16 %v2533
      %v4934 = vunpack.c.l.b16 %v2534
      %v4935 = vunpack.c.l.b16 %v2535
      %v4936 = vunpack.c.l.b16 %v2536
      %v4937 = vunpack.c.l.b16 %v2537
      %v4938 = vunpack.c.l.b16 %v2538
      %v4939 = vunpack.c.l.b16 %v2539
      %v4940 = vunpack.c.l.b16 %v2540
      %v4941 = vunpack.c.l.b16 %v2541
      %v4942 = vunpack.c.l.b16 %v2542
      %v4943 = vunpack.c.l.b16 %v2543
      %v4944 = vunpack.c.l.b16 %v2544
      %v4945 = vunpack.c.l.b16 %v2545
      %v4946 = vunpack.c.l.b16 %v2546
      %v4947 = vunpack.c.l.b16 %v2547
      %v4948 = vunpack.c.l.b16 %v2548
      %v4949 = vunpack.c.l.b16 %v2549
      %v4950 = vunpack.c.l.b16 %v2550
      %v4951 = vunpack.c.l.b16 %v2551
      %v4952 = vunpack.c.l.b16 %v2552
      %v4953 = vunpack.c.l.b16 %v2553
      %v4954 = vunpack.c.l.b16 %v2554
      %v4955 = vunpack.c.l.b16 %v2555
      %v4956 = vunpack.c.l.b16 %v2556
      %v4957 = vunpack.c.h.b16 %v2525
      %v4958 = vunpack.c.h.b16 %v2526
      %v4959 = vunpack.c.h.b16 %v2527
      %v4960 = vunpack.c.h.b16 %v2528
      %v4961 = vunpack.c.h.b16 %v2529
      %v4962 = vunpack.c.h.b16 %v2530
      %v4963 = vunpack.c.h.b16 %v2531
      %v4964 = vunpack.c.h.b16 %v2532
      %v4965 = vunpack.c.h.b16 %v2533
      %v4966 = vunpack.c.h.b16 %v2534
      %v4967 = vunpack.c.h.b16 %v2535
      %v4968 = vunpack.c.h.b16 %v2536
      %v4969 = vunpack.c.h.b16 %v2537
      %v4970 = vunpack.c.h.b16 %v2538
      %v4971 = vunpack.c.h.b16 %v2539
      %v4972 = vunpack.c.h.b16 %v2540
      %v4973 = vunpack.c.h.b16 %v2541
      %v4974 = vunpack.c.h.b16 %v2542
      %v4975 = vunpack.c.h.b16 %v2543
      %v4976 = vunpack.c.h.b16 %v2544
      %v4977 = vunpack.c.h.b16 %v2545
      %v4978 = vunpack.c.h.b16 %v2546
      %v4979 = vunpack.c.h.b16 %v2547
      %v4980 = vunpack.c.h.b16 %v2548
      %v4981 = vunpack.c.h.b16 %v2549
      %v4982 = vunpack.c.h.b16 %v2550
      %v4983 = vunpack.c.h.b16 %v2551
      %v4984 = vunpack.c.h.b16 %v2552
      %v4985 = vunpack.c.h.b16 %v2553
      %v4986 = vunpack.c.h.b16 %v2554
      %v4987 = vunpack.c.h.b16 %v2555
      %v4988 = vunpack.c.h.b16 %v2556
      %v4989 = vunpack.c.l.b16 %v2557
      %v4990 = vunpack.c.l.b16 %v2558
      %v4991 = vunpack.c.l.b16 %v2559
      %v4992 = vunpack.c.l.b16 %v2560
      %v4993 = vunpack.c.l.b16 %v2561
      %v4994 = vunpack.c.l.b16 %v2562
      %v4995 = vunpack.c.l.b16 %v2563
      %v4996 = vunpack.c.l.b16 %v2564
      %v4997 = vunpack.c.l.b16 %v2565
      %v4998 = vunpack.c.l.b16 %v2566
      %v4999 = vunpack.c.l.b16 %v2567
      %v5000 = vunpack.c.l.b16 %v2568
      %v5001 = vunpack.c.l.b16 %v2569
      %v5002 = vunpack.c.l.b16 %v2570
      %v5003 = vunpack.c.l.b16 %v2571
      %v5004 = vunpack.c.l.b16 %v2572
      %v5005 = vunpack.c.l.b16 %v2573
      %v5006 = vunpack.c.l.b16 %v2574
      %v5007 = vunpack.c.l.b16 %v2575
      %v5008 = vunpack.c.l.b16 %v2576
      %v5009 = vunpack.c.l.b16 %v2577
      %v5010 = vunpack.c.l.b16 %v2578
      %v5011 = vunpack.c.l.b16 %v2579
      %v5012 = vunpack.c.l.b16 %v2580
      %v5013 = vunpack.c.l.b16 %v2581
      %v5014 = vunpack.c.l.b16 %v2582
      %v5015 = vunpack.c.l.b16 %v2583
      %v5016 = vunpack.c.l.b16 %v2584
      %v5017 = vunpack.c.l.b16 %v2585
      %v5018 = vunpack.c.l.b16 %v2586
      %v5019 = vunpack.c.l.b16 %v2587
      %v5020 = vunpack.c.l.b16 %v2588
      %v5021 = vunpack.c.h.b16 %v2557
      %v5022 = vunpack.c.h.b16 %v2558
      %v5023 = vunpack.c.h.b16 %v2559
      %v5024 = vunpack.c.h.b16 %v2560
      %v5025 = vunpack.c.h.b16 %v2561
      %v5026 = vunpack.c.h.b16 %v2562
      %v5027 = vunpack.c.h.b16 %v2563
      %v5028 = vunpack.c.h.b16 %v2564
      %v5029 = vunpack.c.h.b16 %v2565
      %v5030 = vunpack.c.h.b16 %v2566
      %v5031 = vunpack.c.h.b16 %v2567
      %v5032 = vunpack.c.h.b16 %v2568
      %v5033 = vunpack.c.h.b16 %v2569
      %v5034 = vunpack.c.h.b16 %v2570
      %v5035 = vunpack.c.h.b16 %v2571
      %v5036 = vunpack.c.h.b16 %v2572
      %v5037 = vunpack.c.h.b16 %v2573
      %v5038 = vunpack.c.h.b16 %v2574
      %v5039 = vunpack.c.h.b16 %v2575
      %v5040 = vunpack.c.h.b16 %v2576
      %v5041 = vunpack.c.h.b16 %v2577
      %v5042 = vunpack.c.h.b16 %v2578
      %v5043 = vunpack.c.h.b16 %v2579
      %v5044 = vunpack.c.h.b16 %v2580
      %v5045 = vunpack.c.h.b16 %v2581
      %v5046 = vunpack.c.h.b16 %v2582
      %v5047 = vunpack.c.h.b16 %v2583
      %v5048 = vunpack.c.h.b16 %v2584
      %v5049 = vunpack.c.h.b16 %v2585
      %v5050 = vunpack.c.h.b16 %v2586
      %v5051 = vunpack.c.h.b16 %v2587
      %v5052 = vunpack.c.h.b16 %v2588
      %v5053 = vunpack.c.l.b16 %v2589
      %v5054 = vunpack.c.l.b16 %v2590
      %v5055 = vunpack.c.l.b16 %v2591
      %v5056 = vunpack.c.l.b16 %v2592
      %v5057 = vunpack.c.l.b16 %v2593
      %v5058 = vunpack.c.l.b16 %v2594
      %v5059 = vunpack.c.l.b16 %v2595
      %v5060 = vunpack.c.l.b16 %v2596
      %v5061 = vunpack.c.l.b16 %v2597
      %v5062 = vunpack.c.l.b16 %v2598
      %v5063 = vunpack.c.l.b16 %v2599
      %v5064 = vunpack.c.l.b16 %v2600
      %v5065 = vunpack.c.l.b16 %v2601
      %v5066 = vunpack.c.l.b16 %v2602
      %v5067 = vunpack.c.l.b16 %v2603
      %v5068 = vunpack.c.l.b16 %v2604
      %v5069 = vunpack.c.l.b16 %v2605
      %v5070 = vunpack.c.l.b16 %v2606
      %v5071 = vunpack.c.l.b16 %v2607
      %v5072 = vunpack.c.l.b16 %v2608
      %v5073 = vunpack.c.l.b16 %v2609
      %v5074 = vunpack.c.l.b16 %v2610
      %v5075 = vunpack.c.l.b16 %v2611
      %v5076 = vunpack.c.l.b16 %v2612
      %v5077 = vunpack.c.l.b16 %v2613
      %v5078 = vunpack.c.l.b16 %v2614
      %v5079 = vunpack.c.l.b16 %v2615
      %v5080 = vunpack.c.l.b16 %v2616
      %v5081 = vunpack.c.l.b16 %v2617
      %v5082 = vunpack.c.l.b16 %v2618
      %v5083 = vunpack.c.l.b16 %v2619
      %v5084 = vunpack.c.l.b16 %v2620
      %v5085 = vunpack.c.h.b16 %v2589
      %v5086 = vunpack.c.h.b16 %v2590
      %v5087 = vunpack.c.h.b16 %v2591
      %v5088 = vunpack.c.h.b16 %v2592
      %v5089 = vunpack.c.h.b16 %v2593
      %v5090 = vunpack.c.h.b16 %v2594
      %v5091 = vunpack.c.h.b16 %v2595
      %v5092 = vunpack.c.h.b16 %v2596
      %v5093 = vunpack.c.h.b16 %v2597
      %v5094 = vunpack.c.h.b16 %v2598
      %v5095 = vunpack.c.h.b16 %v2599
      %v5096 = vunpack.c.h.b16 %v2600
      %v5097 = vunpack.c.h.b16 %v2601
      %v5098 = vunpack.c.h.b16 %v2602
      %v5099 = vunpack.c.h.b16 %v2603
      %v5100 = vunpack.c.h.b16 %v2604
      %v5101 = vunpack.c.h.b16 %v2605
      %v5102 = vunpack.c.h.b16 %v2606
      %v5103 = vunpack.c.h.b16 %v2607
      %v5104 = vunpack.c.h.b16 %v2608
      %v5105 = vunpack.c.h.b16 %v2609
      %v5106 = vunpack.c.h.b16 %v2610
      %v5107 = vunpack.c.h.b16 %v2611
      %v5108 = vunpack.c.h.b16 %v2612
      %v5109 = vunpack.c.h.b16 %v2613
      %v5110 = vunpack.c.h.b16 %v2614
      %v5111 = vunpack.c.h.b16 %v2615
      %v5112 = vunpack.c.h.b16 %v2616
      %v5113 = vunpack.c.h.b16 %v2617
      %v5114 = vunpack.c.h.b16 %v2618
      %v5115 = vunpack.c.h.b16 %v2619
      %v5116 = vunpack.c.h.b16 %v2620
      %v5117 = vunpack.c.l.b16 %v2621
      %v5118 = vunpack.c.l.b16 %v2622
      %v5119 = vunpack.c.l.b16 %v2623
      %v5120 = vunpack.c.l.b16 %v2624
      %v5121 = vunpack.c.l.b16 %v2625
      %v5122 = vunpack.c.l.b16 %v2626
      %v5123 = vunpack.c.l.b16 %v2627
      %v5124 = vunpack.c.l.b16 %v2628
      %v5125 = vunpack.c.l.b16 %v2629
      %v5126 = vunpack.c.l.b16 %v2630
      %v5127 = vunpack.c.l.b16 %v2631
      %v5128 = vunpack.c.l.b16 %v2632
      %v5129 = vunpack.c.l.b16 %v2633
      %v5130 = vunpack.c.l.b16 %v2634
      %v5131 = vunpack.c.l.b16 %v2635
      %v5132 = vunpack.c.l.b16 %v2636
      %v5133 = vunpack.c.l.b16 %v2637
      %v5134 = vunpack.c.l.b16 %v2638
      %v5135 = vunpack.c.l.b16 %v2639
      %v5136 = vunpack.c.l.b16 %v2640
      %v5137 = vunpack.c.l.b16 %v2641
      %v5138 = vunpack.c.l.b16 %v2642
      %v5139 = vunpack.c.l.b16 %v2643
      %v5140 = vunpack.c.l.b16 %v2644
      %v5141 = vunpack.c.l.b16 %v2645
      %v5142 = vunpack.c.l.b16 %v2646
      %v5143 = vunpack.c.l.b16 %v2647
      %v5144 = vunpack.c.l.b16 %v2648
      %v5145 = vunpack.c.l.b16 %v2649
      %v5146 = vunpack.c.l.b16 %v2650
      %v5147 = vunpack.c.l.b16 %v2651
      %v5148 = vunpack.c.l.b16 %v2652
      %v5149 = vunpack.c.h.b16 %v2621
      %v5150 = vunpack.c.h.b16 %v2622
      %v5151 = vunpack.c.h.b16 %v2623
      %v5152 = vunpack.c.h.b16 %v2624
      %v5153 = vunpack.c.h.b16 %v2625
      %v5154 = vunpack.c.h.b16 %v2626
      %v5155 = vunpack.c.h.b16 %v2627
      %v5156 = vunpack.c.h.b16 %v2628
      %v5157 = vunpack.c.h.b16 %v2629
      %v5158 = vunpack.c.h.b16 %v2630
      %v5159 = vunpack.c.h.b16 %v2631
      %v5160 = vunpack.c.h.b16 %v2632
      %v5161 = vunpack.c.h.b16 %v2633
      %v5162 = vunpack.c.h.b16 %v2634
      %v5163 = vunpack.c.h.b16 %v2635
      %v5164 = vunpack.c.h.b16 %v2636
      %v5165 = vunpack.c.h.b16 %v2637
      %v5166 = vunpack.c.h.b16 %v2638
      %v5167 = vunpack.c.h.b16 %v2639
      %v5168 = vunpack.c.h.b16 %v2640
      %v5169 = vunpack.c.h.b16 %v2641
      %v5170 = vunpack.c.h.b16 %v2642
      %v5171 = vunpack.c.h.b16 %v2643
      %v5172 = vunpack.c.h.b16 %v2644
      %v5173 = vunpack.c.h.b16 %v2645
      %v5174 = vunpack.c.h.b16 %v2646
      %v5175 = vunpack.c.h.b16 %v2647
      %v5176 = vunpack.c.h.b16 %v2648
      %v5177 = vunpack.c.h.b16 %v2649
      %v5178 = vunpack.c.h.b16 %v2650
      %v5179 = vunpack.c.h.b16 %v2651
      %v5180 = vunpack.c.h.b16 %v2652
      %v5181 = vunpack.c.l.b16 %v2653
      %v5182 = vunpack.c.l.b16 %v2654
      %v5183 = vunpack.c.l.b16 %v2655
      %v5184 = vunpack.c.l.b16 %v2656
      %v5185 = vunpack.c.l.b16 %v2657
      %v5186 = vunpack.c.l.b16 %v2658
      %v5187 = vunpack.c.l.b16 %v2659
      %v5188 = vunpack.c.l.b16 %v2660
      %v5189 = vunpack.c.l.b16 %v2661
      %v5190 = vunpack.c.l.b16 %v2662
      %v5191 = vunpack.c.l.b16 %v2663
      %v5192 = vunpack.c.l.b16 %v2664
      %v5193 = vunpack.c.l.b16 %v2665
      %v5194 = vunpack.c.l.b16 %v2666
      %v5195 = vunpack.c.l.b16 %v2667
      %v5196 = vunpack.c.l.b16 %v2668
      %v5197 = vunpack.c.l.b16 %v2669
      %v5198 = vunpack.c.l.b16 %v2670
      %v5199 = vunpack.c.l.b16 %v2671
      %v5200 = vunpack.c.l.b16 %v2672
      %v5201 = vunpack.c.l.b16 %v2673
      %v5202 = vunpack.c.l.b16 %v2674
      %v5203 = vunpack.c.l.b16 %v2675
      %v5204 = vunpack.c.l.b16 %v2676
      %v5205 = vunpack.c.l.b16 %v2677
      %v5206 = vunpack.c.l.b16 %v2678
      %v5207 = vunpack.c.l.b16 %v2679
      %v5208 = vunpack.c.l.b16 %v2680
      %v5209 = vunpack.c.l.b16 %v2681
      %v5210 = vunpack.c.l.b16 %v2682
      %v5211 = vunpack.c.l.b16 %v2683
      %v5212 = vunpack.c.l.b16 %v2684
      %v5213 = vunpack.c.h.b16 %v2653
      %v5214 = vunpack.c.h.b16 %v2654
      %v5215 = vunpack.c.h.b16 %v2655
      %v5216 = vunpack.c.h.b16 %v2656
      %v5217 = vunpack.c.h.b16 %v2657
      %v5218 = vunpack.c.h.b16 %v2658
      %v5219 = vunpack.c.h.b16 %v2659
      %v5220 = vunpack.c.h.b16 %v2660
      %v5221 = vunpack.c.h.b16 %v2661
      %v5222 = vunpack.c.h.b16 %v2662
      %v5223 = vunpack.c.h.b16 %v2663
      %v5224 = vunpack.c.h.b16 %v2664
      %v5225 = vunpack.c.h.b16 %v2665
      %v5226 = vunpack.c.h.b16 %v2666
      %v5227 = vunpack.c.h.b16 %v2667
      %v5228 = vunpack.c.h.b16 %v2668
      %v5229 = vunpack.c.h.b16 %v2669
      %v5230 = vunpack.c.h.b16 %v2670
      %v5231 = vunpack.c.h.b16 %v2671
      %v5232 = vunpack.c.h.b16 %v2672
      %v5233 = vunpack.c.h.b16 %v2673
      %v5234 = vunpack.c.h.b16 %v2674
      %v5235 = vunpack.c.h.b16 %v2675
      %v5236 = vunpack.c.h.b16 %v2676
      %v5237 = vunpack.c.h.b16 %v2677
      %v5238 = vunpack.c.h.b16 %v2678
      %v5239 = vunpack.c.h.b16 %v2679
      %v5240 = vunpack.c.h.b16 %v2680
      %v5241 = vunpack.c.h.b16 %v2681
      %v5242 = vunpack.c.h.b16 %v2682
      %v5243 = vunpack.c.h.b16 %v2683
      %v5244 = vunpack.c.h.b16 %v2684
      %v5245 = vunpack.c.l.b16 %v2685
      %v5246 = vunpack.c.l.b16 %v2686
      %v5247 = vunpack.c.l.b16 %v2687
      %v5248 = vunpack.c.l.b16 %v2688
      %v5249 = vunpack.c.l.b16 %v2689
      %v5250 = vunpack.c.l.b16 %v2690
      %v5251 = vunpack.c.l.b16 %v2691
      %v5252 = vunpack.c.l.b16 %v2692
      %v5253 = vunpack.c.l.b16 %v2693
      %v5254 = vunpack.c.l.b16 %v2694
      %v5255 = vunpack.c.l.b16 %v2695
      %v5256 = vunpack.c.l.b16 %v2696
      %v5257 = vunpack.c.l.b16 %v2697
      %v5258 = vunpack.c.l.b16 %v2698
      %v5259 = vunpack.c.l.b16 %v2699
      %v5260 = vunpack.c.l.b16 %v2700
      %v5261 = vunpack.c.l.b16 %v2701
      %v5262 = vunpack.c.l.b16 %v2702
      %v5263 = vunpack.c.l.b16 %v2703
      %v5264 = vunpack.c.l.b16 %v2704
      %v5265 = vunpack.c.l.b16 %v2705
      %v5266 = vunpack.c.l.b16 %v2706
      %v5267 = vunpack.c.l.b16 %v2707
      %v5268 = vunpack.c.l.b16 %v2708
      %v5269 = vunpack.c.l.b16 %v2709
      %v5270 = vunpack.c.l.b16 %v2710
      %v5271 = vunpack.c.l.b16 %v2711
      %v5272 = vunpack.c.l.b16 %v2712
      %v5273 = vunpack.c.l.b16 %v2713
      %v5274 = vunpack.c.l.b16 %v2714
      %v5275 = vunpack.c.l.b16 %v2715
      %v5276 = vunpack.c.l.b16 %v2716
      %v5277 = vunpack.c.h.b16 %v2685
      %v5278 = vunpack.c.h.b16 %v2686
      %v5279 = vunpack.c.h.b16 %v2687
      %v5280 = vunpack.c.h.b16 %v2688
      %v5281 = vunpack.c.h.b16 %v2689
      %v5282 = vunpack.c.h.b16 %v2690
      %v5283 = vunpack.c.h.b16 %v2691
      %v5284 = vunpack.c.h.b16 %v2692
      %v5285 = vunpack.c.h.b16 %v2693
      %v5286 = vunpack.c.h.b16 %v2694
      %v5287 = vunpack.c.h.b16 %v2695
      %v5288 = vunpack.c.h.b16 %v2696
      %v5289 = vunpack.c.h.b16 %v2697
      %v5290 = vunpack.c.h.b16 %v2698
      %v5291 = vunpack.c.h.b16 %v2699
      %v5292 = vunpack.c.h.b16 %v2700
      %v5293 = vunpack.c.h.b16 %v2701
      %v5294 = vunpack.c.h.b16 %v2702
      %v5295 = vunpack.c.h.b16 %v2703
      %v5296 = vunpack.c.h.b16 %v2704
      %v5297 = vunpack.c.h.b16 %v2705
      %v5298 = vunpack.c.h.b16 %v2706
      %v5299 = vunpack.c.h.b16 %v2707
      %v5300 = vunpack.c.h.b16 %v2708
      %v5301 = vunpack.c.h.b16 %v2709
      %v5302 = vunpack.c.h.b16 %v2710
      %v5303 = vunpack.c.h.b16 %v2711
      %v5304 = vunpack.c.h.b16 %v2712
      %v5305 = vunpack.c.h.b16 %v2713
      %v5306 = vunpack.c.h.b16 %v2714
      %v5307 = vunpack.c.h.b16 %v2715
      %v5308 = vunpack.c.h.b16 %v2716
      %v5309 = vunpack.c.l.b16 %v2717
      %v5310 = vunpack.c.l.b16 %v2718
      %v5311 = vunpack.c.l.b16 %v2719
      %v5312 = vunpack.c.l.b16 %v2720
      %v5313 = vunpack.c.l.b16 %v2721
      %v5314 = vunpack.c.l.b16 %v2722
      %v5315 = vunpack.c.l.b16 %v2723
      %v5316 = vunpack.c.l.b16 %v2724
      %v5317 = vunpack.c.l.b16 %v2725
      %v5318 = vunpack.c.l.b16 %v2726
      %v5319 = vunpack.c.l.b16 %v2727
      %v5320 = vunpack.c.l.b16 %v2728
      %v5321 = vunpack.c.l.b16 %v2729
      %v5322 = vunpack.c.l.b16 %v2730
      %v5323 = vunpack.c.l.b16 %v2731
      %v5324 = vunpack.c.l.b16 %v2732
      %v5325 = vunpack.c.l.b16 %v2733
      %v5326 = vunpack.c.l.b16 %v2734
      %v5327 = vunpack.c.l.b16 %v2735
      %v5328 = vunpack.c.l.b16 %v2736
      %v5329 = vunpack.c.l.b16 %v2737
      %v5330 = vunpack.c.l.b16 %v2738
      %v5331 = vunpack.c.l.b16 %v2739
      %v5332 = vunpack.c.l.b16 %v2740
      %v5333 = vunpack.c.l.b16 %v2741
      %v5334 = vunpack.c.l.b16 %v2742
      %v5335 = vunpack.c.l.b16 %v2743
      %v5336 = vunpack.c.l.b16 %v2744
      %v5337 = vunpack.c.l.b16 %v2745
      %v5338 = vunpack.c.l.b16 %v2746
      %v5339 = vunpack.c.l.b16 %v2747
      %v5340 = vunpack.c.l.b16 %v2748
      %v5341 = vunpack.c.h.b16 %v2717
      %v5342 = vunpack.c.h.b16 %v2718
      %v5343 = vunpack.c.h.b16 %v2719
      %v5344 = vunpack.c.h.b16 %v2720
      %v5345 = vunpack.c.h.b16 %v2721
      %v5346 = vunpack.c.h.b16 %v2722
      %v5347 = vunpack.c.h.b16 %v2723
      %v5348 = vunpack.c.h.b16 %v2724
      %v5349 = vunpack.c.h.b16 %v2725
      %v5350 = vunpack.c.h.b16 %v2726
      %v5351 = vunpack.c.h.b16 %v2727
      %v5352 = vunpack.c.h.b16 %v2728
      %v5353 = vunpack.c.h.b16 %v2729
      %v5354 = vunpack.c.h.b16 %v2730
      %v5355 = vunpack.c.h.b16 %v2731
      %v5356 = vunpack.c.h.b16 %v2732
      %v5357 = vunpack.c.h.b16 %v2733
      %v5358 = vunpack.c.h.b16 %v2734
      %v5359 = vunpack.c.h.b16 %v2735
      %v5360 = vunpack.c.h.b16 %v2736
      %v5361 = vunpack.c.h.b16 %v2737
      %v5362 = vunpack.c.h.b16 %v2738
      %v5363 = vunpack.c.h.b16 %v2739
      %v5364 = vunpack.c.h.b16 %v2740
      %v5365 = vunpack.c.h.b16 %v2741
      %v5366 = vunpack.c.h.b16 %v2742
      %v5367 = vunpack.c.h.b16 %v2743
      %v5368 = vunpack.c.h.b16 %v2744
      %v5369 = vunpack.c.h.b16 %v2745
      %v5370 = vunpack.c.h.b16 %v2746
      %v5371 = vunpack.c.h.b16 %v2747
      %v5372 = vunpack.c.h.b16 %v2748
      %v5373 = vunpack.c.l.b16 %v2749
      %v5374 = vunpack.c.l.b16 %v2750
      %v5375 = vunpack.c.l.b16 %v2751
      %v5376 = vunpack.c.l.b16 %v2752
      %v5377 = vunpack.c.l.b16 %v2753
      %v5378 = vunpack.c.l.b16 %v2754
      %v5379 = vunpack.c.l.b16 %v2755
      %v5380 = vunpack.c.l.b16 %v2756
      %v5381 = vunpack.c.l.b16 %v2757
      %v5382 = vunpack.c.l.b16 %v2758
      %v5383 = vunpack.c.l.b16 %v2759
      %v5384 = vunpack.c.l.b16 %v2760
      %v5385 = vunpack.c.l.b16 %v2761
      %v5386 = vunpack.c.l.b16 %v2762
      %v5387 = vunpack.c.l.b16 %v2763
      %v5388 = vunpack.c.l.b16 %v2764
      %v5389 = vunpack.c.l.b16 %v2765
      %v5390 = vunpack.c.l.b16 %v2766
      %v5391 = vunpack.c.l.b16 %v2767
      %v5392 = vunpack.c.l.b16 %v2768
      %v5393 = vunpack.c.l.b16 %v2769
      %v5394 = vunpack.c.l.b16 %v2770
      %v5395 = vunpack.c.l.b16 %v2771
      %v5396 = vunpack.c.l.b16 %v2772
      %v5397 = vunpack.c.l.b16 %v2773
      %v5398 = vunpack.c.l.b16 %v2774
      %v5399 = vunpack.c.l.b16 %v2775
      %v5400 = vunpack.c.l.b16 %v2776
      %v5401 = vunpack.c.l.b16 %v2777
      %v5402 = vunpack.c.l.b16 %v2778
      %v5403 = vunpack.c.l.b16 %v2779
      %v5404 = vunpack.c.l.b16 %v2780
      %v5405 = vunpack.c.h.b16 %v2749
      %v5406 = vunpack.c.h.b16 %v2750
      %v5407 = vunpack.c.h.b16 %v2751
      %v5408 = vunpack.c.h.b16 %v2752
      %v5409 = vunpack.c.h.b16 %v2753
      %v5410 = vunpack.c.h.b16 %v2754
      %v5411 = vunpack.c.h.b16 %v2755
      %v5412 = vunpack.c.h.b16 %v2756
      %v5413 = vunpack.c.h.b16 %v2757
      %v5414 = vunpack.c.h.b16 %v2758
      %v5415 = vunpack.c.h.b16 %v2759
      %v5416 = vunpack.c.h.b16 %v2760
      %v5417 = vunpack.c.h.b16 %v2761
      %v5418 = vunpack.c.h.b16 %v2762
      %v5419 = vunpack.c.h.b16 %v2763
      %v5420 = vunpack.c.h.b16 %v2764
      %v5421 = vunpack.c.h.b16 %v2765
      %v5422 = vunpack.c.h.b16 %v2766
      %v5423 = vunpack.c.h.b16 %v2767
      %v5424 = vunpack.c.h.b16 %v2768
      %v5425 = vunpack.c.h.b16 %v2769
      %v5426 = vunpack.c.h.b16 %v2770
      %v5427 = vunpack.c.h.b16 %v2771
      %v5428 = vunpack.c.h.b16 %v2772
      %v5429 = vunpack.c.h.b16 %v2773
      %v5430 = vunpack.c.h.b16 %v2774
      %v5431 = vunpack.c.h.b16 %v2775
      %v5432 = vunpack.c.h.b16 %v2776
      %v5433 = vunpack.c.h.b16 %v2777
      %v5434 = vunpack.c.h.b16 %v2778
      %v5435 = vunpack.c.h.b16 %v2779
      %v5436 = vunpack.c.h.b16 %v2780
      %v5437 = vunpack.c.l.b16 %v2781
      %v5438 = vunpack.c.l.b16 %v2782
      %v5439 = vunpack.c.l.b16 %v2783
      %v5440 = vunpack.c.l.b16 %v2784
      %v5441 = vunpack.c.l.b16 %v2785
      %v5442 = vunpack.c.l.b16 %v2786
      %v5443 = vunpack.c.l.b16 %v2787
      %v5444 = vunpack.c.l.b16 %v2788
      %v5445 = vunpack.c.l.b16 %v2789
      %v5446 = vunpack.c.l.b16 %v2790
      %v5447 = vunpack.c.l.b16 %v2791
      %v5448 = vunpack.c.l.b16 %v2792
      %v5449 = vunpack.c.l.b16 %v2793
      %v5450 = vunpack.c.l.b16 %v2794
      %v5451 = vunpack.c.l.b16 %v2795
      %v5452 = vunpack.c.l.b16 %v2796
      %v5453 = vunpack.c.l.b16 %v2797
      %v5454 = vunpack.c.l.b16 %v2798
      %v5455 = vunpack.c.l.b16 %v2799
      %v5456 = vunpack.c.l.b16 %v2800
      %v5457 = vunpack.c.l.b16 %v2801
      %v5458 = vunpack.c.l.b16 %v2802
      %v5459 = vunpack.c.l.b16 %v2803
      %v5460 = vunpack.c.l.b16 %v2804
      %v5461 = vunpack.c.l.b16 %v2805
      %v5462 = vunpack.c.l.b16 %v2806
      %v5463 = vunpack.c.l.b16 %v2807
      %v5464 = vunpack.c.l.b16 %v2808
      %v5465 = vunpack.c.l.b16 %v2809
      %v5466 = vunpack.c.l.b16 %v2810
      %v5467 = vunpack.c.l.b16 %v2811
      %v5468 = vunpack.c.l.b16 %v2812
      %v5469 = vunpack.c.h.b16 %v2781
      %v5470 = vunpack.c.h.b16 %v2782
      %v5471 = vunpack.c.h.b16 %v2783
      %v5472 = vunpack.c.h.b16 %v2784
      %v5473 = vunpack.c.h.b16 %v2785
      %v5474 = vunpack.c.h.b16 %v2786
      %v5475 = vunpack.c.h.b16 %v2787
      %v5476 = vunpack.c.h.b16 %v2788
      %v5477 = vunpack.c.h.b16 %v2789
      %v5478 = vunpack.c.h.b16 %v2790
      %v5479 = vunpack.c.h.b16 %v2791
      %v5480 = vunpack.c.h.b16 %v2792
      %v5481 = vunpack.c.h.b16 %v2793
      %v5482 = vunpack.c.h.b16 %v2794
      %v5483 = vunpack.c.h.b16 %v2795
      %v5484 = vunpack.c.h.b16 %v2796
      %v5485 = vunpack.c.h.b16 %v2797
      %v5486 = vunpack.c.h.b16 %v2798
      %v5487 = vunpack.c.h.b16 %v2799
      %v5488 = vunpack.c.h.b16 %v2800
      %v5489 = vunpack.c.h.b16 %v2801
      %v5490 = vunpack.c.h.b16 %v2802
      %v5491 = vunpack.c.h.b16 %v2803
      %v5492 = vunpack.c.h.b16 %v2804
      %v5493 = vunpack.c.h.b16 %v2805
      %v5494 = vunpack.c.h.b16 %v2806
      %v5495 = vunpack.c.h.b16 %v2807
      %v5496 = vunpack.c.h.b16 %v2808
      %v5497 = vunpack.c.h.b16 %v2809
      %v5498 = vunpack.c.h.b16 %v2810
      %v5499 = vunpack.c.h.b16 %v2811
      %v5500 = vunpack.c.h.b16 %v2812
      %v5501 = vunpack.c.l.b16 %v2813
      %v5502 = vunpack.c.l.b16 %v2814
      %v5503 = vunpack.c.l.b16 %v2815
      %v5504 = vunpack.c.l.b16 %v2816
      %v5505 = vunpack.c.l.b16 %v2817
      %v5506 = vunpack.c.l.b16 %v2818
      %v5507 = vunpack.c.l.b16 %v2819
      %v5508 = vunpack.c.l.b16 %v2820
      %v5509 = vunpack.c.l.b16 %v2821
      %v5510 = vunpack.c.l.b16 %v2822
      %v5511 = vunpack.c.l.b16 %v2823
      %v5512 = vunpack.c.l.b16 %v2824
      %v5513 = vunpack.c.l.b16 %v2825
      %v5514 = vunpack.c.l.b16 %v2826
      %v5515 = vunpack.c.l.b16 %v2827
      %v5516 = vunpack.c.l.b16 %v2828
      %v5517 = vunpack.c.l.b16 %v2829
      %v5518 = vunpack.c.l.b16 %v2830
      %v5519 = vunpack.c.l.b16 %v2831
      %v5520 = vunpack.c.l.b16 %v2832
      %v5521 = vunpack.c.l.b16 %v2833
      %v5522 = vunpack.c.l.b16 %v2834
      %v5523 = vunpack.c.l.b16 %v2835
      %v5524 = vunpack.c.l.b16 %v2836
      %v5525 = vunpack.c.l.b16 %v2837
      %v5526 = vunpack.c.l.b16 %v2838
      %v5527 = vunpack.c.l.b16 %v2839
      %v5528 = vunpack.c.l.b16 %v2840
      %v5529 = vunpack.c.l.b16 %v2841
      %v5530 = vunpack.c.l.b16 %v2842
      %v5531 = vunpack.c.l.b16 %v2843
      %v5532 = vunpack.c.l.b16 %v2844
      %v5533 = vunpack.c.h.b16 %v2813
      %v5534 = vunpack.c.h.b16 %v2814
      %v5535 = vunpack.c.h.b16 %v2815
      %v5536 = vunpack.c.h.b16 %v2816
      %v5537 = vunpack.c.h.b16 %v2817
      %v5538 = vunpack.c.h.b16 %v2818
      %v5539 = vunpack.c.h.b16 %v2819
      %v5540 = vunpack.c.h.b16 %v2820
      %v5541 = vunpack.c.h.b16 %v2821
      %v5542 = vunpack.c.h.b16 %v2822
      %v5543 = vunpack.c.h.b16 %v2823
      %v5544 = vunpack.c.h.b16 %v2824
      %v5545 = vunpack.c.h.b16 %v2825
      %v5546 = vunpack.c.h.b16 %v2826
      %v5547 = vunpack.c.h.b16 %v2827
      %v5548 = vunpack.c.h.b16 %v2828
      %v5549 = vunpack.c.h.b16 %v2829
      %v5550 = vunpack.c.h.b16 %v2830
      %v5551 = vunpack.c.h.b16 %v2831
      %v5552 = vunpack.c.h.b16 %v2832
      %v5553 = vunpack.c.h.b16 %v2833
      %v5554 = vunpack.c.h.b16 %v2834
      %v5555 = vunpack.c.h.b16 %v2835
      %v5556 = vunpack.c.h.b16 %v2836
      %v5557 = vunpack.c.h.b16 %v2837
      %v5558 = vunpack.c.h.b16 %v2838
      %v5559 = vunpack.c.h.b16 %v2839
      %v5560 = vunpack.c.h.b16 %v2840
      %v5561 = vunpack.c.h.b16 %v2841
      %v5562 = vunpack.c.h.b16 %v2842
      %v5563 = vunpack.c.h.b16 %v2843
      %v5564 = vunpack.c.h.b16 %v2844
      %v5565 = vunpack.c.l.b16 %v2845
      %v5566 = vunpack.c.l.b16 %v2846
      %v5567 = vunpack.c.l.b16 %v2847
      %v5568 = vunpack.c.l.b16 %v2848
      %v5569 = vunpack.c.l.b16 %v2849
      %v5570 = vunpack.c.l.b16 %v2850
      %v5571 = vunpack.c.l.b16 %v2851
      %v5572 = vunpack.c.l.b16 %v2852
      %v5573 = vunpack.c.l.b16 %v2853
      %v5574 = vunpack.c.l.b16 %v2854
      %v5575 = vunpack.c.l.b16 %v2855
      %v5576 = vunpack.c.l.b16 %v2856
      %v5577 = vunpack.c.l.b16 %v2857
      %v5578 = vunpack.c.l.b16 %v2858
      %v5579 = vunpack.c.l.b16 %v2859
      %v5580 = vunpack.c.l.b16 %v2860
      %v5581 = vunpack.c.l.b16 %v2861
      %v5582 = vunpack.c.l.b16 %v2862
      %v5583 = vunpack.c.l.b16 %v2863
      %v5584 = vunpack.c.l.b16 %v2864
      %v5585 = vunpack.c.l.b16 %v2865
      %v5586 = vunpack.c.l.b16 %v2866
      %v5587 = vunpack.c.l.b16 %v2867
      %v5588 = vunpack.c.l.b16 %v2868
      %v5589 = vunpack.c.l.b16 %v2869
      %v5590 = vunpack.c.l.b16 %v2870
      %v5591 = vunpack.c.l.b16 %v2871
      %v5592 = vunpack.c.l.b16 %v2872
      %v5593 = vunpack.c.l.b16 %v2873
      %v5594 = vunpack.c.l.b16 %v2874
      %v5595 = vunpack.c.l.b16 %v2875
      %v5596 = vunpack.c.l.b16 %v2876
      %v5597 = vunpack.c.h.b16 %v2845
      %v5598 = vunpack.c.h.b16 %v2846
      %v5599 = vunpack.c.h.b16 %v2847
      %v5600 = vunpack.c.h.b16 %v2848
      %v5601 = vunpack.c.h.b16 %v2849
      %v5602 = vunpack.c.h.b16 %v2850
      %v5603 = vunpack.c.h.b16 %v2851
      %v5604 = vunpack.c.h.b16 %v2852
      %v5605 = vunpack.c.h.b16 %v2853
      %v5606 = vunpack.c.h.b16 %v2854
      %v5607 = vunpack.c.h.b16 %v2855
      %v5608 = vunpack.c.h.b16 %v2856
      %v5609 = vunpack.c.h.b16 %v2857
      %v5610 = vunpack.c.h.b16 %v2858
      %v5611 = vunpack.c.h.b16 %v2859
      %v5612 = vunpack.c.h.b16 %v2860
      %v5613 = vunpack.c.h.b16 %v2861
      %v5614 = vunpack.c.h.b16 %v2862
      %v5615 = vunpack.c.h.b16 %v2863
      %v5616 = vunpack.c.h.b16 %v2864
      %v5617 = vunpack.c.h.b16 %v2865
      %v5618 = vunpack.c.h.b16 %v2866
      %v5619 = vunpack.c.h.b16 %v2867
      %v5620 = vunpack.c.h.b16 %v2868
      %v5621 = vunpack.c.h.b16 %v2869
      %v5622 = vunpack.c.h.b16 %v2870
      %v5623 = vunpack.c.h.b16 %v2871
      %v5624 = vunpack.c.h.b16 %v2872
      %v5625 = vunpack.c.h.b16 %v2873
      %v5626 = vunpack.c.h.b16 %v2874
      %v5627 = vunpack.c.h.b16 %v2875
      %v5628 = vunpack.c.h.b16 %v2876
      %v5629 = vunpack.c.l.b16 %v2877
      %v5630 = vunpack.c.l.b16 %v2878
      %v5631 = vunpack.c.l.b16 %v2879
      %v5632 = vunpack.c.l.b16 %v2880
      %v5633 = vunpack.c.l.b16 %v2881
      %v5634 = vunpack.c.l.b16 %v2882
      %v5635 = vunpack.c.l.b16 %v2883
      %v5636 = vunpack.c.l.b16 %v2884
      %v5637 = vunpack.c.l.b16 %v2885
      %v5638 = vunpack.c.l.b16 %v2886
      %v5639 = vunpack.c.l.b16 %v2887
      %v5640 = vunpack.c.l.b16 %v2888
      %v5641 = vunpack.c.l.b16 %v2889
      %v5642 = vunpack.c.l.b16 %v2890
      %v5643 = vunpack.c.l.b16 %v2891
      %v5644 = vunpack.c.l.b16 %v2892
      %v5645 = vunpack.c.l.b16 %v2893
      %v5646 = vunpack.c.l.b16 %v2894
      %v5647 = vunpack.c.l.b16 %v2895
      %v5648 = vunpack.c.l.b16 %v2896
      %v5649 = vunpack.c.l.b16 %v2897
      %v5650 = vunpack.c.l.b16 %v2898
      %v5651 = vunpack.c.l.b16 %v2899
      %v5652 = vunpack.c.l.b16 %v2900
      %v5653 = vunpack.c.l.b16 %v2901
      %v5654 = vunpack.c.l.b16 %v2902
      %v5655 = vunpack.c.l.b16 %v2903
      %v5656 = vunpack.c.l.b16 %v2904
      %v5657 = vunpack.c.l.b16 %v2905
      %v5658 = vunpack.c.l.b16 %v2906
      %v5659 = vunpack.c.l.b16 %v2907
      %v5660 = vunpack.c.l.b16 %v2908
      %v5661 = vunpack.c.h.b16 %v2877
      %v5662 = vunpack.c.h.b16 %v2878
      %v5663 = vunpack.c.h.b16 %v2879
      %v5664 = vunpack.c.h.b16 %v2880
      %v5665 = vunpack.c.h.b16 %v2881
      %v5666 = vunpack.c.h.b16 %v2882
      %v5667 = vunpack.c.h.b16 %v2883
      %v5668 = vunpack.c.h.b16 %v2884
      %v5669 = vunpack.c.h.b16 %v2885
      %v5670 = vunpack.c.h.b16 %v2886
      %v5671 = vunpack.c.h.b16 %v2887
      %v5672 = vunpack.c.h.b16 %v2888
      %v5673 = vunpack.c.h.b16 %v2889
      %v5674 = vunpack.c.h.b16 %v2890
      %v5675 = vunpack.c.h.b16 %v2891
      %v5676 = vunpack.c.h.b16 %v2892
      %v5677 = vunpack.c.h.b16 %v2893
      %v5678 = vunpack.c.h.b16 %v2894
      %v5679 = vunpack.c.h.b16 %v2895
      %v5680 = vunpack.c.h.b16 %v2896
      %v5681 = vunpack.c.h.b16 %v2897
      %v5682 = vunpack.c.h.b16 %v2898
      %v5683 = vunpack.c.h.b16 %v2899
      %v5684 = vunpack.c.h.b16 %v2900
      %v5685 = vunpack.c.h.b16 %v2901
      %v5686 = vunpack.c.h.b16 %v2902
      %v5687 = vunpack.c.h.b16 %v2903
      %v5688 = vunpack.c.h.b16 %v2904
      %v5689 = vunpack.c.h.b16 %v2905
      %v5690 = vunpack.c.h.b16 %v2906
      %v5691 = vunpack.c.h.b16 %v2907
      %v5692 = vunpack.c.h.b16 %v2908
      %v5693 = vunpack.c.l.b16 %v2909
      %v5694 = vunpack.c.l.b16 %v2910
      %v5695 = vunpack.c.l.b16 %v2911
      %v5696 = vunpack.c.l.b16 %v2912
      %v5697 = vunpack.c.l.b16 %v2913
      %v5698 = vunpack.c.l.b16 %v2914
      %v5699 = vunpack.c.l.b16 %v2915
      %v5700 = vunpack.c.l.b16 %v2916
      %v5701 = vunpack.c.l.b16 %v2917
      %v5702 = vunpack.c.l.b16 %v2918
      %v5703 = vunpack.c.l.b16 %v2919
      %v5704 = vunpack.c.l.b16 %v2920
      %v5705 = vunpack.c.l.b16 %v2921
      %v5706 = vunpack.c.l.b16 %v2922
      %v5707 = vunpack.c.l.b16 %v2923
      %v5708 = vunpack.c.l.b16 %v2924
      %v5709 = vunpack.c.l.b16 %v2925
      %v5710 = vunpack.c.l.b16 %v2926
      %v5711 = vunpack.c.l.b16 %v2927
      %v5712 = vunpack.c.l.b16 %v2928
      %v5713 = vunpack.c.l.b16 %v2929
      %v5714 = vunpack.c.l.b16 %v2930
      %v5715 = vunpack.c.l.b16 %v2931
      %v5716 = vunpack.c.l.b16 %v2932
      %v5717 = vunpack.c.l.b16 %v2933
      %v5718 = vunpack.c.l.b16 %v2934
      %v5719 = vunpack.c.l.b16 %v2935
      %v5720 = vunpack.c.l.b16 %v2936
      %v5721 = vunpack.c.l.b16 %v2937
      %v5722 = vunpack.c.l.b16 %v2938
      %v5723 = vunpack.c.l.b16 %v2939
      %v5724 = vunpack.c.l.b16 %v2940
      %v5725 = vunpack.c.h.b16 %v2909
      %v5726 = vunpack.c.h.b16 %v2910
      %v5727 = vunpack.c.h.b16 %v2911
      %v5728 = vunpack.c.h.b16 %v2912
      %v5729 = vunpack.c.h.b16 %v2913
      %v5730 = vunpack.c.h.b16 %v2914
      %v5731 = vunpack.c.h.b16 %v2915
      %v5732 = vunpack.c.h.b16 %v2916
      %v5733 = vunpack.c.h.b16 %v2917
      %v5734 = vunpack.c.h.b16 %v2918
      %v5735 = vunpack.c.h.b16 %v2919
      %v5736 = vunpack.c.h.b16 %v2920
      %v5737 = vunpack.c.h.b16 %v2921
      %v5738 = vunpack.c.h.b16 %v2922
      %v5739 = vunpack.c.h.b16 %v2923
      %v5740 = vunpack.c.h.b16 %v2924
      %v5741 = vunpack.c.h.b16 %v2925
      %v5742 = vunpack.c.h.b16 %v2926
      %v5743 = vunpack.c.h.b16 %v2927
      %v5744 = vunpack.c.h.b16 %v2928
      %v5745 = vunpack.c.h.b16 %v2929
      %v5746 = vunpack.c.h.b16 %v2930
      %v5747 = vunpack.c.h.b16 %v2931
      %v5748 = vunpack.c.h.b16 %v2932
      %v5749 = vunpack.c.h.b16 %v2933
      %v5750 = vunpack.c.h.b16 %v2934
      %v5751 = vunpack.c.h.b16 %v2935
      %v5752 = vunpack.c.h.b16 %v2936
      %v5753 = vunpack.c.h.b16 %v2937
      %v5754 = vunpack.c.h.b16 %v2938
      %v5755 = vunpack.c.h.b16 %v2939
      %v5756 = vunpack.c.h.b16 %v2940
      %v5757 = vunpack.c.l.b16 %v2941
      %v5758 = vunpack.c.l.b16 %v2942
      %v5759 = vunpack.c.l.b16 %v2943
      %v5760 = vunpack.c.l.b16 %v2944
      %v5761 = vunpack.c.l.b16 %v2945
      %v5762 = vunpack.c.l.b16 %v2946
      %v5763 = vunpack.c.l.b16 %v2947
      %v5764 = vunpack.c.l.b16 %v2948
      %v5765 = vunpack.c.l.b16 %v2949
      %v5766 = vunpack.c.l.b16 %v2950
      %v5767 = vunpack.c.l.b16 %v2951
      %v5768 = vunpack.c.l.b16 %v2952
      %v5769 = vunpack.c.l.b16 %v2953
      %v5770 = vunpack.c.l.b16 %v2954
      %v5771 = vunpack.c.l.b16 %v2955
      %v5772 = vunpack.c.l.b16 %v2956
      %v5773 = vunpack.c.l.b16 %v2957
      %v5774 = vunpack.c.l.b16 %v2958
      %v5775 = vunpack.c.l.b16 %v2959
      %v5776 = vunpack.c.l.b16 %v2960
      %v5777 = vunpack.c.l.b16 %v2961
      %v5778 = vunpack.c.l.b16 %v2962
      %v5779 = vunpack.c.l.b16 %v2963
      %v5780 = vunpack.c.l.b16 %v2964
      %v5781 = vunpack.c.l.b16 %v2965
      %v5782 = vunpack.c.l.b16 %v2966
      %v5783 = vunpack.c.l.b16 %v2967
      %v5784 = vunpack.c.l.b16 %v2968
      %v5785 = vunpack.c.l.b16 %v2969
      %v5786 = vunpack.c.l.b16 %v2970
      %v5787 = vunpack.c.l.b16 %v2971
      %v5788 = vunpack.c.l.b16 %v2972
      %v5789 = vunpack.c.h.b16 %v2941
      %v5790 = vunpack.c.h.b16 %v2942
      %v5791 = vunpack.c.h.b16 %v2943
      %v5792 = vunpack.c.h.b16 %v2944
      %v5793 = vunpack.c.h.b16 %v2945
      %v5794 = vunpack.c.h.b16 %v2946
      %v5795 = vunpack.c.h.b16 %v2947
      %v5796 = vunpack.c.h.b16 %v2948
      %v5797 = vunpack.c.h.b16 %v2949
      %v5798 = vunpack.c.h.b16 %v2950
      %v5799 = vunpack.c.h.b16 %v2951
      %v5800 = vunpack.c.h.b16 %v2952
      %v5801 = vunpack.c.h.b16 %v2953
      %v5802 = vunpack.c.h.b16 %v2954
      %v5803 = vunpack.c.h.b16 %v2955
      %v5804 = vunpack.c.h.b16 %v2956
      %v5805 = vunpack.c.h.b16 %v2957
      %v5806 = vunpack.c.h.b16 %v2958
      %v5807 = vunpack.c.h.b16 %v2959
      %v5808 = vunpack.c.h.b16 %v2960
      %v5809 = vunpack.c.h.b16 %v2961
      %v5810 = vunpack.c.h.b16 %v2962
      %v5811 = vunpack.c.h.b16 %v2963
      %v5812 = vunpack.c.h.b16 %v2964
      %v5813 = vunpack.c.h.b16 %v2965
      %v5814 = vunpack.c.h.b16 %v2966
      %v5815 = vunpack.c.h.b16 %v2967
      %v5816 = vunpack.c.h.b16 %v2968
      %v5817 = vunpack.c.h.b16 %v2969
      %v5818 = vunpack.c.h.b16 %v2970
      %v5819 = vunpack.c.h.b16 %v2971
      %v5820 = vunpack.c.h.b16 %v2972
      %v5821 = vunpack.c.l.b16 %v2973
      %v5822 = vunpack.c.l.b16 %v2974
      %v5823 = vunpack.c.l.b16 %v2975
      %v5824 = vunpack.c.l.b16 %v2976
      %v5825 = vunpack.c.l.b16 %v2977
      %v5826 = vunpack.c.l.b16 %v2978
      %v5827 = vunpack.c.l.b16 %v2979
      %v5828 = vunpack.c.l.b16 %v2980
      %v5829 = vunpack.c.l.b16 %v2981
      %v5830 = vunpack.c.l.b16 %v2982
      %v5831 = vunpack.c.l.b16 %v2983
      %v5832 = vunpack.c.l.b16 %v2984
      %v5833 = vunpack.c.l.b16 %v2985
      %v5834 = vunpack.c.l.b16 %v2986
      %v5835 = vunpack.c.l.b16 %v2987
      %v5836 = vunpack.c.l.b16 %v2988
      %v5837 = vunpack.c.l.b16 %v2989
      %v5838 = vunpack.c.l.b16 %v2990
      %v5839 = vunpack.c.l.b16 %v2991
      %v5840 = vunpack.c.l.b16 %v2992
      %v5841 = vunpack.c.l.b16 %v2993
      %v5842 = vunpack.c.l.b16 %v2994
      %v5843 = vunpack.c.l.b16 %v2995
      %v5844 = vunpack.c.l.b16 %v2996
      %v5845 = vunpack.c.l.b16 %v2997
      %v5846 = vunpack.c.l.b16 %v2998
      %v5847 = vunpack.c.l.b16 %v2999
      %v5848 = vunpack.c.l.b16 %v3000
      %v5849 = vunpack.c.l.b16 %v3001
      %v5850 = vunpack.c.l.b16 %v3002
      %v5851 = vunpack.c.l.b16 %v3003
      %v5852 = vunpack.c.l.b16 %v3004
      %v5853 = vunpack.c.h.b16 %v2973
      %v5854 = vunpack.c.h.b16 %v2974
      %v5855 = vunpack.c.h.b16 %v2975
      %v5856 = vunpack.c.h.b16 %v2976
      %v5857 = vunpack.c.h.b16 %v2977
      %v5858 = vunpack.c.h.b16 %v2978
      %v5859 = vunpack.c.h.b16 %v2979
      %v5860 = vunpack.c.h.b16 %v2980
      %v5861 = vunpack.c.h.b16 %v2981
      %v5862 = vunpack.c.h.b16 %v2982
      %v5863 = vunpack.c.h.b16 %v2983
      %v5864 = vunpack.c.h.b16 %v2984
      %v5865 = vunpack.c.h.b16 %v2985
      %v5866 = vunpack.c.h.b16 %v2986
      %v5867 = vunpack.c.h.b16 %v2987
      %v5868 = vunpack.c.h.b16 %v2988
      %v5869 = vunpack.c.h.b16 %v2989
      %v5870 = vunpack.c.h.b16 %v2990
      %v5871 = vunpack.c.h.b16 %v2991
      %v5872 = vunpack.c.h.b16 %v2992
      %v5873 = vunpack.c.h.b16 %v2993
      %v5874 = vunpack.c.h.b16 %v2994
      %v5875 = vunpack.c.h.b16 %v2995
      %v5876 = vunpack.c.h.b16 %v2996
      %v5877 = vunpack.c.h.b16 %v2997
      %v5878 = vunpack.c.h.b16 %v2998
      %v5879 = vunpack.c.h.b16 %v2999
      %v5880 = vunpack.c.h.b16 %v3000
      %v5881 = vunpack.c.h.b16 %v3001
      %v5882 = vunpack.c.h.b16 %v3002
      %v5883 = vunpack.c.h.b16 %v3003
      %v5884 = vunpack.c.h.b16 %v3004
      %v5885 = vunpack.c.l.b16 %v3005
      %v5886 = vunpack.c.l.b16 %v3006
      %v5887 = vunpack.c.l.b16 %v3007
      %v5888 = vunpack.c.l.b16 %v3008
      %v5889 = vunpack.c.l.b16 %v3009
      %v5890 = vunpack.c.l.b16 %v3010
      %v5891 = vunpack.c.l.b16 %v3011
      %v5892 = vunpack.c.l.b16 %v3012
      %v5893 = vunpack.c.l.b16 %v3013
      %v5894 = vunpack.c.l.b16 %v3014
      %v5895 = vunpack.c.l.b16 %v3015
      %v5896 = vunpack.c.l.b16 %v3016
      %v5897 = vunpack.c.l.b16 %v3017
      %v5898 = vunpack.c.l.b16 %v3018
      %v5899 = vunpack.c.l.b16 %v3019
      %v5900 = vunpack.c.l.b16 %v3020
      %v5901 = vunpack.c.l.b16 %v3021
      %v5902 = vunpack.c.l.b16 %v3022
      %v5903 = vunpack.c.l.b16 %v3023
      %v5904 = vunpack.c.l.b16 %v3024
      %v5905 = vunpack.c.l.b16 %v3025
      %v5906 = vunpack.c.l.b16 %v3026
      %v5907 = vunpack.c.l.b16 %v3027
      %v5908 = vunpack.c.l.b16 %v3028
      %v5909 = vunpack.c.l.b16 %v3029
      %v5910 = vunpack.c.l.b16 %v3030
      %v5911 = vunpack.c.l.b16 %v3031
      %v5912 = vunpack.c.l.b16 %v3032
      %v5913 = vunpack.c.l.b16 %v3033
      %v5914 = vunpack.c.l.b16 %v3034
      %v5915 = vunpack.c.l.b16 %v3035
      %v5916 = vunpack.c.l.b16 %v3036
      %v5917 = vunpack.c.h.b16 %v3005
      %v5918 = vunpack.c.h.b16 %v3006
      %v5919 = vunpack.c.h.b16 %v3007
      %v5920 = vunpack.c.h.b16 %v3008
      %v5921 = vunpack.c.h.b16 %v3009
      %v5922 = vunpack.c.h.b16 %v3010
      %v5923 = vunpack.c.h.b16 %v3011
      %v5924 = vunpack.c.h.b16 %v3012
      %v5925 = vunpack.c.h.b16 %v3013
      %v5926 = vunpack.c.h.b16 %v3014
      %v5927 = vunpack.c.h.b16 %v3015
      %v5928 = vunpack.c.h.b16 %v3016
      %v5929 = vunpack.c.h.b16 %v3017
      %v5930 = vunpack.c.h.b16 %v3018
      %v5931 = vunpack.c.h.b16 %v3019
      %v5932 = vunpack.c.h.b16 %v3020
      %v5933 = vunpack.c.h.b16 %v3021
      %v5934 = vunpack.c.h.b16 %v3022
      %v5935 = vunpack.c.h.b16 %v3023
      %v5936 = vunpack.c.h.b16 %v3024
      %v5937 = vunpack.c.h.b16 %v3025
      %v5938 = vunpack.c.h.b16 %v3026
      %v5939 = vunpack.c.h.b16 %v3027
      %v5940 = vunpack.c.h.b16 %v3028
      %v5941 = vunpack.c.h.b16 %v3029
      %v5942 = vunpack.c.h.b16 %v3030
      %v5943 = vunpack.c.h.b16 %v3031
      %v5944 = vunpack.c.h.b16 %v3032
      %v5945 = vunpack.c.h.b16 %v3033
      %v5946 = vunpack.c.h.b16 %v3034
      %v5947 = vunpack.c.h.b16 %v3035
      %v5948 = vunpack.c.h.b16 %v3036
      %v5949 = vunpack.c.l.b16 %v3037
      %v5950 = vunpack.c.l.b16 %v3038
      %v5951 = vunpack.c.l.b16 %v3039
      %v5952 = vunpack.c.l.b16 %v3040
      %v5953 = vunpack.c.l.b16 %v3041
      %v5954 = vunpack.c.l.b16 %v3042
      %v5955 = vunpack.c.l.b16 %v3043
      %v5956 = vunpack.c.l.b16 %v3044
      %v5957 = vunpack.c.l.b16 %v3045
      %v5958 = vunpack.c.l.b16 %v3046
      %v5959 = vunpack.c.l.b16 %v3047
      %v5960 = vunpack.c.l.b16 %v3048
      %v5961 = vunpack.c.l.b16 %v3049
      %v5962 = vunpack.c.l.b16 %v3050
      %v5963 = vunpack.c.l.b16 %v3051
      %v5964 = vunpack.c.l.b16 %v3052
      %v5965 = vunpack.c.l.b16 %v3053
      %v5966 = vunpack.c.l.b16 %v3054
      %v5967 = vunpack.c.l.b16 %v3055
      %v5968 = vunpack.c.l.b16 %v3056
      %v5969 = vunpack.c.l.b16 %v3057
      %v5970 = vunpack.c.l.b16 %v3058
      %v5971 = vunpack.c.l.b16 %v3059
      %v5972 = vunpack.c.l.b16 %v3060
      %v5973 = vunpack.c.l.b16 %v3061
      %v5974 = vunpack.c.l.b16 %v3062
      %v5975 = vunpack.c.l.b16 %v3063
      %v5976 = vunpack.c.l.b16 %v3064
      %v5977 = vunpack.c.l.b16 %v3065
      %v5978 = vunpack.c.l.b16 %v3066
      %v5979 = vunpack.c.l.b16 %v3067
      %v5980 = vunpack.c.l.b16 %v3068
      %v5981 = vunpack.c.h.b16 %v3037
      %v5982 = vunpack.c.h.b16 %v3038
      %v5983 = vunpack.c.h.b16 %v3039
      %v5984 = vunpack.c.h.b16 %v3040
      %v5985 = vunpack.c.h.b16 %v3041
      %v5986 = vunpack.c.h.b16 %v3042
      %v5987 = vunpack.c.h.b16 %v3043
      %v5988 = vunpack.c.h.b16 %v3044
      %v5989 = vunpack.c.h.b16 %v3045
      %v5990 = vunpack.c.h.b16 %v3046
      %v5991 = vunpack.c.h.b16 %v3047
      %v5992 = vunpack.c.h.b16 %v3048
      %v5993 = vunpack.c.h.b16 %v3049
      %v5994 = vunpack.c.h.b16 %v3050
      %v5995 = vunpack.c.h.b16 %v3051
      %v5996 = vunpack.c.h.b16 %v3052
      %v5997 = vunpack.c.h.b16 %v3053
      %v5998 = vunpack.c.h.b16 %v3054
      %v5999 = vunpack.c.h.b16 %v3055
      %v6000 = vunpack.c.h.b16 %v3056
      %v6001 = vunpack.c.h.b16 %v3057
      %v6002 = vunpack.c.h.b16 %v3058
      %v6003 = vunpack.c.h.b16 %v3059
      %v6004 = vunpack.c.h.b16 %v3060
      %v6005 = vunpack.c.h.b16 %v3061
      %v6006 = vunpack.c.h.b16 %v3062
      %v6007 = vunpack.c.h.b16 %v3063
      %v6008 = vunpack.c.h.b16 %v3064
      %v6009 = vunpack.c.h.b16 %v3065
      %v6010 = vunpack.c.h.b16 %v3066
      %v6011 = vunpack.c.h.b16 %v3067
      %v6012 = vunpack.c.h.b16 %v3068
      %v6013 = vunpack.c.l.b16 %v3069
      %v6014 = vunpack.c.l.b16 %v3070
      %v6015 = vunpack.c.l.b16 %v3071
      %v6016 = vunpack.c.l.b16 %v3072
      %v6017 = vunpack.c.l.b16 %v3073
      %v6018 = vunpack.c.l.b16 %v3074
      %v6019 = vunpack.c.l.b16 %v3075
      %v6020 = vunpack.c.l.b16 %v3076
      %v6021 = vunpack.c.l.b16 %v3077
      %v6022 = vunpack.c.l.b16 %v3078
      %v6023 = vunpack.c.l.b16 %v3079
      %v6024 = vunpack.c.l.b16 %v3080
      %v6025 = vunpack.c.l.b16 %v3081
      %v6026 = vunpack.c.l.b16 %v3082
      %v6027 = vunpack.c.l.b16 %v3083
      %v6028 = vunpack.c.l.b16 %v3084
      %v6029 = vunpack.c.l.b16 %v3085
      %v6030 = vunpack.c.l.b16 %v3086
      %v6031 = vunpack.c.l.b16 %v3087
      %v6032 = vunpack.c.l.b16 %v3088
      %v6033 = vunpack.c.l.b16 %v3089
      %v6034 = vunpack.c.l.b16 %v3090
      %v6035 = vunpack.c.l.b16 %v3091
      %v6036 = vunpack.c.l.b16 %v3092
      %v6037 = vunpack.c.l.b16 %v3093
      %v6038 = vunpack.c.l.b16 %v3094
      %v6039 = vunpack.c.l.b16 %v3095
      %v6040 = vunpack.c.l.b16 %v3096
      %v6041 = vunpack.c.l.b16 %v3097
      %v6042 = vunpack.c.l.b16 %v3098
      %v6043 = vunpack.c.l.b16 %v3099
      %v6044 = vunpack.c.l.b16 %v3100
      %v6045 = vunpack.c.h.b16 %v3069
      %v6046 = vunpack.c.h.b16 %v3070
      %v6047 = vunpack.c.h.b16 %v3071
      %v6048 = vunpack.c.h.b16 %v3072
      %v6049 = vunpack.c.h.b16 %v3073
      %v6050 = vunpack.c.h.b16 %v3074
      %v6051 = vunpack.c.h.b16 %v3075
      %v6052 = vunpack.c.h.b16 %v3076
      %v6053 = vunpack.c.h.b16 %v3077
      %v6054 = vunpack.c.h.b16 %v3078
      %v6055 = vunpack.c.h.b16 %v3079
      %v6056 = vunpack.c.h.b16 %v3080
      %v6057 = vunpack.c.h.b16 %v3081
      %v6058 = vunpack.c.h.b16 %v3082
      %v6059 = vunpack.c.h.b16 %v3083
      %v6060 = vunpack.c.h.b16 %v3084
      %v6061 = vunpack.c.h.b16 %v3085
      %v6062 = vunpack.c.h.b16 %v3086
      %v6063 = vunpack.c.h.b16 %v3087
      %v6064 = vunpack.c.h.b16 %v3088
      %v6065 = vunpack.c.h.b16 %v3089
      %v6066 = vunpack.c.h.b16 %v3090
      %v6067 = vunpack.c.h.b16 %v3091
      %v6068 = vunpack.c.h.b16 %v3092
      %v6069 = vunpack.c.h.b16 %v3093
      %v6070 = vunpack.c.h.b16 %v3094
      %v6071 = vunpack.c.h.b16 %v3095
      %v6072 = vunpack.c.h.b16 %v3096
      %v6073 = vunpack.c.h.b16 %v3097
      %v6074 = vunpack.c.h.b16 %v3098
      %v6075 = vunpack.c.h.b16 %v3099
      %v6076 = vunpack.c.h.b16 %v3100
      %v6077 = vunpack.c.l.b16 %v3101
      %v6078 = vunpack.c.l.b16 %v3102
      %v6079 = vunpack.c.l.b16 %v3103
      %v6080 = vunpack.c.l.b16 %v3104
      %v6081 = vunpack.c.l.b16 %v3105
      %v6082 = vunpack.c.l.b16 %v3106
      %v6083 = vunpack.c.l.b16 %v3107
      %v6084 = vunpack.c.l.b16 %v3108
      %v6085 = vunpack.c.l.b16 %v3109
      %v6086 = vunpack.c.l.b16 %v3110
      %v6087 = vunpack.c.l.b16 %v3111
      %v6088 = vunpack.c.l.b16 %v3112
      %v6089 = vunpack.c.l.b16 %v3113
      %v6090 = vunpack.c.l.b16 %v3114
      %v6091 = vunpack.c.l.b16 %v3115
      %v6092 = vunpack.c.l.b16 %v3116
      %v6093 = vunpack.c.l.b16 %v3117
      %v6094 = vunpack.c.l.b16 %v3118
      %v6095 = vunpack.c.l.b16 %v3119
      %v6096 = vunpack.c.l.b16 %v3120
      %v6097 = vunpack.c.l.b16 %v3121
      %v6098 = vunpack.c.l.b16 %v3122
      %v6099 = vunpack.c.l.b16 %v3123
      %v6100 = vunpack.c.l.b16 %v3124
      %v6101 = vunpack.c.l.b16 %v3125
      %v6102 = vunpack.c.l.b16 %v3126
      %v6103 = vunpack.c.l.b16 %v3127
      %v6104 = vunpack.c.l.b16 %v3128
      %v6105 = vunpack.c.l.b16 %v3129
      %v6106 = vunpack.c.l.b16 %v3130
      %v6107 = vunpack.c.l.b16 %v3131
      %v6108 = vunpack.c.l.b16 %v3132
      %v6109 = vunpack.c.h.b16 %v3101
      %v6110 = vunpack.c.h.b16 %v3102
      %v6111 = vunpack.c.h.b16 %v3103
      %v6112 = vunpack.c.h.b16 %v3104
      %v6113 = vunpack.c.h.b16 %v3105
      %v6114 = vunpack.c.h.b16 %v3106
      %v6115 = vunpack.c.h.b16 %v3107
      %v6116 = vunpack.c.h.b16 %v3108
      %v6117 = vunpack.c.h.b16 %v3109
      %v6118 = vunpack.c.h.b16 %v3110
      %v6119 = vunpack.c.h.b16 %v3111
      %v6120 = vunpack.c.h.b16 %v3112
      %v6121 = vunpack.c.h.b16 %v3113
      %v6122 = vunpack.c.h.b16 %v3114
      %v6123 = vunpack.c.h.b16 %v3115
      %v6124 = vunpack.c.h.b16 %v3116
      %v6125 = vunpack.c.h.b16 %v3117
      %v6126 = vunpack.c.h.b16 %v3118
      %v6127 = vunpack.c.h.b16 %v3119
      %v6128 = vunpack.c.h.b16 %v3120
      %v6129 = vunpack.c.h.b16 %v3121
      %v6130 = vunpack.c.h.b16 %v3122
      %v6131 = vunpack.c.h.b16 %v3123
      %v6132 = vunpack.c.h.b16 %v3124
      %v6133 = vunpack.c.h.b16 %v3125
      %v6134 = vunpack.c.h.b16 %v3126
      %v6135 = vunpack.c.h.b16 %v3127
      %v6136 = vunpack.c.h.b16 %v3128
      %v6137 = vunpack.c.h.b16 %v3129
      %v6138 = vunpack.c.h.b16 %v3130
      %v6139 = vunpack.c.h.b16 %v3131
      %v6140 = vunpack.c.h.b16 %v3132
      %v6141 = vunpack.c.l.b16 %v3133
      %v6142 = vunpack.c.l.b16 %v3134
      %v6143 = vunpack.c.l.b16 %v3135
      %v6144 = vunpack.c.l.b16 %v3136
      %v6145 = vunpack.c.l.b16 %v3137
      %v6146 = vunpack.c.l.b16 %v3138
      %v6147 = vunpack.c.l.b16 %v3139
      %v6148 = vunpack.c.l.b16 %v3140
      %v6149 = vunpack.c.l.b16 %v3141
      %v6150 = vunpack.c.l.b16 %v3142
      %v6151 = vunpack.c.l.b16 %v3143
      %v6152 = vunpack.c.l.b16 %v3144
      %v6153 = vunpack.c.l.b16 %v3145
      %v6154 = vunpack.c.l.b16 %v3146
      %v6155 = vunpack.c.l.b16 %v3147
      %v6156 = vunpack.c.l.b16 %v3148
      %v6157 = vunpack.c.l.b16 %v3149
      %v6158 = vunpack.c.l.b16 %v3150
      %v6159 = vunpack.c.l.b16 %v3151
      %v6160 = vunpack.c.l.b16 %v3152
      %v6161 = vunpack.c.l.b16 %v3153
      %v6162 = vunpack.c.l.b16 %v3154
      %v6163 = vunpack.c.l.b16 %v3155
      %v6164 = vunpack.c.l.b16 %v3156
      %v6165 = vunpack.c.l.b16 %v3157
      %v6166 = vunpack.c.l.b16 %v3158
      %v6167 = vunpack.c.l.b16 %v3159
      %v6168 = vunpack.c.l.b16 %v3160
      %v6169 = vunpack.c.l.b16 %v3161
      %v6170 = vunpack.c.l.b16 %v3162
      %v6171 = vunpack.c.l.b16 %v3163
      %v6172 = vunpack.c.l.b16 %v3164
      %v6173 = vunpack.c.h.b16 %v3133
      %v6174 = vunpack.c.h.b16 %v3134
      %v6175 = vunpack.c.h.b16 %v3135
      %v6176 = vunpack.c.h.b16 %v3136
      %v6177 = vunpack.c.h.b16 %v3137
      %v6178 = vunpack.c.h.b16 %v3138
      %v6179 = vunpack.c.h.b16 %v3139
      %v6180 = vunpack.c.h.b16 %v3140
      %v6181 = vunpack.c.h.b16 %v3141
      %v6182 = vunpack.c.h.b16 %v3142
      %v6183 = vunpack.c.h.b16 %v3143
      %v6184 = vunpack.c.h.b16 %v3144
      %v6185 = vunpack.c.h.b16 %v3145
      %v6186 = vunpack.c.h.b16 %v3146
      %v6187 = vunpack.c.h.b16 %v3147
      %v6188 = vunpack.c.h.b16 %v3148
      %v6189 = vunpack.c.h.b16 %v3149
      %v6190 = vunpack.c.h.b16 %v3150
      %v6191 = vunpack.c.h.b16 %v3151
      %v6192 = vunpack.c.h.b16 %v3152
      %v6193 = vunpack.c.h.b16 %v3153
      %v6194 = vunpack.c.h.b16 %v3154
      %v6195 = vunpack.c.h.b16 %v3155
      %v6196 = vunpack.c.h.b16 %v3156
      %v6197 = vunpack.c.h.b16 %v3157
      %v6198 = vunpack.c.h.b16 %v3158
      %v6199 = vunpack.c.h.b16 %v3159
      %v6200 = vunpack.c.h.b16 %v3160
      %v6201 = vunpack.c.h.b16 %v3161
      %v6202 = vunpack.c.h.b16 %v3162
      %v6203 = vunpack.c.h.b16 %v3163
      %v6204 = vunpack.c.h.b16 %v3164
      %v6205 = vunpack.c.l.b16 %v3165
      %v6206 = vunpack.c.l.b16 %v3166
      %v6207 = vunpack.c.l.b16 %v3167
      %v6208 = vunpack.c.l.b16 %v3168
      %v6209 = vunpack.c.l.b16 %v3169
      %v6210 = vunpack.c.l.b16 %v3170
      %v6211 = vunpack.c.l.b16 %v3171
      %v6212 = vunpack.c.l.b16 %v3172
      %v6213 = vunpack.c.l.b16 %v3173
      %v6214 = vunpack.c.l.b16 %v3174
      %v6215 = vunpack.c.l.b16 %v3175
      %v6216 = vunpack.c.l.b16 %v3176
      %v6217 = vunpack.c.l.b16 %v3177
      %v6218 = vunpack.c.l.b16 %v3178
      %v6219 = vunpack.c.l.b16 %v3179
      %v6220 = vunpack.c.l.b16 %v3180
      %v6221 = vunpack.c.l.b16 %v3181
      %v6222 = vunpack.c.l.b16 %v3182
      %v6223 = vunpack.c.l.b16 %v3183
      %v6224 = vunpack.c.l.b16 %v3184
      %v6225 = vunpack.c.l.b16 %v3185
      %v6226 = vunpack.c.l.b16 %v3186
      %v6227 = vunpack.c.l.b16 %v3187
      %v6228 = vunpack.c.l.b16 %v3188
      %v6229 = vunpack.c.l.b16 %v3189
      %v6230 = vunpack.c.l.b16 %v3190
      %v6231 = vunpack.c.l.b16 %v3191
      %v6232 = vunpack.c.l.b16 %v3192
      %v6233 = vunpack.c.l.b16 %v3193
      %v6234 = vunpack.c.l.b16 %v3194
      %v6235 = vunpack.c.l.b16 %v3195
      %v6236 = vunpack.c.l.b16 %v3196
      %v6237 = vunpack.c.h.b16 %v3165
      %v6238 = vunpack.c.h.b16 %v3166
      %v6239 = vunpack.c.h.b16 %v3167
      %v6240 = vunpack.c.h.b16 %v3168
      %v6241 = vunpack.c.h.b16 %v3169
      %v6242 = vunpack.c.h.b16 %v3170
      %v6243 = vunpack.c.h.b16 %v3171
      %v6244 = vunpack.c.h.b16 %v3172
      %v6245 = vunpack.c.h.b16 %v3173
      %v6246 = vunpack.c.h.b16 %v3174
      %v6247 = vunpack.c.h.b16 %v3175
      %v6248 = vunpack.c.h.b16 %v3176
      %v6249 = vunpack.c.h.b16 %v3177
      %v6250 = vunpack.c.h.b16 %v3178
      %v6251 = vunpack.c.h.b16 %v3179
      %v6252 = vunpack.c.h.b16 %v3180
      %v6253 = vunpack.c.h.b16 %v3181
      %v6254 = vunpack.c.h.b16 %v3182
      %v6255 = vunpack.c.h.b16 %v3183
      %v6256 = vunpack.c.h.b16 %v3184
      %v6257 = vunpack.c.h.b16 %v3185
      %v6258 = vunpack.c.h.b16 %v3186
      %v6259 = vunpack.c.h.b16 %v3187
      %v6260 = vunpack.c.h.b16 %v3188
      %v6261 = vunpack.c.h.b16 %v3189
      %v6262 = vunpack.c.h.b16 %v3190
      %v6263 = vunpack.c.h.b16 %v3191
      %v6264 = vunpack.c.h.b16 %v3192
      %v6265 = vunpack.c.h.b16 %v3193
      %v6266 = vunpack.c.h.b16 %v3194
      %v6267 = vunpack.c.h.b16 %v3195
      %v6268 = vunpack.c.h.b16 %v3196
      %v6269 = vpack.c.b16 %v4222, %v4221
      %v6270 = vpack.c.b16 %v4224, %v4223
      %v6271 = vpack.c.b16 %v4226, %v4225
      %v6272 = vpack.c.b16 %v4228, %v4227
      %v6273 = vpack.c.b16 %v4230, %v4229
      %v6274 = vpack.c.b16 %v4232, %v4231
      %v6275 = vpack.c.b16 %v4234, %v4233
      %v6276 = vpack.c.b16 %v4236, %v4235
      %v6277 = vpack.c.b16 %v4238, %v4237
      %v6278 = vpack.c.b16 %v4240, %v4239
      %v6279 = vpack.c.b16 %v4242, %v4241
      %v6280 = vpack.c.b16 %v4244, %v4243
      %v6281 = vpack.c.b16 %v4246, %v4245
      %v6282 = vpack.c.b16 %v4248, %v4247
      %v6283 = vpack.c.b16 %v4250, %v4249
      %v6284 = vpack.c.b16 %v4252, %v4251
      %v6285 = vpack.c.b16 %v4254, %v4253
      %v6286 = vpack.c.b16 %v4256, %v4255
      %v6287 = vpack.c.b16 %v4258, %v4257
      %v6288 = vpack.c.b16 %v4260, %v4259
      %v6289 = vpack.c.b16 %v4262, %v4261
      %v6290 = vpack.c.b16 %v4264, %v4263
      %v6291 = vpack.c.b16 %v4266, %v4265
      %v6292 = vpack.c.b16 %v4268, %v4267
      %v6293 = vpack.c.b16 %v4270, %v4269
      %v6294 = vpack.c.b16 %v4272, %v4271
      %v6295 = vpack.c.b16 %v4274, %v4273
      %v6296 = vpack.c.b16 %v4276, %v4275
      %v6297 = vpack.c.b16 %v4278, %v4277
      %v6298 = vpack.c.b16 %v4280, %v4279
      %v6299 = vpack.c.b16 %v4282, %v4281
      %v6300 = vpack.c.b16 %v4284, %v4283
      %v6301 = vpack.c.b16 %v4286, %v4285
      %v6302 = vpack.c.b16 %v4288, %v4287
      %v6303 = vpack.c.b16 %v4290, %v4289
      %v6304 = vpack.c.b16 %v4292, %v4291
      %v6305 = vpack.c.b16 %v4294, %v4293
      %v6306 = vpack.c.b16 %v4296, %v4295
      %v6307 = vpack.c.b16 %v4298, %v4297
      %v6308 = vpack.c.b16 %v4300, %v4299
      %v6309 = vpack.c.b16 %v4302, %v4301
      %v6310 = vpack.c.b16 %v4304, %v4303
      %v6311 = vpack.c.b16 %v4306, %v4305
      %v6312 = vpack.c.b16 %v4308, %v4307
      %v6313 = vpack.c.b16 %v4310, %v4309
      %v6314 = vpack.c.b16 %v4312, %v4311
      %v6315 = vpack.c.b16 %v4314, %v4313
      %v6316 = vpack.c.b16 %v4316, %v4315
      %v6317 = vpack.c.b16 %v4318, %v4317
      %v6318 = vpack.c.b16 %v4320, %v4319
      %v6319 = vpack.c.b16 %v4322, %v4321
      %v6320 = vpack.c.b16 %v4324, %v4323
      %v6321 = vpack.c.b16 %v4326, %v4325
      %v6322 = vpack.c.b16 %v4328, %v4327
      %v6323 = vpack.c.b16 %v4330, %v4329
      %v6324 = vpack.c.b16 %v4332, %v4331
      %v6325 = vpack.c.b16 %v4334, %v4333
      %v6326 = vpack.c.b16 %v4336, %v4335
      %v6327 = vpack.c.b16 %v4338, %v4337
      %v6328 = vpack.c.b16 %v4340, %v4339
      %v6329 = vpack.c.b16 %v4342, %v4341
      %v6330 = vpack.c.b16 %v4344, %v4343
      %v6331 = vpack.c.b16 %v4346, %v4345
      %v6332 = vpack.c.b16 %v4348, %v4347
      %v6333 = vpack.c.b16 %v4350, %v4349
      %v6334 = vpack.c.b16 %v4352, %v4351
      %v6335 = vpack.c.b16 %v4354, %v4353
      %v6336 = vpack.c.b16 %v4356, %v4355
      %v6337 = vpack.c.b16 %v4358, %v4357
      %v6338 = vpack.c.b16 %v4360, %v4359
      %v6339 = vpack.c.b16 %v4362, %v4361
      %v6340 = vpack.c.b16 %v4364, %v4363
      %v6341 = vpack.c.b16 %v4366, %v4365
      %v6342 = vpack.c.b16 %v4368, %v4367
      %v6343 = vpack.c.b16 %v4370, %v4369
      %v6344 = vpack.c.b16 %v4372, %v4371
      %v6345 = vpack.c.b16 %v4374, %v4373
      %v6346 = vpack.c.b16 %v4376, %v4375
      %v6347 = vpack.c.b16 %v4378, %v4377
      %v6348 = vpack.c.b16 %v4380, %v4379
      %v6349 = vpack.c.b16 %v4382, %v4381
      %v6350 = vpack.c.b16 %v4384, %v4383
      %v6351 = vpack.c.b16 %v4386, %v4385
      %v6352 = vpack.c.b16 %v4388, %v4387
      %v6353 = vpack.c.b16 %v4390, %v4389
      %v6354 = vpack.c.b16 %v4392, %v4391
      %v6355 = vpack.c.b16 %v4394, %v4393
      %v6356 = vpack.c.b16 %v4396, %v4395
      %v6357 = vpack.c.b16 %v4398, %v4397
      %v6358 = vpack.c.b16 %v4400, %v4399
      %v6359 = vpack.c.b16 %v4402, %v4401
      %v6360 = vpack.c.b16 %v4404, %v4403
      %v6361 = vpack.c.b16 %v4406, %v4405
      %v6362 = vpack.c.b16 %v4408, %v4407
      %v6363 = vpack.c.b16 %v4410, %v4409
      %v6364 = vpack.c.b16 %v4412, %v4411
      %v6365 = vpack.c.b16 %v4414, %v4413
      %v6366 = vpack.c.b16 %v4416, %v4415
      %v6367 = vpack.c.b16 %v4418, %v4417
      %v6368 = vpack.c.b16 %v4420, %v4419
      %v6369 = vpack.c.b16 %v4422, %v4421
      %v6370 = vpack.c.b16 %v4424, %v4423
      %v6371 = vpack.c.b16 %v4426, %v4425
      %v6372 = vpack.c.b16 %v4428, %v4427
      %v6373 = vpack.c.b16 %v4430, %v4429
      %v6374 = vpack.c.b16 %v4432, %v4431
      %v6375 = vpack.c.b16 %v4434, %v4433
      %v6376 = vpack.c.b16 %v4436, %v4435
      %v6377 = vpack.c.b16 %v4438, %v4437
      %v6378 = vpack.c.b16 %v4440, %v4439
      %v6379 = vpack.c.b16 %v4442, %v4441
      %v6380 = vpack.c.b16 %v4444, %v4443
      %v6381 = vpack.c.b16 %v4446, %v4445
      %v6382 = vpack.c.b16 %v4448, %v4447
      %v6383 = vpack.c.b16 %v4450, %v4449
      %v6384 = vpack.c.b16 %v4452, %v4451
      %v6385 = vpack.c.b16 %v4454, %v4453
      %v6386 = vpack.c.b16 %v4456, %v4455
      %v6387 = vpack.c.b16 %v4458, %v4457
      %v6388 = vpack.c.b16 %v4460, %v4459
      %v6389 = vpack.c.b16 %v4462, %v4461
      %v6390 = vpack.c.b16 %v4464, %v4463
      %v6391 = vpack.c.b16 %v4466, %v4465
      %v6392 = vpack.c.b16 %v4468, %v4467
      %v6393 = vpack.c.b16 %v4470, %v4469
      %v6394 = vpack.c.b16 %v4472, %v4471
      %v6395 = vpack.c.b16 %v4474, %v4473
      %v6396 = vpack.c.b16 %v4476, %v4475
      %v6397 = vpack.c.b16 %v4478, %v4477
      %v6398 = vpack.c.b16 %v4480, %v4479
      %v6399 = vpack.c.b16 %v4482, %v4481
      %v6400 = vpack.c.b16 %v4484, %v4483
      %v6401 = vpack.c.b16 %v4486, %v4485
      %v6402 = vpack.c.b16 %v4488, %v4487
      %v6403 = vpack.c.b16 %v4490, %v4489
      %v6404 = vpack.c.b16 %v4492, %v4491
      %v6405 = vpack.c.b16 %v4494, %v4493
      %v6406 = vpack.c.b16 %v4496, %v4495
      %v6407 = vpack.c.b16 %v4498, %v4497
      %v6408 = vpack.c.b16 %v4500, %v4499
      %v6409 = vpack.c.b16 %v4502, %v4501
      %v6410 = vpack.c.b16 %v4504, %v4503
      %v6411 = vpack.c.b16 %v4506, %v4505
      %v6412 = vpack.c.b16 %v4508, %v4507
      %v6413 = vpack.c.b16 %v4510, %v4509
      %v6414 = vpack.c.b16 %v4512, %v4511
      %v6415 = vpack.c.b16 %v4514, %v4513
      %v6416 = vpack.c.b16 %v4516, %v4515
      %v6417 = vpack.c.b16 %v4518, %v4517
      %v6418 = vpack.c.b16 %v4520, %v4519
      %v6419 = vpack.c.b16 %v4522, %v4521
      %v6420 = vpack.c.b16 %v4524, %v4523
      %v6421 = vpack.c.b16 %v4526, %v4525
      %v6422 = vpack.c.b16 %v4528, %v4527
      %v6423 = vpack.c.b16 %v4530, %v4529
      %v6424 = vpack.c.b16 %v4532, %v4531
      %v6425 = vpack.c.b16 %v4534, %v4533
      %v6426 = vpack.c.b16 %v4536, %v4535
      %v6427 = vpack.c.b16 %v4538, %v4537
      %v6428 = vpack.c.b16 %v4540, %v4539
      %v6429 = vpack.c.b16 %v4542, %v4541
      %v6430 = vpack.c.b16 %v4544, %v4543
      %v6431 = vpack.c.b16 %v4546, %v4545
      %v6432 = vpack.c.b16 %v4548, %v4547
      %v6433 = vpack.c.b16 %v4550, %v4549
      %v6434 = vpack.c.b16 %v4552, %v4551
      %v6435 = vpack.c.b16 %v4554, %v4553
      %v6436 = vpack.c.b16 %v4556, %v4555
      %v6437 = vpack.c.b16 %v4558, %v4557
      %v6438 = vpack.c.b16 %v4560, %v4559
      %v6439 = vpack.c.b16 %v4562, %v4561
      %v6440 = vpack.c.b16 %v4564, %v4563
      %v6441 = vpack.c.b16 %v4566, %v4565
      %v6442 = vpack.c.b16 %v4568, %v4567
      %v6443 = vpack.c.b16 %v4570, %v4569
      %v6444 = vpack.c.b16 %v4572, %v4571
      %v6445 = vpack.c.b16 %v4574, %v4573
      %v6446 = vpack.c.b16 %v4576, %v4575
      %v6447 = vpack.c.b16 %v4578, %v4577
      %v6448 = vpack.c.b16 %v4580, %v4579
      %v6449 = vpack.c.b16 %v4582, %v4581
      %v6450 = vpack.c.b16 %v4584, %v4583
      %v6451 = vpack.c.b16 %v4586, %v4585
      %v6452 = vpack.c.b16 %v4588, %v4587
      %v6453 = vpack.c.b16 %v4590, %v4589
      %v6454 = vpack.c.b16 %v4592, %v4591
      %v6455 = vpack.c.b16 %v4594, %v4593
      %v6456 = vpack.c.b16 %v4596, %v4595
      %v6457 = vpack.c.b16 %v4598, %v4597
      %v6458 = vpack.c.b16 %v4600, %v4599
      %v6459 = vpack.c.b16 %v4602, %v4601
      %v6460 = vpack.c.b16 %v4604, %v4603
      %v6461 = vpack.c.b16 %v4606, %v4605
      %v6462 = vpack.c.b16 %v4608, %v4607
      %v6463 = vpack.c.b16 %v4610, %v4609
      %v6464 = vpack.c.b16 %v4612, %v4611
      %v6465 = vpack.c.b16 %v4614, %v4613
      %v6466 = vpack.c.b16 %v4616, %v4615
      %v6467 = vpack.c.b16 %v4618, %v4617
      %v6468 = vpack.c.b16 %v4620, %v4619
      %v6469 = vpack.c.b16 %v4622, %v4621
      %v6470 = vpack.c.b16 %v4624, %v4623
      %v6471 = vpack.c.b16 %v4626, %v4625
      %v6472 = vpack.c.b16 %v4628, %v4627
      %v6473 = vpack.c.b16 %v4630, %v4629
      %v6474 = vpack.c.b16 %v4632, %v4631
      %v6475 = vpack.c.b16 %v4634, %v4633
      %v6476 = vpack.c.b16 %v4636, %v4635
      %v6477 = vpack.c.b16 %v4638, %v4637
      %v6478 = vpack.c.b16 %v4640, %v4639
      %v6479 = vpack.c.b16 %v4642, %v4641
      %v6480 = vpack.c.b16 %v4644, %v4643
      %v6481 = vpack.c.b16 %v4646, %v4645
      %v6482 = vpack.c.b16 %v4648, %v4647
      %v6483 = vpack.c.b16 %v4650, %v4649
      %v6484 = vpack.c.b16 %v4652, %v4651
      %v6485 = vpack.c.b16 %v4654, %v4653
      %v6486 = vpack.c.b16 %v4656, %v4655
      %v6487 = vpack.c.b16 %v4658, %v4657
      %v6488 = vpack.c.b16 %v4660, %v4659
      %v6489 = vpack.c.b16 %v4662, %v4661
      %v6490 = vpack.c.b16 %v4664, %v4663
      %v6491 = vpack.c.b16 %v4666, %v4665
      %v6492 = vpack.c.b16 %v4668, %v4667
      %v6493 = vpack.c.b16 %v4670, %v4669
      %v6494 = vpack.c.b16 %v4672, %v4671
      %v6495 = vpack.c.b16 %v4674, %v4673
      %v6496 = vpack.c.b16 %v4676, %v4675
      %v6497 = vpack.c.b16 %v4678, %v4677
      %v6498 = vpack.c.b16 %v4680, %v4679
      %v6499 = vpack.c.b16 %v4682, %v4681
      %v6500 = vpack.c.b16 %v4684, %v4683
      %v6501 = vpack.c.b16 %v4686, %v4685
      %v6502 = vpack.c.b16 %v4688, %v4687
      %v6503 = vpack.c.b16 %v4690, %v4689
      %v6504 = vpack.c.b16 %v4692, %v4691
      %v6505 = vpack.c.b16 %v4694, %v4693
      %v6506 = vpack.c.b16 %v4696, %v4695
      %v6507 = vpack.c.b16 %v4698, %v4697
      %v6508 = vpack.c.b16 %v4700, %v4699
      %v6509 = vpack.c.b16 %v4702, %v4701
      %v6510 = vpack.c.b16 %v4704, %v4703
      %v6511 = vpack.c.b16 %v4706, %v4705
      %v6512 = vpack.c.b16 %v4708, %v4707
      %v6513 = vpack.c.b16 %v4710, %v4709
      %v6514 = vpack.c.b16 %v4712, %v4711
      %v6515 = vpack.c.b16 %v4714, %v4713
      %v6516 = vpack.c.b16 %v4716, %v4715
      %v6517 = vpack.c.b16 %v4718, %v4717
      %v6518 = vpack.c.b16 %v4720, %v4719
      %v6519 = vpack.c.b16 %v4722, %v4721
      %v6520 = vpack.c.b16 %v4724, %v4723
      %v6521 = vpack.c.b16 %v4726, %v4725
      %v6522 = vpack.c.b16 %v4728, %v4727
      %v6523 = vpack.c.b16 %v4730, %v4729
      %v6524 = vpack.c.b16 %v4732, %v4731
      %v6525 = vpack.c.b16 %v4734, %v4733
      %v6526 = vpack.c.b16 %v4736, %v4735
      %v6527 = vpack.c.b16 %v4738, %v4737
      %v6528 = vpack.c.b16 %v4740, %v4739
      %v6529 = vpack.c.b16 %v4742, %v4741
      %v6530 = vpack.c.b16 %v4744, %v4743
      %v6531 = vpack.c.b16 %v4746, %v4745
      %v6532 = vpack.c.b16 %v4748, %v4747
      %v6533 = vpack.c.b16 %v4750, %v4749
      %v6534 = vpack.c.b16 %v4752, %v4751
      %v6535 = vpack.c.b16 %v4754, %v4753
      %v6536 = vpack.c.b16 %v4756, %v4755
      %v6537 = vpack.c.b16 %v4758, %v4757
      %v6538 = vpack.c.b16 %v4760, %v4759
      %v6539 = vpack.c.b16 %v4762, %v4761
      %v6540 = vpack.c.b16 %v4764, %v4763
      %v6541 = vpack.c.b16 %v4766, %v4765
      %v6542 = vpack.c.b16 %v4768, %v4767
      %v6543 = vpack.c.b16 %v4770, %v4769
      %v6544 = vpack.c.b16 %v4772, %v4771
      %v6545 = vpack.c.b16 %v4774, %v4773
      %v6546 = vpack.c.b16 %v4776, %v4775
      %v6547 = vpack.c.b16 %v4778, %v4777
      %v6548 = vpack.c.b16 %v4780, %v4779
      %v6549 = vpack.c.b16 %v4782, %v4781
      %v6550 = vpack.c.b16 %v4784, %v4783
      %v6551 = vpack.c.b16 %v4786, %v4785
      %v6552 = vpack.c.b16 %v4788, %v4787
      %v6553 = vpack.c.b16 %v4790, %v4789
      %v6554 = vpack.c.b16 %v4792, %v4791
      %v6555 = vpack.c.b16 %v4794, %v4793
      %v6556 = vpack.c.b16 %v4796, %v4795
      %v6557 = vpack.c.b16 %v4798, %v4797
      %v6558 = vpack.c.b16 %v4800, %v4799
      %v6559 = vpack.c.b16 %v4802, %v4801
      %v6560 = vpack.c.b16 %v4804, %v4803
      %v6561 = vpack.c.b16 %v4806, %v4805
      %v6562 = vpack.c.b16 %v4808, %v4807
      %v6563 = vpack.c.b16 %v4810, %v4809
      %v6564 = vpack.c.b16 %v4812, %v4811
      %v6565 = vpack.c.b16 %v4814, %v4813
      %v6566 = vpack.c.b16 %v4816, %v4815
      %v6567 = vpack.c.b16 %v4818, %v4817
      %v6568 = vpack.c.b16 %v4820, %v4819
      %v6569 = vpack.c.b16 %v4822, %v4821
      %v6570 = vpack.c.b16 %v4824, %v4823
      %v6571 = vpack.c.b16 %v4826, %v4825
      %v6572 = vpack.c.b16 %v4828, %v4827
      %v6573 = vpack.c.b16 %v4830, %v4829
      %v6574 = vpack.c.b16 %v4832, %v4831
      %v6575 = vpack.c.b16 %v4834, %v4833
      %v6576 = vpack.c.b16 %v4836, %v4835
      %v6577 = vpack.c.b16 %v4838, %v4837
      %v6578 = vpack.c.b16 %v4840, %v4839
      %v6579 = vpack.c.b16 %v4842, %v4841
      %v6580 = vpack.c.b16 %v4844, %v4843
      %v6581 = vpack.c.b16 %v4846, %v4845
      %v6582 = vpack.c.b16 %v4848, %v4847
      %v6583 = vpack.c.b16 %v4850, %v4849
      %v6584 = vpack.c.b16 %v4852, %v4851
      %v6585 = vpack.c.b16 %v4854, %v4853
      %v6586 = vpack.c.b16 %v4856, %v4855
      %v6587 = vpack.c.b16 %v4858, %v4857
      %v6588 = vpack.c.b16 %v4860, %v4859
      %v6589 = vpack.c.b16 %v4862, %v4861
      %v6590 = vpack.c.b16 %v4864, %v4863
      %v6591 = vpack.c.b16 %v4866, %v4865
      %v6592 = vpack.c.b16 %v4868, %v4867
      %v6593 = vpack.c.b16 %v4870, %v4869
      %v6594 = vpack.c.b16 %v4872, %v4871
      %v6595 = vpack.c.b16 %v4874, %v4873
      %v6596 = vpack.c.b16 %v4876, %v4875
      %v6597 = vpack.c.b16 %v4878, %v4877
      %v6598 = vpack.c.b16 %v4880, %v4879
      %v6599 = vpack.c.b16 %v4882, %v4881
      %v6600 = vpack.c.b16 %v4884, %v4883
      %v6601 = vpack.c.b16 %v4886, %v4885
      %v6602 = vpack.c.b16 %v4888, %v4887
      %v6603 = vpack.c.b16 %v4890, %v4889
      %v6604 = vpack.c.b16 %v4892, %v4891
      %v6605 = vpack.c.b16 %v4894, %v4893
      %v6606 = vpack.c.b16 %v4896, %v4895
      %v6607 = vpack.c.b16 %v4898, %v4897
      %v6608 = vpack.c.b16 %v4900, %v4899
      %v6609 = vpack.c.b16 %v4902, %v4901
      %v6610 = vpack.c.b16 %v4904, %v4903
      %v6611 = vpack.c.b16 %v4906, %v4905
      %v6612 = vpack.c.b16 %v4908, %v4907
      %v6613 = vpack.c.b16 %v4910, %v4909
      %v6614 = vpack.c.b16 %v4912, %v4911
      %v6615 = vpack.c.b16 %v4914, %v4913
      %v6616 = vpack.c.b16 %v4916, %v4915
      %v6617 = vpack.c.b16 %v4918, %v4917
      %v6618 = vpack.c.b16 %v4920, %v4919
      %v6619 = vpack.c.b16 %v4922, %v4921
      %v6620 = vpack.c.b16 %v4924, %v4923
      %v6621 = vpack.c.b16 %v4926, %v4925
      %v6622 = vpack.c.b16 %v4928, %v4927
      %v6623 = vpack.c.b16 %v4930, %v4929
      %v6624 = vpack.c.b16 %v4932, %v4931
      %v6625 = vpack.c.b16 %v4934, %v4933
      %v6626 = vpack.c.b16 %v4936, %v4935
      %v6627 = vpack.c.b16 %v4938, %v4937
      %v6628 = vpack.c.b16 %v4940, %v4939
      %v6629 = vpack.c.b16 %v4942, %v4941
      %v6630 = vpack.c.b16 %v4944, %v4943
      %v6631 = vpack.c.b16 %v4946, %v4945
      %v6632 = vpack.c.b16 %v4948, %v4947
      %v6633 = vpack.c.b16 %v4950, %v4949
      %v6634 = vpack.c.b16 %v4952, %v4951
      %v6635 = vpack.c.b16 %v4954, %v4953
      %v6636 = vpack.c.b16 %v4956, %v4955
      %v6637 = vpack.c.b16 %v4958, %v4957
      %v6638 = vpack.c.b16 %v4960, %v4959
      %v6639 = vpack.c.b16 %v4962, %v4961
      %v6640 = vpack.c.b16 %v4964, %v4963
      %v6641 = vpack.c.b16 %v4966, %v4965
      %v6642 = vpack.c.b16 %v4968, %v4967
      %v6643 = vpack.c.b16 %v4970, %v4969
      %v6644 = vpack.c.b16 %v4972, %v4971
      %v6645 = vpack.c.b16 %v4974, %v4973
      %v6646 = vpack.c.b16 %v4976, %v4975
      %v6647 = vpack.c.b16 %v4978, %v4977
      %v6648 = vpack.c.b16 %v4980, %v4979
      %v6649 = vpack.c.b16 %v4982, %v4981
      %v6650 = vpack.c.b16 %v4984, %v4983
      %v6651 = vpack.c.b16 %v4986, %v4985
      %v6652 = vpack.c.b16 %v4988, %v4987
      %v6653 = vpack.c.b16 %v4990, %v4989
      %v6654 = vpack.c.b16 %v4992, %v4991
      %v6655 = vpack.c.b16 %v4994, %v4993
      %v6656 = vpack.c.b16 %v4996, %v4995
      %v6657 = vpack.c.b16 %v4998, %v4997
      %v6658 = vpack.c.b16 %v5000, %v4999
      %v6659 = vpack.c.b16 %v5002, %v5001
      %v6660 = vpack.c.b16 %v5004, %v5003
      %v6661 = vpack.c.b16 %v5006, %v5005
      %v6662 = vpack.c.b16 %v5008, %v5007
      %v6663 = vpack.c.b16 %v5010, %v5009
      %v6664 = vpack.c.b16 %v5012, %v5011
      %v6665 = vpack.c.b16 %v5014, %v5013
      %v6666 = vpack.c.b16 %v5016, %v5015
      %v6667 = vpack.c.b16 %v5018, %v5017
      %v6668 = vpack.c.b16 %v5020, %v5019
      %v6669 = vpack.c.b16 %v5022, %v5021
      %v6670 = vpack.c.b16 %v5024, %v5023
      %v6671 = vpack.c.b16 %v5026, %v5025
      %v6672 = vpack.c.b16 %v5028, %v5027
      %v6673 = vpack.c.b16 %v5030, %v5029
      %v6674 = vpack.c.b16 %v5032, %v5031
      %v6675 = vpack.c.b16 %v5034, %v5033
      %v6676 = vpack.c.b16 %v5036, %v5035
      %v6677 = vpack.c.b16 %v5038, %v5037
      %v6678 = vpack.c.b16 %v5040, %v5039
      %v6679 = vpack.c.b16 %v5042, %v5041
      %v6680 = vpack.c.b16 %v5044, %v5043
      %v6681 = vpack.c.b16 %v5046, %v5045
      %v6682 = vpack.c.b16 %v5048, %v5047
      %v6683 = vpack.c.b16 %v5050, %v5049
      %v6684 = vpack.c.b16 %v5052, %v5051
      %v6685 = vpack.c.b16 %v5054, %v5053
      %v6686 = vpack.c.b16 %v5056, %v5055
      %v6687 = vpack.c.b16 %v5058, %v5057
      %v6688 = vpack.c.b16 %v5060, %v5059
      %v6689 = vpack.c.b16 %v5062, %v5061
      %v6690 = vpack.c.b16 %v5064, %v5063
      %v6691 = vpack.c.b16 %v5066, %v5065
      %v6692 = vpack.c.b16 %v5068, %v5067
      %v6693 = vpack.c.b16 %v5070, %v5069
      %v6694 = vpack.c.b16 %v5072, %v5071
      %v6695 = vpack.c.b16 %v5074, %v5073
      %v6696 = vpack.c.b16 %v5076, %v5075
      %v6697 = vpack.c.b16 %v5078, %v5077
      %v6698 = vpack.c.b16 %v5080, %v5079
      %v6699 = vpack.c.b16 %v5082, %v5081
      %v6700 = vpack.c.b16 %v5084, %v5083
      %v6701 = vpack.c.b16 %v5086, %v5085
      %v6702 = vpack.c.b16 %v5088, %v5087
      %v6703 = vpack.c.b16 %v5090, %v5089
      %v6704 = vpack.c.b16 %v5092, %v5091
      %v6705 = vpack.c.b16 %v5094, %v5093
      %v6706 = vpack.c.b16 %v5096, %v5095
      %v6707 = vpack.c.b16 %v5098, %v5097
      %v6708 = vpack.c.b16 %v5100, %v5099
      %v6709 = vpack.c.b16 %v5102, %v5101
      %v6710 = vpack.c.b16 %v5104, %v5103
      %v6711 = vpack.c.b16 %v5106, %v5105
      %v6712 = vpack.c.b16 %v5108, %v5107
      %v6713 = vpack.c.b16 %v5110, %v5109
      %v6714 = vpack.c.b16 %v5112, %v5111
      %v6715 = vpack.c.b16 %v5114, %v5113
      %v6716 = vpack.c.b16 %v5116, %v5115
      %v6717 = vpack.c.b16 %v5118, %v5117
      %v6718 = vpack.c.b16 %v5120, %v5119
      %v6719 = vpack.c.b16 %v5122, %v5121
      %v6720 = vpack.c.b16 %v5124, %v5123
      %v6721 = vpack.c.b16 %v5126, %v5125
      %v6722 = vpack.c.b16 %v5128, %v5127
      %v6723 = vpack.c.b16 %v5130, %v5129
      %v6724 = vpack.c.b16 %v5132, %v5131
      %v6725 = vpack.c.b16 %v5134, %v5133
      %v6726 = vpack.c.b16 %v5136, %v5135
      %v6727 = vpack.c.b16 %v5138, %v5137
      %v6728 = vpack.c.b16 %v5140, %v5139
      %v6729 = vpack.c.b16 %v5142, %v5141
      %v6730 = vpack.c.b16 %v5144, %v5143
      %v6731 = vpack.c.b16 %v5146, %v5145
      %v6732 = vpack.c.b16 %v5148, %v5147
      %v6733 = vpack.c.b16 %v5150, %v5149
      %v6734 = vpack.c.b16 %v5152, %v5151
      %v6735 = vpack.c.b16 %v5154, %v5153
      %v6736 = vpack.c.b16 %v5156, %v5155
      %v6737 = vpack.c.b16 %v5158, %v5157
      %v6738 = vpack.c.b16 %v5160, %v5159
      %v6739 = vpack.c.b16 %v5162, %v5161
      %v6740 = vpack.c.b16 %v5164, %v5163
      %v6741 = vpack.c.b16 %v5166, %v5165
      %v6742 = vpack.c.b16 %v5168, %v5167
      %v6743 = vpack.c.b16 %v5170, %v5169
      %v6744 = vpack.c.b16 %v5172, %v5171
      %v6745 = vpack.c.b16 %v5174, %v5173
      %v6746 = vpack.c.b16 %v5176, %v5175
      %v6747 = vpack.c.b16 %v5178, %v5177
      %v6748 = vpack.c.b16 %v5180, %v5179
      %v6749 = vpack.c.b16 %v5182, %v5181
      %v6750 = vpack.c.b16 %v5184, %v5183
      %v6751 = vpack.c.b16 %v5186, %v5185
      %v6752 = vpack.c.b16 %v5188, %v5187
      %v6753 = vpack.c.b16 %v5190, %v5189
      %v6754 = vpack.c.b16 %v5192, %v5191
      %v6755 = vpack.c.b16 %v5194, %v5193
      %v6756 = vpack.c.b16 %v5196, %v5195
      %v6757 = vpack.c.b16 %v5198, %v5197
      %v6758 = vpack.c.b16 %v5200, %v5199
      %v6759 = vpack.c.b16 %v5202, %v5201
      %v6760 = vpack.c.b16 %v5204, %v5203
      %v6761 = vpack.c.b16 %v5206, %v5205
      %v6762 = vpack.c.b16 %v5208, %v5207
      %v6763 = vpack.c.b16 %v5210, %v5209
      %v6764 = vpack.c.b16 %v5212, %v5211
      %v6765 = vpack.c.b16 %v5214, %v5213
      %v6766 = vpack.c.b16 %v5216, %v5215
      %v6767 = vpack.c.b16 %v5218, %v5217
      %v6768 = vpack.c.b16 %v5220, %v5219
      %v6769 = vpack.c.b16 %v5222, %v5221
      %v6770 = vpack.c.b16 %v5224, %v5223
      %v6771 = vpack.c.b16 %v5226, %v5225
      %v6772 = vpack.c.b16 %v5228, %v5227
      %v6773 = vpack.c.b16 %v5230, %v5229
      %v6774 = vpack.c.b16 %v5232, %v5231
      %v6775 = vpack.c.b16 %v5234, %v5233
      %v6776 = vpack.c.b16 %v5236, %v5235
      %v6777 = vpack.c.b16 %v5238, %v5237
      %v6778 = vpack.c.b16 %v5240, %v5239
      %v6779 = vpack.c.b16 %v5242, %v5241
      %v6780 = vpack.c.b16 %v5244, %v5243
      %v6781 = vpack.c.b16 %v5246, %v5245
      %v6782 = vpack.c.b16 %v5248, %v5247
      %v6783 = vpack.c.b16 %v5250, %v5249
      %v6784 = vpack.c.b16 %v5252, %v5251
      %v6785 = vpack.c.b16 %v5254, %v5253
      %v6786 = vpack.c.b16 %v5256, %v5255
      %v6787 = vpack.c.b16 %v5258, %v5257
      %v6788 = vpack.c.b16 %v5260, %v5259
      %v6789 = vpack.c.b16 %v5262, %v5261
      %v6790 = vpack.c.b16 %v5264, %v5263
      %v6791 = vpack.c.b16 %v5266, %v5265
      %v6792 = vpack.c.b16 %v5268, %v5267
      %v6793 = vpack.c.b16 %v5270, %v5269
      %v6794 = vpack.c.b16 %v5272, %v5271
      %v6795 = vpack.c.b16 %v5274, %v5273
      %v6796 = vpack.c.b16 %v5276, %v5275
      %v6797 = vpack.c.b16 %v5278, %v5277
      %v6798 = vpack.c.b16 %v5280, %v5279
      %v6799 = vpack.c.b16 %v5282, %v5281
      %v6800 = vpack.c.b16 %v5284, %v5283
      %v6801 = vpack.c.b16 %v5286, %v5285
      %v6802 = vpack.c.b16 %v5288, %v5287
      %v6803 = vpack.c.b16 %v5290, %v5289
      %v6804 = vpack.c.b16 %v5292, %v5291
      %v6805 = vpack.c.b16 %v5294, %v5293
      %v6806 = vpack.c.b16 %v5296, %v5295
      %v6807 = vpack.c.b16 %v5298, %v5297
      %v6808 = vpack.c.b16 %v5300, %v5299
      %v6809 = vpack.c.b16 %v5302, %v5301
      %v6810 = vpack.c.b16 %v5304, %v5303
      %v6811 = vpack.c.b16 %v5306, %v5305
      %v6812 = vpack.c.b16 %v5308, %v5307
      %v6813 = vpack.c.b16 %v5310, %v5309
      %v6814 = vpack.c.b16 %v5312, %v5311
      %v6815 = vpack.c.b16 %v5314, %v5313
      %v6816 = vpack.c.b16 %v5316, %v5315
      %v6817 = vpack.c.b16 %v5318, %v5317
      %v6818 = vpack.c.b16 %v5320, %v5319
      %v6819 = vpack.c.b16 %v5322, %v5321
      %v6820 = vpack.c.b16 %v5324, %v5323
      %v6821 = vpack.c.b16 %v5326, %v5325
      %v6822 = vpack.c.b16 %v5328, %v5327
      %v6823 = vpack.c.b16 %v5330, %v5329
      %v6824 = vpack.c.b16 %v5332, %v5331
      %v6825 = vpack.c.b16 %v5334, %v5333
      %v6826 = vpack.c.b16 %v5336, %v5335
      %v6827 = vpack.c.b16 %v5338, %v5337
      %v6828 = vpack.c.b16 %v5340, %v5339
      %v6829 = vpack.c.b16 %v5342, %v5341
      %v6830 = vpack.c.b16 %v5344, %v5343
      %v6831 = vpack.c.b16 %v5346, %v5345
      %v6832 = vpack.c.b16 %v5348, %v5347
      %v6833 = vpack.c.b16 %v5350, %v5349
      %v6834 = vpack.c.b16 %v5352, %v5351
      %v6835 = vpack.c.b16 %v5354, %v5353
      %v6836 = vpack.c.b16 %v5356, %v5355
      %v6837 = vpack.c.b16 %v5358, %v5357
      %v6838 = vpack.c.b16 %v5360, %v5359
      %v6839 = vpack.c.b16 %v5362, %v5361
      %v6840 = vpack.c.b16 %v5364, %v5363
      %v6841 = vpack.c.b16 %v5366, %v5365
      %v6842 = vpack.c.b16 %v5368, %v5367
      %v6843 = vpack.c.b16 %v5370, %v5369
      %v6844 = vpack.c.b16 %v5372, %v5371
      %v6845 = vpack.c.b16 %v5374, %v5373
      %v6846 = vpack.c.b16 %v5376, %v5375
      %v6847 = vpack.c.b16 %v5378, %v5377
      %v6848 = vpack.c.b16 %v5380, %v5379
      %v6849 = vpack.c.b16 %v5382, %v5381
      %v6850 = vpack.c.b16 %v5384, %v5383
      %v6851 = vpack.c.b16 %v5386, %v5385
      %v6852 = vpack.c.b16 %v5388, %v5387
      %v6853 = vpack.c.b16 %v5390, %v5389
      %v6854 = vpack.c.b16 %v5392, %v5391
      %v6855 = vpack.c.b16 %v5394, %v5393
      %v6856 = vpack.c.b16 %v5396, %v5395
      %v6857 = vpack.c.b16 %v5398, %v5397
      %v6858 = vpack.c.b16 %v5400, %v5399
      %v6859 = vpack.c.b16 %v5402, %v5401
      %v6860 = vpack.c.b16 %v5404, %v5403
      %v6861 = vpack.c.b16 %v5406, %v5405
      %v6862 = vpack.c.b16 %v5408, %v5407
      %v6863 = vpack.c.b16 %v5410, %v5409
      %v6864 = vpack.c.b16 %v5412, %v5411
      %v6865 = vpack.c.b16 %v5414, %v5413
      %v6866 = vpack.c.b16 %v5416, %v5415
      %v6867 = vpack.c.b16 %v5418, %v5417
      %v6868 = vpack.c.b16 %v5420, %v5419
      %v6869 = vpack.c.b16 %v5422, %v5421
      %v6870 = vpack.c.b16 %v5424, %v5423
      %v6871 = vpack.c.b16 %v5426, %v5425
      %v6872 = vpack.c.b16 %v5428, %v5427
      %v6873 = vpack.c.b16 %v5430, %v5429
      %v6874 = vpack.c.b16 %v5432, %v5431
      %v6875 = vpack.c.b16 %v5434, %v5433
      %v6876 = vpack.c.b16 %v5436, %v5435
      %v6877 = vpack.c.b16 %v5438, %v5437
      %v6878 = vpack.c.b16 %v5440, %v5439
      %v6879 = vpack.c.b16 %v5442, %v5441
      %v6880 = vpack.c.b16 %v5444, %v5443
      %v6881 = vpack.c.b16 %v5446, %v5445
      %v6882 = vpack.c.b16 %v5448, %v5447
      %v6883 = vpack.c.b16 %v5450, %v5449
      %v6884 = vpack.c.b16 %v5452, %v5451
      %v6885 = vpack.c.b16 %v5454, %v5453
      %v6886 = vpack.c.b16 %v5456, %v5455
      %v6887 = vpack.c.b16 %v5458, %v5457
      %v6888 = vpack.c.b16 %v5460, %v5459
      %v6889 = vpack.c.b16 %v5462, %v5461
      %v6890 = vpack.c.b16 %v5464, %v5463
      %v6891 = vpack.c.b16 %v5466, %v5465
      %v6892 = vpack.c.b16 %v5468, %v5467
      %v6893 = vpack.c.b16 %v5470, %v5469
      %v6894 = vpack.c.b16 %v5472, %v5471
      %v6895 = vpack.c.b16 %v5474, %v5473
      %v6896 = vpack.c.b16 %v5476, %v5475
      %v6897 = vpack.c.b16 %v5478, %v5477
      %v6898 = vpack.c.b16 %v5480, %v5479
      %v6899 = vpack.c.b16 %v5482, %v5481
      %v6900 = vpack.c.b16 %v5484, %v5483
      %v6901 = vpack.c.b16 %v5486, %v5485
      %v6902 = vpack.c.b16 %v5488, %v5487
      %v6903 = vpack.c.b16 %v5490, %v5489
      %v6904 = vpack.c.b16 %v5492, %v5491
      %v6905 = vpack.c.b16 %v5494, %v5493
      %v6906 = vpack.c.b16 %v5496, %v5495
      %v6907 = vpack.c.b16 %v5498, %v5497
      %v6908 = vpack.c.b16 %v5500, %v5499
      %v6909 = vpack.c.b16 %v5502, %v5501
      %v6910 = vpack.c.b16 %v5504, %v5503
      %v6911 = vpack.c.b16 %v5506, %v5505
      %v6912 = vpack.c.b16 %v5508, %v5507
      %v6913 = vpack.c.b16 %v5510, %v5509
      %v6914 = vpack.c.b16 %v5512, %v5511
      %v6915 = vpack.c.b16 %v5514, %v5513
      %v6916 = vpack.c.b16 %v5516, %v5515
      %v6917 = vpack.c.b16 %v5518, %v5517
      %v6918 = vpack.c.b16 %v5520, %v5519
      %v6919 = vpack.c.b16 %v5522, %v5521
      %v6920 = vpack.c.b16 %v5524, %v5523
      %v6921 = vpack.c.b16 %v5526, %v5525
      %v6922 = vpack.c.b16 %v5528, %v5527
      %v6923 = vpack.c.b16 %v5530, %v5529
      %v6924 = vpack.c.b16 %v5532, %v5531
      %v6925 = vpack.c.b16 %v5534, %v5533
      %v6926 = vpack.c.b16 %v5536, %v5535
      %v6927 = vpack.c.b16 %v5538, %v5537
      %v6928 = vpack.c.b16 %v5540, %v5539
      %v6929 = vpack.c.b16 %v5542, %v5541
      %v6930 = vpack.c.b16 %v5544, %v5543
      %v6931 = vpack.c.b16 %v5546, %v5545
      %v6932 = vpack.c.b16 %v5548, %v5547
      %v6933 = vpack.c.b16 %v5550, %v5549
      %v6934 = vpack.c.b16 %v5552, %v5551
      %v6935 = vpack.c.b16 %v5554, %v5553
      %v6936 = vpack.c.b16 %v5556, %v5555
      %v6937 = vpack.c.b16 %v5558, %v5557
      %v6938 = vpack.c.b16 %v5560, %v5559
      %v6939 = vpack.c.b16 %v5562, %v5561
      %v6940 = vpack.c.b16 %v5564, %v5563
      %v6941 = vpack.c.b16 %v5566, %v5565
      %v6942 = vpack.c.b16 %v5568, %v5567
      %v6943 = vpack.c.b16 %v5570, %v5569
      %v6944 = vpack.c.b16 %v5572, %v5571
      %v6945 = vpack.c.b16 %v5574, %v5573
      %v6946 = vpack.c.b16 %v5576, %v5575
      %v6947 = vpack.c.b16 %v5578, %v5577
      %v6948 = vpack.c.b16 %v5580, %v5579
      %v6949 = vpack.c.b16 %v5582, %v5581
      %v6950 = vpack.c.b16 %v5584, %v5583
      %v6951 = vpack.c.b16 %v5586, %v5585
      %v6952 = vpack.c.b16 %v5588, %v5587
      %v6953 = vpack.c.b16 %v5590, %v5589
      %v6954 = vpack.c.b16 %v5592, %v5591
      %v6955 = vpack.c.b16 %v5594, %v5593
      %v6956 = vpack.c.b16 %v5596, %v5595
      %v6957 = vpack.c.b16 %v5598, %v5597
      %v6958 = vpack.c.b16 %v5600, %v5599
      %v6959 = vpack.c.b16 %v5602, %v5601
      %v6960 = vpack.c.b16 %v5604, %v5603
      %v6961 = vpack.c.b16 %v5606, %v5605
      %v6962 = vpack.c.b16 %v5608, %v5607
      %v6963 = vpack.c.b16 %v5610, %v5609
      %v6964 = vpack.c.b16 %v5612, %v5611
      %v6965 = vpack.c.b16 %v5614, %v5613
      %v6966 = vpack.c.b16 %v5616, %v5615
      %v6967 = vpack.c.b16 %v5618, %v5617
      %v6968 = vpack.c.b16 %v5620, %v5619
      %v6969 = vpack.c.b16 %v5622, %v5621
      %v6970 = vpack.c.b16 %v5624, %v5623
      %v6971 = vpack.c.b16 %v5626, %v5625
      %v6972 = vpack.c.b16 %v5628, %v5627
      %v6973 = vpack.c.b16 %v5630, %v5629
      %v6974 = vpack.c.b16 %v5632, %v5631
      %v6975 = vpack.c.b16 %v5634, %v5633
      %v6976 = vpack.c.b16 %v5636, %v5635
      %v6977 = vpack.c.b16 %v5638, %v5637
      %v6978 = vpack.c.b16 %v5640, %v5639
      %v6979 = vpack.c.b16 %v5642, %v5641
      %v6980 = vpack.c.b16 %v5644, %v5643
      %v6981 = vpack.c.b16 %v5646, %v5645
      %v6982 = vpack.c.b16 %v5648, %v5647
      %v6983 = vpack.c.b16 %v5650, %v5649
      %v6984 = vpack.c.b16 %v5652, %v5651
      %v6985 = vpack.c.b16 %v5654, %v5653
      %v6986 = vpack.c.b16 %v5656, %v5655
      %v6987 = vpack.c.b16 %v5658, %v5657
      %v6988 = vpack.c.b16 %v5660, %v5659
      %v6989 = vpack.c.b16 %v5662, %v5661
      %v6990 = vpack.c.b16 %v5664, %v5663
      %v6991 = vpack.c.b16 %v5666, %v5665
      %v6992 = vpack.c.b16 %v5668, %v5667
      %v6993 = vpack.c.b16 %v5670, %v5669
      %v6994 = vpack.c.b16 %v5672, %v5671
      %v6995 = vpack.c.b16 %v5674, %v5673
      %v6996 = vpack.c.b16 %v5676, %v5675
      %v6997 = vpack.c.b16 %v5678, %v5677
      %v6998 = vpack.c.b16 %v5680, %v5679
      %v6999 = vpack.c.b16 %v5682, %v5681
      %v7000 = vpack.c.b16 %v5684, %v5683
      %v7001 = vpack.c.b16 %v5686, %v5685
      %v7002 = vpack.c.b16 %v5688, %v5687
      %v7003 = vpack.c.b16 %v5690, %v5689
      %v7004 = vpack.c.b16 %v5692, %v5691
      %v7005 = vpack.c.b16 %v5694, %v5693
      %v7006 = vpack.c.b16 %v5696, %v5695
      %v7007 = vpack.c.b16 %v5698, %v5697
      %v7008 = vpack.c.b16 %v5700, %v5699
      %v7009 = vpack.c.b16 %v5702, %v5701
      %v7010 = vpack.c.b16 %v5704, %v5703
      %v7011 = vpack.c.b16 %v5706, %v5705
      %v7012 = vpack.c.b16 %v5708, %v5707
      %v7013 = vpack.c.b16 %v5710, %v5709
      %v7014 = vpack.c.b16 %v5712, %v5711
      %v7015 = vpack.c.b16 %v5714, %v5713
      %v7016 = vpack.c.b16 %v5716, %v5715
      %v7017 = vpack.c.b16 %v5718, %v5717
      %v7018 = vpack.c.b16 %v5720, %v5719
      %v7019 = vpack.c.b16 %v5722, %v5721
      %v7020 = vpack.c.b16 %v5724, %v5723
      %v7021 = vpack.c.b16 %v5726, %v5725
      %v7022 = vpack.c.b16 %v5728, %v5727
      %v7023 = vpack.c.b16 %v5730, %v5729
      %v7024 = vpack.c.b16 %v5732, %v5731
      %v7025 = vpack.c.b16 %v5734, %v5733
      %v7026 = vpack.c.b16 %v5736, %v5735
      %v7027 = vpack.c.b16 %v5738, %v5737
      %v7028 = vpack.c.b16 %v5740, %v5739
      %v7029 = vpack.c.b16 %v5742, %v5741
      %v7030 = vpack.c.b16 %v5744, %v5743
      %v7031 = vpack.c.b16 %v5746, %v5745
      %v7032 = vpack.c.b16 %v5748, %v5747
      %v7033 = vpack.c.b16 %v5750, %v5749
      %v7034 = vpack.c.b16 %v5752, %v5751
      %v7035 = vpack.c.b16 %v5754, %v5753
      %v7036 = vpack.c.b16 %v5756, %v5755
      %v7037 = vpack.c.b16 %v5758, %v5757
      %v7038 = vpack.c.b16 %v5760, %v5759
      %v7039 = vpack.c.b16 %v5762, %v5761
      %v7040 = vpack.c.b16 %v5764, %v5763
      %v7041 = vpack.c.b16 %v5766, %v5765
      %v7042 = vpack.c.b16 %v5768, %v5767
      %v7043 = vpack.c.b16 %v5770, %v5769
      %v7044 = vpack.c.b16 %v5772, %v5771
      %v7045 = vpack.c.b16 %v5774, %v5773
      %v7046 = vpack.c.b16 %v5776, %v5775
      %v7047 = vpack.c.b16 %v5778, %v5777
      %v7048 = vpack.c.b16 %v5780, %v5779
      %v7049 = vpack.c.b16 %v5782, %v5781
      %v7050 = vpack.c.b16 %v5784, %v5783
      %v7051 = vpack.c.b16 %v5786, %v5785
      %v7052 = vpack.c.b16 %v5788, %v5787
      %v7053 = vpack.c.b16 %v5790, %v5789
      %v7054 = vpack.c.b16 %v5792, %v5791
      %v7055 = vpack.c.b16 %v5794, %v5793
      %v7056 = vpack.c.b16 %v5796, %v5795
      %v7057 = vpack.c.b16 %v5798, %v5797
      %v7058 = vpack.c.b16 %v5800, %v5799
      %v7059 = vpack.c.b16 %v5802, %v5801
      %v7060 = vpack.c.b16 %v5804, %v5803
      %v7061 = vpack.c.b16 %v5806, %v5805
      %v7062 = vpack.c.b16 %v5808, %v5807
      %v7063 = vpack.c.b16 %v5810, %v5809
      %v7064 = vpack.c.b16 %v5812, %v5811
      %v7065 = vpack.c.b16 %v5814, %v5813
      %v7066 = vpack.c.b16 %v5816, %v5815
      %v7067 = vpack.c.b16 %v5818, %v5817
      %v7068 = vpack.c.b16 %v5820, %v5819
      %v7069 = vpack.c.b16 %v5822, %v5821
      %v7070 = vpack.c.b16 %v5824, %v5823
      %v7071 = vpack.c.b16 %v5826, %v5825
      %v7072 = vpack.c.b16 %v5828, %v5827
      %v7073 = vpack.c.b16 %v5830, %v5829
      %v7074 = vpack.c.b16 %v5832, %v5831
      %v7075 = vpack.c.b16 %v5834, %v5833
      %v7076 = vpack.c.b16 %v5836, %v5835
      %v7077 = vpack.c.b16 %v5838, %v5837
      %v7078 = vpack.c.b16 %v5840, %v5839
      %v7079 = vpack.c.b16 %v5842, %v5841
      %v7080 = vpack.c.b16 %v5844, %v5843
      %v7081 = vpack.c.b16 %v5846, %v5845
      %v7082 = vpack.c.b16 %v5848, %v5847
      %v7083 = vpack.c.b16 %v5850, %v5849
      %v7084 = vpack.c.b16 %v5852, %v5851
      %v7085 = vpack.c.b16 %v5854, %v5853
      %v7086 = vpack.c.b16 %v5856, %v5855
      %v7087 = vpack.c.b16 %v5858, %v5857
      %v7088 = vpack.c.b16 %v5860, %v5859
      %v7089 = vpack.c.b16 %v5862, %v5861
      %v7090 = vpack.c.b16 %v5864, %v5863
      %v7091 = vpack.c.b16 %v5866, %v5865
      %v7092 = vpack.c.b16 %v5868, %v5867
      %v7093 = vpack.c.b16 %v5870, %v5869
      %v7094 = vpack.c.b16 %v5872, %v5871
      %v7095 = vpack.c.b16 %v5874, %v5873
      %v7096 = vpack.c.b16 %v5876, %v5875
      %v7097 = vpack.c.b16 %v5878, %v5877
      %v7098 = vpack.c.b16 %v5880, %v5879
      %v7099 = vpack.c.b16 %v5882, %v5881
      %v7100 = vpack.c.b16 %v5884, %v5883
      %v7101 = vpack.c.b16 %v5886, %v5885
      %v7102 = vpack.c.b16 %v5888, %v5887
      %v7103 = vpack.c.b16 %v5890, %v5889
      %v7104 = vpack.c.b16 %v5892, %v5891
      %v7105 = vpack.c.b16 %v5894, %v5893
      %v7106 = vpack.c.b16 %v5896, %v5895
      %v7107 = vpack.c.b16 %v5898, %v5897
      %v7108 = vpack.c.b16 %v5900, %v5899
      %v7109 = vpack.c.b16 %v5902, %v5901
      %v7110 = vpack.c.b16 %v5904, %v5903
      %v7111 = vpack.c.b16 %v5906, %v5905
      %v7112 = vpack.c.b16 %v5908, %v5907
      %v7113 = vpack.c.b16 %v5910, %v5909
      %v7114 = vpack.c.b16 %v5912, %v5911
      %v7115 = vpack.c.b16 %v5914, %v5913
      %v7116 = vpack.c.b16 %v5916, %v5915
      %v7117 = vpack.c.b16 %v5918, %v5917
      %v7118 = vpack.c.b16 %v5920, %v5919
      %v7119 = vpack.c.b16 %v5922, %v5921
      %v7120 = vpack.c.b16 %v5924, %v5923
      %v7121 = vpack.c.b16 %v5926, %v5925
      %v7122 = vpack.c.b16 %v5928, %v5927
      %v7123 = vpack.c.b16 %v5930, %v5929
      %v7124 = vpack.c.b16 %v5932, %v5931
      %v7125 = vpack.c.b16 %v5934, %v5933
      %v7126 = vpack.c.b16 %v5936, %v5935
      %v7127 = vpack.c.b16 %v5938, %v5937
      %v7128 = vpack.c.b16 %v5940, %v5939
      %v7129 = vpack.c.b16 %v5942, %v5941
      %v7130 = vpack.c.b16 %v5944, %v5943
      %v7131 = vpack.c.b16 %v5946, %v5945
      %v7132 = vpack.c.b16 %v5948, %v5947
      %v7133 = vpack.c.b16 %v5950, %v5949
      %v7134 = vpack.c.b16 %v5952, %v5951
      %v7135 = vpack.c.b16 %v5954, %v5953
      %v7136 = vpack.c.b16 %v5956, %v5955
      %v7137 = vpack.c.b16 %v5958, %v5957
      %v7138 = vpack.c.b16 %v5960, %v5959
      %v7139 = vpack.c.b16 %v5962, %v5961
      %v7140 = vpack.c.b16 %v5964, %v5963
      %v7141 = vpack.c.b16 %v5966, %v5965
      %v7142 = vpack.c.b16 %v5968, %v5967
      %v7143 = vpack.c.b16 %v5970, %v5969
      %v7144 = vpack.c.b16 %v5972, %v5971
      %v7145 = vpack.c.b16 %v5974, %v5973
      %v7146 = vpack.c.b16 %v5976, %v5975
      %v7147 = vpack.c.b16 %v5978, %v5977
      %v7148 = vpack.c.b16 %v5980, %v5979
      %v7149 = vpack.c.b16 %v5982, %v5981
      %v7150 = vpack.c.b16 %v5984, %v5983
      %v7151 = vpack.c.b16 %v5986, %v5985
      %v7152 = vpack.c.b16 %v5988, %v5987
      %v7153 = vpack.c.b16 %v5990, %v5989
      %v7154 = vpack.c.b16 %v5992, %v5991
      %v7155 = vpack.c.b16 %v5994, %v5993
      %v7156 = vpack.c.b16 %v5996, %v5995
      %v7157 = vpack.c.b16 %v5998, %v5997
      %v7158 = vpack.c.b16 %v6000, %v5999
      %v7159 = vpack.c.b16 %v6002, %v6001
      %v7160 = vpack.c.b16 %v6004, %v6003
      %v7161 = vpack.c.b16 %v6006, %v6005
      %v7162 = vpack.c.b16 %v6008, %v6007
      %v7163 = vpack.c.b16 %v6010, %v6009
      %v7164 = vpack.c.b16 %v6012, %v6011
      %v7165 = vpack.c.b16 %v6014, %v6013
      %v7166 = vpack.c.b16 %v6016, %v6015
      %v7167 = vpack.c.b16 %v6018, %v6017
      %v7168 = vpack.c.b16 %v6020, %v6019
      %v7169 = vpack.c.b16 %v6022, %v6021
      %v7170 = vpack.c.b16 %v6024, %v6023
      %v7171 = vpack.c.b16 %v6026, %v6025
      %v7172 = vpack.c.b16 %v6028, %v6027
      %v7173 = vpack.c.b16 %v6030, %v6029
      %v7174 = vpack.c.b16 %v6032, %v6031
      %v7175 = vpack.c.b16 %v6034, %v6033
      %v7176 = vpack.c.b16 %v6036, %v6035
      %v7177 = vpack.c.b16 %v6038, %v6037
      %v7178 = vpack.c.b16 %v6040, %v6039
      %v7179 = vpack.c.b16 %v6042, %v6041
      %v7180 = vpack.c.b16 %v6044, %v6043
      %v7181 = vpack.c.b16 %v6046, %v6045
      %v7182 = vpack.c.b16 %v6048, %v6047
      %v7183 = vpack.c.b16 %v6050, %v6049
      %v7184 = vpack.c.b16 %v6052, %v6051
      %v7185 = vpack.c.b16 %v6054, %v6053
      %v7186 = vpack.c.b16 %v6056, %v6055
      %v7187 = vpack.c.b16 %v6058, %v6057
      %v7188 = vpack.c.b16 %v6060, %v6059
      %v7189 = vpack.c.b16 %v6062, %v6061
      %v7190 = vpack.c.b16 %v6064, %v6063
      %v7191 = vpack.c.b16 %v6066, %v6065
      %v7192 = vpack.c.b16 %v6068, %v6067
      %v7193 = vpack.c.b16 %v6070, %v6069
      %v7194 = vpack.c.b16 %v6072, %v6071
      %v7195 = vpack.c.b16 %v6074, %v6073
      %v7196 = vpack.c.b16 %v6076, %v6075
      %v7197 = vpack.c.b16 %v6078, %v6077
      %v7198 = vpack.c.b16 %v6080, %v6079
      %v7199 = vpack.c.b16 %v6082, %v6081
      %v7200 = vpack.c.b16 %v6084, %v6083
      %v7201 = vpack.c.b16 %v6086, %v6085
      %v7202 = vpack.c.b16 %v6088, %v6087
      %v7203 = vpack.c.b16 %v6090, %v6089
      %v7204 = vpack.c.b16 %v6092, %v6091
      %v7205 = vpack.c.b16 %v6094, %v6093
      %v7206 = vpack.c.b16 %v6096, %v6095
      %v7207 = vpack.c.b16 %v6098, %v6097
      %v7208 = vpack.c.b16 %v6100, %v6099
      %v7209 = vpack.c.b16 %v6102, %v6101
      %v7210 = vpack.c.b16 %v6104, %v6103
      %v7211 = vpack.c.b16 %v6106, %v6105
      %v7212 = vpack.c.b16 %v6108, %v6107
      %v7213 = vpack.c.b16 %v6110, %v6109
      %v7214 = vpack.c.b16 %v6112, %v6111
      %v7215 = vpack.c.b16 %v6114, %v6113
      %v7216 = vpack.c.b16 %v6116, %v6115
      %v7217 = vpack.c.b16 %v6118, %v6117
      %v7218 = vpack.c.b16 %v6120, %v6119
      %v7219 = vpack.c.b16 %v6122, %v6121
      %v7220 = vpack.c.b16 %v6124, %v6123
      %v7221 = vpack.c.b16 %v6126, %v6125
      %v7222 = vpack.c.b16 %v6128, %v6127
      %v7223 = vpack.c.b16 %v6130, %v6129
      %v7224 = vpack.c.b16 %v6132, %v6131
      %v7225 = vpack.c.b16 %v6134, %v6133
      %v7226 = vpack.c.b16 %v6136, %v6135
      %v7227 = vpack.c.b16 %v6138, %v6137
      %v7228 = vpack.c.b16 %v6140, %v6139
      %v7229 = vpack.c.b16 %v6142, %v6141
      %v7230 = vpack.c.b16 %v6144, %v6143
      %v7231 = vpack.c.b16 %v6146, %v6145
      %v7232 = vpack.c.b16 %v6148, %v6147
      %v7233 = vpack.c.b16 %v6150, %v6149
      %v7234 = vpack.c.b16 %v6152, %v6151
      %v7235 = vpack.c.b16 %v6154, %v6153
      %v7236 = vpack.c.b16 %v6156, %v6155
      %v7237 = vpack.c.b16 %v6158, %v6157
      %v7238 = vpack.c.b16 %v6160, %v6159
      %v7239 = vpack.c.b16 %v6162, %v6161
      %v7240 = vpack.c.b16 %v6164, %v6163
      %v7241 = vpack.c.b16 %v6166, %v6165
      %v7242 = vpack.c.b16 %v6168, %v6167
      %v7243 = vpack.c.b16 %v6170, %v6169
      %v7244 = vpack.c.b16 %v6172, %v6171
      %v7245 = vpack.c.b16 %v6174, %v6173
      %v7246 = vpack.c.b16 %v6176, %v6175
      %v7247 = vpack.c.b16 %v6178, %v6177
      %v7248 = vpack.c.b16 %v6180, %v6179
      %v7249 = vpack.c.b16 %v6182, %v6181
      %v7250 = vpack.c.b16 %v6184, %v6183
      %v7251 = vpack.c.b16 %v6186, %v6185
      %v7252 = vpack.c.b16 %v6188, %v6187
      %v7253 = vpack.c.b16 %v6190, %v6189
      %v7254 = vpack.c.b16 %v6192, %v6191
      %v7255 = vpack.c.b16 %v6194, %v6193
      %v7256 = vpack.c.b16 %v6196, %v6195
      %v7257 = vpack.c.b16 %v6198, %v6197
      %v7258 = vpack.c.b16 %v6200, %v6199
      %v7259 = vpack.c.b16 %v6202, %v6201
      %v7260 = vpack.c.b16 %v6204, %v6203
      %v7261 = vpack.c.b16 %v6206, %v6205
      %v7262 = vpack.c.b16 %v6208, %v6207
      %v7263 = vpack.c.b16 %v6210, %v6209
      %v7264 = vpack.c.b16 %v6212, %v6211
      %v7265 = vpack.c.b16 %v6214, %v6213
      %v7266 = vpack.c.b16 %v6216, %v6215
      %v7267 = vpack.c.b16 %v6218, %v6217
      %v7268 = vpack.c.b16 %v6220, %v6219
      %v7269 = vpack.c.b16 %v6222, %v6221
      %v7270 = vpack.c.b16 %v6224, %v6223
      %v7271 = vpack.c.b16 %v6226, %v6225
      %v7272 = vpack.c.b16 %v6228, %v6227
      %v7273 = vpack.c.b16 %v6230, %v6229
      %v7274 = vpack.c.b16 %v6232, %v6231
      %v7275 = vpack.c.b16 %v6234, %v6233
      %v7276 = vpack.c.b16 %v6236, %v6235
      %v7277 = vpack.c.b16 %v6238, %v6237
      %v7278 = vpack.c.b16 %v6240, %v6239
      %v7279 = vpack.c.b16 %v6242, %v6241
      %v7280 = vpack.c.b16 %v6244, %v6243
      %v7281 = vpack.c.b16 %v6246, %v6245
      %v7282 = vpack.c.b16 %v6248, %v6247
      %v7283 = vpack.c.b16 %v6250, %v6249
      %v7284 = vpack.c.b16 %v6252, %v6251
      %v7285 = vpack.c.b16 %v6254, %v6253
      %v7286 = vpack.c.b16 %v6256, %v6255
      %v7287 = vpack.c.b16 %v6258, %v6257
      %v7288 = vpack.c.b16 %v6260, %v6259
      %v7289 = vpack.c.b16 %v6262, %v6261
      %v7290 = vpack.c.b16 %v6264, %v6263
      %v7291 = vpack.c.b16 %v6266, %v6265
      %v7292 = vpack.c.b16 %v6268, %v6267
      %8317 = vst [vmem:[%s123] sm:$0xff] %v6269
      %8318 = vst [vmem:[%s123 + $0x8] sm:$0xff] %v6270
      %8319 = vst [vmem:[%s123 + $0x10] sm:$0xff] %v6271
      %8320 = vst [vmem:[%s123 + $0x18] sm:$0xff] %v6272
      %8321 = vst [vmem:[%s123 + $0x20] sm:$0xff] %v6273
      %8322 = vst [vmem:[%s123 + $0x28] sm:$0xff] %v6274
      %8323 = vst [vmem:[%s123 + $0x30] sm:$0xff] %v6275
      %8324 = vst [vmem:[%s123 + $0x38] sm:$0xff] %v6276
      %8325 = vst [vmem:[%s123 + $0x40] sm:$0xff] %v6277
      %8326 = vst [vmem:[%s123 + $0x48] sm:$0xff] %v6278
      %8327 = vst [vmem:[%s123 + $0x50] sm:$0xff] %v6279
      %8328 = vst [vmem:[%s123 + $0x58] sm:$0xff] %v6280
      %8329 = vst [vmem:[%s123 + $0x60] sm:$0xff] %v6281
      %8330 = vst [vmem:[%s123 + $0x68] sm:$0xff] %v6282
      %8331 = vst [vmem:[%s123 + $0x70] sm:$0xff] %v6283
      %8332 = vst [vmem:[%s123 + $0x78] sm:$0xff] %v6284
      %8333 = vst [vmem:[%s123 + $0x80] sm:$0xff] %v6285
      %8334 = vst [vmem:[%s123 + $0x88] sm:$0xff] %v6286
      %8335 = vst [vmem:[%s123 + $0x90] sm:$0xff] %v6287
      %8336 = vst [vmem:[%s123 + $0x98] sm:$0xff] %v6288
      %8337 = vst [vmem:[%s123 + $0xa0] sm:$0xff] %v6289
      %8338 = vst [vmem:[%s123 + $0xa8] sm:$0xff] %v6290
      %8339 = vst [vmem:[%s123 + $0xb0] sm:$0xff] %v6291
      %8340 = vst [vmem:[%s123 + $0xb8] sm:$0xff] %v6292
      %8341 = vst [vmem:[%s123 + $0xc0] sm:$0xff] %v6293
      %8342 = vst [vmem:[%s123 + $0xc8] sm:$0xff] %v6294
      %8343 = vst [vmem:[%s123 + $0xd0] sm:$0xff] %v6295
      %8344 = vst [vmem:[%s123 + $0xd8] sm:$0xff] %v6296
      %8345 = vst [vmem:[%s123 + $0xe0] sm:$0xff] %v6297
      %8346 = vst [vmem:[%s123 + $0xe8] sm:$0xff] %v6298
      %8347 = vst [vmem:[%s123 + $0xf0] sm:$0xff] %v6299
      %8348 = vst [vmem:[%s123 + $0xf8] sm:$0xff] %v6300
      %8349 = vst [vmem:[%s123 + $0x100] sm:$0xff] %v6301
      %8350 = vst [vmem:[%s123 + $0x108] sm:$0xff] %v6302
      %8351 = vst [vmem:[%s123 + $0x110] sm:$0xff] %v6303
      %8352 = vst [vmem:[%s123 + $0x118] sm:$0xff] %v6304
      %8353 = vst [vmem:[%s123 + $0x120] sm:$0xff] %v6305
      %8354 = vst [vmem:[%s123 + $0x128] sm:$0xff] %v6306
      %8355 = vst [vmem:[%s123 + $0x130] sm:$0xff] %v6307
      %8356 = vst [vmem:[%s123 + $0x138] sm:$0xff] %v6308
      %8357 = vst [vmem:[%s123 + $0x140] sm:$0xff] %v6309
      %8358 = vst [vmem:[%s123 + $0x148] sm:$0xff] %v6310
      %8359 = vst [vmem:[%s123 + $0x150] sm:$0xff] %v6311
      %8360 = vst [vmem:[%s123 + $0x158] sm:$0xff] %v6312
      %8361 = vst [vmem:[%s123 + $0x160] sm:$0xff] %v6313
      %8362 = vst [vmem:[%s123 + $0x168] sm:$0xff] %v6314
      %8363 = vst [vmem:[%s123 + $0x170] sm:$0xff] %v6315
      %8364 = vst [vmem:[%s123 + $0x178] sm:$0xff] %v6316
      %8365 = vst [vmem:[%s123 + $0x180] sm:$0xff] %v6317
      %8366 = vst [vmem:[%s123 + $0x188] sm:$0xff] %v6318
      %8367 = vst [vmem:[%s123 + $0x190] sm:$0xff] %v6319
      %8368 = vst [vmem:[%s123 + $0x198] sm:$0xff] %v6320
      %8369 = vst [vmem:[%s123 + $0x1a0] sm:$0xff] %v6321
      %8370 = vst [vmem:[%s123 + $0x1a8] sm:$0xff] %v6322
      %8371 = vst [vmem:[%s123 + $0x1b0] sm:$0xff] %v6323
      %8372 = vst [vmem:[%s123 + $0x1b8] sm:$0xff] %v6324
      %8373 = vst [vmem:[%s123 + $0x1c0] sm:$0xff] %v6325
      %8374 = vst [vmem:[%s123 + $0x1c8] sm:$0xff] %v6326
      %8375 = vst [vmem:[%s123 + $0x1d0] sm:$0xff] %v6327
      %8376 = vst [vmem:[%s123 + $0x1d8] sm:$0xff] %v6328
      %8377 = vst [vmem:[%s123 + $0x1e0] sm:$0xff] %v6329
      %8378 = vst [vmem:[%s123 + $0x1e8] sm:$0xff] %v6330
      %8379 = vst [vmem:[%s123 + $0x1f0] sm:$0xff] %v6331
      %8380 = vst [vmem:[%s123 + $0x1f8] sm:$0xff] %v6332
      %8381 = vst [vmem:[%s123 + $0x200] sm:$0xff] %v6333
      %8382 = vst [vmem:[%s123 + $0x208] sm:$0xff] %v6334
      %8383 = vst [vmem:[%s123 + $0x210] sm:$0xff] %v6335
      %8384 = vst [vmem:[%s123 + $0x218] sm:$0xff] %v6336
      %8385 = vst [vmem:[%s123 + $0x220] sm:$0xff] %v6337
      %8386 = vst [vmem:[%s123 + $0x228] sm:$0xff] %v6338
      %8387 = vst [vmem:[%s123 + $0x230] sm:$0xff] %v6339
      %8388 = vst [vmem:[%s123 + $0x238] sm:$0xff] %v6340
      %8389 = vst [vmem:[%s123 + $0x240] sm:$0xff] %v6341
      %8390 = vst [vmem:[%s123 + $0x248] sm:$0xff] %v6342
      %8391 = vst [vmem:[%s123 + $0x250] sm:$0xff] %v6343
      %8392 = vst [vmem:[%s123 + $0x258] sm:$0xff] %v6344
      %8393 = vst [vmem:[%s123 + $0x260] sm:$0xff] %v6345
      %8394 = vst [vmem:[%s123 + $0x268] sm:$0xff] %v6346
      %8395 = vst [vmem:[%s123 + $0x270] sm:$0xff] %v6347
      %8396 = vst [vmem:[%s123 + $0x278] sm:$0xff] %v6348
      %8397 = vst [vmem:[%s123 + $0x280] sm:$0xff] %v6349
      %8398 = vst [vmem:[%s123 + $0x288] sm:$0xff] %v6350
      %8399 = vst [vmem:[%s123 + $0x290] sm:$0xff] %v6351
      %8400 = vst [vmem:[%s123 + $0x298] sm:$0xff] %v6352
      %8401 = vst [vmem:[%s123 + $0x2a0] sm:$0xff] %v6353
      %8402 = vst [vmem:[%s123 + $0x2a8] sm:$0xff] %v6354
      %8403 = vst [vmem:[%s123 + $0x2b0] sm:$0xff] %v6355
      %8404 = vst [vmem:[%s123 + $0x2b8] sm:$0xff] %v6356
      %8405 = vst [vmem:[%s123 + $0x2c0] sm:$0xff] %v6357
      %8406 = vst [vmem:[%s123 + $0x2c8] sm:$0xff] %v6358
      %8407 = vst [vmem:[%s123 + $0x2d0] sm:$0xff] %v6359
      %8408 = vst [vmem:[%s123 + $0x2d8] sm:$0xff] %v6360
      %8409 = vst [vmem:[%s123 + $0x2e0] sm:$0xff] %v6361
      %8410 = vst [vmem:[%s123 + $0x2e8] sm:$0xff] %v6362
      %8411 = vst [vmem:[%s123 + $0x2f0] sm:$0xff] %v6363
      %8412 = vst [vmem:[%s123 + $0x2f8] sm:$0xff] %v6364
      %8413 = vst [vmem:[%s123 + $0x300] sm:$0xff] %v6365
      %8414 = vst [vmem:[%s123 + $0x308] sm:$0xff] %v6366
      %8415 = vst [vmem:[%s123 + $0x310] sm:$0xff] %v6367
      %8416 = vst [vmem:[%s123 + $0x318] sm:$0xff] %v6368
      %8417 = vst [vmem:[%s123 + $0x320] sm:$0xff] %v6369
      %8418 = vst [vmem:[%s123 + $0x328] sm:$0xff] %v6370
      %8419 = vst [vmem:[%s123 + $0x330] sm:$0xff] %v6371
      %8420 = vst [vmem:[%s123 + $0x338] sm:$0xff] %v6372
      %8421 = vst [vmem:[%s123 + $0x340] sm:$0xff] %v6373
      %8422 = vst [vmem:[%s123 + $0x348] sm:$0xff] %v6374
      %8423 = vst [vmem:[%s123 + $0x350] sm:$0xff] %v6375
      %8424 = vst [vmem:[%s123 + $0x358] sm:$0xff] %v6376
      %8425 = vst [vmem:[%s123 + $0x360] sm:$0xff] %v6377
      %8426 = vst [vmem:[%s123 + $0x368] sm:$0xff] %v6378
      %8427 = vst [vmem:[%s123 + $0x370] sm:$0xff] %v6379
      %8428 = vst [vmem:[%s123 + $0x378] sm:$0xff] %v6380
      %8429 = vst [vmem:[%s123 + $0x380] sm:$0xff] %v6381
      %8430 = vst [vmem:[%s123 + $0x388] sm:$0xff] %v6382
      %8431 = vst [vmem:[%s123 + $0x390] sm:$0xff] %v6383
      %8432 = vst [vmem:[%s123 + $0x398] sm:$0xff] %v6384
      %8433 = vst [vmem:[%s123 + $0x3a0] sm:$0xff] %v6385
      %8434 = vst [vmem:[%s123 + $0x3a8] sm:$0xff] %v6386
      %8435 = vst [vmem:[%s123 + $0x3b0] sm:$0xff] %v6387
      %8436 = vst [vmem:[%s123 + $0x3b8] sm:$0xff] %v6388
      %8437 = vst [vmem:[%s123 + $0x3c0] sm:$0xff] %v6389
      %8438 = vst [vmem:[%s123 + $0x3c8] sm:$0xff] %v6390
      %8439 = vst [vmem:[%s123 + $0x3d0] sm:$0xff] %v6391
      %8440 = vst [vmem:[%s123 + $0x3d8] sm:$0xff] %v6392
      %8441 = vst [vmem:[%s123 + $0x3e0] sm:$0xff] %v6393
      %8442 = vst [vmem:[%s123 + $0x3e8] sm:$0xff] %v6394
      %8443 = vst [vmem:[%s123 + $0x3f0] sm:$0xff] %v6395
      %8444 = vst [vmem:[%s123 + $0x3f8] sm:$0xff] %v6396
      %8445 = vst [vmem:[%s123 + $0x400] sm:$0xff] %v6397
      %8446 = vst [vmem:[%s123 + $0x408] sm:$0xff] %v6398
      %8447 = vst [vmem:[%s123 + $0x410] sm:$0xff] %v6399
      %8448 = vst [vmem:[%s123 + $0x418] sm:$0xff] %v6400
      %8449 = vst [vmem:[%s123 + $0x420] sm:$0xff] %v6401
      %8450 = vst [vmem:[%s123 + $0x428] sm:$0xff] %v6402
      %8451 = vst [vmem:[%s123 + $0x430] sm:$0xff] %v6403
      %8452 = vst [vmem:[%s123 + $0x438] sm:$0xff] %v6404
      %8453 = vst [vmem:[%s123 + $0x440] sm:$0xff] %v6405
      %8454 = vst [vmem:[%s123 + $0x448] sm:$0xff] %v6406
      %8455 = vst [vmem:[%s123 + $0x450] sm:$0xff] %v6407
      %8456 = vst [vmem:[%s123 + $0x458] sm:$0xff] %v6408
      %8457 = vst [vmem:[%s123 + $0x460] sm:$0xff] %v6409
      %8458 = vst [vmem:[%s123 + $0x468] sm:$0xff] %v6410
      %8459 = vst [vmem:[%s123 + $0x470] sm:$0xff] %v6411
      %8460 = vst [vmem:[%s123 + $0x478] sm:$0xff] %v6412
      %8461 = vst [vmem:[%s123 + $0x480] sm:$0xff] %v6413
      %8462 = vst [vmem:[%s123 + $0x488] sm:$0xff] %v6414
      %8463 = vst [vmem:[%s123 + $0x490] sm:$0xff] %v6415
      %8464 = vst [vmem:[%s123 + $0x498] sm:$0xff] %v6416
      %8465 = vst [vmem:[%s123 + $0x4a0] sm:$0xff] %v6417
      %8466 = vst [vmem:[%s123 + $0x4a8] sm:$0xff] %v6418
      %8467 = vst [vmem:[%s123 + $0x4b0] sm:$0xff] %v6419
      %8468 = vst [vmem:[%s123 + $0x4b8] sm:$0xff] %v6420
      %8469 = vst [vmem:[%s123 + $0x4c0] sm:$0xff] %v6421
      %8470 = vst [vmem:[%s123 + $0x4c8] sm:$0xff] %v6422
      %8471 = vst [vmem:[%s123 + $0x4d0] sm:$0xff] %v6423
      %8472 = vst [vmem:[%s123 + $0x4d8] sm:$0xff] %v6424
      %8473 = vst [vmem:[%s123 + $0x4e0] sm:$0xff] %v6425
      %8474 = vst [vmem:[%s123 + $0x4e8] sm:$0xff] %v6426
      %8475 = vst [vmem:[%s123 + $0x4f0] sm:$0xff] %v6427
      %8476 = vst [vmem:[%s123 + $0x4f8] sm:$0xff] %v6428
      %8477 = vst [vmem:[%s123 + $0x500] sm:$0xff] %v6429
      %8478 = vst [vmem:[%s123 + $0x508] sm:$0xff] %v6430
      %8479 = vst [vmem:[%s123 + $0x510] sm:$0xff] %v6431
      %8480 = vst [vmem:[%s123 + $0x518] sm:$0xff] %v6432
      %8481 = vst [vmem:[%s123 + $0x520] sm:$0xff] %v6433
      %8482 = vst [vmem:[%s123 + $0x528] sm:$0xff] %v6434
      %8483 = vst [vmem:[%s123 + $0x530] sm:$0xff] %v6435
      %8484 = vst [vmem:[%s123 + $0x538] sm:$0xff] %v6436
      %8485 = vst [vmem:[%s123 + $0x540] sm:$0xff] %v6437
      %8486 = vst [vmem:[%s123 + $0x548] sm:$0xff] %v6438
      %8487 = vst [vmem:[%s123 + $0x550] sm:$0xff] %v6439
      %8488 = vst [vmem:[%s123 + $0x558] sm:$0xff] %v6440
      %8489 = vst [vmem:[%s123 + $0x560] sm:$0xff] %v6441
      %8490 = vst [vmem:[%s123 + $0x568] sm:$0xff] %v6442
      %8491 = vst [vmem:[%s123 + $0x570] sm:$0xff] %v6443
      %8492 = vst [vmem:[%s123 + $0x578] sm:$0xff] %v6444
      %8493 = vst [vmem:[%s123 + $0x580] sm:$0xff] %v6445
      %8494 = vst [vmem:[%s123 + $0x588] sm:$0xff] %v6446
      %8495 = vst [vmem:[%s123 + $0x590] sm:$0xff] %v6447
      %8496 = vst [vmem:[%s123 + $0x598] sm:$0xff] %v6448
      %8497 = vst [vmem:[%s123 + $0x5a0] sm:$0xff] %v6449
      %8498 = vst [vmem:[%s123 + $0x5a8] sm:$0xff] %v6450
      %8499 = vst [vmem:[%s123 + $0x5b0] sm:$0xff] %v6451
      %8500 = vst [vmem:[%s123 + $0x5b8] sm:$0xff] %v6452
      %8501 = vst [vmem:[%s123 + $0x5c0] sm:$0xff] %v6453
      %8502 = vst [vmem:[%s123 + $0x5c8] sm:$0xff] %v6454
      %8503 = vst [vmem:[%s123 + $0x5d0] sm:$0xff] %v6455
      %8504 = vst [vmem:[%s123 + $0x5d8] sm:$0xff] %v6456
      %8505 = vst [vmem:[%s123 + $0x5e0] sm:$0xff] %v6457
      %8506 = vst [vmem:[%s123 + $0x5e8] sm:$0xff] %v6458
      %8507 = vst [vmem:[%s123 + $0x5f0] sm:$0xff] %v6459
      %8508 = vst [vmem:[%s123 + $0x5f8] sm:$0xff] %v6460
      %8509 = vst [vmem:[%s123 + $0x600] sm:$0xff] %v6461
      %8510 = vst [vmem:[%s123 + $0x608] sm:$0xff] %v6462
      %8511 = vst [vmem:[%s123 + $0x610] sm:$0xff] %v6463
      %8512 = vst [vmem:[%s123 + $0x618] sm:$0xff] %v6464
      %8513 = vst [vmem:[%s123 + $0x620] sm:$0xff] %v6465
      %8514 = vst [vmem:[%s123 + $0x628] sm:$0xff] %v6466
      %8515 = vst [vmem:[%s123 + $0x630] sm:$0xff] %v6467
      %8516 = vst [vmem:[%s123 + $0x638] sm:$0xff] %v6468
      %8517 = vst [vmem:[%s123 + $0x640] sm:$0xff] %v6469
      %8518 = vst [vmem:[%s123 + $0x648] sm:$0xff] %v6470
      %8519 = vst [vmem:[%s123 + $0x650] sm:$0xff] %v6471
      %8520 = vst [vmem:[%s123 + $0x658] sm:$0xff] %v6472
      %8521 = vst [vmem:[%s123 + $0x660] sm:$0xff] %v6473
      %8522 = vst [vmem:[%s123 + $0x668] sm:$0xff] %v6474
      %8523 = vst [vmem:[%s123 + $0x670] sm:$0xff] %v6475
      %8524 = vst [vmem:[%s123 + $0x678] sm:$0xff] %v6476
      %8525 = vst [vmem:[%s123 + $0x680] sm:$0xff] %v6477
      %8526 = vst [vmem:[%s123 + $0x688] sm:$0xff] %v6478
      %8527 = vst [vmem:[%s123 + $0x690] sm:$0xff] %v6479
      %8528 = vst [vmem:[%s123 + $0x698] sm:$0xff] %v6480
      %8529 = vst [vmem:[%s123 + $0x6a0] sm:$0xff] %v6481
      %8530 = vst [vmem:[%s123 + $0x6a8] sm:$0xff] %v6482
      %8531 = vst [vmem:[%s123 + $0x6b0] sm:$0xff] %v6483
      %8532 = vst [vmem:[%s123 + $0x6b8] sm:$0xff] %v6484
      %8533 = vst [vmem:[%s123 + $0x6c0] sm:$0xff] %v6485
      %8534 = vst [vmem:[%s123 + $0x6c8] sm:$0xff] %v6486
      %8535 = vst [vmem:[%s123 + $0x6d0] sm:$0xff] %v6487
      %8536 = vst [vmem:[%s123 + $0x6d8] sm:$0xff] %v6488
      %8537 = vst [vmem:[%s123 + $0x6e0] sm:$0xff] %v6489
      %8538 = vst [vmem:[%s123 + $0x6e8] sm:$0xff] %v6490
      %8539 = vst [vmem:[%s123 + $0x6f0] sm:$0xff] %v6491
      %8540 = vst [vmem:[%s123 + $0x6f8] sm:$0xff] %v6492
      %8541 = vst [vmem:[%s123 + $0x700] sm:$0xff] %v6493
      %8542 = vst [vmem:[%s123 + $0x708] sm:$0xff] %v6494
      %8543 = vst [vmem:[%s123 + $0x710] sm:$0xff] %v6495
      %8544 = vst [vmem:[%s123 + $0x718] sm:$0xff] %v6496
      %8545 = vst [vmem:[%s123 + $0x720] sm:$0xff] %v6497
      %8546 = vst [vmem:[%s123 + $0x728] sm:$0xff] %v6498
      %8547 = vst [vmem:[%s123 + $0x730] sm:$0xff] %v6499
      %8548 = vst [vmem:[%s123 + $0x738] sm:$0xff] %v6500
      %8549 = vst [vmem:[%s123 + $0x740] sm:$0xff] %v6501
      %8550 = vst [vmem:[%s123 + $0x748] sm:$0xff] %v6502
      %8551 = vst [vmem:[%s123 + $0x750] sm:$0xff] %v6503
      %8552 = vst [vmem:[%s123 + $0x758] sm:$0xff] %v6504
      %8553 = vst [vmem:[%s123 + $0x760] sm:$0xff] %v6505
      %8554 = vst [vmem:[%s123 + $0x768] sm:$0xff] %v6506
      %8555 = vst [vmem:[%s123 + $0x770] sm:$0xff] %v6507
      %8556 = vst [vmem:[%s123 + $0x778] sm:$0xff] %v6508
      %8557 = vst [vmem:[%s123 + $0x780] sm:$0xff] %v6509
      %8558 = vst [vmem:[%s123 + $0x788] sm:$0xff] %v6510
      %8559 = vst [vmem:[%s123 + $0x790] sm:$0xff] %v6511
      %8560 = vst [vmem:[%s123 + $0x798] sm:$0xff] %v6512
      %8561 = vst [vmem:[%s123 + $0x7a0] sm:$0xff] %v6513
      %8562 = vst [vmem:[%s123 + $0x7a8] sm:$0xff] %v6514
      %8563 = vst [vmem:[%s123 + $0x7b0] sm:$0xff] %v6515
      %8564 = vst [vmem:[%s123 + $0x7b8] sm:$0xff] %v6516
      %8565 = vst [vmem:[%s123 + $0x7c0] sm:$0xff] %v6517
      %8566 = vst [vmem:[%s123 + $0x7c8] sm:$0xff] %v6518
      %8567 = vst [vmem:[%s123 + $0x7d0] sm:$0xff] %v6519
      %8568 = vst [vmem:[%s123 + $0x7d8] sm:$0xff] %v6520
      %8569 = vst [vmem:[%s123 + $0x7e0] sm:$0xff] %v6521
      %8570 = vst [vmem:[%s123 + $0x7e8] sm:$0xff] %v6522
      %8571 = vst [vmem:[%s123 + $0x7f0] sm:$0xff] %v6523
      %8572 = vst [vmem:[%s123 + $0x7f8] sm:$0xff] %v6524
      %8573 = vst [vmem:[%s123 + $0x800] sm:$0xff] %v6525
      %8574 = vst [vmem:[%s123 + $0x808] sm:$0xff] %v6526
      %8575 = vst [vmem:[%s123 + $0x810] sm:$0xff] %v6527
      %8576 = vst [vmem:[%s123 + $0x818] sm:$0xff] %v6528
      %8577 = vst [vmem:[%s123 + $0x820] sm:$0xff] %v6529
      %8578 = vst [vmem:[%s123 + $0x828] sm:$0xff] %v6530
      %8579 = vst [vmem:[%s123 + $0x830] sm:$0xff] %v6531
      %8580 = vst [vmem:[%s123 + $0x838] sm:$0xff] %v6532
      %8581 = vst [vmem:[%s123 + $0x840] sm:$0xff] %v6533
      %8582 = vst [vmem:[%s123 + $0x848] sm:$0xff] %v6534
      %8583 = vst [vmem:[%s123 + $0x850] sm:$0xff] %v6535
      %8584 = vst [vmem:[%s123 + $0x858] sm:$0xff] %v6536
      %8585 = vst [vmem:[%s123 + $0x860] sm:$0xff] %v6537
      %8586 = vst [vmem:[%s123 + $0x868] sm:$0xff] %v6538
      %8587 = vst [vmem:[%s123 + $0x870] sm:$0xff] %v6539
      %8588 = vst [vmem:[%s123 + $0x878] sm:$0xff] %v6540
      %8589 = vst [vmem:[%s123 + $0x880] sm:$0xff] %v6541
      %8590 = vst [vmem:[%s123 + $0x888] sm:$0xff] %v6542
      %8591 = vst [vmem:[%s123 + $0x890] sm:$0xff] %v6543
      %8592 = vst [vmem:[%s123 + $0x898] sm:$0xff] %v6544
      %8593 = vst [vmem:[%s123 + $0x8a0] sm:$0xff] %v6545
      %8594 = vst [vmem:[%s123 + $0x8a8] sm:$0xff] %v6546
      %8595 = vst [vmem:[%s123 + $0x8b0] sm:$0xff] %v6547
      %8596 = vst [vmem:[%s123 + $0x8b8] sm:$0xff] %v6548
      %8597 = vst [vmem:[%s123 + $0x8c0] sm:$0xff] %v6549
      %8598 = vst [vmem:[%s123 + $0x8c8] sm:$0xff] %v6550
      %8599 = vst [vmem:[%s123 + $0x8d0] sm:$0xff] %v6551
      %8600 = vst [vmem:[%s123 + $0x8d8] sm:$0xff] %v6552
      %8601 = vst [vmem:[%s123 + $0x8e0] sm:$0xff] %v6553
      %8602 = vst [vmem:[%s123 + $0x8e8] sm:$0xff] %v6554
      %8603 = vst [vmem:[%s123 + $0x8f0] sm:$0xff] %v6555
      %8604 = vst [vmem:[%s123 + $0x8f8] sm:$0xff] %v6556
      %8605 = vst [vmem:[%s123 + $0x900] sm:$0xff] %v6557
      %8606 = vst [vmem:[%s123 + $0x908] sm:$0xff] %v6558
      %8607 = vst [vmem:[%s123 + $0x910] sm:$0xff] %v6559
      %8608 = vst [vmem:[%s123 + $0x918] sm:$0xff] %v6560
      %8609 = vst [vmem:[%s123 + $0x920] sm:$0xff] %v6561
      %8610 = vst [vmem:[%s123 + $0x928] sm:$0xff] %v6562
      %8611 = vst [vmem:[%s123 + $0x930] sm:$0xff] %v6563
      %8612 = vst [vmem:[%s123 + $0x938] sm:$0xff] %v6564
      %8613 = vst [vmem:[%s123 + $0x940] sm:$0xff] %v6565
      %8614 = vst [vmem:[%s123 + $0x948] sm:$0xff] %v6566
      %8615 = vst [vmem:[%s123 + $0x950] sm:$0xff] %v6567
      %8616 = vst [vmem:[%s123 + $0x958] sm:$0xff] %v6568
      %8617 = vst [vmem:[%s123 + $0x960] sm:$0xff] %v6569
      %8618 = vst [vmem:[%s123 + $0x968] sm:$0xff] %v6570
      %8619 = vst [vmem:[%s123 + $0x970] sm:$0xff] %v6571
      %8620 = vst [vmem:[%s123 + $0x978] sm:$0xff] %v6572
      %8621 = vst [vmem:[%s123 + $0x980] sm:$0xff] %v6573
      %8622 = vst [vmem:[%s123 + $0x988] sm:$0xff] %v6574
      %8623 = vst [vmem:[%s123 + $0x990] sm:$0xff] %v6575
      %8624 = vst [vmem:[%s123 + $0x998] sm:$0xff] %v6576
      %8625 = vst [vmem:[%s123 + $0x9a0] sm:$0xff] %v6577
      %8626 = vst [vmem:[%s123 + $0x9a8] sm:$0xff] %v6578
      %8627 = vst [vmem:[%s123 + $0x9b0] sm:$0xff] %v6579
      %8628 = vst [vmem:[%s123 + $0x9b8] sm:$0xff] %v6580
      %8629 = vst [vmem:[%s123 + $0x9c0] sm:$0xff] %v6581
      %8630 = vst [vmem:[%s123 + $0x9c8] sm:$0xff] %v6582
      %8631 = vst [vmem:[%s123 + $0x9d0] sm:$0xff] %v6583
      %8632 = vst [vmem:[%s123 + $0x9d8] sm:$0xff] %v6584
      %8633 = vst [vmem:[%s123 + $0x9e0] sm:$0xff] %v6585
      %8634 = vst [vmem:[%s123 + $0x9e8] sm:$0xff] %v6586
      %8635 = vst [vmem:[%s123 + $0x9f0] sm:$0xff] %v6587
      %8636 = vst [vmem:[%s123 + $0x9f8] sm:$0xff] %v6588
      %8637 = vst [vmem:[%s123 + $0xa00] sm:$0xff] %v6589
      %8638 = vst [vmem:[%s123 + $0xa08] sm:$0xff] %v6590
      %8639 = vst [vmem:[%s123 + $0xa10] sm:$0xff] %v6591
      %8640 = vst [vmem:[%s123 + $0xa18] sm:$0xff] %v6592
      %8641 = vst [vmem:[%s123 + $0xa20] sm:$0xff] %v6593
      %8642 = vst [vmem:[%s123 + $0xa28] sm:$0xff] %v6594
      %8643 = vst [vmem:[%s123 + $0xa30] sm:$0xff] %v6595
      %8644 = vst [vmem:[%s123 + $0xa38] sm:$0xff] %v6596
      %8645 = vst [vmem:[%s123 + $0xa40] sm:$0xff] %v6597
      %8646 = vst [vmem:[%s123 + $0xa48] sm:$0xff] %v6598
      %8647 = vst [vmem:[%s123 + $0xa50] sm:$0xff] %v6599
      %8648 = vst [vmem:[%s123 + $0xa58] sm:$0xff] %v6600
      %8649 = vst [vmem:[%s123 + $0xa60] sm:$0xff] %v6601
      %8650 = vst [vmem:[%s123 + $0xa68] sm:$0xff] %v6602
      %8651 = vst [vmem:[%s123 + $0xa70] sm:$0xff] %v6603
      %8652 = vst [vmem:[%s123 + $0xa78] sm:$0xff] %v6604
      %8653 = vst [vmem:[%s123 + $0xa80] sm:$0xff] %v6605
      %8654 = vst [vmem:[%s123 + $0xa88] sm:$0xff] %v6606
      %8655 = vst [vmem:[%s123 + $0xa90] sm:$0xff] %v6607
      %8656 = vst [vmem:[%s123 + $0xa98] sm:$0xff] %v6608
      %8657 = vst [vmem:[%s123 + $0xaa0] sm:$0xff] %v6609
      %8658 = vst [vmem:[%s123 + $0xaa8] sm:$0xff] %v6610
      %8659 = vst [vmem:[%s123 + $0xab0] sm:$0xff] %v6611
      %8660 = vst [vmem:[%s123 + $0xab8] sm:$0xff] %v6612
      %8661 = vst [vmem:[%s123 + $0xac0] sm:$0xff] %v6613
      %8662 = vst [vmem:[%s123 + $0xac8] sm:$0xff] %v6614
      %8663 = vst [vmem:[%s123 + $0xad0] sm:$0xff] %v6615
      %8664 = vst [vmem:[%s123 + $0xad8] sm:$0xff] %v6616
      %8665 = vst [vmem:[%s123 + $0xae0] sm:$0xff] %v6617
      %8666 = vst [vmem:[%s123 + $0xae8] sm:$0xff] %v6618
      %8667 = vst [vmem:[%s123 + $0xaf0] sm:$0xff] %v6619
      %8668 = vst [vmem:[%s123 + $0xaf8] sm:$0xff] %v6620
      %8669 = vst [vmem:[%s123 + $0xb00] sm:$0xff] %v6621
      %8670 = vst [vmem:[%s123 + $0xb08] sm:$0xff] %v6622
      %8671 = vst [vmem:[%s123 + $0xb10] sm:$0xff] %v6623
      %8672 = vst [vmem:[%s123 + $0xb18] sm:$0xff] %v6624
      %8673 = vst [vmem:[%s123 + $0xb20] sm:$0xff] %v6625
      %8674 = vst [vmem:[%s123 + $0xb28] sm:$0xff] %v6626
      %8675 = vst [vmem:[%s123 + $0xb30] sm:$0xff] %v6627
      %8676 = vst [vmem:[%s123 + $0xb38] sm:$0xff] %v6628
      %8677 = vst [vmem:[%s123 + $0xb40] sm:$0xff] %v6629
      %8678 = vst [vmem:[%s123 + $0xb48] sm:$0xff] %v6630
      %8679 = vst [vmem:[%s123 + $0xb50] sm:$0xff] %v6631
      %8680 = vst [vmem:[%s123 + $0xb58] sm:$0xff] %v6632
      %8681 = vst [vmem:[%s123 + $0xb60] sm:$0xff] %v6633
      %8682 = vst [vmem:[%s123 + $0xb68] sm:$0xff] %v6634
      %8683 = vst [vmem:[%s123 + $0xb70] sm:$0xff] %v6635
      %8684 = vst [vmem:[%s123 + $0xb78] sm:$0xff] %v6636
      %8685 = vst [vmem:[%s123 + $0xb80] sm:$0xff] %v6637
      %8686 = vst [vmem:[%s123 + $0xb88] sm:$0xff] %v6638
      %8687 = vst [vmem:[%s123 + $0xb90] sm:$0xff] %v6639
      %8688 = vst [vmem:[%s123 + $0xb98] sm:$0xff] %v6640
      %8689 = vst [vmem:[%s123 + $0xba0] sm:$0xff] %v6641
      %8690 = vst [vmem:[%s123 + $0xba8] sm:$0xff] %v6642
      %8691 = vst [vmem:[%s123 + $0xbb0] sm:$0xff] %v6643
      %8692 = vst [vmem:[%s123 + $0xbb8] sm:$0xff] %v6644
      %8693 = vst [vmem:[%s123 + $0xbc0] sm:$0xff] %v6645
      %8694 = vst [vmem:[%s123 + $0xbc8] sm:$0xff] %v6646
      %8695 = vst [vmem:[%s123 + $0xbd0] sm:$0xff] %v6647
      %8696 = vst [vmem:[%s123 + $0xbd8] sm:$0xff] %v6648
      %8697 = vst [vmem:[%s123 + $0xbe0] sm:$0xff] %v6649
      %8698 = vst [vmem:[%s123 + $0xbe8] sm:$0xff] %v6650
      %8699 = vst [vmem:[%s123 + $0xbf0] sm:$0xff] %v6651
      %8700 = vst [vmem:[%s123 + $0xbf8] sm:$0xff] %v6652
      %8701 = vst [vmem:[%s123 + $0xc00] sm:$0xff] %v6653
      %8702 = vst [vmem:[%s123 + $0xc08] sm:$0xff] %v6654
      %8703 = vst [vmem:[%s123 + $0xc10] sm:$0xff] %v6655
      %8704 = vst [vmem:[%s123 + $0xc18] sm:$0xff] %v6656
      %8705 = vst [vmem:[%s123 + $0xc20] sm:$0xff] %v6657
      %8706 = vst [vmem:[%s123 + $0xc28] sm:$0xff] %v6658
      %8707 = vst [vmem:[%s123 + $0xc30] sm:$0xff] %v6659
      %8708 = vst [vmem:[%s123 + $0xc38] sm:$0xff] %v6660
      %8709 = vst [vmem:[%s123 + $0xc40] sm:$0xff] %v6661
      %8710 = vst [vmem:[%s123 + $0xc48] sm:$0xff] %v6662
      %8711 = vst [vmem:[%s123 + $0xc50] sm:$0xff] %v6663
      %8712 = vst [vmem:[%s123 + $0xc58] sm:$0xff] %v6664
      %8713 = vst [vmem:[%s123 + $0xc60] sm:$0xff] %v6665
      %8714 = vst [vmem:[%s123 + $0xc68] sm:$0xff] %v6666
      %8715 = vst [vmem:[%s123 + $0xc70] sm:$0xff] %v6667
      %8716 = vst [vmem:[%s123 + $0xc78] sm:$0xff] %v6668
      %8717 = vst [vmem:[%s123 + $0xc80] sm:$0xff] %v6669
      %8718 = vst [vmem:[%s123 + $0xc88] sm:$0xff] %v6670
      %8719 = vst [vmem:[%s123 + $0xc90] sm:$0xff] %v6671
      %8720 = vst [vmem:[%s123 + $0xc98] sm:$0xff] %v6672
      %8721 = vst [vmem:[%s123 + $0xca0] sm:$0xff] %v6673
      %8722 = vst [vmem:[%s123 + $0xca8] sm:$0xff] %v6674
      %8723 = vst [vmem:[%s123 + $0xcb0] sm:$0xff] %v6675
      %8724 = vst [vmem:[%s123 + $0xcb8] sm:$0xff] %v6676
      %8725 = vst [vmem:[%s123 + $0xcc0] sm:$0xff] %v6677
      %8726 = vst [vmem:[%s123 + $0xcc8] sm:$0xff] %v6678
      %8727 = vst [vmem:[%s123 + $0xcd0] sm:$0xff] %v6679
      %8728 = vst [vmem:[%s123 + $0xcd8] sm:$0xff] %v6680
      %8729 = vst [vmem:[%s123 + $0xce0] sm:$0xff] %v6681
      %8730 = vst [vmem:[%s123 + $0xce8] sm:$0xff] %v6682
      %8731 = vst [vmem:[%s123 + $0xcf0] sm:$0xff] %v6683
      %8732 = vst [vmem:[%s123 + $0xcf8] sm:$0xff] %v6684
      %8733 = vst [vmem:[%s123 + $0xd00] sm:$0xff] %v6685
      %8734 = vst [vmem:[%s123 + $0xd08] sm:$0xff] %v6686
      %8735 = vst [vmem:[%s123 + $0xd10] sm:$0xff] %v6687
      %8736 = vst [vmem:[%s123 + $0xd18] sm:$0xff] %v6688
      %8737 = vst [vmem:[%s123 + $0xd20] sm:$0xff] %v6689
      %8738 = vst [vmem:[%s123 + $0xd28] sm:$0xff] %v6690
      %8739 = vst [vmem:[%s123 + $0xd30] sm:$0xff] %v6691
      %8740 = vst [vmem:[%s123 + $0xd38] sm:$0xff] %v6692
      %8741 = vst [vmem:[%s123 + $0xd40] sm:$0xff] %v6693
      %8742 = vst [vmem:[%s123 + $0xd48] sm:$0xff] %v6694
      %8743 = vst [vmem:[%s123 + $0xd50] sm:$0xff] %v6695
      %8744 = vst [vmem:[%s123 + $0xd58] sm:$0xff] %v6696
      %8745 = vst [vmem:[%s123 + $0xd60] sm:$0xff] %v6697
      %8746 = vst [vmem:[%s123 + $0xd68] sm:$0xff] %v6698
      %8747 = vst [vmem:[%s123 + $0xd70] sm:$0xff] %v6699
      %8748 = vst [vmem:[%s123 + $0xd78] sm:$0xff] %v6700
      %8749 = vst [vmem:[%s123 + $0xd80] sm:$0xff] %v6701
      %8750 = vst [vmem:[%s123 + $0xd88] sm:$0xff] %v6702
      %8751 = vst [vmem:[%s123 + $0xd90] sm:$0xff] %v6703
      %8752 = vst [vmem:[%s123 + $0xd98] sm:$0xff] %v6704
      %8753 = vst [vmem:[%s123 + $0xda0] sm:$0xff] %v6705
      %8754 = vst [vmem:[%s123 + $0xda8] sm:$0xff] %v6706
      %8755 = vst [vmem:[%s123 + $0xdb0] sm:$0xff] %v6707
      %8756 = vst [vmem:[%s123 + $0xdb8] sm:$0xff] %v6708
      %8757 = vst [vmem:[%s123 + $0xdc0] sm:$0xff] %v6709
      %8758 = vst [vmem:[%s123 + $0xdc8] sm:$0xff] %v6710
      %8759 = vst [vmem:[%s123 + $0xdd0] sm:$0xff] %v6711
      %8760 = vst [vmem:[%s123 + $0xdd8] sm:$0xff] %v6712
      %8761 = vst [vmem:[%s123 + $0xde0] sm:$0xff] %v6713
      %8762 = vst [vmem:[%s123 + $0xde8] sm:$0xff] %v6714
      %8763 = vst [vmem:[%s123 + $0xdf0] sm:$0xff] %v6715
      %8764 = vst [vmem:[%s123 + $0xdf8] sm:$0xff] %v6716
      %8765 = vst [vmem:[%s123 + $0xe00] sm:$0xff] %v6717
      %8766 = vst [vmem:[%s123 + $0xe08] sm:$0xff] %v6718
      %8767 = vst [vmem:[%s123 + $0xe10] sm:$0xff] %v6719
      %8768 = vst [vmem:[%s123 + $0xe18] sm:$0xff] %v6720
      %8769 = vst [vmem:[%s123 + $0xe20] sm:$0xff] %v6721
      %8770 = vst [vmem:[%s123 + $0xe28] sm:$0xff] %v6722
      %8771 = vst [vmem:[%s123 + $0xe30] sm:$0xff] %v6723
      %8772 = vst [vmem:[%s123 + $0xe38] sm:$0xff] %v6724
      %8773 = vst [vmem:[%s123 + $0xe40] sm:$0xff] %v6725
      %8774 = vst [vmem:[%s123 + $0xe48] sm:$0xff] %v6726
      %8775 = vst [vmem:[%s123 + $0xe50] sm:$0xff] %v6727
      %8776 = vst [vmem:[%s123 + $0xe58] sm:$0xff] %v6728
      %8777 = vst [vmem:[%s123 + $0xe60] sm:$0xff] %v6729
      %8778 = vst [vmem:[%s123 + $0xe68] sm:$0xff] %v6730
      %8779 = vst [vmem:[%s123 + $0xe70] sm:$0xff] %v6731
      %8780 = vst [vmem:[%s123 + $0xe78] sm:$0xff] %v6732
      %8781 = vst [vmem:[%s123 + $0xe80] sm:$0xff] %v6733
      %8782 = vst [vmem:[%s123 + $0xe88] sm:$0xff] %v6734
      %8783 = vst [vmem:[%s123 + $0xe90] sm:$0xff] %v6735
      %8784 = vst [vmem:[%s123 + $0xe98] sm:$0xff] %v6736
      %8785 = vst [vmem:[%s123 + $0xea0] sm:$0xff] %v6737
      %8786 = vst [vmem:[%s123 + $0xea8] sm:$0xff] %v6738
      %8787 = vst [vmem:[%s123 + $0xeb0] sm:$0xff] %v6739
      %8788 = vst [vmem:[%s123 + $0xeb8] sm:$0xff] %v6740
      %8789 = vst [vmem:[%s123 + $0xec0] sm:$0xff] %v6741
      %8790 = vst [vmem:[%s123 + $0xec8] sm:$0xff] %v6742
      %8791 = vst [vmem:[%s123 + $0xed0] sm:$0xff] %v6743
      %8792 = vst [vmem:[%s123 + $0xed8] sm:$0xff] %v6744
      %8793 = vst [vmem:[%s123 + $0xee0] sm:$0xff] %v6745
      %8794 = vst [vmem:[%s123 + $0xee8] sm:$0xff] %v6746
      %8795 = vst [vmem:[%s123 + $0xef0] sm:$0xff] %v6747
      %8796 = vst [vmem:[%s123 + $0xef8] sm:$0xff] %v6748
      %8797 = vst [vmem:[%s123 + $0xf00] sm:$0xff] %v6749
      %8798 = vst [vmem:[%s123 + $0xf08] sm:$0xff] %v6750
      %8799 = vst [vmem:[%s123 + $0xf10] sm:$0xff] %v6751
      %8800 = vst [vmem:[%s123 + $0xf18] sm:$0xff] %v6752
      %8801 = vst [vmem:[%s123 + $0xf20] sm:$0xff] %v6753
      %8802 = vst [vmem:[%s123 + $0xf28] sm:$0xff] %v6754
      %8803 = vst [vmem:[%s123 + $0xf30] sm:$0xff] %v6755
      %8804 = vst [vmem:[%s123 + $0xf38] sm:$0xff] %v6756
      %8805 = vst [vmem:[%s123 + $0xf40] sm:$0xff] %v6757
      %8806 = vst [vmem:[%s123 + $0xf48] sm:$0xff] %v6758
      %8807 = vst [vmem:[%s123 + $0xf50] sm:$0xff] %v6759
      %8808 = vst [vmem:[%s123 + $0xf58] sm:$0xff] %v6760
      %8809 = vst [vmem:[%s123 + $0xf60] sm:$0xff] %v6761
      %8810 = vst [vmem:[%s123 + $0xf68] sm:$0xff] %v6762
      %8811 = vst [vmem:[%s123 + $0xf70] sm:$0xff] %v6763
      %8812 = vst [vmem:[%s123 + $0xf78] sm:$0xff] %v6764
      %8813 = vst [vmem:[%s123 + $0xf80] sm:$0xff] %v6765
      %8814 = vst [vmem:[%s123 + $0xf88] sm:$0xff] %v6766
      %8815 = vst [vmem:[%s123 + $0xf90] sm:$0xff] %v6767
      %8816 = vst [vmem:[%s123 + $0xf98] sm:$0xff] %v6768
      %8817 = vst [vmem:[%s123 + $0xfa0] sm:$0xff] %v6769
      %8818 = vst [vmem:[%s123 + $0xfa8] sm:$0xff] %v6770
      %8819 = vst [vmem:[%s123 + $0xfb0] sm:$0xff] %v6771
      %8820 = vst [vmem:[%s123 + $0xfb8] sm:$0xff] %v6772
      %8821 = vst [vmem:[%s123 + $0xfc0] sm:$0xff] %v6773
      %8822 = vst [vmem:[%s123 + $0xfc8] sm:$0xff] %v6774
      %8823 = vst [vmem:[%s123 + $0xfd0] sm:$0xff] %v6775
      %8824 = vst [vmem:[%s123 + $0xfd8] sm:$0xff] %v6776
      %8825 = vst [vmem:[%s123 + $0xfe0] sm:$0xff] %v6777
      %8826 = vst [vmem:[%s123 + $0xfe8] sm:$0xff] %v6778
      %8827 = vst [vmem:[%s123 + $0xff0] sm:$0xff] %v6779
      %8828 = vst [vmem:[%s123 + $0xff8] sm:$0xff] %v6780
      %8829 = vst [vmem:[%s123 + $0x1000] sm:$0xff] %v6781
      %8830 = vst [vmem:[%s123 + $0x1008] sm:$0xff] %v6782
      %8831 = vst [vmem:[%s123 + $0x1010] sm:$0xff] %v6783
      %8832 = vst [vmem:[%s123 + $0x1018] sm:$0xff] %v6784
      %8833 = vst [vmem:[%s123 + $0x1020] sm:$0xff] %v6785
      %8834 = vst [vmem:[%s123 + $0x1028] sm:$0xff] %v6786
      %8835 = vst [vmem:[%s123 + $0x1030] sm:$0xff] %v6787
      %8836 = vst [vmem:[%s123 + $0x1038] sm:$0xff] %v6788
      %8837 = vst [vmem:[%s123 + $0x1040] sm:$0xff] %v6789
      %8838 = vst [vmem:[%s123 + $0x1048] sm:$0xff] %v6790
      %8839 = vst [vmem:[%s123 + $0x1050] sm:$0xff] %v6791
      %8840 = vst [vmem:[%s123 + $0x1058] sm:$0xff] %v6792
      %8841 = vst [vmem:[%s123 + $0x1060] sm:$0xff] %v6793
      %8842 = vst [vmem:[%s123 + $0x1068] sm:$0xff] %v6794
      %8843 = vst [vmem:[%s123 + $0x1070] sm:$0xff] %v6795
      %8844 = vst [vmem:[%s123 + $0x1078] sm:$0xff] %v6796
      %8845 = vst [vmem:[%s123 + $0x1080] sm:$0xff] %v6797
      %8846 = vst [vmem:[%s123 + $0x1088] sm:$0xff] %v6798
      %8847 = vst [vmem:[%s123 + $0x1090] sm:$0xff] %v6799
      %8848 = vst [vmem:[%s123 + $0x1098] sm:$0xff] %v6800
      %8849 = vst [vmem:[%s123 + $0x10a0] sm:$0xff] %v6801
      %8850 = vst [vmem:[%s123 + $0x10a8] sm:$0xff] %v6802
      %8851 = vst [vmem:[%s123 + $0x10b0] sm:$0xff] %v6803
      %8852 = vst [vmem:[%s123 + $0x10b8] sm:$0xff] %v6804
      %8853 = vst [vmem:[%s123 + $0x10c0] sm:$0xff] %v6805
      %8854 = vst [vmem:[%s123 + $0x10c8] sm:$0xff] %v6806
      %8855 = vst [vmem:[%s123 + $0x10d0] sm:$0xff] %v6807
      %8856 = vst [vmem:[%s123 + $0x10d8] sm:$0xff] %v6808
      %8857 = vst [vmem:[%s123 + $0x10e0] sm:$0xff] %v6809
      %8858 = vst [vmem:[%s123 + $0x10e8] sm:$0xff] %v6810
      %8859 = vst [vmem:[%s123 + $0x10f0] sm:$0xff] %v6811
      %8860 = vst [vmem:[%s123 + $0x10f8] sm:$0xff] %v6812
      %8861 = vst [vmem:[%s123 + $0x1100] sm:$0xff] %v6813
      %8862 = vst [vmem:[%s123 + $0x1108] sm:$0xff] %v6814
      %8863 = vst [vmem:[%s123 + $0x1110] sm:$0xff] %v6815
      %8864 = vst [vmem:[%s123 + $0x1118] sm:$0xff] %v6816
      %8865 = vst [vmem:[%s123 + $0x1120] sm:$0xff] %v6817
      %8866 = vst [vmem:[%s123 + $0x1128] sm:$0xff] %v6818
      %8867 = vst [vmem:[%s123 + $0x1130] sm:$0xff] %v6819
      %8868 = vst [vmem:[%s123 + $0x1138] sm:$0xff] %v6820
      %8869 = vst [vmem:[%s123 + $0x1140] sm:$0xff] %v6821
      %8870 = vst [vmem:[%s123 + $0x1148] sm:$0xff] %v6822
      %8871 = vst [vmem:[%s123 + $0x1150] sm:$0xff] %v6823
      %8872 = vst [vmem:[%s123 + $0x1158] sm:$0xff] %v6824
      %8873 = vst [vmem:[%s123 + $0x1160] sm:$0xff] %v6825
      %8874 = vst [vmem:[%s123 + $0x1168] sm:$0xff] %v6826
      %8875 = vst [vmem:[%s123 + $0x1170] sm:$0xff] %v6827
      %8876 = vst [vmem:[%s123 + $0x1178] sm:$0xff] %v6828
      %8877 = vst [vmem:[%s123 + $0x1180] sm:$0xff] %v6829
      %8878 = vst [vmem:[%s123 + $0x1188] sm:$0xff] %v6830
      %8879 = vst [vmem:[%s123 + $0x1190] sm:$0xff] %v6831
      %8880 = vst [vmem:[%s123 + $0x1198] sm:$0xff] %v6832
      %8881 = vst [vmem:[%s123 + $0x11a0] sm:$0xff] %v6833
      %8882 = vst [vmem:[%s123 + $0x11a8] sm:$0xff] %v6834
      %8883 = vst [vmem:[%s123 + $0x11b0] sm:$0xff] %v6835
      %8884 = vst [vmem:[%s123 + $0x11b8] sm:$0xff] %v6836
      %8885 = vst [vmem:[%s123 + $0x11c0] sm:$0xff] %v6837
      %8886 = vst [vmem:[%s123 + $0x11c8] sm:$0xff] %v6838
      %8887 = vst [vmem:[%s123 + $0x11d0] sm:$0xff] %v6839
      %8888 = vst [vmem:[%s123 + $0x11d8] sm:$0xff] %v6840
      %8889 = vst [vmem:[%s123 + $0x11e0] sm:$0xff] %v6841
      %8890 = vst [vmem:[%s123 + $0x11e8] sm:$0xff] %v6842
      %8891 = vst [vmem:[%s123 + $0x11f0] sm:$0xff] %v6843
      %8892 = vst [vmem:[%s123 + $0x11f8] sm:$0xff] %v6844
      %8893 = vst [vmem:[%s123 + $0x1200] sm:$0xff] %v6845
      %8894 = vst [vmem:[%s123 + $0x1208] sm:$0xff] %v6846
      %8895 = vst [vmem:[%s123 + $0x1210] sm:$0xff] %v6847
      %8896 = vst [vmem:[%s123 + $0x1218] sm:$0xff] %v6848
      %8897 = vst [vmem:[%s123 + $0x1220] sm:$0xff] %v6849
      %8898 = vst [vmem:[%s123 + $0x1228] sm:$0xff] %v6850
      %8899 = vst [vmem:[%s123 + $0x1230] sm:$0xff] %v6851
      %8900 = vst [vmem:[%s123 + $0x1238] sm:$0xff] %v6852
      %8901 = vst [vmem:[%s123 + $0x1240] sm:$0xff] %v6853
      %8902 = vst [vmem:[%s123 + $0x1248] sm:$0xff] %v6854
      %8903 = vst [vmem:[%s123 + $0x1250] sm:$0xff] %v6855
      %8904 = vst [vmem:[%s123 + $0x1258] sm:$0xff] %v6856
      %8905 = vst [vmem:[%s123 + $0x1260] sm:$0xff] %v6857
      %8906 = vst [vmem:[%s123 + $0x1268] sm:$0xff] %v6858
      %8907 = vst [vmem:[%s123 + $0x1270] sm:$0xff] %v6859
      %8908 = vst [vmem:[%s123 + $0x1278] sm:$0xff] %v6860
      %8909 = vst [vmem:[%s123 + $0x1280] sm:$0xff] %v6861
      %8910 = vst [vmem:[%s123 + $0x1288] sm:$0xff] %v6862
      %8911 = vst [vmem:[%s123 + $0x1290] sm:$0xff] %v6863
      %8912 = vst [vmem:[%s123 + $0x1298] sm:$0xff] %v6864
      %8913 = vst [vmem:[%s123 + $0x12a0] sm:$0xff] %v6865
      %8914 = vst [vmem:[%s123 + $0x12a8] sm:$0xff] %v6866
      %8915 = vst [vmem:[%s123 + $0x12b0] sm:$0xff] %v6867
      %8916 = vst [vmem:[%s123 + $0x12b8] sm:$0xff] %v6868
      %8917 = vst [vmem:[%s123 + $0x12c0] sm:$0xff] %v6869
      %8918 = vst [vmem:[%s123 + $0x12c8] sm:$0xff] %v6870
      %8919 = vst [vmem:[%s123 + $0x12d0] sm:$0xff] %v6871
      %8920 = vst [vmem:[%s123 + $0x12d8] sm:$0xff] %v6872
      %8921 = vst [vmem:[%s123 + $0x12e0] sm:$0xff] %v6873
      %8922 = vst [vmem:[%s123 + $0x12e8] sm:$0xff] %v6874
      %8923 = vst [vmem:[%s123 + $0x12f0] sm:$0xff] %v6875
      %8924 = vst [vmem:[%s123 + $0x12f8] sm:$0xff] %v6876
      %8925 = vst [vmem:[%s123 + $0x1300] sm:$0xff] %v6877
      %8926 = vst [vmem:[%s123 + $0x1308] sm:$0xff] %v6878
      %8927 = vst [vmem:[%s123 + $0x1310] sm:$0xff] %v6879
      %8928 = vst [vmem:[%s123 + $0x1318] sm:$0xff] %v6880
      %8929 = vst [vmem:[%s123 + $0x1320] sm:$0xff] %v6881
      %8930 = vst [vmem:[%s123 + $0x1328] sm:$0xff] %v6882
      %8931 = vst [vmem:[%s123 + $0x1330] sm:$0xff] %v6883
      %8932 = vst [vmem:[%s123 + $0x1338] sm:$0xff] %v6884
      %8933 = vst [vmem:[%s123 + $0x1340] sm:$0xff] %v6885
      %8934 = vst [vmem:[%s123 + $0x1348] sm:$0xff] %v6886
      %8935 = vst [vmem:[%s123 + $0x1350] sm:$0xff] %v6887
      %8936 = vst [vmem:[%s123 + $0x1358] sm:$0xff] %v6888
      %8937 = vst [vmem:[%s123 + $0x1360] sm:$0xff] %v6889
      %8938 = vst [vmem:[%s123 + $0x1368] sm:$0xff] %v6890
      %8939 = vst [vmem:[%s123 + $0x1370] sm:$0xff] %v6891
      %8940 = vst [vmem:[%s123 + $0x1378] sm:$0xff] %v6892
      %8941 = vst [vmem:[%s123 + $0x1380] sm:$0xff] %v6893
      %8942 = vst [vmem:[%s123 + $0x1388] sm:$0xff] %v6894
      %8943 = vst [vmem:[%s123 + $0x1390] sm:$0xff] %v6895
      %8944 = vst [vmem:[%s123 + $0x1398] sm:$0xff] %v6896
      %8945 = vst [vmem:[%s123 + $0x13a0] sm:$0xff] %v6897
      %8946 = vst [vmem:[%s123 + $0x13a8] sm:$0xff] %v6898
      %8947 = vst [vmem:[%s123 + $0x13b0] sm:$0xff] %v6899
      %8948 = vst [vmem:[%s123 + $0x13b8] sm:$0xff] %v6900
      %8949 = vst [vmem:[%s123 + $0x13c0] sm:$0xff] %v6901
      %8950 = vst [vmem:[%s123 + $0x13c8] sm:$0xff] %v6902
      %8951 = vst [vmem:[%s123 + $0x13d0] sm:$0xff] %v6903
      %8952 = vst [vmem:[%s123 + $0x13d8] sm:$0xff] %v6904
      %8953 = vst [vmem:[%s123 + $0x13e0] sm:$0xff] %v6905
      %8954 = vst [vmem:[%s123 + $0x13e8] sm:$0xff] %v6906
      %8955 = vst [vmem:[%s123 + $0x13f0] sm:$0xff] %v6907
      %8956 = vst [vmem:[%s123 + $0x13f8] sm:$0xff] %v6908
      %8957 = vst [vmem:[%s123 + $0x1400] sm:$0xff] %v6909
      %8958 = vst [vmem:[%s123 + $0x1408] sm:$0xff] %v6910
      %8959 = vst [vmem:[%s123 + $0x1410] sm:$0xff] %v6911
      %8960 = vst [vmem:[%s123 + $0x1418] sm:$0xff] %v6912
      %8961 = vst [vmem:[%s123 + $0x1420] sm:$0xff] %v6913
      %8962 = vst [vmem:[%s123 + $0x1428] sm:$0xff] %v6914
      %8963 = vst [vmem:[%s123 + $0x1430] sm:$0xff] %v6915
      %8964 = vst [vmem:[%s123 + $0x1438] sm:$0xff] %v6916
      %8965 = vst [vmem:[%s123 + $0x1440] sm:$0xff] %v6917
      %8966 = vst [vmem:[%s123 + $0x1448] sm:$0xff] %v6918
      %8967 = vst [vmem:[%s123 + $0x1450] sm:$0xff] %v6919
      %8968 = vst [vmem:[%s123 + $0x1458] sm:$0xff] %v6920
      %8969 = vst [vmem:[%s123 + $0x1460] sm:$0xff] %v6921
      %8970 = vst [vmem:[%s123 + $0x1468] sm:$0xff] %v6922
      %8971 = vst [vmem:[%s123 + $0x1470] sm:$0xff] %v6923
      %8972 = vst [vmem:[%s123 + $0x1478] sm:$0xff] %v6924
      %8973 = vst [vmem:[%s123 + $0x1480] sm:$0xff] %v6925
      %8974 = vst [vmem:[%s123 + $0x1488] sm:$0xff] %v6926
      %8975 = vst [vmem:[%s123 + $0x1490] sm:$0xff] %v6927
      %8976 = vst [vmem:[%s123 + $0x1498] sm:$0xff] %v6928
      %8977 = vst [vmem:[%s123 + $0x14a0] sm:$0xff] %v6929
      %8978 = vst [vmem:[%s123 + $0x14a8] sm:$0xff] %v6930
      %8979 = vst [vmem:[%s123 + $0x14b0] sm:$0xff] %v6931
      %8980 = vst [vmem:[%s123 + $0x14b8] sm:$0xff] %v6932
      %8981 = vst [vmem:[%s123 + $0x14c0] sm:$0xff] %v6933
      %8982 = vst [vmem:[%s123 + $0x14c8] sm:$0xff] %v6934
      %8983 = vst [vmem:[%s123 + $0x14d0] sm:$0xff] %v6935
      %8984 = vst [vmem:[%s123 + $0x14d8] sm:$0xff] %v6936
      %8985 = vst [vmem:[%s123 + $0x14e0] sm:$0xff] %v6937
      %8986 = vst [vmem:[%s123 + $0x14e8] sm:$0xff] %v6938
      %8987 = vst [vmem:[%s123 + $0x14f0] sm:$0xff] %v6939
      %8988 = vst [vmem:[%s123 + $0x14f8] sm:$0xff] %v6940
      %8989 = vst [vmem:[%s123 + $0x1500] sm:$0xff] %v6941
      %8990 = vst [vmem:[%s123 + $0x1508] sm:$0xff] %v6942
      %8991 = vst [vmem:[%s123 + $0x1510] sm:$0xff] %v6943
      %8992 = vst [vmem:[%s123 + $0x1518] sm:$0xff] %v6944
      %8993 = vst [vmem:[%s123 + $0x1520] sm:$0xff] %v6945
      %8994 = vst [vmem:[%s123 + $0x1528] sm:$0xff] %v6946
      %8995 = vst [vmem:[%s123 + $0x1530] sm:$0xff] %v6947
      %8996 = vst [vmem:[%s123 + $0x1538] sm:$0xff] %v6948
      %8997 = vst [vmem:[%s123 + $0x1540] sm:$0xff] %v6949
      %8998 = vst [vmem:[%s123 + $0x1548] sm:$0xff] %v6950
      %8999 = vst [vmem:[%s123 + $0x1550] sm:$0xff] %v6951
      %9000 = vst [vmem:[%s123 + $0x1558] sm:$0xff] %v6952
      %9001 = vst [vmem:[%s123 + $0x1560] sm:$0xff] %v6953
      %9002 = vst [vmem:[%s123 + $0x1568] sm:$0xff] %v6954
      %9003 = vst [vmem:[%s123 + $0x1570] sm:$0xff] %v6955
      %9004 = vst [vmem:[%s123 + $0x1578] sm:$0xff] %v6956
      %9005 = vst [vmem:[%s123 + $0x1580] sm:$0xff] %v6957
      %9006 = vst [vmem:[%s123 + $0x1588] sm:$0xff] %v6958
      %9007 = vst [vmem:[%s123 + $0x1590] sm:$0xff] %v6959
      %9008 = vst [vmem:[%s123 + $0x1598] sm:$0xff] %v6960
      %9009 = vst [vmem:[%s123 + $0x15a0] sm:$0xff] %v6961
      %9010 = vst [vmem:[%s123 + $0x15a8] sm:$0xff] %v6962
      %9011 = vst [vmem:[%s123 + $0x15b0] sm:$0xff] %v6963
      %9012 = vst [vmem:[%s123 + $0x15b8] sm:$0xff] %v6964
      %9013 = vst [vmem:[%s123 + $0x15c0] sm:$0xff] %v6965
      %9014 = vst [vmem:[%s123 + $0x15c8] sm:$0xff] %v6966
      %9015 = vst [vmem:[%s123 + $0x15d0] sm:$0xff] %v6967
      %9016 = vst [vmem:[%s123 + $0x15d8] sm:$0xff] %v6968
      %9017 = vst [vmem:[%s123 + $0x15e0] sm:$0xff] %v6969
      %9018 = vst [vmem:[%s123 + $0x15e8] sm:$0xff] %v6970
      %9019 = vst [vmem:[%s123 + $0x15f0] sm:$0xff] %v6971
      %9020 = vst [vmem:[%s123 + $0x15f8] sm:$0xff] %v6972
      %9021 = vst [vmem:[%s123 + $0x1600] sm:$0xff] %v6973
      %9022 = vst [vmem:[%s123 + $0x1608] sm:$0xff] %v6974
      %9023 = vst [vmem:[%s123 + $0x1610] sm:$0xff] %v6975
      %9024 = vst [vmem:[%s123 + $0x1618] sm:$0xff] %v6976
      %9025 = vst [vmem:[%s123 + $0x1620] sm:$0xff] %v6977
      %9026 = vst [vmem:[%s123 + $0x1628] sm:$0xff] %v6978
      %9027 = vst [vmem:[%s123 + $0x1630] sm:$0xff] %v6979
      %9028 = vst [vmem:[%s123 + $0x1638] sm:$0xff] %v6980
      %9029 = vst [vmem:[%s123 + $0x1640] sm:$0xff] %v6981
      %9030 = vst [vmem:[%s123 + $0x1648] sm:$0xff] %v6982
      %9031 = vst [vmem:[%s123 + $0x1650] sm:$0xff] %v6983
      %9032 = vst [vmem:[%s123 + $0x1658] sm:$0xff] %v6984
      %9033 = vst [vmem:[%s123 + $0x1660] sm:$0xff] %v6985
      %9034 = vst [vmem:[%s123 + $0x1668] sm:$0xff] %v6986
      %9035 = vst [vmem:[%s123 + $0x1670] sm:$0xff] %v6987
      %9036 = vst [vmem:[%s123 + $0x1678] sm:$0xff] %v6988
      %9037 = vst [vmem:[%s123 + $0x1680] sm:$0xff] %v6989
      %9038 = vst [vmem:[%s123 + $0x1688] sm:$0xff] %v6990
      %9039 = vst [vmem:[%s123 + $0x1690] sm:$0xff] %v6991
      %9040 = vst [vmem:[%s123 + $0x1698] sm:$0xff] %v6992
      %9041 = vst [vmem:[%s123 + $0x16a0] sm:$0xff] %v6993
      %9042 = vst [vmem:[%s123 + $0x16a8] sm:$0xff] %v6994
      %9043 = vst [vmem:[%s123 + $0x16b0] sm:$0xff] %v6995
      %9044 = vst [vmem:[%s123 + $0x16b8] sm:$0xff] %v6996
      %9045 = vst [vmem:[%s123 + $0x16c0] sm:$0xff] %v6997
      %9046 = vst [vmem:[%s123 + $0x16c8] sm:$0xff] %v6998
      %9047 = vst [vmem:[%s123 + $0x16d0] sm:$0xff] %v6999
      %9048 = vst [vmem:[%s123 + $0x16d8] sm:$0xff] %v7000
      %9049 = vst [vmem:[%s123 + $0x16e0] sm:$0xff] %v7001
      %9050 = vst [vmem:[%s123 + $0x16e8] sm:$0xff] %v7002
      %9051 = vst [vmem:[%s123 + $0x16f0] sm:$0xff] %v7003
      %9052 = vst [vmem:[%s123 + $0x16f8] sm:$0xff] %v7004
      %9053 = vst [vmem:[%s123 + $0x1700] sm:$0xff] %v7005
      %9054 = vst [vmem:[%s123 + $0x1708] sm:$0xff] %v7006
      %9055 = vst [vmem:[%s123 + $0x1710] sm:$0xff] %v7007
      %9056 = vst [vmem:[%s123 + $0x1718] sm:$0xff] %v7008
      %9057 = vst [vmem:[%s123 + $0x1720] sm:$0xff] %v7009
      %9058 = vst [vmem:[%s123 + $0x1728] sm:$0xff] %v7010
      %9059 = vst [vmem:[%s123 + $0x1730] sm:$0xff] %v7011
      %9060 = vst [vmem:[%s123 + $0x1738] sm:$0xff] %v7012
      %9061 = vst [vmem:[%s123 + $0x1740] sm:$0xff] %v7013
      %9062 = vst [vmem:[%s123 + $0x1748] sm:$0xff] %v7014
      %9063 = vst [vmem:[%s123 + $0x1750] sm:$0xff] %v7015
      %9064 = vst [vmem:[%s123 + $0x1758] sm:$0xff] %v7016
      %9065 = vst [vmem:[%s123 + $0x1760] sm:$0xff] %v7017
      %9066 = vst [vmem:[%s123 + $0x1768] sm:$0xff] %v7018
      %9067 = vst [vmem:[%s123 + $0x1770] sm:$0xff] %v7019
      %9068 = vst [vmem:[%s123 + $0x1778] sm:$0xff] %v7020
      %9069 = vst [vmem:[%s123 + $0x1780] sm:$0xff] %v7021
      %9070 = vst [vmem:[%s123 + $0x1788] sm:$0xff] %v7022
      %9071 = vst [vmem:[%s123 + $0x1790] sm:$0xff] %v7023
      %9072 = vst [vmem:[%s123 + $0x1798] sm:$0xff] %v7024
      %9073 = vst [vmem:[%s123 + $0x17a0] sm:$0xff] %v7025
      %9074 = vst [vmem:[%s123 + $0x17a8] sm:$0xff] %v7026
      %9075 = vst [vmem:[%s123 + $0x17b0] sm:$0xff] %v7027
      %9076 = vst [vmem:[%s123 + $0x17b8] sm:$0xff] %v7028
      %9077 = vst [vmem:[%s123 + $0x17c0] sm:$0xff] %v7029
      %9078 = vst [vmem:[%s123 + $0x17c8] sm:$0xff] %v7030
      %9079 = vst [vmem:[%s123 + $0x17d0] sm:$0xff] %v7031
      %9080 = vst [vmem:[%s123 + $0x17d8] sm:$0xff] %v7032
      %9081 = vst [vmem:[%s123 + $0x17e0] sm:$0xff] %v7033
      %9082 = vst [vmem:[%s123 + $0x17e8] sm:$0xff] %v7034
      %9083 = vst [vmem:[%s123 + $0x17f0] sm:$0xff] %v7035
      %9084 = vst [vmem:[%s123 + $0x17f8] sm:$0xff] %v7036
      %9085 = vst [vmem:[%s123 + $0x1800] sm:$0xff] %v7037
      %9086 = vst [vmem:[%s123 + $0x1808] sm:$0xff] %v7038
      %9087 = vst [vmem:[%s123 + $0x1810] sm:$0xff] %v7039
      %9088 = vst [vmem:[%s123 + $0x1818] sm:$0xff] %v7040
      %9089 = vst [vmem:[%s123 + $0x1820] sm:$0xff] %v7041
      %9090 = vst [vmem:[%s123 + $0x1828] sm:$0xff] %v7042
      %9091 = vst [vmem:[%s123 + $0x1830] sm:$0xff] %v7043
      %9092 = vst [vmem:[%s123 + $0x1838] sm:$0xff] %v7044
      %9093 = vst [vmem:[%s123 + $0x1840] sm:$0xff] %v7045
      %9094 = vst [vmem:[%s123 + $0x1848] sm:$0xff] %v7046
      %9095 = vst [vmem:[%s123 + $0x1850] sm:$0xff] %v7047
      %9096 = vst [vmem:[%s123 + $0x1858] sm:$0xff] %v7048
      %9097 = vst [vmem:[%s123 + $0x1860] sm:$0xff] %v7049
      %9098 = vst [vmem:[%s123 + $0x1868] sm:$0xff] %v7050
      %9099 = vst [vmem:[%s123 + $0x1870] sm:$0xff] %v7051
      %9100 = vst [vmem:[%s123 + $0x1878] sm:$0xff] %v7052
      %9101 = vst [vmem:[%s123 + $0x1880] sm:$0xff] %v7053
      %9102 = vst [vmem:[%s123 + $0x1888] sm:$0xff] %v7054
      %9103 = vst [vmem:[%s123 + $0x1890] sm:$0xff] %v7055
      %9104 = vst [vmem:[%s123 + $0x1898] sm:$0xff] %v7056
      %9105 = vst [vmem:[%s123 + $0x18a0] sm:$0xff] %v7057
      %9106 = vst [vmem:[%s123 + $0x18a8] sm:$0xff] %v7058
      %9107 = vst [vmem:[%s123 + $0x18b0] sm:$0xff] %v7059
      %9108 = vst [vmem:[%s123 + $0x18b8] sm:$0xff] %v7060
      %9109 = vst [vmem:[%s123 + $0x18c0] sm:$0xff] %v7061
      %9110 = vst [vmem:[%s123 + $0x18c8] sm:$0xff] %v7062
      %9111 = vst [vmem:[%s123 + $0x18d0] sm:$0xff] %v7063
      %9112 = vst [vmem:[%s123 + $0x18d8] sm:$0xff] %v7064
      %9113 = vst [vmem:[%s123 + $0x18e0] sm:$0xff] %v7065
      %9114 = vst [vmem:[%s123 + $0x18e8] sm:$0xff] %v7066
      %9115 = vst [vmem:[%s123 + $0x18f0] sm:$0xff] %v7067
      %9116 = vst [vmem:[%s123 + $0x18f8] sm:$0xff] %v7068
      %9117 = vst [vmem:[%s123 + $0x1900] sm:$0xff] %v7069
      %9118 = vst [vmem:[%s123 + $0x1908] sm:$0xff] %v7070
      %9119 = vst [vmem:[%s123 + $0x1910] sm:$0xff] %v7071
      %9120 = vst [vmem:[%s123 + $0x1918] sm:$0xff] %v7072
      %9121 = vst [vmem:[%s123 + $0x1920] sm:$0xff] %v7073
      %9122 = vst [vmem:[%s123 + $0x1928] sm:$0xff] %v7074
      %9123 = vst [vmem:[%s123 + $0x1930] sm:$0xff] %v7075
      %9124 = vst [vmem:[%s123 + $0x1938] sm:$0xff] %v7076
      %9125 = vst [vmem:[%s123 + $0x1940] sm:$0xff] %v7077
      %9126 = vst [vmem:[%s123 + $0x1948] sm:$0xff] %v7078
      %9127 = vst [vmem:[%s123 + $0x1950] sm:$0xff] %v7079
      %9128 = vst [vmem:[%s123 + $0x1958] sm:$0xff] %v7080
      %9129 = vst [vmem:[%s123 + $0x1960] sm:$0xff] %v7081
      %9130 = vst [vmem:[%s123 + $0x1968] sm:$0xff] %v7082
      %9131 = vst [vmem:[%s123 + $0x1970] sm:$0xff] %v7083
      %9132 = vst [vmem:[%s123 + $0x1978] sm:$0xff] %v7084
      %9133 = vst [vmem:[%s123 + $0x1980] sm:$0xff] %v7085
      %9134 = vst [vmem:[%s123 + $0x1988] sm:$0xff] %v7086
      %9135 = vst [vmem:[%s123 + $0x1990] sm:$0xff] %v7087
      %9136 = vst [vmem:[%s123 + $0x1998] sm:$0xff] %v7088
      %9137 = vst [vmem:[%s123 + $0x19a0] sm:$0xff] %v7089
      %9138 = vst [vmem:[%s123 + $0x19a8] sm:$0xff] %v7090
      %9139 = vst [vmem:[%s123 + $0x19b0] sm:$0xff] %v7091
      %9140 = vst [vmem:[%s123 + $0x19b8] sm:$0xff] %v7092
      %9141 = vst [vmem:[%s123 + $0x19c0] sm:$0xff] %v7093
      %9142 = vst [vmem:[%s123 + $0x19c8] sm:$0xff] %v7094
      %9143 = vst [vmem:[%s123 + $0x19d0] sm:$0xff] %v7095
      %9144 = vst [vmem:[%s123 + $0x19d8] sm:$0xff] %v7096
      %9145 = vst [vmem:[%s123 + $0x19e0] sm:$0xff] %v7097
      %9146 = vst [vmem:[%s123 + $0x19e8] sm:$0xff] %v7098
      %9147 = vst [vmem:[%s123 + $0x19f0] sm:$0xff] %v7099
      %9148 = vst [vmem:[%s123 + $0x19f8] sm:$0xff] %v7100
      %9149 = vst [vmem:[%s123 + $0x1a00] sm:$0xff] %v7101
      %9150 = vst [vmem:[%s123 + $0x1a08] sm:$0xff] %v7102
      %9151 = vst [vmem:[%s123 + $0x1a10] sm:$0xff] %v7103
      %9152 = vst [vmem:[%s123 + $0x1a18] sm:$0xff] %v7104
      %9153 = vst [vmem:[%s123 + $0x1a20] sm:$0xff] %v7105
      %9154 = vst [vmem:[%s123 + $0x1a28] sm:$0xff] %v7106
      %9155 = vst [vmem:[%s123 + $0x1a30] sm:$0xff] %v7107
      %9156 = vst [vmem:[%s123 + $0x1a38] sm:$0xff] %v7108
      %9157 = vst [vmem:[%s123 + $0x1a40] sm:$0xff] %v7109
      %9158 = vst [vmem:[%s123 + $0x1a48] sm:$0xff] %v7110
      %9159 = vst [vmem:[%s123 + $0x1a50] sm:$0xff] %v7111
      %9160 = vst [vmem:[%s123 + $0x1a58] sm:$0xff] %v7112
      %9161 = vst [vmem:[%s123 + $0x1a60] sm:$0xff] %v7113
      %9162 = vst [vmem:[%s123 + $0x1a68] sm:$0xff] %v7114
      %9163 = vst [vmem:[%s123 + $0x1a70] sm:$0xff] %v7115
      %9164 = vst [vmem:[%s123 + $0x1a78] sm:$0xff] %v7116
      %9165 = vst [vmem:[%s123 + $0x1a80] sm:$0xff] %v7117
      %9166 = vst [vmem:[%s123 + $0x1a88] sm:$0xff] %v7118
      %9167 = vst [vmem:[%s123 + $0x1a90] sm:$0xff] %v7119
      %9168 = vst [vmem:[%s123 + $0x1a98] sm:$0xff] %v7120
      %9169 = vst [vmem:[%s123 + $0x1aa0] sm:$0xff] %v7121
      %9170 = vst [vmem:[%s123 + $0x1aa8] sm:$0xff] %v7122
      %9171 = vst [vmem:[%s123 + $0x1ab0] sm:$0xff] %v7123
      %9172 = vst [vmem:[%s123 + $0x1ab8] sm:$0xff] %v7124
      %9173 = vst [vmem:[%s123 + $0x1ac0] sm:$0xff] %v7125
      %9174 = vst [vmem:[%s123 + $0x1ac8] sm:$0xff] %v7126
      %9175 = vst [vmem:[%s123 + $0x1ad0] sm:$0xff] %v7127
      %9176 = vst [vmem:[%s123 + $0x1ad8] sm:$0xff] %v7128
      %9177 = vst [vmem:[%s123 + $0x1ae0] sm:$0xff] %v7129
      %9178 = vst [vmem:[%s123 + $0x1ae8] sm:$0xff] %v7130
      %9179 = vst [vmem:[%s123 + $0x1af0] sm:$0xff] %v7131
      %9180 = vst [vmem:[%s123 + $0x1af8] sm:$0xff] %v7132
      %9181 = vst [vmem:[%s123 + $0x1b00] sm:$0xff] %v7133
      %9182 = vst [vmem:[%s123 + $0x1b08] sm:$0xff] %v7134
      %9183 = vst [vmem:[%s123 + $0x1b10] sm:$0xff] %v7135
      %9184 = vst [vmem:[%s123 + $0x1b18] sm:$0xff] %v7136
      %9185 = vst [vmem:[%s123 + $0x1b20] sm:$0xff] %v7137
      %9186 = vst [vmem:[%s123 + $0x1b28] sm:$0xff] %v7138
      %9187 = vst [vmem:[%s123 + $0x1b30] sm:$0xff] %v7139
      %9188 = vst [vmem:[%s123 + $0x1b38] sm:$0xff] %v7140
      %9189 = vst [vmem:[%s123 + $0x1b40] sm:$0xff] %v7141
      %9190 = vst [vmem:[%s123 + $0x1b48] sm:$0xff] %v7142
      %9191 = vst [vmem:[%s123 + $0x1b50] sm:$0xff] %v7143
      %9192 = vst [vmem:[%s123 + $0x1b58] sm:$0xff] %v7144
      %9193 = vst [vmem:[%s123 + $0x1b60] sm:$0xff] %v7145
      %9194 = vst [vmem:[%s123 + $0x1b68] sm:$0xff] %v7146
      %9195 = vst [vmem:[%s123 + $0x1b70] sm:$0xff] %v7147
      %9196 = vst [vmem:[%s123 + $0x1b78] sm:$0xff] %v7148
      %9197 = vst [vmem:[%s123 + $0x1b80] sm:$0xff] %v7149
      %9198 = vst [vmem:[%s123 + $0x1b88] sm:$0xff] %v7150
      %9199 = vst [vmem:[%s123 + $0x1b90] sm:$0xff] %v7151
      %9200 = vst [vmem:[%s123 + $0x1b98] sm:$0xff] %v7152
      %9201 = vst [vmem:[%s123 + $0x1ba0] sm:$0xff] %v7153
      %9202 = vst [vmem:[%s123 + $0x1ba8] sm:$0xff] %v7154
      %9203 = vst [vmem:[%s123 + $0x1bb0] sm:$0xff] %v7155
      %9204 = vst [vmem:[%s123 + $0x1bb8] sm:$0xff] %v7156
      %9205 = vst [vmem:[%s123 + $0x1bc0] sm:$0xff] %v7157
      %9206 = vst [vmem:[%s123 + $0x1bc8] sm:$0xff] %v7158
      %9207 = vst [vmem:[%s123 + $0x1bd0] sm:$0xff] %v7159
      %9208 = vst [vmem:[%s123 + $0x1bd8] sm:$0xff] %v7160
      %9209 = vst [vmem:[%s123 + $0x1be0] sm:$0xff] %v7161
      %9210 = vst [vmem:[%s123 + $0x1be8] sm:$0xff] %v7162
      %9211 = vst [vmem:[%s123 + $0x1bf0] sm:$0xff] %v7163
      %9212 = vst [vmem:[%s123 + $0x1bf8] sm:$0xff] %v7164
      %9213 = vst [vmem:[%s123 + $0x1c00] sm:$0xff] %v7165
      %9214 = vst [vmem:[%s123 + $0x1c08] sm:$0xff] %v7166
      %9215 = vst [vmem:[%s123 + $0x1c10] sm:$0xff] %v7167
      %9216 = vst [vmem:[%s123 + $0x1c18] sm:$0xff] %v7168
      %9217 = vst [vmem:[%s123 + $0x1c20] sm:$0xff] %v7169
      %9218 = vst [vmem:[%s123 + $0x1c28] sm:$0xff] %v7170
      %9219 = vst [vmem:[%s123 + $0x1c30] sm:$0xff] %v7171
      %9220 = vst [vmem:[%s123 + $0x1c38] sm:$0xff] %v7172
      %9221 = vst [vmem:[%s123 + $0x1c40] sm:$0xff] %v7173
      %9222 = vst [vmem:[%s123 + $0x1c48] sm:$0xff] %v7174
      %9223 = vst [vmem:[%s123 + $0x1c50] sm:$0xff] %v7175
      %9224 = vst [vmem:[%s123 + $0x1c58] sm:$0xff] %v7176
      %9225 = vst [vmem:[%s123 + $0x1c60] sm:$0xff] %v7177
      %9226 = vst [vmem:[%s123 + $0x1c68] sm:$0xff] %v7178
      %9227 = vst [vmem:[%s123 + $0x1c70] sm:$0xff] %v7179
      %9228 = vst [vmem:[%s123 + $0x1c78] sm:$0xff] %v7180
      %9229 = vst [vmem:[%s123 + $0x1c80] sm:$0xff] %v7181
      %9230 = vst [vmem:[%s123 + $0x1c88] sm:$0xff] %v7182
      %9231 = vst [vmem:[%s123 + $0x1c90] sm:$0xff] %v7183
      %9232 = vst [vmem:[%s123 + $0x1c98] sm:$0xff] %v7184
      %9233 = vst [vmem:[%s123 + $0x1ca0] sm:$0xff] %v7185
      %9234 = vst [vmem:[%s123 + $0x1ca8] sm:$0xff] %v7186
      %9235 = vst [vmem:[%s123 + $0x1cb0] sm:$0xff] %v7187
      %9236 = vst [vmem:[%s123 + $0x1cb8] sm:$0xff] %v7188
      %9237 = vst [vmem:[%s123 + $0x1cc0] sm:$0xff] %v7189
      %9238 = vst [vmem:[%s123 + $0x1cc8] sm:$0xff] %v7190
      %9239 = vst [vmem:[%s123 + $0x1cd0] sm:$0xff] %v7191
      %9240 = vst [vmem:[%s123 + $0x1cd8] sm:$0xff] %v7192
      %9241 = vst [vmem:[%s123 + $0x1ce0] sm:$0xff] %v7193
      %9242 = vst [vmem:[%s123 + $0x1ce8] sm:$0xff] %v7194
      %9243 = vst [vmem:[%s123 + $0x1cf0] sm:$0xff] %v7195
      %9244 = vst [vmem:[%s123 + $0x1cf8] sm:$0xff] %v7196
      %9245 = vst [vmem:[%s123 + $0x1d00] sm:$0xff] %v7197
      %9246 = vst [vmem:[%s123 + $0x1d08] sm:$0xff] %v7198
      %9247 = vst [vmem:[%s123 + $0x1d10] sm:$0xff] %v7199
      %9248 = vst [vmem:[%s123 + $0x1d18] sm:$0xff] %v7200
      %9249 = vst [vmem:[%s123 + $0x1d20] sm:$0xff] %v7201
      %9250 = vst [vmem:[%s123 + $0x1d28] sm:$0xff] %v7202
      %9251 = vst [vmem:[%s123 + $0x1d30] sm:$0xff] %v7203
      %9252 = vst [vmem:[%s123 + $0x1d38] sm:$0xff] %v7204
      %9253 = vst [vmem:[%s123 + $0x1d40] sm:$0xff] %v7205
      %9254 = vst [vmem:[%s123 + $0x1d48] sm:$0xff] %v7206
      %9255 = vst [vmem:[%s123 + $0x1d50] sm:$0xff] %v7207
      %9256 = vst [vmem:[%s123 + $0x1d58] sm:$0xff] %v7208
      %9257 = vst [vmem:[%s123 + $0x1d60] sm:$0xff] %v7209
      %9258 = vst [vmem:[%s123 + $0x1d68] sm:$0xff] %v7210
      %9259 = vst [vmem:[%s123 + $0x1d70] sm:$0xff] %v7211
      %9260 = vst [vmem:[%s123 + $0x1d78] sm:$0xff] %v7212
      %9261 = vst [vmem:[%s123 + $0x1d80] sm:$0xff] %v7213
      %9262 = vst [vmem:[%s123 + $0x1d88] sm:$0xff] %v7214
      %9263 = vst [vmem:[%s123 + $0x1d90] sm:$0xff] %v7215
      %9264 = vst [vmem:[%s123 + $0x1d98] sm:$0xff] %v7216
      %9265 = vst [vmem:[%s123 + $0x1da0] sm:$0xff] %v7217
      %9266 = vst [vmem:[%s123 + $0x1da8] sm:$0xff] %v7218
      %9267 = vst [vmem:[%s123 + $0x1db0] sm:$0xff] %v7219
      %9268 = vst [vmem:[%s123 + $0x1db8] sm:$0xff] %v7220
      %9269 = vst [vmem:[%s123 + $0x1dc0] sm:$0xff] %v7221
      %9270 = vst [vmem:[%s123 + $0x1dc8] sm:$0xff] %v7222
      %9271 = vst [vmem:[%s123 + $0x1dd0] sm:$0xff] %v7223
      %9272 = vst [vmem:[%s123 + $0x1dd8] sm:$0xff] %v7224
      %9273 = vst [vmem:[%s123 + $0x1de0] sm:$0xff] %v7225
      %9274 = vst [vmem:[%s123 + $0x1de8] sm:$0xff] %v7226
      %9275 = vst [vmem:[%s123 + $0x1df0] sm:$0xff] %v7227
      %9276 = vst [vmem:[%s123 + $0x1df8] sm:$0xff] %v7228
      %9277 = vst [vmem:[%s123 + $0x1e00] sm:$0xff] %v7229
      %9278 = vst [vmem:[%s123 + $0x1e08] sm:$0xff] %v7230
      %9279 = vst [vmem:[%s123 + $0x1e10] sm:$0xff] %v7231
      %9280 = vst [vmem:[%s123 + $0x1e18] sm:$0xff] %v7232
      %9281 = vst [vmem:[%s123 + $0x1e20] sm:$0xff] %v7233
      %9282 = vst [vmem:[%s123 + $0x1e28] sm:$0xff] %v7234
      %9283 = vst [vmem:[%s123 + $0x1e30] sm:$0xff] %v7235
      %9284 = vst [vmem:[%s123 + $0x1e38] sm:$0xff] %v7236
      %9285 = vst [vmem:[%s123 + $0x1e40] sm:$0xff] %v7237
      %9286 = vst [vmem:[%s123 + $0x1e48] sm:$0xff] %v7238
      %9287 = vst [vmem:[%s123 + $0x1e50] sm:$0xff] %v7239
      %9288 = vst [vmem:[%s123 + $0x1e58] sm:$0xff] %v7240
      %9289 = vst [vmem:[%s123 + $0x1e60] sm:$0xff] %v7241
      %9290 = vst [vmem:[%s123 + $0x1e68] sm:$0xff] %v7242
      %9291 = vst [vmem:[%s123 + $0x1e70] sm:$0xff] %v7243
      %9292 = vst [vmem:[%s123 + $0x1e78] sm:$0xff] %v7244
      %9293 = vst [vmem:[%s123 + $0x1e80] sm:$0xff] %v7245
      %9294 = vst [vmem:[%s123 + $0x1e88] sm:$0xff] %v7246
      %9295 = vst [vmem:[%s123 + $0x1e90] sm:$0xff] %v7247
      %9296 = vst [vmem:[%s123 + $0x1e98] sm:$0xff] %v7248
      %9297 = vst [vmem:[%s123 + $0x1ea0] sm:$0xff] %v7249
      %9298 = vst [vmem:[%s123 + $0x1ea8] sm:$0xff] %v7250
      %9299 = vst [vmem:[%s123 + $0x1eb0] sm:$0xff] %v7251
      %9300 = vst [vmem:[%s123 + $0x1eb8] sm:$0xff] %v7252
      %9301 = vst [vmem:[%s123 + $0x1ec0] sm:$0xff] %v7253
      %9302 = vst [vmem:[%s123 + $0x1ec8] sm:$0xff] %v7254
      %9303 = vst [vmem:[%s123 + $0x1ed0] sm:$0xff] %v7255
      %9304 = vst [vmem:[%s123 + $0x1ed8] sm:$0xff] %v7256
      %9305 = vst [vmem:[%s123 + $0x1ee0] sm:$0xff] %v7257
      %9306 = vst [vmem:[%s123 + $0x1ee8] sm:$0xff] %v7258
      %9307 = vst [vmem:[%s123 + $0x1ef0] sm:$0xff] %v7259
      %9308 = vst [vmem:[%s123 + $0x1ef8] sm:$0xff] %v7260
      %9309 = vst [vmem:[%s123 + $0x1f00] sm:$0xff] %v7261
      %9310 = vst [vmem:[%s123 + $0x1f08] sm:$0xff] %v7262
      %9311 = vst [vmem:[%s123 + $0x1f10] sm:$0xff] %v7263
      %9312 = vst [vmem:[%s123 + $0x1f18] sm:$0xff] %v7264
      %9313 = vst [vmem:[%s123 + $0x1f20] sm:$0xff] %v7265
      %9314 = vst [vmem:[%s123 + $0x1f28] sm:$0xff] %v7266
      %9315 = vst [vmem:[%s123 + $0x1f30] sm:$0xff] %v7267
      %9316 = vst [vmem:[%s123 + $0x1f38] sm:$0xff] %v7268
      %9317 = vst [vmem:[%s123 + $0x1f40] sm:$0xff] %v7269
      %9318 = vst [vmem:[%s123 + $0x1f48] sm:$0xff] %v7270
      %9319 = vst [vmem:[%s123 + $0x1f50] sm:$0xff] %v7271
      %9320 = vst [vmem:[%s123 + $0x1f58] sm:$0xff] %v7272
      %9321 = vst [vmem:[%s123 + $0x1f60] sm:$0xff] %v7273
      %9322 = vst [vmem:[%s123 + $0x1f68] sm:$0xff] %v7274
      %9323 = vst [vmem:[%s123 + $0x1f70] sm:$0xff] %v7275
      %9324 = vst [vmem:[%s123 + $0x1f78] sm:$0xff] %v7276
      %9325 = vst [vmem:[%s123 + $0x1f80] sm:$0xff] %v7277
      %9326 = vst [vmem:[%s123 + $0x1f88] sm:$0xff] %v7278
      %9327 = vst [vmem:[%s123 + $0x1f90] sm:$0xff] %v7279
      %9328 = vst [vmem:[%s123 + $0x1f98] sm:$0xff] %v7280
      %9329 = vst [vmem:[%s123 + $0x1fa0] sm:$0xff] %v7281
      %9330 = vst [vmem:[%s123 + $0x1fa8] sm:$0xff] %v7282
      %9331 = vst [vmem:[%s123 + $0x1fb0] sm:$0xff] %v7283
      %9332 = vst [vmem:[%s123 + $0x1fb8] sm:$0xff] %v7284
      %9333 = vst [vmem:[%s123 + $0x1fc0] sm:$0xff] %v7285
      %9334 = vst [vmem:[%s123 + $0x1fc8] sm:$0xff] %v7286
      %9335 = vst [vmem:[%s123 + $0x1fd0] sm:$0xff] %v7287
      %9336 = vst [vmem:[%s123 + $0x1fd8] sm:$0xff] %v7288
      %9337 = vst [vmem:[%s123 + $0x1fe0] sm:$0xff] %v7289
      %9338 = vst [vmem:[%s123 + $0x1fe8] sm:$0xff] %v7290
      %9339 = vst [vmem:[%s123 + $0x1ff0] sm:$0xff] %v7291
      %9340 = vst [vmem:[%s123 + $0x1ff8] sm:$0xff] %v7292
      %s9341 = smul.u32 64, %s12
      %p9342 = scmp.lt.s32.totalorder %s9341, 127
      %s9343 = scalar_select %p9342, %s9341, 127
      %s9344 = smul.addr %s9343, 32
      %s9345 = smul.addr %s9344, 4
      %s9346 = scalar_lea.vmem %s1, %s9345
      // Predicated region
      $region25: #{f.1} parent=23 // pred_check
        %p9347 = pneg %p56
      $region26: #{f.1} parent=23 // pred_check_branch
        %9349 = sbr.rel (%p9347) target = $region28
      $region27: #{f.1} parent=23 // pred_region
        %s9350 = smul.u32 64, %s12
      $region28: #{f.1} parent=23 // pred_fallthru
        _
    $region24: #{f.1} parent=5 // pred_fallthru
      _
    %p9351 = scmp.le.s32.totalorder 2, %s7
    // Predicated region
    $region29: #{f.1} parent=5 // pred_check
      %p9352 = pneg %p9351
    $region30: #{f.1} parent=5 // pred_check_branch
      %9354 = sbr.rel (%p9352) target = $region32
    $region31: #{f.1} parent=5 // pred_region
      %s9355 = ssub.s32 %s7, 2
      // Predicated region
      $region33: #{f.1} parent=31 // pred_check
        %p9356 = pneg %p62
      $region34: #{f.1} parent=31 // pred_check_branch
        %9358 = sbr.rel (%p9356) target = $region36
      $region35: #{f.1} parent=31 // pred_region
        %s9359 = smul.u32 64, %s13
        %p9360 = scmp.lt.s32.totalorder %s9359, 127
        %s9361 = scalar_select %p9360, %s9359, 127
        %s9362 = smul.addr %s9361, 32
        %s9363 = smul.addr %s9362, 4
        %s9364 = scalar_lea.vmem %s1, %s9363
      $region36: #{f.1} parent=31 // pred_fallthru
        _
    $region32: #{f.1} parent=5 // pred_fallthru
      _
  $region6: #{f.1} parent=0 // loop_footer
    %s11 = sadd.s32 1, %s7
  $region7: #{f.1} parent=0 // loop_footer_branch
    %6 = sbr.rel target = $region3
  $region8: #{f.1} parent=0 // loop_exit
    _

</llo_original>
